<compile_context>
chip_gen: v7x
topology: tpu7x:2x2x1
jax: 0.10.0
libtpu: 0.0.40
codegen_flags: <defaults>
</compile_context>

<pallas_src>
import jax
import jax.numpy as jnp
import numpy as np
from jax.experimental import pallas as pl
from jax.experimental.pallas import tpu as pltpu

K = 5          # conv kernel size
ROWS_PER_IMG = 32  # input height; every activation keeps 32 rows per image


# ---------------------------------------------------------------------------
# Hardware-dependent sizing (v7x: 64 MiB VMEM -> bblk 128 / 48 MiB limit;
# v5e/v6e: 128 MiB -> bblk 256 / 100 MiB limit).
# ---------------------------------------------------------------------------
def _vmem_capacity_bytes():
    try:
        info = pltpu.get_tpu_info()
        cap = getattr(info, "vmem_capacity_bytes", None)
        if cap:
            return int(cap)
    except Exception:
        pass
    return 64 * 1024 * 1024   # conservative default (v7x-sized)


_VMEM_CAP = _vmem_capacity_bytes()
_BIG_VMEM = _VMEM_CAP > 64 * 1024 * 1024
_VMEM_LIMIT = 100 * 1024 * 1024 if _BIG_VMEM else 48 * 1024 * 1024
_BBLK_MAX = 256 if _BIG_VMEM else 128


def _pick_block(batch):
    """Batch-block size: big blocks for MXU M / step amortization, but keep
    >= 2 grid steps when possible so megacore ('parallel') has work to split."""
    if batch >= 2 * _BBLK_MAX:
        return _BBLK_MAX
    if batch >= 16:
        half = -(-((batch + 1) // 2) // 8) * 8      # ceil(B/2) rounded up to 8
        return min(_BBLK_MAX, half)
    return 8


# ---------------------------------------------------------------------------
# In-kernel helpers (traced inside the Pallas kernel; static Python loops).
# ---------------------------------------------------------------------------
def _shift_rows(x, k):
    """result[r, :] = x[r + k, :] (cyclic).  Wrapped / cross-image rows only
    ever land in don't-care positions of the dilated layout."""
    if k == 0:
        return x
    return jnp.concatenate([x[k:, :], x[:k, :]], axis=0)


def _shift_lanes(x, k):
    """result[:, l] = x[:, l + k] (cyclic); wrap only hits don't-care lanes."""
    if k == 0:
        return x
    return jnp.concatenate([x[:, k:], x[:, :k]], axis=1)


def _band_matmul(x, wref, nsteps, row_step):
    """out[r, :] = sum_k  x[r + k*row_step, :] @ wref[k]   (full-lane MXU matmuls)."""
    acc = jnp.dot(x, wref[0], preferred_element_type=jnp.float32)
    for k in range(1, nsteps):
        acc = acc + jnp.dot(_shift_rows(x, k * row_step), wref[k],
                            preferred_element_type=jnp.float32)
    return acc


def _pool2x2(y, row_step, lane_step):
    """2x2 / stride-2 max pool, 'lazy': the pooled value for window (2i, 2j)
    is left at row offset 2i*row_step-ish and lane offset 2j*lane_step; other
    positions hold unused (finite) values."""
    ym = jnp.maximum(y, _shift_rows(y, row_step))
    return jnp.maximum(ym, _shift_lanes(ym, lane_step))


# ---------------------------------------------------------------------------
# Single fused kernel: conv1+pool+relu -> conv2+pool+relu -> fc1 -> fc2 -> fc3
# Activation layout: 2-D, rows = (batch, h) [32 rows per image], lanes = (w, c).
# ---------------------------------------------------------------------------
def coolnet_kernel(x_ref, wb1_ref, b1_ref, wb2_ref, b2_ref,
                   wf1b_ref, bf1_ref, wf2_ref, bf2_ref, wf3_ref, bf3_ref,
                   o_ref):
    x = x_ref[...]                                       # [Bb*32, 96]  lanes = 3*w + c

    # conv1: 5 banded matmuls, valid at (row b*32+oh, lane 6*ow+c), oh,ow < 28
    y1 = _band_matmul(x, wb1_ref, K, 1)                  # [Bb*32, 168]
    # pool 2x2 (+bias+ReLU after pool; commutes) -> valid at (b*32+2i, 12j+c)
    h1 = jnp.maximum(_pool2x2(y1, 1, 6) + b1_ref[...], 0.0)

    # conv2 reads the dilated layout directly (band rows were built for it):
    # valid at (row b*32+2*i2, lane 16*ow2+co), i2,ow2 < 10
    y2 = _band_matmul(h1, wb2_ref, K, 2)                 # [Bb*32, 160]
    # pool -> valid at (row b*32+4*i3, lane 32*j3+co), i3,j3 < 5
    h2 = jnp.maximum(_pool2x2(y2, 2, 16) + b2_ref[...], 0.0)

    # fc1 as a band over the 5 pooled rows (row step 4); valid at rows b*32
    f1 = jnp.maximum(_band_matmul(h2, wf1b_ref, 5, 4) + bf1_ref[...], 0.0)   # [Bb*32, 120]
    f2 = jnp.maximum(jnp.dot(f1, wf2_ref[...],
                             preferred_element_type=jnp.float32) + bf2_ref[...], 0.0)
    o = jnp.dot(f2, wf3_ref[...], preferred_element_type=jnp.float32) + bf3_ref[...]
    o_ref[...] = o.astype(o_ref.dtype)                   # wrapper keeps rows b*32 only


# ---------------------------------------------------------------------------
# Wrapper: banded-weight prep (tiny, per-trace) + single pallas_call.
# ---------------------------------------------------------------------------
@jax.jit
def coolnet_forward(x_nchw, params):
    f32 = jnp.float32
    x = jnp.transpose(x_nchw, (0, 2, 3, 1)).astype(f32)          # NCHW -> NHWC
    batch = x.shape[0]

    w1 = params["w_conv1"].astype(f32)                           # [5,5,3,6]  HWIO
    w2 = params["w_conv2"].astype(f32)                           # [5,5,6,16] HWIO
    b1 = params["b_conv1"].astype(f32)
    b2 = params["b_conv2"].astype(f32)
    wf1 = params["w_fc1"].astype(f32)                            # [400,120], rows=(c,h,w)
    bf1 = params["b_fc1"].astype(f32)
    wf2 = params["w_fc2"].astype(f32)                            # [120,84]
    bf2 = params["b_fc2"].astype(f32)
    wf3 = params["w_fc3"].astype(f32)                            # [84,10]
    bf3 = params["b_fc3"].astype(f32)

    # --- banded (Toeplitz) weights: conv / fc1 as a few full-lane matmuls ---
    # conv1: input lanes 3*w+c (w<32), output cols 6*ow+co (ow<28)
    w1f = w1.reshape(K, 3 * K, 6)                                # [kh, 3*kw+c, co]
    wb1 = jnp.zeros((K, 96, 168), f32)
    for ow in range(28):
        wb1 = wb1.at[:, 3 * ow:3 * ow + 15, 6 * ow:6 * ow + 6].set(w1f)
    # conv2: input lanes 12*w1+c (pooled/dilated, w1<14), cols 16*ow2+co (ow2<10)
    wb2 = jnp.zeros((K, 168, 160), f32)
    for ow2 in range(10):
        for kw2 in range(K):
            r0 = 12 * (ow2 + kw2)
            wb2 = wb2.at[:, r0:r0 + 6, 16 * ow2:16 * ow2 + 16].set(w2[:, kw2])
    # fc1: per pooled-row i3 (row step 4); input lanes 32*j3+co
    wf1r = wf1.reshape(16, 5, 5, 120)                            # [c, i3, j3, n]
    wf1b = jnp.zeros((5, 160, 120), f32)
    for j3 in range(5):
        wf1b = wf1b.at[:, 32 * j3:32 * j3 + 16, :].set(
            jnp.transpose(wf1r[:, :, j3, :], (1, 0, 2)))

    b1t = jnp.tile(b1, 28).reshape(1, 168)                       # bias per (w,c) lane
    b2t = jnp.tile(b2, 10).reshape(1, 160)
    bf1r = bf1.reshape(1, 120)
    bf2r = bf2.reshape(1, 84)
    bf3r = bf3.reshape(1, 10)

    # --- lane-dense 2-D activation layout: rows (b, h), lanes (w, c) --------
    bblk = _pick_block(batch)
    pad = (-batch) % bblk
    if pad:
        x = jnp.pad(x, ((0, pad), (0, 0), (0, 0), (0, 0)))
    bp = x.shape[0]
    x2d = x.reshape(bp * ROWS_PER_IMG, 96)

    weights = (wb1, b1t, wb2, b2t, wf1b, bf1r, wf2, bf2r, wf3, bf3r)

    def const_spec(a):
        nd = a.ndim
        return pl.BlockSpec(a.shape, lambda n, _nd=nd: (0,) * _nd)

    rows_blk = bblk * ROWS_PER_IMG
    out = pl.pallas_call(
        coolnet_kernel,
        out_shape=jax.ShapeDtypeStruct((bp * ROWS_PER_IMG, 10), f32),
        grid_spec=pltpu.PrefetchScalarGridSpec(
            num_scalar_prefetch=0,
            grid=(bp // bblk,),
            in_specs=[pl.BlockSpec((rows_blk, 96), lambda n: (n, 0))]
                     + [const_spec(a) for a in weights],
            out_specs=pl.BlockSpec((rows_blk, 10), lambda n: (n, 0)),
        ),
        compiler_params=pltpu.CompilerParams(
            dimension_semantics=("parallel",),          # megacore split on v7x
            vmem_limit_bytes=_VMEM_LIMIT,
        ),
    )(x2d, *weights)

    # valid logits live at the h==0 row of each image; drop batch padding.
    return out.reshape(bp, ROWS_PER_IMG, 10)[:batch, 0, :]


# ---------------------------------------------------------------------------
# Deterministic parameter init (PyTorch-like uniform(-1/sqrt(fan_in), ...)).
# ---------------------------------------------------------------------------
def init_params(key):
    def uniform(k, shape, fan_in):
        bound = 1.0 / np.sqrt(fan_in)
        return jax.random.uniform(k, shape, jnp.float32, -bound, bound)

    ks = jax.random.split(key, 10)
    w_conv1 = uniform(ks[0], (6, 3, 5, 5), 3 * 25)      # OIHW (PyTorch)
    b_conv1 = uniform(ks[1], (6,), 3 * 25)
    w_conv2 = uniform(ks[2], (16, 6, 5, 5), 6 * 25)
    b_conv2 = uniform(ks[3], (16,), 6 * 25)
    w_fc1 = uniform(ks[4], (120, 400), 400)             # [out, in] (PyTorch)
    b_fc1 = uniform(ks[5], (120,), 400)
    w_fc2 = uniform(ks[6], (84, 120), 120)
    b_fc2 = uniform(ks[7], (84,), 120)
    w_fc3 = uniform(ks[8], (10, 84), 84)
    b_fc3 = uniform(ks[9], (10,), 84)
    return {
        "w_conv1": jnp.transpose(w_conv1, (2, 3, 1, 0)),  # OIHW -> HWIO
        "b_conv1": b_conv1,
        "w_conv2": jnp.transpose(w_conv2, (2, 3, 1, 0)),
        "b_conv2": b_conv2,
        "w_fc1": jnp.transpose(w_fc1), "b_fc1": b_fc1,    # [in, out], in = (c,h,w)
        "w_fc2": jnp.transpose(w_fc2), "b_fc2": b_fc2,
        "w_fc3": jnp.transpose(w_fc3), "b_fc3": b_fc3,
    }


# Pure-JAX reference (same math as the PyTorch forward) for verification.
def reference_forward(x_nchw, params):
    x = jnp.transpose(x_nchw, (0, 2, 3, 1))
    dn = ("NHWC", "HWIO", "NHWC")
    hp = jax.lax.Precision.HIGHEST

    def stage(x, w, b):
        y = jax.lax.conv_general_dilated(x, w, (1, 1), "VALID",
                                         dimension_numbers=dn, precision=hp)
        y = jnp.maximum(y + b, 0.0)
        return jax.lax.reduce_window(y, -jnp.inf, jax.lax.max,
                                     (1, 2, 2, 1), (1, 2, 2, 1), "VALID")

    h = stage(x, params["w_conv1"], params["b_conv1"])
    h = stage(h, params["w_conv2"], params["b_conv2"])
    h = jnp.transpose(h, (0, 3, 1, 2)).reshape(h.shape[0], -1)   # (c,h,w) flatten
    h = jnp.maximum(jnp.dot(h, params["w_fc1"], precision=hp) + params["b_fc1"], 0.0)
    h = jnp.maximum(jnp.dot(h, params["w_fc2"], precision=hp) + params["b_fc2"], 0.0)
    return jnp.dot(h, params["w_fc3"], precision=hp) + params["b_fc3"]


if __name__ == "__main__":
    key = jax.random.PRNGKey(0)
    kp, kx = jax.random.split(key)
    params = init_params(kp)
    x = jax.random.normal(kx, (2, 3, 32, 32), jnp.float32)  # NCHW, as in PyTorch

    out = coolnet_forward(x, params)
    out = jax.block_until_ready(out)
    assert out.shape == (2, 10) and out.dtype == jnp.float32

    ref = reference_forward(x, params)
    np.testing.assert_allclose(np.asarray(out), np.asarray(ref), rtol=1e-3, atol=1e-3)
    print("KERNEL_OK")
</pallas_src>

<mosaic_0001>
module attributes {stable_mosaic.version = 11 : i64} {
  func.func @coolnet_kernel(%arg0: i32, %arg1: memref<256x96xf32, #tpu.memory_space<vmem>>, %arg2: memref<5x96x168xf32, #tpu.memory_space<vmem>>, %arg3: memref<1x168xf32, #tpu.memory_space<vmem>>, %arg4: memref<5x168x160xf32, #tpu.memory_space<vmem>>, %arg5: memref<1x160xf32, #tpu.memory_space<vmem>>, %arg6: memref<5x160x120xf32, #tpu.memory_space<vmem>>, %arg7: memref<1x120xf32, #tpu.memory_space<vmem>>, %arg8: memref<120x84xf32, #tpu.memory_space<vmem>>, %arg9: memref<1x84xf32, #tpu.memory_space<vmem>>, %arg10: memref<84x10xf32, #tpu.memory_space<vmem>>, %arg11: memref<1x10xf32, #tpu.memory_space<vmem>>, %arg12: memref<256x10xf32, #tpu.memory_space<vmem>>) attributes {dimension_semantics = [#tpu.dimension_semantics<parallel>], iteration_bounds = array<i64: 1>, scalar_prefetch = 0 : i64, scratch_operands = 0 : i64, tpu.core_type = #tpu.core_type<tc>, window_params = [{transform_indices = @transform_0, window_bounds = array<i64: 256, 96>}, {pipeline_mode = #tpu.pipeline_mode<synchronous>, transform_indices = @transform_1, window_bounds = array<i64: 5, 96, 168>}, {pipeline_mode = #tpu.pipeline_mode<synchronous>, transform_indices = @transform_2, window_bounds = array<i64: 1, 168>}, {pipeline_mode = #tpu.pipeline_mode<synchronous>, transform_indices = @transform_3, window_bounds = array<i64: 5, 168, 160>}, {pipeline_mode = #tpu.pipeline_mode<synchronous>, transform_indices = @transform_4, window_bounds = array<i64: 1, 160>}, {pipeline_mode = #tpu.pipeline_mode<synchronous>, transform_indices = @transform_5, window_bounds = array<i64: 5, 160, 120>}, {pipeline_mode = #tpu.pipeline_mode<synchronous>, transform_indices = @transform_6, window_bounds = array<i64: 1, 120>}, {pipeline_mode = #tpu.pipeline_mode<synchronous>, transform_indices = @transform_7, window_bounds = array<i64: 120, 84>}, {pipeline_mode = #tpu.pipeline_mode<synchronous>, transform_indices = @transform_8, window_bounds = array<i64: 1, 84>}, {pipeline_mode = #tpu.pipeline_mode<synchronous>, transform_indices = @transform_9, window_bounds = array<i64: 84, 10>}, {pipeline_mode = #tpu.pipeline_mode<synchronous>, transform_indices = @transform_10, window_bounds = array<i64: 1, 10>}, {transform_indices = @transform_11, window_bounds = array<i64: 256, 10>}]} {
    %c0 = arith.constant 0 : index
    %c0_0 = arith.constant 0 : index
    %0 = vector.load %arg1[%c0, %c0_0] : memref<256x96xf32, #tpu.memory_space<vmem>>, vector<256x96xf32>
    %c0_1 = arith.constant 0 : index
    %c0_2 = arith.constant 0 : index
    %c0_3 = arith.constant 0 : index
    %1 = vector.load %arg2[%c0_1, %c0_2, %c0_3] : memref<5x96x168xf32, #tpu.memory_space<vmem>>, vector<1x96x168xf32>
    %2 = vector.shape_cast %1 : vector<1x96x168xf32> to vector<96x168xf32>
    %cst = arith.constant dense<0.000000e+00> : vector<256x168xf32>
    %3 = tpu.matmul %0, %2, %cst {dimension_numbers = #tpu.dot_dimension_numbers<[1], [0], [0], [1], [0, 0, 1, 1], [], []>} : vector<256x96xf32>, vector<96x168xf32>, vector<256x168xf32> -> vector<256x168xf32>
    %4 = vector.extract_strided_slice %0 {offsets = [1, 0], sizes = [255, 96], strides = [1, 1]} : vector<256x96xf32> to vector<255x96xf32>
    %5 = vector.extract_strided_slice %0 {offsets = [0, 0], sizes = [1, 96], strides = [1, 1]} : vector<256x96xf32> to vector<1x96xf32>
    %6 = tpu.concatenate %4, %5 in 0 : vector<255x96xf32>, vector<1x96xf32> -> vector<256x96xf32>
    %c1 = arith.constant 1 : index
    %c0_4 = arith.constant 0 : index
    %c0_5 = arith.constant 0 : index
    %7 = vector.load %arg2[%c1, %c0_4, %c0_5] : memref<5x96x168xf32, #tpu.memory_space<vmem>>, vector<1x96x168xf32>
    %8 = vector.shape_cast %7 : vector<1x96x168xf32> to vector<96x168xf32>
    %cst_6 = arith.constant dense<0.000000e+00> : vector<256x168xf32>
    %9 = tpu.matmul %6, %8, %cst_6 {dimension_numbers = #tpu.dot_dimension_numbers<[1], [0], [0], [1], [0, 0, 1, 1], [], []>} : vector<256x96xf32>, vector<96x168xf32>, vector<256x168xf32> -> vector<256x168xf32>
    %10 = arith.addf %3, %9 : vector<256x168xf32>
    %11 = vector.extract_strided_slice %0 {offsets = [2, 0], sizes = [254, 96], strides = [1, 1]} : vector<256x96xf32> to vector<254x96xf32>
    %12 = vector.extract_strided_slice %0 {offsets = [0, 0], sizes = [2, 96], strides = [1, 1]} : vector<256x96xf32> to vector<2x96xf32>
    %13 = tpu.concatenate %11, %12 in 0 : vector<254x96xf32>, vector<2x96xf32> -> vector<256x96xf32>
    %c2 = arith.constant 2 : index
    %c0_7 = arith.constant 0 : index
    %c0_8 = arith.constant 0 : index
    %14 = vector.load %arg2[%c2, %c0_7, %c0_8] : memref<5x96x168xf32, #tpu.memory_space<vmem>>, vector<1x96x168xf32>
    %15 = vector.shape_cast %14 : vector<1x96x168xf32> to vector<96x168xf32>
    %cst_9 = arith.constant dense<0.000000e+00> : vector<256x168xf32>
    %16 = tpu.matmul %13, %15, %cst_9 {dimension_numbers = #tpu.dot_dimension_numbers<[1], [0], [0], [1], [0, 0, 1, 1], [], []>} : vector<256x96xf32>, vector<96x168xf32>, vector<256x168xf32> -> vector<256x168xf32>
    %17 = arith.addf %10, %16 : vector<256x168xf32>
    %18 = vector.extract_strided_slice %0 {offsets = [3, 0], sizes = [253, 96], strides = [1, 1]} : vector<256x96xf32> to vector<253x96xf32>
    %19 = vector.extract_strided_slice %0 {offsets = [0, 0], sizes = [3, 96], strides = [1, 1]} : vector<256x96xf32> to vector<3x96xf32>
    %20 = tpu.concatenate %18, %19 in 0 : vector<253x96xf32>, vector<3x96xf32> -> vector<256x96xf32>
    %c3 = arith.constant 3 : index
    %c0_10 = arith.constant 0 : index
    %c0_11 = arith.constant 0 : index
    %21 = vector.load %arg2[%c3, %c0_10, %c0_11] : memref<5x96x168xf32, #tpu.memory_space<vmem>>, vector<1x96x168xf32>
    %22 = vector.shape_cast %21 : vector<1x96x168xf32> to vector<96x168xf32>
    %cst_12 = arith.constant dense<0.000000e+00> : vector<256x168xf32>
    %23 = tpu.matmul %20, %22, %cst_12 {dimension_numbers = #tpu.dot_dimension_numbers<[1], [0], [0], [1], [0, 0, 1, 1], [], []>} : vector<256x96xf32>, vector<96x168xf32>, vector<256x168xf32> -> vector<256x168xf32>
    %24 = arith.addf %17, %23 : vector<256x168xf32>
    %25 = vector.extract_strided_slice %0 {offsets = [4, 0], sizes = [252, 96], strides = [1, 1]} : vector<256x96xf32> to vector<252x96xf32>
    %26 = vector.extract_strided_slice %0 {offsets = [0, 0], sizes = [4, 96], strides = [1, 1]} : vector<256x96xf32> to vector<4x96xf32>
    %27 = tpu.concatenate %25, %26 in 0 : vector<252x96xf32>, vector<4x96xf32> -> vector<256x96xf32>
    %c4 = arith.constant 4 : index
    %c0_13 = arith.constant 0 : index
    %c0_14 = arith.constant 0 : index
    %28 = vector.load %arg2[%c4, %c0_13, %c0_14] : memref<5x96x168xf32, #tpu.memory_space<vmem>>, vector<1x96x168xf32>
    %29 = vector.shape_cast %28 : vector<1x96x168xf32> to vector<96x168xf32>
    %cst_15 = arith.constant dense<0.000000e+00> : vector<256x168xf32>
    %30 = tpu.matmul %27, %29, %cst_15 {dimension_numbers = #tpu.dot_dimension_numbers<[1], [0], [0], [1], [0, 0, 1, 1], [], []>} : vector<256x96xf32>, vector<96x168xf32>, vector<256x168xf32> -> vector<256x168xf32>
    %31 = arith.addf %24, %30 : vector<256x168xf32>
    %32 = vector.extract_strided_slice %31 {offsets = [1, 0], sizes = [255, 168], strides = [1, 1]} : vector<256x168xf32> to vector<255x168xf32>
    %33 = vector.extract_strided_slice %31 {offsets = [0, 0], sizes = [1, 168], strides = [1, 1]} : vector<256x168xf32> to vector<1x168xf32>
    %34 = tpu.concatenate %32, %33 in 0 : vector<255x168xf32>, vector<1x168xf32> -> vector<256x168xf32>
    %35 = arith.maximumf %31, %34 : vector<256x168xf32>
    %36 = vector.extract_strided_slice %35 {offsets = [0, 6], sizes = [256, 162], strides = [1, 1]} : vector<256x168xf32> to vector<256x162xf32>
    %37 = vector.extract_strided_slice %35 {offsets = [0, 0], sizes = [256, 6], strides = [1, 1]} : vector<256x168xf32> to vector<256x6xf32>
    %38 = tpu.concatenate %36, %37 in 1 : vector<256x162xf32>, vector<256x6xf32> -> vector<256x168xf32>
    %39 = arith.maximumf %35, %38 : vector<256x168xf32>
    %c0_16 = arith.constant 0 : index
    %c0_17 = arith.constant 0 : index
    %40 = vector.load %arg3[%c0_16, %c0_17] : memref<1x168xf32, #tpu.memory_space<vmem>>, vector<1x168xf32>
    %41 = vector.broadcast %40 : vector<1x168xf32> to vector<256x168xf32>
    %42 = arith.addf %39, %41 : vector<256x168xf32>
    %cst_18 = arith.constant 0.000000e+00 : f32
    %43 = vector.broadcast %cst_18 : f32 to vector<256x168xf32>
    %44 = arith.maximumf %42, %43 : vector<256x168xf32>
    %c0_19 = arith.constant 0 : index
    %c0_20 = arith.constant 0 : index
    %c0_21 = arith.constant 0 : index
    %45 = vector.load %arg4[%c0_19, %c0_20, %c0_21] : memref<5x168x160xf32, #tpu.memory_space<vmem>>, vector<1x168x160xf32>
    %46 = vector.shape_cast %45 : vector<1x168x160xf32> to vector<168x160xf32>
    %cst_22 = arith.constant dense<0.000000e+00> : vector<256x160xf32>
    %47 = tpu.matmul %44, %46, %cst_22 {dimension_numbers = #tpu.dot_dimension_numbers<[1], [0], [0], [1], [0, 0, 1, 1], [], []>} : vector<256x168xf32>, vector<168x160xf32>, vector<256x160xf32> -> vector<256x160xf32>
    %48 = vector.extract_strided_slice %44 {offsets = [2, 0], sizes = [254, 168], strides = [1, 1]} : vector<256x168xf32> to vector<254x168xf32>
    %49 = vector.extract_strided_slice %44 {offsets = [0, 0], sizes = [2, 168], strides = [1, 1]} : vector<256x168xf32> to vector<2x168xf32>
    %50 = tpu.concatenate %48, %49 in 0 : vector<254x168xf32>, vector<2x168xf32> -> vector<256x168xf32>
    %c1_23 = arith.constant 1 : index
    %c0_24 = arith.constant 0 : index
    %c0_25 = arith.constant 0 : index
    %51 = vector.load %arg4[%c1_23, %c0_24, %c0_25] : memref<5x168x160xf32, #tpu.memory_space<vmem>>, vector<1x168x160xf32>
    %52 = vector.shape_cast %51 : vector<1x168x160xf32> to vector<168x160xf32>
    %cst_26 = arith.constant dense<0.000000e+00> : vector<256x160xf32>
    %53 = tpu.matmul %50, %52, %cst_26 {dimension_numbers = #tpu.dot_dimension_numbers<[1], [0], [0], [1], [0, 0, 1, 1], [], []>} : vector<256x168xf32>, vector<168x160xf32>, vector<256x160xf32> -> vector<256x160xf32>
    %54 = arith.addf %47, %53 : vector<256x160xf32>
    %55 = vector.extract_strided_slice %44 {offsets = [4, 0], sizes = [252, 168], strides = [1, 1]} : vector<256x168xf32> to vector<252x168xf32>
    %56 = vector.extract_strided_slice %44 {offsets = [0, 0], sizes = [4, 168], strides = [1, 1]} : vector<256x168xf32> to vector<4x168xf32>
    %57 = tpu.concatenate %55, %56 in 0 : vector<252x168xf32>, vector<4x168xf32> -> vector<256x168xf32>
    %c2_27 = arith.constant 2 : index
    %c0_28 = arith.constant 0 : index
    %c0_29 = arith.constant 0 : index
    %58 = vector.load %arg4[%c2_27, %c0_28, %c0_29] : memref<5x168x160xf32, #tpu.memory_space<vmem>>, vector<1x168x160xf32>
    %59 = vector.shape_cast %58 : vector<1x168x160xf32> to vector<168x160xf32>
    %cst_30 = arith.constant dense<0.000000e+00> : vector<256x160xf32>
    %60 = tpu.matmul %57, %59, %cst_30 {dimension_numbers = #tpu.dot_dimension_numbers<[1], [0], [0], [1], [0, 0, 1, 1], [], []>} : vector<256x168xf32>, vector<168x160xf32>, vector<256x160xf32> -> vector<256x160xf32>
    %61 = arith.addf %54, %60 : vector<256x160xf32>
    %62 = vector.extract_strided_slice %44 {offsets = [6, 0], sizes = [250, 168], strides = [1, 1]} : vector<256x168xf32> to vector<250x168xf32>
    %63 = vector.extract_strided_slice %44 {offsets = [0, 0], sizes = [6, 168], strides = [1, 1]} : vector<256x168xf32> to vector<6x168xf32>
    %64 = tpu.concatenate %62, %63 in 0 : vector<250x168xf32>, vector<6x168xf32> -> vector<256x168xf32>
    %c3_31 = arith.constant 3 : index
    %c0_32 = arith.constant 0 : index
    %c0_33 = arith.constant 0 : index
    %65 = vector.load %arg4[%c3_31, %c0_32, %c0_33] : memref<5x168x160xf32, #tpu.memory_space<vmem>>, vector<1x168x160xf32>
    %66 = vector.shape_cast %65 : vector<1x168x160xf32> to vector<168x160xf32>
    %cst_34 = arith.constant dense<0.000000e+00> : vector<256x160xf32>
    %67 = tpu.matmul %64, %66, %cst_34 {dimension_numbers = #tpu.dot_dimension_numbers<[1], [0], [0], [1], [0, 0, 1, 1], [], []>} : vector<256x168xf32>, vector<168x160xf32>, vector<256x160xf32> -> vector<256x160xf32>
    %68 = arith.addf %61, %67 : vector<256x160xf32>
    %69 = vector.extract_strided_slice %44 {offsets = [8, 0], sizes = [248, 168], strides = [1, 1]} : vector<256x168xf32> to vector<248x168xf32>
    %70 = vector.extract_strided_slice %44 {offsets = [0, 0], sizes = [8, 168], strides = [1, 1]} : vector<256x168xf32> to vector<8x168xf32>
    %71 = tpu.concatenate %69, %70 in 0 : vector<248x168xf32>, vector<8x168xf32> -> vector<256x168xf32>
    %c4_35 = arith.constant 4 : index
    %c0_36 = arith.constant 0 : index
    %c0_37 = arith.constant 0 : index
    %72 = vector.load %arg4[%c4_35, %c0_36, %c0_37] : memref<5x168x160xf32, #tpu.memory_space<vmem>>, vector<1x168x160xf32>
    %73 = vector.shape_cast %72 : vector<1x168x160xf32> to vector<168x160xf32>
    %cst_38 = arith.constant dense<0.000000e+00> : vector<256x160xf32>
    %74 = tpu.matmul %71, %73, %cst_38 {dimension_numbers = #tpu.dot_dimension_numbers<[1], [0], [0], [1], [0, 0, 1, 1], [], []>} : vector<256x168xf32>, vector<168x160xf32>, vector<256x160xf32> -> vector<256x160xf32>
    %75 = arith.addf %68, %74 : vector<256x160xf32>
    %76 = vector.extract_strided_slice %75 {offsets = [2, 0], sizes = [254, 160], strides = [1, 1]} : vector<256x160xf32> to vector<254x160xf32>
    %77 = vector.extract_strided_slice %75 {offsets = [0, 0], sizes = [2, 160], strides = [1, 1]} : vector<256x160xf32> to vector<2x160xf32>
    %78 = tpu.concatenate %76, %77 in 0 : vector<254x160xf32>, vector<2x160xf32> -> vector<256x160xf32>
    %79 = arith.maximumf %75, %78 : vector<256x160xf32>
    %80 = vector.extract_strided_slice %79 {offsets = [0, 16], sizes = [256, 144], strides = [1, 1]} : vector<256x160xf32> to vector<256x144xf32>
    %81 = vector.extract_strided_slice %79 {offsets = [0, 0], sizes = [256, 16], strides = [1, 1]} : vector<256x160xf32> to vector<256x16xf32>
    %82 = tpu.concatenate %80, %81 in 1 : vector<256x144xf32>, vector<256x16xf32> -> vector<256x160xf32>
    %83 = arith.maximumf %79, %82 : vector<256x160xf32>
    %c0_39 = arith.constant 0 : index
    %c0_40 = arith.constant 0 : index
    %84 = vector.load %arg5[%c0_39, %c0_40] : memref<1x160xf32, #tpu.memory_space<vmem>>, vector<1x160xf32>
    %85 = vector.broadcast %84 : vector<1x160xf32> to vector<256x160xf32>
    %86 = arith.addf %83, %85 : vector<256x160xf32>
    %cst_41 = arith.constant 0.000000e+00 : f32
    %87 = vector.broadcast %cst_41 : f32 to vector<256x160xf32>
    %88 = arith.maximumf %86, %87 : vector<256x160xf32>
    %c0_42 = arith.constant 0 : index
    %c0_43 = arith.constant 0 : index
    %c0_44 = arith.constant 0 : index
    %89 = vector.load %arg6[%c0_42, %c0_43, %c0_44] : memref<5x160x120xf32, #tpu.memory_space<vmem>>, vector<1x160x120xf32>
    %90 = vector.shape_cast %89 : vector<1x160x120xf32> to vector<160x120xf32>
    %cst_45 = arith.constant dense<0.000000e+00> : vector<256x120xf32>
    %91 = tpu.matmul %88, %90, %cst_45 {dimension_numbers = #tpu.dot_dimension_numbers<[1], [0], [0], [1], [0, 0, 1, 1], [], []>} : vector<256x160xf32>, vector<160x120xf32>, vector<256x120xf32> -> vector<256x120xf32>
    %92 = vector.extract_strided_slice %88 {offsets = [4, 0], sizes = [252, 160], strides = [1, 1]} : vector<256x160xf32> to vector<252x160xf32>
    %93 = vector.extract_strided_slice %88 {offsets = [0, 0], sizes = [4, 160], strides = [1, 1]} : vector<256x160xf32> to vector<4x160xf32>
    %94 = tpu.concatenate %92, %93 in 0 : vector<252x160xf32>, vector<4x160xf32> -> vector<256x160xf32>
    %c1_46 = arith.constant 1 : index
    %c0_47 = arith.constant 0 : index
    %c0_48 = arith.constant 0 : index
    %95 = vector.load %arg6[%c1_46, %c0_47, %c0_48] : memref<5x160x120xf32, #tpu.memory_space<vmem>>, vector<1x160x120xf32>
    %96 = vector.shape_cast %95 : vector<1x160x120xf32> to vector<160x120xf32>
    %cst_49 = arith.constant dense<0.000000e+00> : vector<256x120xf32>
    %97 = tpu.matmul %94, %96, %cst_49 {dimension_numbers = #tpu.dot_dimension_numbers<[1], [0], [0], [1], [0, 0, 1, 1], [], []>} : vector<256x160xf32>, vector<160x120xf32>, vector<256x120xf32> -> vector<256x120xf32>
    %98 = arith.addf %91, %97 : vector<256x120xf32>
    %99 = vector.extract_strided_slice %88 {offsets = [8, 0], sizes = [248, 160], strides = [1, 1]} : vector<256x160xf32> to vector<248x160xf32>
    %100 = vector.extract_strided_slice %88 {offsets = [0, 0], sizes = [8, 160], strides = [1, 1]} : vector<256x160xf32> to vector<8x160xf32>
    %101 = tpu.concatenate %99, %100 in 0 : vector<248x160xf32>, vector<8x160xf32> -> vector<256x160xf32>
    %c2_50 = arith.constant 2 : index
    %c0_51 = arith.constant 0 : index
    %c0_52 = arith.constant 0 : index
    %102 = vector.load %arg6[%c2_50, %c0_51, %c0_52] : memref<5x160x120xf32, #tpu.memory_space<vmem>>, vector<1x160x120xf32>
    %103 = vector.shape_cast %102 : vector<1x160x120xf32> to vector<160x120xf32>
    %cst_53 = arith.constant dense<0.000000e+00> : vector<256x120xf32>
    %104 = tpu.matmul %101, %103, %cst_53 {dimension_numbers = #tpu.dot_dimension_numbers<[1], [0], [0], [1], [0, 0, 1, 1], [], []>} : vector<256x160xf32>, vector<160x120xf32>, vector<256x120xf32> -> vector<256x120xf32>
    %105 = arith.addf %98, %104 : vector<256x120xf32>
    %106 = vector.extract_strided_slice %88 {offsets = [12, 0], sizes = [244, 160], strides = [1, 1]} : vector<256x160xf32> to vector<244x160xf32>
    %107 = vector.extract_strided_slice %88 {offsets = [0, 0], sizes = [12, 160], strides = [1, 1]} : vector<256x160xf32> to vector<12x160xf32>
    %108 = tpu.concatenate %106, %107 in 0 : vector<244x160xf32>, vector<12x160xf32> -> vector<256x160xf32>
    %c3_54 = arith.constant 3 : index
    %c0_55 = arith.constant 0 : index
    %c0_56 = arith.constant 0 : index
    %109 = vector.load %arg6[%c3_54, %c0_55, %c0_56] : memref<5x160x120xf32, #tpu.memory_space<vmem>>, vector<1x160x120xf32>
    %110 = vector.shape_cast %109 : vector<1x160x120xf32> to vector<160x120xf32>
    %cst_57 = arith.constant dense<0.000000e+00> : vector<256x120xf32>
    %111 = tpu.matmul %108, %110, %cst_57 {dimension_numbers = #tpu.dot_dimension_numbers<[1], [0], [0], [1], [0, 0, 1, 1], [], []>} : vector<256x160xf32>, vector<160x120xf32>, vector<256x120xf32> -> vector<256x120xf32>
    %112 = arith.addf %105, %111 : vector<256x120xf32>
    %113 = vector.extract_strided_slice %88 {offsets = [16, 0], sizes = [240, 160], strides = [1, 1]} : vector<256x160xf32> to vector<240x160xf32>
    %114 = vector.extract_strided_slice %88 {offsets = [0, 0], sizes = [16, 160], strides = [1, 1]} : vector<256x160xf32> to vector<16x160xf32>
    %115 = tpu.concatenate %113, %114 in 0 : vector<240x160xf32>, vector<16x160xf32> -> vector<256x160xf32>
    %c4_58 = arith.constant 4 : index
    %c0_59 = arith.constant 0 : index
    %c0_60 = arith.constant 0 : index
    %116 = vector.load %arg6[%c4_58, %c0_59, %c0_60] : memref<5x160x120xf32, #tpu.memory_space<vmem>>, vector<1x160x120xf32>
    %117 = vector.shape_cast %116 : vector<1x160x120xf32> to vector<160x120xf32>
    %cst_61 = arith.constant dense<0.000000e+00> : vector<256x120xf32>
    %118 = tpu.matmul %115, %117, %cst_61 {dimension_numbers = #tpu.dot_dimension_numbers<[1], [0], [0], [1], [0, 0, 1, 1], [], []>} : vector<256x160xf32>, vector<160x120xf32>, vector<256x120xf32> -> vector<256x120xf32>
    %119 = arith.addf %112, %118 : vector<256x120xf32>
    %c0_62 = arith.constant 0 : index
    %c0_63 = arith.constant 0 : index
    %120 = vector.load %arg7[%c0_62, %c0_63] : memref<1x120xf32, #tpu.memory_space<vmem>>, vector<1x120xf32>
    %121 = vector.broadcast %120 : vector<1x120xf32> to vector<256x120xf32>
    %122 = arith.addf %119, %121 : vector<256x120xf32>
    %cst_64 = arith.constant 0.000000e+00 : f32
    %123 = vector.broadcast %cst_64 : f32 to vector<256x120xf32>
    %124 = arith.maximumf %122, %123 : vector<256x120xf32>
    %c0_65 = arith.constant 0 : index
    %c0_66 = arith.constant 0 : index
    %125 = vector.load %arg8[%c0_65, %c0_66] : memref<120x84xf32, #tpu.memory_space<vmem>>, vector<120x84xf32>
    %cst_67 = arith.constant dense<0.000000e+00> : vector<256x84xf32>
    %126 = tpu.matmul %124, %125, %cst_67 {dimension_numbers = #tpu.dot_dimension_numbers<[1], [0], [0], [1], [0, 0, 1, 1], [], []>} : vector<256x120xf32>, vector<120x84xf32>, vector<256x84xf32> -> vector<256x84xf32>
    %c0_68 = arith.constant 0 : index
    %c0_69 = arith.constant 0 : index
    %127 = vector.load %arg9[%c0_68, %c0_69] : memref<1x84xf32, #tpu.memory_space<vmem>>, vector<1x84xf32>
    %128 = vector.broadcast %127 : vector<1x84xf32> to vector<256x84xf32>
    %129 = arith.addf %126, %128 : vector<256x84xf32>
    %cst_70 = arith.constant 0.000000e+00 : f32
    %130 = vector.broadcast %cst_70 : f32 to vector<256x84xf32>
    %131 = arith.maximumf %129, %130 : vector<256x84xf32>
    %c0_71 = arith.constant 0 : index
    %c0_72 = arith.constant 0 : index
    %132 = vector.load %arg10[%c0_71, %c0_72] : memref<84x10xf32, #tpu.memory_space<vmem>>, vector<84x10xf32>
    %cst_73 = arith.constant dense<0.000000e+00> : vector<256x10xf32>
    %133 = tpu.matmul %131, %132, %cst_73 {dimension_numbers = #tpu.dot_dimension_numbers<[1], [0], [0], [1], [0, 0, 1, 1], [], []>} : vector<256x84xf32>, vector<84x10xf32>, vector<256x10xf32> -> vector<256x10xf32>
    %c0_74 = arith.constant 0 : index
    %c0_75 = arith.constant 0 : index
    %134 = vector.load %arg11[%c0_74, %c0_75] : memref<1x10xf32, #tpu.memory_space<vmem>>, vector<1x10xf32>
    %135 = vector.broadcast %134 : vector<1x10xf32> to vector<256x10xf32>
    %136 = arith.addf %133, %135 : vector<256x10xf32>
    %c0_76 = arith.constant 0 : index
    %c0_77 = arith.constant 0 : index
    %137 = vector.load %arg12[%c0_76, %c0_77] : memref<256x10xf32, #tpu.memory_space<vmem>>, vector<256x10xf32>
    tpu.vector_store %arg12[%c0_76, %c0_77], %136 {strides = array<i32>} : memref<256x10xf32, #tpu.memory_space<vmem>>, vector<256x10xf32>,
    return
  }
  func.func @transform_0(%arg0: i32) -> (i32, i32) {
    %c0_i32 = arith.constant 0 : i32
    %c0_i32_0 = arith.constant 0 : i32
    return %arg0, %c0_i32 : i32, i32
  }
  func.func @transform_1(%arg0: i32) -> (i32, i32, i32) {
    %c0_i32 = arith.constant 0 : i32
    %c0_i32_0 = arith.constant 0 : i32
    %c0_i32_1 = arith.constant 0 : i32
    %c0_i32_2 = arith.constant 0 : i32
    return %c0_i32, %c0_i32_0, %c0_i32_1 : i32, i32, i32
  }
  func.func @transform_2(%arg0: i32) -> (i32, i32) {
    %c0_i32 = arith.constant 0 : i32
    %c0_i32_0 = arith.constant 0 : i32
    %c0_i32_1 = arith.constant 0 : i32
    return %c0_i32, %c0_i32_0 : i32, i32
  }
  func.func @transform_3(%arg0: i32) -> (i32, i32, i32) {
    %c0_i32 = arith.constant 0 : i32
    %c0_i32_0 = arith.constant 0 : i32
    %c0_i32_1 = arith.constant 0 : i32
    %c0_i32_2 = arith.constant 0 : i32
    return %c0_i32, %c0_i32_0, %c0_i32_1 : i32, i32, i32
  }
  func.func @transform_4(%arg0: i32) -> (i32, i32) {
    %c0_i32 = arith.constant 0 : i32
    %c0_i32_0 = arith.constant 0 : i32
    %c0_i32_1 = arith.constant 0 : i32
    return %c0_i32, %c0_i32_0 : i32, i32
  }
  func.func @transform_5(%arg0: i32) -> (i32, i32, i32) {
    %c0_i32 = arith.constant 0 : i32
    %c0_i32_0 = arith.constant 0 : i32
    %c0_i32_1 = arith.constant 0 : i32
    %c0_i32_2 = arith.constant 0 : i32
    return %c0_i32, %c0_i32_0, %c0_i32_1 : i32, i32, i32
  }
  func.func @transform_6(%arg0: i32) -> (i32, i32) {
    %c0_i32 = arith.constant 0 : i32
    %c0_i32_0 = arith.constant 0 : i32
    %c0_i32_1 = arith.constant 0 : i32
    return %c0_i32, %c0_i32_0 : i32, i32
  }
  func.func @transform_7(%arg0: i32) -> (i32, i32) {
    %c0_i32 = arith.constant 0 : i32
    %c0_i32_0 = arith.constant 0 : i32
    %c0_i32_1 = arith.constant 0 : i32
    return %c0_i32, %c0_i32_0 : i32, i32
  }
  func.func @transform_8(%arg0: i32) -> (i32, i32) {
    %c0_i32 = arith.constant 0 : i32
    %c0_i32_0 = arith.constant 0 : i32
    %c0_i32_1 = arith.constant 0 : i32
    return %c0_i32, %c0_i32_0 : i32, i32
  }
  func.func @transform_9(%arg0: i32) -> (i32, i32) {
    %c0_i32 = arith.constant 0 : i32
    %c0_i32_0 = arith.constant 0 : i32
    %c0_i32_1 = arith.constant 0 : i32
    return %c0_i32, %c0_i32_0 : i32, i32
  }
  func.func @transform_10(%arg0: i32) -> (i32, i32) {
    %c0_i32 = arith.constant 0 : i32
    %c0_i32_0 = arith.constant 0 : i32
    %c0_i32_1 = arith.constant 0 : i32
    return %c0_i32, %c0_i32_0 : i32, i32
  }
  func.func @transform_11(%arg0: i32) -> (i32, i32) {
    %c0_i32 = arith.constant 0 : i32
    %c0_i32_0 = arith.constant 0 : i32
    return %arg0, %c0_i32 : i32, i32
  }
}

</mosaic_0001>

<llo_original>
// kernel: tile.13
$region0: #{tile.13}
  #allocation0 [shape = 's32[1]{0}', space=sflag, size = 0x4, scoped, tag = 'scoped memory for tile.13']
  %s0 = inlined_call_operand.vmem [shape: f32[6], index: 0, kind: input, shape index: {}]
  %s1 = inlined_call_operand.vmem [shape: f32[28,6], index: 1, kind: output, shape index: {}]
  // Predicated region
  $region2: #{tile.13} parent=0 // pred_check
    _
  $region3: #{tile.13} parent=0 // pred_check_branch
    %3 = sbr.rel (0) target = $region5
  $region4: #{tile.13} parent=0 // pred_region
    _
  $region5: #{tile.13} parent=0 // pred_fallthru
    _
  %v4 = vld [vmem:[%s0] ss:$0 sm:$0xff]
  %5 = vst [vmem:[%s1] sm:$0xff] %v4
  %s6 = scalar_lea.vmem %s1, 8
  %7 = vst [vmem:[%s6] sm:$0xff] %v4
  %s8 = scalar_lea.vmem %s1, 16
  %9 = vst [vmem:[%s8] sm:$0xff] %v4
  %s10 = scalar_lea.vmem %s1, 24
  %11 = vst [vmem:[%s10] sm:$0xff] %v4

// kernel: tile.14
$region0: #{tile.14}
  %s0 = inlined_call_operand.vmem [shape: f32[28,6], index: 0, kind: input, shape index: {}]
  %s1 = inlined_call_operand.vmem [shape: f32[1,168], index: 1, kind: output, shape index: {}]
  $region1: #{tile.14} parent=0
    #allocation0 [shape = 'u8[8192]{0}', space=vmem, size = 0x2000, scoped, tag = 'scoped mem for output reshape']
    %v2 = vld [vmem:[%s0] sm:$0x1]
    %vm3 = vcmask 48128
    %4 = vst.msk [vmem:[#allocation0] sm:$0x1] %vm3, %v2
    %s5 = scalar_lea.vmem %s0, 21
    %v6 = vld [vmem:[%s5] sm:$0x1]
    %s7 = scalar_lea.vmem %s0, 21
    %v8 = vld [vmem:[%s7] sm:$0x1]
    %vm9 = vcmask 15360
    %v10 = vsel %vm9, %v8, %v6
    %11 = vrot.lane.b32.xlu0 %v10, 126
    %v12 = vpop.permute.xlu0 %11
    %vm13 = vcmask 31744
    %s14 = scalar_lea.vmem [#allocation0], 8
    %15 = vst.msk [vmem:[%s14] sm:$0x1] %vm13, %v12
    %vm16 = vcmask 1048560
    %17 = vst.msk [vmem:[#allocation0] sm:$0x1] %vm16, %v12
    %s18 = scalar_lea.vmem %s0, 20
    %v19 = vld [vmem:[%s18] sm:$0x1]
    %20 = vrot.lane.b32.xlu0 %v19, 120
    %v21 = vpop.permute.xlu0 %20
    %vm22 = vcmask 1032128
    %23 = vst.msk [vmem:[#allocation0] sm:$0x1] %vm22, %v21
    %s24 = scalar_lea.vmem %s0, 19
    %v25 = vld [vmem:[%s24] sm:$0x1]
    %26 = vrot.lane.b32.xlu0 %v25, 114
    %v27 = vpop.permute.xlu0 %26
    %vm28 = vcmask 982928
    %29 = vst.msk [vmem:[#allocation0] sm:$0x1] %vm28, %v27
    %s30 = scalar_lea.vmem %s0, 18
    %v31 = vld [vmem:[%s30] sm:$0x1]
    %32 = vrot.lane.b32.xlu0 %v31, 108
    %v33 = vpop.permute.xlu0 %32
    %vm34 = vcmask 933728
    %35 = vst.msk [vmem:[#allocation0] sm:$0x1] %vm34, %v33
    %s36 = scalar_lea.vmem %s0, 17
    %v37 = vld [vmem:[%s36] sm:$0x1]
    %38 = vrot.lane.b32.xlu0 %v37, 102
    %v39 = vpop.permute.xlu0 %38
    %vm40 = vcmask 884528
    %41 = vst.msk [vmem:[#allocation0] sm:$0x1] %vm40, %v39
    %s42 = scalar_lea.vmem %s0, 16
    %v43 = vld [vmem:[%s42] sm:$0x1]
    %44 = vrot.lane.b32.xlu0 %v43, 96
    %v45 = vpop.permute.xlu0 %44
    %vm46 = vcmask 835328
    %47 = vst.msk [vmem:[#allocation0] sm:$0x1] %vm46, %v45
    %s48 = scalar_lea.vmem %s0, 15
    %v49 = vld [vmem:[%s48] sm:$0x1]
    %50 = vrot.lane.b32.xlu0 %v49, 90
    %v51 = vpop.permute.xlu0 %50
    %vm52 = vcmask 786128
    %53 = vst.msk [vmem:[#allocation0] sm:$0x1] %vm52, %v51
    %s54 = scalar_lea.vmem %s0, 14
    %v55 = vld [vmem:[%s54] sm:$0x1]
    %56 = vrot.lane.b32.xlu0 %v55, 84
    %v57 = vpop.permute.xlu0 %56
    %vm58 = vcmask 736928
    %59 = vst.msk [vmem:[#allocation0] sm:$0x1] %vm58, %v57
    %s60 = scalar_lea.vmem %s0, 13
    %v61 = vld [vmem:[%s60] sm:$0x1]
    %62 = vrot.lane.b32.xlu0 %v61, 78
    %v63 = vpop.permute.xlu0 %62
    %vm64 = vcmask 687728
    %65 = vst.msk [vmem:[#allocation0] sm:$0x1] %vm64, %v63
    %s66 = scalar_lea.vmem %s0, 12
    %v67 = vld [vmem:[%s66] sm:$0x1]
    %68 = vrot.lane.b32.xlu0 %v67, 72
    %v69 = vpop.permute.xlu0 %68
    %vm70 = vcmask 638528
    %71 = vst.msk [vmem:[#allocation0] sm:$0x1] %vm70, %v69
    %s72 = scalar_lea.vmem %s0, 11
    %v73 = vld [vmem:[%s72] sm:$0x1]
    %74 = vrot.lane.b32.xlu0 %v73, 66
    %v75 = vpop.permute.xlu0 %74
    %vm76 = vcmask 589328
    %77 = vst.msk [vmem:[#allocation0] sm:$0x1] %vm76, %v75
    %s78 = scalar_lea.vmem %s0, 10
    %v79 = vld [vmem:[%s78] sm:$0x1]
    %80 = vrot.lane.b32.xlu0 %v79, 60
    %v81 = vpop.permute.xlu0 %80
    %vm82 = vcmask 540128
    %83 = vst.msk [vmem:[#allocation0] sm:$0x1] %vm82, %v81
    %s84 = scalar_lea.vmem %s0, 9
    %v85 = vld [vmem:[%s84] sm:$0x1]
    %86 = vrot.lane.b32.xlu0 %v85, 54
    %v87 = vpop.permute.xlu0 %86
    %vm88 = vcmask 490928
    %89 = vst.msk [vmem:[#allocation0] sm:$0x1] %vm88, %v87
    %s90 = scalar_lea.vmem %s0, 8
    %v91 = vld [vmem:[%s90] sm:$0x1]
    %92 = vrot.lane.b32.xlu0 %v91, 48
    %v93 = vpop.permute.xlu0 %92
    %vm94 = vcmask 441728
    %95 = vst.msk [vmem:[#allocation0] sm:$0x1] %vm94, %v93
    %s96 = scalar_lea.vmem %s0, 7
    %v97 = vld [vmem:[%s96] sm:$0x1]
    %98 = vrot.lane.b32.xlu0 %v97, 42
    %v99 = vpop.permute.xlu0 %98
    %vm100 = vcmask 392528
    %101 = vst.msk [vmem:[#allocation0] sm:$0x1] %vm100, %v99
    %s102 = scalar_lea.vmem %s0, 6
    %v103 = vld [vmem:[%s102] sm:$0x1]
    %104 = vrot.lane.b32.xlu0 %v103, 36
    %v105 = vpop.permute.xlu0 %104
    %vm106 = vcmask 343328
    %107 = vst.msk [vmem:[#allocation0] sm:$0x1] %vm106, %v105
    %s108 = scalar_lea.vmem %s0, 27
    %v109 = vld [vmem:[%s108] sm:$0x1]
    %110 = vrot.lane.b32.xlu0 %v109, 34
    %v111 = vpop.permute.xlu0 %110
    %vm112 = vcmask 326928
    %s113 = scalar_lea.vmem [#allocation0], 8
    %114 = vst.msk [vmem:[%s113] sm:$0x1] %vm112, %v111
    %s115 = scalar_lea.vmem %s0, 5
    %v116 = vld [vmem:[%s115] sm:$0x1]
    %117 = vrot.lane.b32.xlu0 %v116, 30
    %v118 = vpop.permute.xlu0 %117
    %vm119 = vcmask 294128
    %120 = vst.msk [vmem:[#allocation0] sm:$0x1] %vm119, %v118
    %s121 = scalar_lea.vmem %s0, 26
    %v122 = vld [vmem:[%s121] sm:$0x1]
    %123 = vrot.lane.b32.xlu0 %v122, 28
    %v124 = vpop.permute.xlu0 %123
    %vm125 = vcmask 277728
    %s126 = scalar_lea.vmem [#allocation0], 8
    %127 = vst.msk [vmem:[%s126] sm:$0x1] %vm125, %v124
    %s128 = scalar_lea.vmem %s0, 4
    %v129 = vld [vmem:[%s128] sm:$0x1]
    %130 = vrot.lane.b32.xlu0 %v129, 24
    %v131 = vpop.permute.xlu0 %130
    %vm132 = vcmask 244928
    %133 = vst.msk [vmem:[#allocation0] sm:$0x1] %vm132, %v131
    %s134 = scalar_lea.vmem %s0, 25
    %v135 = vld [vmem:[%s134] sm:$0x1]
    %136 = vrot.lane.b32.xlu0 %v135, 22
    %v137 = vpop.permute.xlu0 %136
    %vm138 = vcmask 228528
    %s139 = scalar_lea.vmem [#allocation0], 8
    %140 = vst.msk [vmem:[%s139] sm:$0x1] %vm138, %v137
    %s141 = scalar_lea.vmem %s0, 3
    %v142 = vld [vmem:[%s141] sm:$0x1]
    %143 = vrot.lane.b32.xlu0 %v142, 18
    %v144 = vpop.permute.xlu0 %143
    %vm145 = vcmask 195728
    %146 = vst.msk [vmem:[#allocation0] sm:$0x1] %vm145, %v144
    %s147 = scalar_lea.vmem %s0, 24
    %v148 = vld [vmem:[%s147] sm:$0x1]
    %149 = vrot.lane.b32.xlu0 %v148, 16
    %v150 = vpop.permute.xlu0 %149
    %vm151 = vcmask 179328
    %s152 = scalar_lea.vmem [#allocation0], 8
    %153 = vst.msk [vmem:[%s152] sm:$0x1] %vm151, %v150
    %s154 = scalar_lea.vmem %s0, 2
    %v155 = vld [vmem:[%s154] sm:$0x1]
    %156 = vrot.lane.b32.xlu0 %v155, 12
    %v157 = vpop.permute.xlu0 %156
    %vm158 = vcmask 146528
    %159 = vst.msk [vmem:[#allocation0] sm:$0x1] %vm158, %v157
    %s160 = scalar_lea.vmem %s0, 23
    %v161 = vld [vmem:[%s160] sm:$0x1]
    %162 = vrot.lane.b32.xlu0 %v161, 10
    %v163 = vpop.permute.xlu0 %162
    %vm164 = vcmask 130128
    %s165 = scalar_lea.vmem [#allocation0], 8
    %166 = vst.msk [vmem:[%s165] sm:$0x1] %vm164, %v163
    %s167 = scalar_lea.vmem %s0, 1
    %v168 = vld [vmem:[%s167] sm:$0x1]
    %169 = vrot.lane.b32.xlu0 %v168, 6
    %v170 = vpop.permute.xlu0 %169
    %vm171 = vcmask 97328
    %172 = vst.msk [vmem:[#allocation0] sm:$0x1] %vm171, %v170
    %s173 = scalar_lea.vmem %s0, 22
    %v174 = vld [vmem:[%s173] sm:$0x1]
    %175 = vrot.lane.b32.xlu0 %v174, 4
    %v176 = vpop.permute.xlu0 %175
    %vm177 = vcmask 80928
    %s178 = scalar_lea.vmem [#allocation0], 8
    %179 = vst.msk [vmem:[%s178] sm:$0x1] %vm177, %v176
    %s181 = sshllo.u32 0, 1
    %v183 = vld [vmem:[#allocation0] sm:%s181]
    %s184 = sshllo.u32 0, 1
    %185 = vst [vmem:[%s1] sm:%s184] %v183
    %s186 = scalar_lea.vmem [#allocation0], 8
    %v187 = vld [vmem:[%s186] sm:%s181]
    %s188 = sshllo.u32 0, 1
    %s189 = scalar_lea.vmem %s1, 1
    %190 = vst [vmem:[%s189] sm:%s188] %v187

// kernel: tile.18
$region0: #{tile.18}
  #allocation0 [shape = 's32[1]{0}', space=sflag, size = 0x4, scoped, tag = 'scoped memory for tile.18']
  %s0 = inlined_call_operand.vmem [shape: f32[16], index: 0, kind: input, shape index: {}]
  %s1 = inlined_call_operand.vmem [shape: f32[10,16], index: 1, kind: output, shape index: {}]
  // Predicated region
  $region2: #{tile.18} parent=0 // pred_check
    _
  $region3: #{tile.18} parent=0 // pred_check_branch
    %3 = sbr.rel (0) target = $region5
  $region4: #{tile.18} parent=0 // pred_region
    _
  $region5: #{tile.18} parent=0 // pred_fallthru
    _
  %v4 = vld [vmem:[%s0] ss:$0 sm:$0xff]
  %5 = vst [vmem:[%s1] sm:$0xff] %v4
  %s6 = scalar_lea.vmem %s1, 8
  %7 = vst [vmem:[%s6] sm:$0xff] %v4

// kernel: tile.19
$region0: #{tile.19}
  %s0 = inlined_call_operand.vmem [shape: f32[10,16], index: 0, kind: input, shape index: {}]
  %s1 = inlined_call_operand.vmem [shape: f32[1,160], index: 1, kind: output, shape index: {}]
  $region1: #{tile.19} parent=0
    #allocation0 [shape = 'u8[8192]{0}', space=vmem, size = 0x2000, scoped, tag = 'scoped mem for output reshape']
    %s2 = smov 3
    %v3 = vld [vmem:[%s0] ss:$8 sm:%s2]
    %vm4 = vcmask 130048
    %5 = vst.msk [vmem:[#allocation0] ss:$8 sm:$0x3] %vm4, %v3
    %s6 = scalar_lea.vmem %s0, 7
    %v7 = vld [vmem:[%s6] sm:$0x1]
    %8 = vrot.lane.b32.xlu0 %v7, 112
    %v9 = vpop.permute.xlu0 %8
    %vm10 = vcmask 1048448
    %11 = vst.msk [vmem:[#allocation0] sm:$0x1] %vm10, %v9
    %s12 = scalar_lea.vmem %s0, 6
    %v13 = vld [vmem:[%s12] sm:$0x1]
    %14 = vrot.lane.b32.xlu0 %v13, 96
    %v15 = vpop.permute.xlu0 %14
    %vm16 = vcmask 917248
    %17 = vst.msk [vmem:[#allocation0] sm:$0x1] %vm16, %v15
    %s18 = scalar_lea.vmem %s0, 5
    %v19 = vld [vmem:[%s18] sm:$0x1]
    %20 = vrot.lane.b32.xlu0 %v19, 80
    %v21 = vpop.permute.xlu0 %20
    %vm22 = vcmask 786048
    %23 = vst.msk [vmem:[#allocation0] sm:$0x1] %vm22, %v21
    %s24 = scalar_lea.vmem %s0, 4
    %v25 = vld [vmem:[%s24] sm:$0x1]
    %26 = vrot.lane.b32.xlu0 %v25, 64
    %v27 = vpop.permute.xlu0 %26
    %vm28 = vcmask 654848
    %29 = vst.msk [vmem:[#allocation0] sm:$0x1] %vm28, %v27
    %s30 = scalar_lea.vmem %s0, 3
    %v31 = vld [vmem:[%s30] sm:$0x1]
    %32 = vrot.lane.b32.xlu0 %v31, 48
    %v33 = vpop.permute.xlu0 %32
    %vm34 = vcmask 523648
    %35 = vst.msk [vmem:[#allocation0] sm:$0x1] %vm34, %v33
    %s36 = scalar_lea.vmem %s0, 2
    %v37 = vld [vmem:[%s36] sm:$0x1]
    %38 = vrot.lane.b32.xlu0 %v37, 32
    %v39 = vpop.permute.xlu0 %38
    %vm40 = vcmask 392448
    %41 = vst.msk [vmem:[#allocation0] sm:$0x1] %vm40, %v39
    %s42 = scalar_lea.vmem %s0, 1
    %s43 = smov 3
    %v44 = vld [vmem:[%s42] ss:$8 sm:%s43]
    %45 = vrot.lane.b32.xlu0 %v44, 16
    %v46 = vpop.permute.xlu0 %45
    %vm47 = vcmask 261248
    %48 = vst.msk [vmem:[#allocation0] ss:$8 sm:$0x3] %vm47, %v46
    %s50 = sshllo.u32 0, 1
    %v52 = vld [vmem:[#allocation0] sm:%s50]
    %s53 = sshllo.u32 0, 1
    %54 = vst [vmem:[%s1] sm:%s53] %v52
    %s55 = scalar_lea.vmem [#allocation0], 8
    %v56 = vld [vmem:[%s55] sm:%s50]
    %s57 = sshllo.u32 0, 1
    %s58 = scalar_lea.vmem %s1, 1
    %59 = vst [vmem:[%s58] sm:%s57] %v56

// kernel: coolnet_forward.1
$region0: #{coolnet_forward.1}
  #allocation0 [shape = 'u32[]', space=smem, size = 0x4, offset = 0x4, fixed_abs, tag = 'smem constant byte address 0x4 - core index']
  #allocation1 [shape = 'u32[144,128]{1,0:T(1,128)}', space=vmem, size = 0x12000, scoped, tag = 'internal scratch']
  %s0 = inlined_call_operand.vmem [shape: f32[256,96], index: 0, kind: input, shape index: {}]
  %s1 = inlined_call_operand.vmem [shape: f32[5,96,168], index: 1, kind: input, shape index: {}]
  %s2 = inlined_call_operand.vmem [shape: f32[1,168], index: 2, kind: input, shape index: {}]
  %s3 = inlined_call_operand.vmem [shape: f32[5,168,160], index: 3, kind: input, shape index: {}]
  %s4 = inlined_call_operand.vmem [shape: f32[1,160], index: 4, kind: input, shape index: {}]
  %s5 = inlined_call_operand.vmem [shape: f32[5,160,120], index: 5, kind: input, shape index: {}]
  %s6 = inlined_call_operand.vmem [shape: f32[1,120], index: 6, kind: input, shape index: {}]
  %s7 = inlined_call_operand.vmem [shape: f32[120,84], index: 7, kind: input, shape index: {}]
  %s8 = inlined_call_operand.vmem [shape: f32[1,84], index: 8, kind: input, shape index: {}]
  %s9 = inlined_call_operand.vmem [shape: f32[84,10], index: 9, kind: input, shape index: {}]
  %s10 = inlined_call_operand.vmem [shape: f32[1,10], index: 10, kind: input, shape index: {}]
  %s11 = inlined_call_operand.vmem [shape: f32[256,10], index: 11, kind: output, shape index: {}]
  %s12 = sld [smem:[#allocation0]]
  $region54: #{coolnet_forward.1} parent=0
    _
  %s14 = ssub.s32 1, %s12
  %s15 = scalar_select 0, %s14, %s12
  // Predicated region
  $region2: #{coolnet_forward.1} parent=0 // pred_check
    _
  $region3: #{coolnet_forward.1} parent=0 // pred_check_branch
    %17 = sbr.rel (0) target = $region5
  $region4: #{coolnet_forward.1} parent=0 // pred_region
    _
  $region5: #{coolnet_forward.1} parent=0 // pred_fallthru
    _
  // Predicated region
  $region6: #{coolnet_forward.1} parent=0 // pred_check
    _
  $region7: #{coolnet_forward.1} parent=0 // pred_check_branch
    %19 = sbr.rel (0) target = $region9
  $region8: #{coolnet_forward.1} parent=0 // pred_region
    _
  $region9: #{coolnet_forward.1} parent=0 // pred_fallthru
    _
  // Predicated region
  $region10: #{coolnet_forward.1} parent=0 // pred_check
    _
  $region11: #{coolnet_forward.1} parent=0 // pred_check_branch
    %21 = sbr.rel (0) target = $region13
  $region12: #{coolnet_forward.1} parent=0 // pred_region
    _
  $region13: #{coolnet_forward.1} parent=0 // pred_fallthru
    _
  // Predicated region
  $region14: #{coolnet_forward.1} parent=0 // pred_check
    _
  $region15: #{coolnet_forward.1} parent=0 // pred_check_branch
    %23 = sbr.rel (0) target = $region17
  $region16: #{coolnet_forward.1} parent=0 // pred_region
    _
  $region17: #{coolnet_forward.1} parent=0 // pred_fallthru
    _
  // Predicated region
  $region18: #{coolnet_forward.1} parent=0 // pred_check
    _
  $region19: #{coolnet_forward.1} parent=0 // pred_check_branch
    %25 = sbr.rel (0) target = $region21
  $region20: #{coolnet_forward.1} parent=0 // pred_region
    _
  $region21: #{coolnet_forward.1} parent=0 // pred_fallthru
    _
  // Predicated region
  $region22: #{coolnet_forward.1} parent=0 // pred_check
    _
  $region23: #{coolnet_forward.1} parent=0 // pred_check_branch
    %27 = sbr.rel (0) target = $region25
  $region24: #{coolnet_forward.1} parent=0 // pred_region
    _
  $region25: #{coolnet_forward.1} parent=0 // pred_fallthru
    _
  // Predicated region
  $region26: #{coolnet_forward.1} parent=0 // pred_check
    _
  $region27: #{coolnet_forward.1} parent=0 // pred_check_branch
    %29 = sbr.rel (0) target = $region29
  $region28: #{coolnet_forward.1} parent=0 // pred_region
    _
  $region29: #{coolnet_forward.1} parent=0 // pred_fallthru
    _
  // Predicated region
  $region30: #{coolnet_forward.1} parent=0 // pred_check
    _
  $region31: #{coolnet_forward.1} parent=0 // pred_check_branch
    %31 = sbr.rel (0) target = $region33
  $region32: #{coolnet_forward.1} parent=0 // pred_region
    _
  $region33: #{coolnet_forward.1} parent=0 // pred_fallthru
    _
  // Predicated region
  $region34: #{coolnet_forward.1} parent=0 // pred_check
    _
  $region35: #{coolnet_forward.1} parent=0 // pred_check_branch
    %33 = sbr.rel (0) target = $region37
  $region36: #{coolnet_forward.1} parent=0 // pred_region
    _
  $region37: #{coolnet_forward.1} parent=0 // pred_fallthru
    _
  // Predicated region
  $region38: #{coolnet_forward.1} parent=0 // pred_check
    _
  $region39: #{coolnet_forward.1} parent=0 // pred_check_branch
    %35 = sbr.rel (0) target = $region41
  $region40: #{coolnet_forward.1} parent=0 // pred_region
    _
  $region41: #{coolnet_forward.1} parent=0 // pred_fallthru
    _
  // Predicated region
  $region42: #{coolnet_forward.1} parent=0 // pred_check
    _
  $region43: #{coolnet_forward.1} parent=0 // pred_check_branch
    %37 = sbr.rel (0) target = $region45
  $region44: #{coolnet_forward.1} parent=0 // pred_region
    _
  $region45: #{coolnet_forward.1} parent=0 // pred_fallthru
    _
  %v38 = vld [vmem:[%s0] sm:$0xff]
  %v39 = vld [vmem:[%s0 + $0x8] sm:$0xff]
  %v40 = vld [vmem:[%s0 + $0x10] sm:$0xff]
  %v41 = vld [vmem:[%s0 + $0x18] sm:$0xff]
  %v42 = vld [vmem:[%s0 + $0x20] sm:$0xff]
  %v43 = vld [vmem:[%s0 + $0x28] sm:$0xff]
  %v44 = vld [vmem:[%s0 + $0x30] sm:$0xff]
  %v45 = vld [vmem:[%s0 + $0x38] sm:$0xff]
  %v46 = vld [vmem:[%s0 + $0x40] sm:$0xff]
  %v47 = vld [vmem:[%s0 + $0x48] sm:$0xff]
  %v48 = vld [vmem:[%s0 + $0x50] sm:$0xff]
  %v49 = vld [vmem:[%s0 + $0x58] sm:$0xff]
  %v50 = vld [vmem:[%s0 + $0x60] sm:$0xff]
  %v51 = vld [vmem:[%s0 + $0x68] sm:$0xff]
  %v52 = vld [vmem:[%s0 + $0x70] sm:$0xff]
  %v53 = vld [vmem:[%s0 + $0x78] sm:$0xff]
  %v54 = vld [vmem:[%s0 + $0x80] sm:$0xff]
  %v55 = vld [vmem:[%s0 + $0x88] sm:$0xff]
  %v56 = vld [vmem:[%s0 + $0x90] sm:$0xff]
  %v57 = vld [vmem:[%s0 + $0x98] sm:$0xff]
  %v58 = vld [vmem:[%s0 + $0xa0] sm:$0xff]
  %v59 = vld [vmem:[%s0 + $0xa8] sm:$0xff]
  %v60 = vld [vmem:[%s0 + $0xb0] sm:$0xff]
  %v61 = vld [vmem:[%s0 + $0xb8] sm:$0xff]
  %v62 = vld [vmem:[%s0 + $0xc0] sm:$0xff]
  %v63 = vld [vmem:[%s0 + $0xc8] sm:$0xff]
  %v64 = vld [vmem:[%s0 + $0xd0] sm:$0xff]
  %v65 = vld [vmem:[%s0 + $0xd8] sm:$0xff]
  %v66 = vld [vmem:[%s0 + $0xe0] sm:$0xff]
  %v67 = vld [vmem:[%s0 + $0xe8] sm:$0xff]
  %v68 = vld [vmem:[%s0 + $0xf0] sm:$0xff]
  %v69 = vld [vmem:[%s0 + $0xf8] sm:$0xff]
  %v70 = vld [vmem:[%s1] sm:$0xff]
  %v71 = vld [vmem:[%s1 + $0x8] sm:$0xff]
  %v72 = vld [vmem:[%s1 + $0x10] sm:$0xff]
  %v73 = vld [vmem:[%s1 + $0x18] sm:$0xff]
  %v74 = vld [vmem:[%s1 + $0x20] sm:$0xff]
  %v75 = vld [vmem:[%s1 + $0x28] sm:$0xff]
  %v76 = vld [vmem:[%s1 + $0x30] sm:$0xff]
  %v77 = vld [vmem:[%s1 + $0x38] sm:$0xff]
  %v78 = vld [vmem:[%s1 + $0x40] sm:$0xff]
  %v79 = vld [vmem:[%s1 + $0x48] sm:$0xff]
  %v80 = vld [vmem:[%s1 + $0x50] sm:$0xff]
  %v81 = vld [vmem:[%s1 + $0x58] sm:$0xff]
  %v82 = vld [vmem:[%s1 + $0x60] sm:$0xff]
  %v83 = vld [vmem:[%s1 + $0x68] sm:$0xff]
  %v84 = vld [vmem:[%s1 + $0x70] sm:$0xff]
  %v85 = vld [vmem:[%s1 + $0x78] sm:$0xff]
  %v86 = vld [vmem:[%s1 + $0x80] sm:$0xff]
  %v87 = vld [vmem:[%s1 + $0x88] sm:$0xff]
  %v88 = vld [vmem:[%s1 + $0x90] sm:$0xff]
  %v89 = vld [vmem:[%s1 + $0x98] sm:$0xff]
  %v90 = vld [vmem:[%s1 + $0xa0] sm:$0xff]
  %v91 = vld [vmem:[%s1 + $0xa8] sm:$0xff]
  %v92 = vld [vmem:[%s1 + $0xb0] sm:$0xff]
  %v93 = vld [vmem:[%s1 + $0xb8] sm:$0xff]
  %vm126 = vcmask 1046528
  %v127 = vrot.slane %v38, 1
  %v128 = vrot.slane %v39, 1
  %v129 = vsel %vm126, %v127, %v128
  %v130 = vrot.slane %v40, 1
  %v131 = vsel %vm126, %v128, %v130
  %v132 = vrot.slane %v41, 1
  %v133 = vsel %vm126, %v130, %v132
  %v134 = vrot.slane %v42, 1
  %v135 = vsel %vm126, %v132, %v134
  %v136 = vrot.slane %v43, 1
  %v137 = vsel %vm126, %v134, %v136
  %v138 = vrot.slane %v44, 1
  %v139 = vsel %vm126, %v136, %v138
  %v140 = vrot.slane %v45, 1
  %v141 = vsel %vm126, %v138, %v140
  %v142 = vrot.slane %v46, 1
  %v143 = vsel %vm126, %v140, %v142
  %v144 = vrot.slane %v47, 1
  %v145 = vsel %vm126, %v142, %v144
  %v146 = vrot.slane %v48, 1
  %v147 = vsel %vm126, %v144, %v146
  %v148 = vrot.slane %v49, 1
  %v149 = vsel %vm126, %v146, %v148
  %v150 = vrot.slane %v50, 1
  %v151 = vsel %vm126, %v148, %v150
  %v152 = vrot.slane %v51, 1
  %v153 = vsel %vm126, %v150, %v152
  %v154 = vrot.slane %v52, 1
  %v155 = vsel %vm126, %v152, %v154
  %v156 = vrot.slane %v53, 1
  %v157 = vsel %vm126, %v154, %v156
  %v158 = vrot.slane %v54, 1
  %v159 = vsel %vm126, %v156, %v158
  %v160 = vrot.slane %v55, 1
  %v161 = vsel %vm126, %v158, %v160
  %v162 = vrot.slane %v56, 1
  %v163 = vsel %vm126, %v160, %v162
  %v164 = vrot.slane %v57, 1
  %v165 = vsel %vm126, %v162, %v164
  %v166 = vrot.slane %v58, 1
  %v167 = vsel %vm126, %v164, %v166
  %v168 = vrot.slane %v59, 1
  %v169 = vsel %vm126, %v166, %v168
  %v170 = vrot.slane %v60, 1
  %v171 = vsel %vm126, %v168, %v170
  %v172 = vrot.slane %v61, 1
  %v173 = vsel %vm126, %v170, %v172
  %v174 = vrot.slane %v62, 1
  %v175 = vsel %vm126, %v172, %v174
  %v176 = vrot.slane %v63, 1
  %v177 = vsel %vm126, %v174, %v176
  %v178 = vrot.slane %v64, 1
  %v179 = vsel %vm126, %v176, %v178
  %v180 = vrot.slane %v65, 1
  %v181 = vsel %vm126, %v178, %v180
  %v182 = vrot.slane %v66, 1
  %v183 = vsel %vm126, %v180, %v182
  %v184 = vrot.slane %v67, 1
  %v185 = vsel %vm126, %v182, %v184
  %v186 = vrot.slane %v68, 1
  %v187 = vsel %vm126, %v184, %v186
  %v188 = vrot.slane %v69, 1
  %v189 = vsel %vm126, %v186, %v188
  %v192 = vsel %vm126, %v188, %v127
  %s193 = scalar_lea.vmem %s1, 192
  %v194 = vld [vmem:[%s193] sm:$0xff]
  %v195 = vld [vmem:[%s193 + $0x8] sm:$0xff]
  %v196 = vld [vmem:[%s193 + $0x10] sm:$0xff]
  %v197 = vld [vmem:[%s193 + $0x18] sm:$0xff]
  %v198 = vld [vmem:[%s193 + $0x20] sm:$0xff]
  %v199 = vld [vmem:[%s193 + $0x28] sm:$0xff]
  %v200 = vld [vmem:[%s193 + $0x30] sm:$0xff]
  %v201 = vld [vmem:[%s193 + $0x38] sm:$0xff]
  %v202 = vld [vmem:[%s193 + $0x40] sm:$0xff]
  %v203 = vld [vmem:[%s193 + $0x48] sm:$0xff]
  %v204 = vld [vmem:[%s193 + $0x50] sm:$0xff]
  %v205 = vld [vmem:[%s193 + $0x58] sm:$0xff]
  %v206 = vld [vmem:[%s193 + $0x60] sm:$0xff]
  %v207 = vld [vmem:[%s193 + $0x68] sm:$0xff]
  %v208 = vld [vmem:[%s193 + $0x70] sm:$0xff]
  %v209 = vld [vmem:[%s193 + $0x78] sm:$0xff]
  %v210 = vld [vmem:[%s193 + $0x80] sm:$0xff]
  %v211 = vld [vmem:[%s193 + $0x88] sm:$0xff]
  %v212 = vld [vmem:[%s193 + $0x90] sm:$0xff]
  %v213 = vld [vmem:[%s193 + $0x98] sm:$0xff]
  %v214 = vld [vmem:[%s193 + $0xa0] sm:$0xff]
  %v215 = vld [vmem:[%s193 + $0xa8] sm:$0xff]
  %v216 = vld [vmem:[%s193 + $0xb0] sm:$0xff]
  %v217 = vld [vmem:[%s193 + $0xb8] sm:$0xff]
  %vm218 = vcmask 785408
  %v219 = vsel %vm218, %v129, 0
  %v221 = vsel %vm218, %v131, 0
  %v223 = vsel %vm218, %v133, 0
  %v225 = vsel %vm218, %v135, 0
  %v227 = vsel %vm218, %v137, 0
  %v229 = vsel %vm218, %v139, 0
  %v231 = vsel %vm218, %v141, 0
  %v233 = vsel %vm218, %v143, 0
  %v235 = vsel %vm218, %v145, 0
  %v237 = vsel %vm218, %v147, 0
  %v239 = vsel %vm218, %v149, 0
  %v241 = vsel %vm218, %v151, 0
  %v243 = vsel %vm218, %v153, 0
  %v245 = vsel %vm218, %v155, 0
  %v247 = vsel %vm218, %v157, 0
  %v249 = vsel %vm218, %v159, 0
  %v251 = vsel %vm218, %v161, 0
  %v253 = vsel %vm218, %v163, 0
  %v255 = vsel %vm218, %v165, 0
  %v257 = vsel %vm218, %v167, 0
  %v259 = vsel %vm218, %v169, 0
  %v261 = vsel %vm218, %v171, 0
  %v263 = vsel %vm218, %v173, 0
  %v265 = vsel %vm218, %v175, 0
  %v267 = vsel %vm218, %v177, 0
  %v269 = vsel %vm218, %v179, 0
  %v271 = vsel %vm218, %v181, 0
  %v273 = vsel %vm218, %v183, 0
  %v275 = vsel %vm218, %v185, 0
  %v277 = vsel %vm218, %v187, 0
  %v279 = vsel %vm218, %v189, 0
  %v282 = vsel %vm218, %v192, 0
  %284 = vmatprep.subr.mxu0 %v195
  %285 = vmatpush1.msra.mxu0 %v194
  %286 = vmatprep.subr.mxu0 %v197
  %287 = vmatpush1.msra.mxu0 %v196
  %288 = vmatprep.subr.mxu0 %v199
  %289 = vmatpush1.msra.mxu0 %v198
  %290 = vmatprep.subr.mxu0 %v201
  %291 = vmatpush1.msra.mxu0 %v200
  %292 = vmatprep.subr.mxu0 %v203
  %293 = vmatpush1.msra.mxu0 %v202
  %294 = vmatprep.subr.mxu0 %v205
  %295 = vmatpush1.msra.mxu0 %v204
  %296 = vmatprep.subr.mxu0 %v207
  %297 = vmatpush1.msra.mxu0 %v206
  %298 = vmatprep.subr.mxu0 %v209
  %299 = vmatpush1.msra.mxu0 %v208
  %300 = vmatprep.subr.mxu0 %v211
  %301 = vmatpush1.msra.mxu0 %v210
  %302 = vmatprep.subr.mxu0 %v213
  %303 = vmatpush1.msra.mxu0 %v212
  %304 = vmatprep.subr.mxu0 %v215
  %305 = vmatpush1.msra.mxu0 %v214
  %306 = vmatprep.subr.mxu0 %v217
  %307 = vmatpush1.msra.mxu0 %v216
  %308 = vmatprep.subr.mxu0 0.0
  %309 = vmatpush1.msra.mxu0 0.0
  %310 = vmatprep.subr.mxu0 0.0
  %311 = vmatpush1.msra.mxu0 0.0
  %312 = vmatprep.subr.mxu0 0.0
  %313 = vmatpush1.msra.mxu0 0.0
  %314 = vmatprep.subr.mxu0 0.0
  %315 = vmatpush1.msra.mxu0 0.0
  %316 = vmatprep.subr.mxu0 0.0
  %317 = vmatpush1.msra.mxu0 0.0
  %318 = vmatprep.subr.mxu0 0.0
  %319 = vmatpush1.msra.mxu0 0.0
  %320 = vmatprep.subr.mxu0 0.0
  %321 = vmatpush1.msra.mxu0 0.0
  %322 = vmatprep.subr.mxu0 0.0
  %323 = vmatpush1.msra.mxu0 0.0
  %324 = vmatprep.subr.mxu0 0.0
  %325 = vmatpush1.msra.mxu0 0.0
  %326 = vmatprep.subr.mxu0 0.0
  %327 = vmatpush1.msra.mxu0 0.0
  %328 = vmatprep.subr.mxu0 0.0
  %329 = vmatpush1.msra.mxu0 0.0
  %330 = vmatprep.subr.mxu0 0.0
  %331 = vmatpush1.msra.mxu0 0.0
  %332 = vmatprep.subr.mxu0 0.0
  %333 = vmatpush1.msra.mxu0 0.0
  %334 = vmatprep.subr.mxu0 0.0
  %335 = vmatpush1.msra.mxu0 0.0
  %336 = vmatprep.subr.mxu0 0.0
  %337 = vmatpush1.msra.mxu0 0.0
  %338 = vmatprep.subr.mxu0 0.0
  %339 = vmatpush1.msra.mxu0 0.0
  %340 = vmatprep.subr.mxu0 0.0
  %341 = vmatpush1.msra.mxu0 0.0
  %342 = vmatprep.subr.mxu0 0.0
  %343 = vmatpush1.msra.mxu0 0.0
  %344 = vmatprep.subr.mxu0 0.0
  %345 = vmatpush1.msra.mxu0 0.0
  %346 = vmatprep.subr.mxu0 0.0
  %347 = vmatpush1.msra.mxu0 0.0
  %348 = vmatprep.mubr.f32.mxu0 0.0
  %349 = vmatmul.mubr.f32.gmra.mrb[0].mxu0 %v219
  %v350 = vpop.f32.mrb[0].mxu0
  %v351 = vadd.f32 0.0, %v350
  %v352 = vpop.f32.mrb[0].mxu0
  %v353 = vadd.f32 0.0, %v352
  %354 = vmatprep.mubr.f32.mxu0 0.0
  %355 = vmatmul.mubr.f32.gmra.mrb[0].mxu0 %v221
  %v356 = vpop.f32.mrb[0].mxu0
  %v357 = vadd.f32 0.0, %v356
  %v358 = vpop.f32.mrb[0].mxu0
  %v359 = vadd.f32 0.0, %v358
  %360 = vmatprep.mubr.f32.mxu0 0.0
  %361 = vmatmul.mubr.f32.gmra.mrb[0].mxu0 %v223
  %v362 = vpop.f32.mrb[0].mxu0
  %v363 = vadd.f32 0.0, %v362
  %v364 = vpop.f32.mrb[0].mxu0
  %v365 = vadd.f32 0.0, %v364
  %366 = vmatprep.mubr.f32.mxu0 0.0
  %367 = vmatmul.mubr.f32.gmra.mrb[0].mxu0 %v225
  %v368 = vpop.f32.mrb[0].mxu0
  %v369 = vadd.f32 0.0, %v368
  %v370 = vpop.f32.mrb[0].mxu0
  %v371 = vadd.f32 0.0, %v370
  %372 = vmatprep.mubr.f32.mxu0 0.0
  %373 = vmatmul.mubr.f32.gmra.mrb[0].mxu0 %v227
  %v374 = vpop.f32.mrb[0].mxu0
  %v375 = vadd.f32 0.0, %v374
  %v376 = vpop.f32.mrb[0].mxu0
  %v377 = vadd.f32 0.0, %v376
  %378 = vmatprep.mubr.f32.mxu0 0.0
  %379 = vmatmul.mubr.f32.gmra.mrb[0].mxu0 %v229
  %v380 = vpop.f32.mrb[0].mxu0
  %v381 = vadd.f32 0.0, %v380
  %v382 = vpop.f32.mrb[0].mxu0
  %v383 = vadd.f32 0.0, %v382
  %384 = vmatprep.mubr.f32.mxu0 0.0
  %385 = vmatmul.mubr.f32.gmra.mrb[0].mxu0 %v231
  %v386 = vpop.f32.mrb[0].mxu0
  %v387 = vadd.f32 0.0, %v386
  %v388 = vpop.f32.mrb[0].mxu0
  %v389 = vadd.f32 0.0, %v388
  %390 = vmatprep.mubr.f32.mxu0 0.0
  %391 = vmatmul.mubr.f32.gmra.mrb[0].mxu0 %v233
  %v392 = vpop.f32.mrb[0].mxu0
  %v393 = vadd.f32 0.0, %v392
  %v394 = vpop.f32.mrb[0].mxu0
  %v395 = vadd.f32 0.0, %v394
  %396 = vmatprep.mubr.f32.mxu0 0.0
  %397 = vmatmul.mubr.f32.gmra.mrb[0].mxu0 %v235
  %v398 = vpop.f32.mrb[0].mxu0
  %v399 = vadd.f32 0.0, %v398
  %v400 = vpop.f32.mrb[0].mxu0
  %v401 = vadd.f32 0.0, %v400
  %402 = vmatprep.mubr.f32.mxu0 0.0
  %403 = vmatmul.mubr.f32.gmra.mrb[0].mxu0 %v237
  %v404 = vpop.f32.mrb[0].mxu0
  %v405 = vadd.f32 0.0, %v404
  %v406 = vpop.f32.mrb[0].mxu0
  %v407 = vadd.f32 0.0, %v406
  %408 = vmatprep.mubr.f32.mxu0 0.0
  %409 = vmatmul.mubr.f32.gmra.mrb[0].mxu0 %v239
  %v410 = vpop.f32.mrb[0].mxu0
  %v411 = vadd.f32 0.0, %v410
  %v412 = vpop.f32.mrb[0].mxu0
  %v413 = vadd.f32 0.0, %v412
  %414 = vmatprep.mubr.f32.mxu0 0.0
  %415 = vmatmul.mubr.f32.gmra.mrb[0].mxu0 %v241
  %v416 = vpop.f32.mrb[0].mxu0
  %v417 = vadd.f32 0.0, %v416
  %v418 = vpop.f32.mrb[0].mxu0
  %v419 = vadd.f32 0.0, %v418
  %420 = vmatprep.mubr.f32.mxu0 0.0
  %421 = vmatmul.mubr.f32.gmra.mrb[0].mxu0 %v243
  %v422 = vpop.f32.mrb[0].mxu0
  %v423 = vadd.f32 0.0, %v422
  %v424 = vpop.f32.mrb[0].mxu0
  %v425 = vadd.f32 0.0, %v424
  %426 = vmatprep.mubr.f32.mxu0 0.0
  %427 = vmatmul.mubr.f32.gmra.mrb[0].mxu0 %v245
  %v428 = vpop.f32.mrb[0].mxu0
  %v429 = vadd.f32 0.0, %v428
  %v430 = vpop.f32.mrb[0].mxu0
  %v431 = vadd.f32 0.0, %v430
  %432 = vmatprep.mubr.f32.mxu0 0.0
  %433 = vmatmul.mubr.f32.gmra.mrb[0].mxu0 %v247
  %v434 = vpop.f32.mrb[0].mxu0
  %v435 = vadd.f32 0.0, %v434
  %v436 = vpop.f32.mrb[0].mxu0
  %v437 = vadd.f32 0.0, %v436
  %438 = vmatprep.mubr.f32.mxu0 0.0
  %439 = vmatmul.mubr.f32.gmra.mrb[0].mxu0 %v249
  %v440 = vpop.f32.mrb[0].mxu0
  %v441 = vadd.f32 0.0, %v440
  %v442 = vpop.f32.mrb[0].mxu0
  %v443 = vadd.f32 0.0, %v442
  %444 = vmatprep.mubr.f32.mxu0 0.0
  %445 = vmatmul.mubr.f32.gmra.mrb[0].mxu0 %v251
  %v446 = vpop.f32.mrb[0].mxu0
  %v447 = vadd.f32 0.0, %v446
  %v448 = vpop.f32.mrb[0].mxu0
  %v449 = vadd.f32 0.0, %v448
  %450 = vmatprep.mubr.f32.mxu0 0.0
  %451 = vmatmul.mubr.f32.gmra.mrb[0].mxu0 %v253
  %v452 = vpop.f32.mrb[0].mxu0
  %v453 = vadd.f32 0.0, %v452
  %v454 = vpop.f32.mrb[0].mxu0
  %v455 = vadd.f32 0.0, %v454
  %456 = vmatprep.mubr.f32.mxu0 0.0
  %457 = vmatmul.mubr.f32.gmra.mrb[0].mxu0 %v255
  %v458 = vpop.f32.mrb[0].mxu0
  %v459 = vadd.f32 0.0, %v458
  %v460 = vpop.f32.mrb[0].mxu0
  %v461 = vadd.f32 0.0, %v460
  %462 = vmatprep.mubr.f32.mxu0 0.0
  %463 = vmatmul.mubr.f32.gmra.mrb[0].mxu0 %v257
  %v464 = vpop.f32.mrb[0].mxu0
  %v465 = vadd.f32 0.0, %v464
  %v466 = vpop.f32.mrb[0].mxu0
  %v467 = vadd.f32 0.0, %v466
  %468 = vmatprep.mubr.f32.mxu0 0.0
  %469 = vmatmul.mubr.f32.gmra.mrb[0].mxu0 %v259
  %v470 = vpop.f32.mrb[0].mxu0
  %v471 = vadd.f32 0.0, %v470
  %v472 = vpop.f32.mrb[0].mxu0
  %v473 = vadd.f32 0.0, %v472
  %474 = vmatprep.mubr.f32.mxu0 0.0
  %475 = vmatmul.mubr.f32.gmra.mrb[0].mxu0 %v261
  %v476 = vpop.f32.mrb[0].mxu0
  %v477 = vadd.f32 0.0, %v476
  %v478 = vpop.f32.mrb[0].mxu0
  %v479 = vadd.f32 0.0, %v478
  %480 = vmatprep.mubr.f32.mxu0 0.0
  %481 = vmatmul.mubr.f32.gmra.mrb[0].mxu0 %v263
  %v482 = vpop.f32.mrb[0].mxu0
  %v483 = vadd.f32 0.0, %v482
  %v484 = vpop.f32.mrb[0].mxu0
  %v485 = vadd.f32 0.0, %v484
  %486 = vmatprep.mubr.f32.mxu0 0.0
  %487 = vmatmul.mubr.f32.gmra.mrb[0].mxu0 %v265
  %v488 = vpop.f32.mrb[0].mxu0
  %v489 = vadd.f32 0.0, %v488
  %v490 = vpop.f32.mrb[0].mxu0
  %v491 = vadd.f32 0.0, %v490
  %492 = vmatprep.mubr.f32.mxu0 0.0
  %493 = vmatmul.mubr.f32.gmra.mrb[0].mxu0 %v267
  %v494 = vpop.f32.mrb[0].mxu0
  %v495 = vadd.f32 0.0, %v494
  %v496 = vpop.f32.mrb[0].mxu0
  %v497 = vadd.f32 0.0, %v496
  %498 = vmatprep.mubr.f32.mxu0 0.0
  %499 = vmatmul.mubr.f32.gmra.mrb[0].mxu0 %v269
  %v500 = vpop.f32.mrb[0].mxu0
  %v501 = vadd.f32 0.0, %v500
  %v502 = vpop.f32.mrb[0].mxu0
  %v503 = vadd.f32 0.0, %v502
  %504 = vmatprep.mubr.f32.mxu0 0.0
  %505 = vmatmul.mubr.f32.gmra.mrb[0].mxu0 %v271
  %v506 = vpop.f32.mrb[0].mxu0
  %v507 = vadd.f32 0.0, %v506
  %v508 = vpop.f32.mrb[0].mxu0
  %v509 = vadd.f32 0.0, %v508
  %510 = vmatprep.mubr.f32.mxu0 0.0
  %511 = vmatmul.mubr.f32.gmra.mrb[0].mxu0 %v273
  %v512 = vpop.f32.mrb[0].mxu0
  %v513 = vadd.f32 0.0, %v512
  %v514 = vpop.f32.mrb[0].mxu0
  %v515 = vadd.f32 0.0, %v514
  %516 = vmatprep.mubr.f32.mxu0 0.0
  %517 = vmatmul.mubr.f32.gmra.mrb[0].mxu0 %v275
  %v518 = vpop.f32.mrb[0].mxu0
  %v519 = vadd.f32 0.0, %v518
  %v520 = vpop.f32.mrb[0].mxu0
  %v521 = vadd.f32 0.0, %v520
  %522 = vmatprep.mubr.f32.mxu0 0.0
  %523 = vmatmul.mubr.f32.gmra.mrb[0].mxu0 %v277
  %v524 = vpop.f32.mrb[0].mxu0
  %v525 = vadd.f32 0.0, %v524
  %v526 = vpop.f32.mrb[0].mxu0
  %v527 = vadd.f32 0.0, %v526
  %528 = vmatprep.mubr.f32.mxu0 0.0
  %529 = vmatmul.mubr.f32.gmra.mrb[0].mxu0 %v279
  %v530 = vpop.f32.mrb[0].mxu0
  %v531 = vadd.f32 0.0, %v530
  %v532 = vpop.f32.mrb[0].mxu0
  %v533 = vadd.f32 0.0, %v532
  %534 = vmatprep.mubr.f32.mxu0 0.0
  %535 = vmatmul.mubr.f32.gmra.mrb[0].mxu0 %v282
  %v536 = vpop.f32.mrb[0].mxu0
  %v537 = vadd.f32 0.0, %v536
  %v538 = vpop.f32.mrb[0].mxu0
  %v539 = vadd.f32 0.0, %v538
  %540 = vdwg.mxu0
  %v541 = vsel %vm218, %v38, 0
  %v543 = vsel %vm218, %v39, 0
  %v545 = vsel %vm218, %v40, 0
  %v547 = vsel %vm218, %v41, 0
  %v549 = vsel %vm218, %v42, 0
  %v551 = vsel %vm218, %v43, 0
  %v553 = vsel %vm218, %v44, 0
  %v555 = vsel %vm218, %v45, 0
  %v557 = vsel %vm218, %v46, 0
  %v559 = vsel %vm218, %v47, 0
  %v561 = vsel %vm218, %v48, 0
  %v563 = vsel %vm218, %v49, 0
  %v565 = vsel %vm218, %v50, 0
  %v567 = vsel %vm218, %v51, 0
  %v569 = vsel %vm218, %v52, 0
  %v571 = vsel %vm218, %v53, 0
  %v573 = vsel %vm218, %v54, 0
  %v575 = vsel %vm218, %v55, 0
  %v577 = vsel %vm218, %v56, 0
  %v579 = vsel %vm218, %v57, 0
  %v581 = vsel %vm218, %v58, 0
  %v583 = vsel %vm218, %v59, 0
  %v585 = vsel %vm218, %v60, 0
  %v587 = vsel %vm218, %v61, 0
  %v589 = vsel %vm218, %v62, 0
  %v591 = vsel %vm218, %v63, 0
  %v593 = vsel %vm218, %v64, 0
  %v595 = vsel %vm218, %v65, 0
  %v597 = vsel %vm218, %v66, 0
  %v599 = vsel %vm218, %v67, 0
  %v601 = vsel %vm218, %v68, 0
  %v603 = vsel %vm218, %v69, 0
  %605 = vmatprep.subr.mxu0 %v71
  %606 = vmatpush1.msra.mxu0 %v70
  %607 = vmatprep.subr.mxu0 %v73
  %608 = vmatpush1.msra.mxu0 %v72
  %609 = vmatprep.subr.mxu0 %v75
  %610 = vmatpush1.msra.mxu0 %v74
  %611 = vmatprep.subr.mxu0 %v77
  %612 = vmatpush1.msra.mxu0 %v76
  %613 = vmatprep.subr.mxu0 %v79
  %614 = vmatpush1.msra.mxu0 %v78
  %615 = vmatprep.subr.mxu0 %v81
  %616 = vmatpush1.msra.mxu0 %v80
  %617 = vmatprep.subr.mxu0 %v83
  %618 = vmatpush1.msra.mxu0 %v82
  %619 = vmatprep.subr.mxu0 %v85
  %620 = vmatpush1.msra.mxu0 %v84
  %621 = vmatprep.subr.mxu0 %v87
  %622 = vmatpush1.msra.mxu0 %v86
  %623 = vmatprep.subr.mxu0 %v89
  %624 = vmatpush1.msra.mxu0 %v88
  %625 = vmatprep.subr.mxu0 %v91
  %626 = vmatpush1.msra.mxu0 %v90
  %627 = vmatprep.subr.mxu0 %v93
  %628 = vmatpush1.msra.mxu0 %v92
  %629 = vmatprep.subr.mxu0 0.0
  %630 = vmatpush1.msra.mxu0 0.0
  %631 = vmatprep.subr.mxu0 0.0
  %632 = vmatpush1.msra.mxu0 0.0
  %633 = vmatprep.subr.mxu0 0.0
  %634 = vmatpush1.msra.mxu0 0.0
  %635 = vmatprep.subr.mxu0 0.0
  %636 = vmatpush1.msra.mxu0 0.0
  %637 = vmatprep.subr.mxu0 0.0
  %638 = vmatpush1.msra.mxu0 0.0
  %639 = vmatprep.subr.mxu0 0.0
  %640 = vmatpush1.msra.mxu0 0.0
  %641 = vmatprep.subr.mxu0 0.0
  %642 = vmatpush1.msra.mxu0 0.0
  %643 = vmatprep.subr.mxu0 0.0
  %644 = vmatpush1.msra.mxu0 0.0
  %645 = vmatprep.subr.mxu0 0.0
  %646 = vmatpush1.msra.mxu0 0.0
  %647 = vmatprep.subr.mxu0 0.0
  %648 = vmatpush1.msra.mxu0 0.0
  %649 = vmatprep.subr.mxu0 0.0
  %650 = vmatpush1.msra.mxu0 0.0
  %651 = vmatprep.subr.mxu0 0.0
  %652 = vmatpush1.msra.mxu0 0.0
  %653 = vmatprep.subr.mxu0 0.0
  %654 = vmatpush1.msra.mxu0 0.0
  %655 = vmatprep.subr.mxu0 0.0
  %656 = vmatpush1.msra.mxu0 0.0
  %657 = vmatprep.subr.mxu0 0.0
  %658 = vmatpush1.msra.mxu0 0.0
  %659 = vmatprep.subr.mxu0 0.0
  %660 = vmatpush1.msra.mxu0 0.0
  %661 = vmatprep.subr.mxu0 0.0
  %662 = vmatpush1.msra.mxu0 0.0
  %663 = vmatprep.subr.mxu0 0.0
  %664 = vmatpush1.msra.mxu0 0.0
  %665 = vmatprep.subr.mxu0 0.0
  %666 = vmatpush1.msra.mxu0 0.0
  %667 = vmatprep.subr.mxu0 0.0
  %668 = vmatpush1.msra.mxu0 0.0
  %669 = vmatprep.mubr.f32.mxu0 0.0
  %670 = vmatmul.mubr.f32.gmra.mrb[0].mxu0 %v541
  %v671 = vpop.f32.mrb[0].mxu0
  %v672 = vadd.f32 %v351, %v671
  %v673 = vpop.f32.mrb[0].mxu0
  %v674 = vadd.f32 %v353, %v673
  %675 = vmatprep.mubr.f32.mxu0 0.0
  %676 = vmatmul.mubr.f32.gmra.mrb[0].mxu0 %v543
  %v677 = vpop.f32.mrb[0].mxu0
  %v678 = vadd.f32 %v357, %v677
  %v679 = vpop.f32.mrb[0].mxu0
  %v680 = vadd.f32 %v359, %v679
  %681 = vmatprep.mubr.f32.mxu0 0.0
  %682 = vmatmul.mubr.f32.gmra.mrb[0].mxu0 %v545
  %v683 = vpop.f32.mrb[0].mxu0
  %v684 = vadd.f32 %v363, %v683
  %v685 = vpop.f32.mrb[0].mxu0
  %v686 = vadd.f32 %v365, %v685
  %687 = vmatprep.mubr.f32.mxu0 0.0
  %688 = vmatmul.mubr.f32.gmra.mrb[0].mxu0 %v547
  %v689 = vpop.f32.mrb[0].mxu0
  %v690 = vadd.f32 %v369, %v689
  %v691 = vpop.f32.mrb[0].mxu0
  %v692 = vadd.f32 %v371, %v691
  %693 = vmatprep.mubr.f32.mxu0 0.0
  %694 = vmatmul.mubr.f32.gmra.mrb[0].mxu0 %v549
  %v695 = vpop.f32.mrb[0].mxu0
  %v696 = vadd.f32 %v375, %v695
  %v697 = vpop.f32.mrb[0].mxu0
  %v698 = vadd.f32 %v377, %v697
  %699 = vmatprep.mubr.f32.mxu0 0.0
  %700 = vmatmul.mubr.f32.gmra.mrb[0].mxu0 %v551
  %v701 = vpop.f32.mrb[0].mxu0
  %v702 = vadd.f32 %v381, %v701
  %v703 = vpop.f32.mrb[0].mxu0
  %v704 = vadd.f32 %v383, %v703
  %705 = vmatprep.mubr.f32.mxu0 0.0
  %706 = vmatmul.mubr.f32.gmra.mrb[0].mxu0 %v553
  %v707 = vpop.f32.mrb[0].mxu0
  %v708 = vadd.f32 %v387, %v707
  %v709 = vpop.f32.mrb[0].mxu0
  %v710 = vadd.f32 %v389, %v709
  %711 = vmatprep.mubr.f32.mxu0 0.0
  %712 = vmatmul.mubr.f32.gmra.mrb[0].mxu0 %v555
  %v713 = vpop.f32.mrb[0].mxu0
  %v714 = vadd.f32 %v393, %v713
  %v715 = vpop.f32.mrb[0].mxu0
  %v716 = vadd.f32 %v395, %v715
  %717 = vmatprep.mubr.f32.mxu0 0.0
  %718 = vmatmul.mubr.f32.gmra.mrb[0].mxu0 %v557
  %v719 = vpop.f32.mrb[0].mxu0
  %v720 = vadd.f32 %v399, %v719
  %v721 = vpop.f32.mrb[0].mxu0
  %v722 = vadd.f32 %v401, %v721
  %723 = vmatprep.mubr.f32.mxu0 0.0
  %724 = vmatmul.mubr.f32.gmra.mrb[0].mxu0 %v559
  %v725 = vpop.f32.mrb[0].mxu0
  %v726 = vadd.f32 %v405, %v725
  %v727 = vpop.f32.mrb[0].mxu0
  %v728 = vadd.f32 %v407, %v727
  %729 = vmatprep.mubr.f32.mxu0 0.0
  %730 = vmatmul.mubr.f32.gmra.mrb[0].mxu0 %v561
  %v731 = vpop.f32.mrb[0].mxu0
  %v732 = vadd.f32 %v411, %v731
  %v733 = vpop.f32.mrb[0].mxu0
  %v734 = vadd.f32 %v413, %v733
  %735 = vmatprep.mubr.f32.mxu0 0.0
  %736 = vmatmul.mubr.f32.gmra.mrb[0].mxu0 %v563
  %v737 = vpop.f32.mrb[0].mxu0
  %v738 = vadd.f32 %v417, %v737
  %v739 = vpop.f32.mrb[0].mxu0
  %v740 = vadd.f32 %v419, %v739
  %741 = vmatprep.mubr.f32.mxu0 0.0
  %742 = vmatmul.mubr.f32.gmra.mrb[0].mxu0 %v565
  %v743 = vpop.f32.mrb[0].mxu0
  %v744 = vadd.f32 %v423, %v743
  %v745 = vpop.f32.mrb[0].mxu0
  %v746 = vadd.f32 %v425, %v745
  %747 = vmatprep.mubr.f32.mxu0 0.0
  %748 = vmatmul.mubr.f32.gmra.mrb[0].mxu0 %v567
  %v749 = vpop.f32.mrb[0].mxu0
  %v750 = vadd.f32 %v429, %v749
  %v751 = vpop.f32.mrb[0].mxu0
  %v752 = vadd.f32 %v431, %v751
  %753 = vmatprep.mubr.f32.mxu0 0.0
  %754 = vmatmul.mubr.f32.gmra.mrb[0].mxu0 %v569
  %v755 = vpop.f32.mrb[0].mxu0
  %v756 = vadd.f32 %v435, %v755
  %v757 = vpop.f32.mrb[0].mxu0
  %v758 = vadd.f32 %v437, %v757
  %759 = vmatprep.mubr.f32.mxu0 0.0
  %760 = vmatmul.mubr.f32.gmra.mrb[0].mxu0 %v571
  %v761 = vpop.f32.mrb[0].mxu0
  %v762 = vadd.f32 %v441, %v761
  %v763 = vpop.f32.mrb[0].mxu0
  %v764 = vadd.f32 %v443, %v763
  %765 = vmatprep.mubr.f32.mxu0 0.0
  %766 = vmatmul.mubr.f32.gmra.mrb[0].mxu0 %v573
  %v767 = vpop.f32.mrb[0].mxu0
  %v768 = vadd.f32 %v447, %v767
  %v769 = vpop.f32.mrb[0].mxu0
  %v770 = vadd.f32 %v449, %v769
  %771 = vmatprep.mubr.f32.mxu0 0.0
  %772 = vmatmul.mubr.f32.gmra.mrb[0].mxu0 %v575
  %v773 = vpop.f32.mrb[0].mxu0
  %v774 = vadd.f32 %v453, %v773
  %v775 = vpop.f32.mrb[0].mxu0
  %v776 = vadd.f32 %v455, %v775
  %777 = vmatprep.mubr.f32.mxu0 0.0
  %778 = vmatmul.mubr.f32.gmra.mrb[0].mxu0 %v577
  %v779 = vpop.f32.mrb[0].mxu0
  %v780 = vadd.f32 %v459, %v779
  %v781 = vpop.f32.mrb[0].mxu0
  %v782 = vadd.f32 %v461, %v781
  %783 = vmatprep.mubr.f32.mxu0 0.0
  %784 = vmatmul.mubr.f32.gmra.mrb[0].mxu0 %v579
  %v785 = vpop.f32.mrb[0].mxu0
  %v786 = vadd.f32 %v465, %v785
  %v787 = vpop.f32.mrb[0].mxu0
  %v788 = vadd.f32 %v467, %v787
  %789 = vmatprep.mubr.f32.mxu0 0.0
  %790 = vmatmul.mubr.f32.gmra.mrb[0].mxu0 %v581
  %v791 = vpop.f32.mrb[0].mxu0
  %v792 = vadd.f32 %v471, %v791
  %v793 = vpop.f32.mrb[0].mxu0
  %v794 = vadd.f32 %v473, %v793
  %795 = vmatprep.mubr.f32.mxu0 0.0
  %796 = vmatmul.mubr.f32.gmra.mrb[0].mxu0 %v583
  %v797 = vpop.f32.mrb[0].mxu0
  %v798 = vadd.f32 %v477, %v797
  %v799 = vpop.f32.mrb[0].mxu0
  %v800 = vadd.f32 %v479, %v799
  %801 = vmatprep.mubr.f32.mxu0 0.0
  %802 = vmatmul.mubr.f32.gmra.mrb[0].mxu0 %v585
  %v803 = vpop.f32.mrb[0].mxu0
  %v804 = vadd.f32 %v483, %v803
  %v805 = vpop.f32.mrb[0].mxu0
  %v806 = vadd.f32 %v485, %v805
  %807 = vmatprep.mubr.f32.mxu0 0.0
  %808 = vmatmul.mubr.f32.gmra.mrb[0].mxu0 %v587
  %v809 = vpop.f32.mrb[0].mxu0
  %v810 = vadd.f32 %v489, %v809
  %v811 = vpop.f32.mrb[0].mxu0
  %v812 = vadd.f32 %v491, %v811
  %813 = vmatprep.mubr.f32.mxu0 0.0
  %814 = vmatmul.mubr.f32.gmra.mrb[0].mxu0 %v589
  %v815 = vpop.f32.mrb[0].mxu0
  %v816 = vadd.f32 %v495, %v815
  %v817 = vpop.f32.mrb[0].mxu0
  %v818 = vadd.f32 %v497, %v817
  %819 = vmatprep.mubr.f32.mxu0 0.0
  %820 = vmatmul.mubr.f32.gmra.mrb[0].mxu0 %v591
  %v821 = vpop.f32.mrb[0].mxu0
  %v822 = vadd.f32 %v501, %v821
  %v823 = vpop.f32.mrb[0].mxu0
  %v824 = vadd.f32 %v503, %v823
  %825 = vmatprep.mubr.f32.mxu0 0.0
  %826 = vmatmul.mubr.f32.gmra.mrb[0].mxu0 %v593
  %v827 = vpop.f32.mrb[0].mxu0
  %v828 = vadd.f32 %v507, %v827
  %v829 = vpop.f32.mrb[0].mxu0
  %v830 = vadd.f32 %v509, %v829
  %831 = vmatprep.mubr.f32.mxu0 0.0
  %832 = vmatmul.mubr.f32.gmra.mrb[0].mxu0 %v595
  %v833 = vpop.f32.mrb[0].mxu0
  %v834 = vadd.f32 %v513, %v833
  %v835 = vpop.f32.mrb[0].mxu0
  %v836 = vadd.f32 %v515, %v835
  %837 = vmatprep.mubr.f32.mxu0 0.0
  %838 = vmatmul.mubr.f32.gmra.mrb[0].mxu0 %v597
  %v839 = vpop.f32.mrb[0].mxu0
  %v840 = vadd.f32 %v519, %v839
  %v841 = vpop.f32.mrb[0].mxu0
  %v842 = vadd.f32 %v521, %v841
  %843 = vmatprep.mubr.f32.mxu0 0.0
  %844 = vmatmul.mubr.f32.gmra.mrb[0].mxu0 %v599
  %v845 = vpop.f32.mrb[0].mxu0
  %v846 = vadd.f32 %v525, %v845
  %v847 = vpop.f32.mrb[0].mxu0
  %v848 = vadd.f32 %v527, %v847
  %849 = vmatprep.mubr.f32.mxu0 0.0
  %850 = vmatmul.mubr.f32.gmra.mrb[0].mxu0 %v601
  %v851 = vpop.f32.mrb[0].mxu0
  %v852 = vadd.f32 %v531, %v851
  %v853 = vpop.f32.mrb[0].mxu0
  %v854 = vadd.f32 %v533, %v853
  %855 = vmatprep.mubr.f32.mxu0 0.0
  %856 = vmatmul.mubr.f32.gmra.mrb[0].mxu0 %v603
  %v857 = vpop.f32.mrb[0].mxu0
  %v858 = vadd.f32 %v537, %v857
  %v859 = vpop.f32.mrb[0].mxu0
  %v860 = vadd.f32 %v539, %v859
  %861 = vdwg.mxu0
  %vm862 = vcmask 1045504
  %v863 = vrot.slane %v38, 2
  %v864 = vrot.slane %v39, 2
  %v865 = vsel %vm862, %v863, %v864
  %v866 = vrot.slane %v40, 2
  %v867 = vsel %vm862, %v864, %v866
  %v868 = vrot.slane %v41, 2
  %v869 = vsel %vm862, %v866, %v868
  %v870 = vrot.slane %v42, 2
  %v871 = vsel %vm862, %v868, %v870
  %v872 = vrot.slane %v43, 2
  %v873 = vsel %vm862, %v870, %v872
  %v874 = vrot.slane %v44, 2
  %v875 = vsel %vm862, %v872, %v874
  %v876 = vrot.slane %v45, 2
  %v877 = vsel %vm862, %v874, %v876
  %v878 = vrot.slane %v46, 2
  %v879 = vsel %vm862, %v876, %v878
  %v880 = vrot.slane %v47, 2
  %v881 = vsel %vm862, %v878, %v880
  %v882 = vrot.slane %v48, 2
  %v883 = vsel %vm862, %v880, %v882
  %v884 = vrot.slane %v49, 2
  %v885 = vsel %vm862, %v882, %v884
  %v886 = vrot.slane %v50, 2
  %v887 = vsel %vm862, %v884, %v886
  %v888 = vrot.slane %v51, 2
  %v889 = vsel %vm862, %v886, %v888
  %v890 = vrot.slane %v52, 2
  %v891 = vsel %vm862, %v888, %v890
  %v892 = vrot.slane %v53, 2
  %v893 = vsel %vm862, %v890, %v892
  %v894 = vrot.slane %v54, 2
  %v895 = vsel %vm862, %v892, %v894
  %v896 = vrot.slane %v55, 2
  %v897 = vsel %vm862, %v894, %v896
  %v898 = vrot.slane %v56, 2
  %v899 = vsel %vm862, %v896, %v898
  %v900 = vrot.slane %v57, 2
  %v901 = vsel %vm862, %v898, %v900
  %v902 = vrot.slane %v58, 2
  %v903 = vsel %vm862, %v900, %v902
  %v904 = vrot.slane %v59, 2
  %v905 = vsel %vm862, %v902, %v904
  %v906 = vrot.slane %v60, 2
  %v907 = vsel %vm862, %v904, %v906
  %v908 = vrot.slane %v61, 2
  %v909 = vsel %vm862, %v906, %v908
  %v910 = vrot.slane %v62, 2
  %v911 = vsel %vm862, %v908, %v910
  %v912 = vrot.slane %v63, 2
  %v913 = vsel %vm862, %v910, %v912
  %v914 = vrot.slane %v64, 2
  %v915 = vsel %vm862, %v912, %v914
  %v916 = vrot.slane %v65, 2
  %v917 = vsel %vm862, %v914, %v916
  %v918 = vrot.slane %v66, 2
  %v919 = vsel %vm862, %v916, %v918
  %v920 = vrot.slane %v67, 2
  %v921 = vsel %vm862, %v918, %v920
  %v922 = vrot.slane %v68, 2
  %v923 = vsel %vm862, %v920, %v922
  %v924 = vrot.slane %v69, 2
  %v925 = vsel %vm862, %v922, %v924
  %v928 = vsel %vm862, %v924, %v863
  %s929 = scalar_lea.vmem %s1, 384
  %v930 = vld [vmem:[%s929] sm:$0xff]
  %v931 = vld [vmem:[%s929 + $0x8] sm:$0xff]
  %v932 = vld [vmem:[%s929 + $0x10] sm:$0xff]
  %v933 = vld [vmem:[%s929 + $0x18] sm:$0xff]
  %v934 = vld [vmem:[%s929 + $0x20] sm:$0xff]
  %v935 = vld [vmem:[%s929 + $0x28] sm:$0xff]
  %v936 = vld [vmem:[%s929 + $0x30] sm:$0xff]
  %v937 = vld [vmem:[%s929 + $0x38] sm:$0xff]
  %v938 = vld [vmem:[%s929 + $0x40] sm:$0xff]
  %v939 = vld [vmem:[%s929 + $0x48] sm:$0xff]
  %v940 = vld [vmem:[%s929 + $0x50] sm:$0xff]
  %v941 = vld [vmem:[%s929 + $0x58] sm:$0xff]
  %v942 = vld [vmem:[%s929 + $0x60] sm:$0xff]
  %v943 = vld [vmem:[%s929 + $0x68] sm:$0xff]
  %v944 = vld [vmem:[%s929 + $0x70] sm:$0xff]
  %v945 = vld [vmem:[%s929 + $0x78] sm:$0xff]
  %v946 = vld [vmem:[%s929 + $0x80] sm:$0xff]
  %v947 = vld [vmem:[%s929 + $0x88] sm:$0xff]
  %v948 = vld [vmem:[%s929 + $0x90] sm:$0xff]
  %v949 = vld [vmem:[%s929 + $0x98] sm:$0xff]
  %v950 = vld [vmem:[%s929 + $0xa0] sm:$0xff]
  %v951 = vld [vmem:[%s929 + $0xa8] sm:$0xff]
  %v952 = vld [vmem:[%s929 + $0xb0] sm:$0xff]
  %v953 = vld [vmem:[%s929 + $0xb8] sm:$0xff]
  %v954 = vsel %vm218, %v865, 0
  %v956 = vsel %vm218, %v867, 0
  %v958 = vsel %vm218, %v869, 0
  %v960 = vsel %vm218, %v871, 0
  %v962 = vsel %vm218, %v873, 0
  %v964 = vsel %vm218, %v875, 0
  %v966 = vsel %vm218, %v877, 0
  %v968 = vsel %vm218, %v879, 0
  %v970 = vsel %vm218, %v881, 0
  %v972 = vsel %vm218, %v883, 0
  %v974 = vsel %vm218, %v885, 0
  %v976 = vsel %vm218, %v887, 0
  %v978 = vsel %vm218, %v889, 0
  %v980 = vsel %vm218, %v891, 0
  %v982 = vsel %vm218, %v893, 0
  %v984 = vsel %vm218, %v895, 0
  %v986 = vsel %vm218, %v897, 0
  %v988 = vsel %vm218, %v899, 0
  %v990 = vsel %vm218, %v901, 0
  %v992 = vsel %vm218, %v903, 0
  %v994 = vsel %vm218, %v905, 0
  %v996 = vsel %vm218, %v907, 0
  %v998 = vsel %vm218, %v909, 0
  %v1000 = vsel %vm218, %v911, 0
  %v1002 = vsel %vm218, %v913, 0
  %v1004 = vsel %vm218, %v915, 0
  %v1006 = vsel %vm218, %v917, 0
  %v1008 = vsel %vm218, %v919, 0
  %v1010 = vsel %vm218, %v921, 0
  %v1012 = vsel %vm218, %v923, 0
  %v1014 = vsel %vm218, %v925, 0
  %v1017 = vsel %vm218, %v928, 0
  %1019 = vmatprep.subr.mxu0 %v931
  %1020 = vmatpush1.msra.mxu0 %v930
  %1021 = vmatprep.subr.mxu0 %v933
  %1022 = vmatpush1.msra.mxu0 %v932
  %1023 = vmatprep.subr.mxu0 %v935
  %1024 = vmatpush1.msra.mxu0 %v934
  %1025 = vmatprep.subr.mxu0 %v937
  %1026 = vmatpush1.msra.mxu0 %v936
  %1027 = vmatprep.subr.mxu0 %v939
  %1028 = vmatpush1.msra.mxu0 %v938
  %1029 = vmatprep.subr.mxu0 %v941
  %1030 = vmatpush1.msra.mxu0 %v940
  %1031 = vmatprep.subr.mxu0 %v943
  %1032 = vmatpush1.msra.mxu0 %v942
  %1033 = vmatprep.subr.mxu0 %v945
  %1034 = vmatpush1.msra.mxu0 %v944
  %1035 = vmatprep.subr.mxu0 %v947
  %1036 = vmatpush1.msra.mxu0 %v946
  %1037 = vmatprep.subr.mxu0 %v949
  %1038 = vmatpush1.msra.mxu0 %v948
  %1039 = vmatprep.subr.mxu0 %v951
  %1040 = vmatpush1.msra.mxu0 %v950
  %1041 = vmatprep.subr.mxu0 %v953
  %1042 = vmatpush1.msra.mxu0 %v952
  %1043 = vmatprep.subr.mxu0 0.0
  %1044 = vmatpush1.msra.mxu0 0.0
  %1045 = vmatprep.subr.mxu0 0.0
  %1046 = vmatpush1.msra.mxu0 0.0
  %1047 = vmatprep.subr.mxu0 0.0
  %1048 = vmatpush1.msra.mxu0 0.0
  %1049 = vmatprep.subr.mxu0 0.0
  %1050 = vmatpush1.msra.mxu0 0.0
  %1051 = vmatprep.subr.mxu0 0.0
  %1052 = vmatpush1.msra.mxu0 0.0
  %1053 = vmatprep.subr.mxu0 0.0
  %1054 = vmatpush1.msra.mxu0 0.0
  %1055 = vmatprep.subr.mxu0 0.0
  %1056 = vmatpush1.msra.mxu0 0.0
  %1057 = vmatprep.subr.mxu0 0.0
  %1058 = vmatpush1.msra.mxu0 0.0
  %1059 = vmatprep.subr.mxu0 0.0
  %1060 = vmatpush1.msra.mxu0 0.0
  %1061 = vmatprep.subr.mxu0 0.0
  %1062 = vmatpush1.msra.mxu0 0.0
  %1063 = vmatprep.subr.mxu0 0.0
  %1064 = vmatpush1.msra.mxu0 0.0
  %1065 = vmatprep.subr.mxu0 0.0
  %1066 = vmatpush1.msra.mxu0 0.0
  %1067 = vmatprep.subr.mxu0 0.0
  %1068 = vmatpush1.msra.mxu0 0.0
  %1069 = vmatprep.subr.mxu0 0.0
  %1070 = vmatpush1.msra.mxu0 0.0
  %1071 = vmatprep.subr.mxu0 0.0
  %1072 = vmatpush1.msra.mxu0 0.0
  %1073 = vmatprep.subr.mxu0 0.0
  %1074 = vmatpush1.msra.mxu0 0.0
  %1075 = vmatprep.subr.mxu0 0.0
  %1076 = vmatpush1.msra.mxu0 0.0
  %1077 = vmatprep.subr.mxu0 0.0
  %1078 = vmatpush1.msra.mxu0 0.0
  %1079 = vmatprep.subr.mxu0 0.0
  %1080 = vmatpush1.msra.mxu0 0.0
  %1081 = vmatprep.subr.mxu0 0.0
  %1082 = vmatpush1.msra.mxu0 0.0
  %1083 = vmatprep.mubr.f32.mxu0 0.0
  %1084 = vmatmul.mubr.f32.gmra.mrb[0].mxu0 %v954
  %v1085 = vpop.f32.mrb[0].mxu0
  %v1086 = vadd.f32 0.0, %v1085
  %v1087 = vpop.f32.mrb[0].mxu0
  %v1088 = vadd.f32 0.0, %v1087
  %1089 = vmatprep.mubr.f32.mxu0 0.0
  %1090 = vmatmul.mubr.f32.gmra.mrb[0].mxu0 %v956
  %v1091 = vpop.f32.mrb[0].mxu0
  %v1092 = vadd.f32 0.0, %v1091
  %v1093 = vpop.f32.mrb[0].mxu0
  %v1094 = vadd.f32 0.0, %v1093
  %1095 = vmatprep.mubr.f32.mxu0 0.0
  %1096 = vmatmul.mubr.f32.gmra.mrb[0].mxu0 %v958
  %v1097 = vpop.f32.mrb[0].mxu0
  %v1098 = vadd.f32 0.0, %v1097
  %v1099 = vpop.f32.mrb[0].mxu0
  %v1100 = vadd.f32 0.0, %v1099
  %1101 = vmatprep.mubr.f32.mxu0 0.0
  %1102 = vmatmul.mubr.f32.gmra.mrb[0].mxu0 %v960
  %v1103 = vpop.f32.mrb[0].mxu0
  %v1104 = vadd.f32 0.0, %v1103
  %v1105 = vpop.f32.mrb[0].mxu0
  %v1106 = vadd.f32 0.0, %v1105
  %1107 = vmatprep.mubr.f32.mxu0 0.0
  %1108 = vmatmul.mubr.f32.gmra.mrb[0].mxu0 %v962
  %v1109 = vpop.f32.mrb[0].mxu0
  %v1110 = vadd.f32 0.0, %v1109
  %v1111 = vpop.f32.mrb[0].mxu0
  %v1112 = vadd.f32 0.0, %v1111
  %1113 = vmatprep.mubr.f32.mxu0 0.0
  %1114 = vmatmul.mubr.f32.gmra.mrb[0].mxu0 %v964
  %v1115 = vpop.f32.mrb[0].mxu0
  %v1116 = vadd.f32 0.0, %v1115
  %v1117 = vpop.f32.mrb[0].mxu0
  %v1118 = vadd.f32 0.0, %v1117
  %1119 = vmatprep.mubr.f32.mxu0 0.0
  %1120 = vmatmul.mubr.f32.gmra.mrb[0].mxu0 %v966
  %v1121 = vpop.f32.mrb[0].mxu0
  %v1122 = vadd.f32 0.0, %v1121
  %v1123 = vpop.f32.mrb[0].mxu0
  %v1124 = vadd.f32 0.0, %v1123
  %1125 = vmatprep.mubr.f32.mxu0 0.0
  %1126 = vmatmul.mubr.f32.gmra.mrb[0].mxu0 %v968
  %v1127 = vpop.f32.mrb[0].mxu0
  %v1128 = vadd.f32 0.0, %v1127
  %v1129 = vpop.f32.mrb[0].mxu0
  %v1130 = vadd.f32 0.0, %v1129
  %1131 = vmatprep.mubr.f32.mxu0 0.0
  %1132 = vmatmul.mubr.f32.gmra.mrb[0].mxu0 %v970
  %v1133 = vpop.f32.mrb[0].mxu0
  %v1134 = vadd.f32 0.0, %v1133
  %v1135 = vpop.f32.mrb[0].mxu0
  %v1136 = vadd.f32 0.0, %v1135
  %1137 = vmatprep.mubr.f32.mxu0 0.0
  %1138 = vmatmul.mubr.f32.gmra.mrb[0].mxu0 %v972
  %v1139 = vpop.f32.mrb[0].mxu0
  %v1140 = vadd.f32 0.0, %v1139
  %v1141 = vpop.f32.mrb[0].mxu0
  %v1142 = vadd.f32 0.0, %v1141
  %1143 = vmatprep.mubr.f32.mxu0 0.0
  %1144 = vmatmul.mubr.f32.gmra.mrb[0].mxu0 %v974
  %v1145 = vpop.f32.mrb[0].mxu0
  %v1146 = vadd.f32 0.0, %v1145
  %v1147 = vpop.f32.mrb[0].mxu0
  %v1148 = vadd.f32 0.0, %v1147
  %1149 = vmatprep.mubr.f32.mxu0 0.0
  %1150 = vmatmul.mubr.f32.gmra.mrb[0].mxu0 %v976
  %v1151 = vpop.f32.mrb[0].mxu0
  %v1152 = vadd.f32 0.0, %v1151
  %v1153 = vpop.f32.mrb[0].mxu0
  %v1154 = vadd.f32 0.0, %v1153
  %1155 = vmatprep.mubr.f32.mxu0 0.0
  %1156 = vmatmul.mubr.f32.gmra.mrb[0].mxu0 %v978
  %v1157 = vpop.f32.mrb[0].mxu0
  %v1158 = vadd.f32 0.0, %v1157
  %v1159 = vpop.f32.mrb[0].mxu0
  %v1160 = vadd.f32 0.0, %v1159
  %1161 = vmatprep.mubr.f32.mxu0 0.0
  %1162 = vmatmul.mubr.f32.gmra.mrb[0].mxu0 %v980
  %v1163 = vpop.f32.mrb[0].mxu0
  %v1164 = vadd.f32 0.0, %v1163
  %v1165 = vpop.f32.mrb[0].mxu0
  %v1166 = vadd.f32 0.0, %v1165
  %1167 = vmatprep.mubr.f32.mxu0 0.0
  %1168 = vmatmul.mubr.f32.gmra.mrb[0].mxu0 %v982
  %v1169 = vpop.f32.mrb[0].mxu0
  %v1170 = vadd.f32 0.0, %v1169
  %v1171 = vpop.f32.mrb[0].mxu0
  %v1172 = vadd.f32 0.0, %v1171
  %1173 = vmatprep.mubr.f32.mxu0 0.0
  %1174 = vmatmul.mubr.f32.gmra.mrb[0].mxu0 %v984
  %v1175 = vpop.f32.mrb[0].mxu0
  %v1176 = vadd.f32 0.0, %v1175
  %v1177 = vpop.f32.mrb[0].mxu0
  %v1178 = vadd.f32 0.0, %v1177
  %1179 = vmatprep.mubr.f32.mxu0 0.0
  %1180 = vmatmul.mubr.f32.gmra.mrb[0].mxu0 %v986
  %v1181 = vpop.f32.mrb[0].mxu0
  %v1182 = vadd.f32 0.0, %v1181
  %v1183 = vpop.f32.mrb[0].mxu0
  %v1184 = vadd.f32 0.0, %v1183
  %1185 = vmatprep.mubr.f32.mxu0 0.0
  %1186 = vmatmul.mubr.f32.gmra.mrb[0].mxu0 %v988
  %v1187 = vpop.f32.mrb[0].mxu0
  %v1188 = vadd.f32 0.0, %v1187
  %v1189 = vpop.f32.mrb[0].mxu0
  %v1190 = vadd.f32 0.0, %v1189
  %1191 = vmatprep.mubr.f32.mxu0 0.0
  %1192 = vmatmul.mubr.f32.gmra.mrb[0].mxu0 %v990
  %v1193 = vpop.f32.mrb[0].mxu0
  %v1194 = vadd.f32 0.0, %v1193
  %v1195 = vpop.f32.mrb[0].mxu0
  %v1196 = vadd.f32 0.0, %v1195
  %1197 = vmatprep.mubr.f32.mxu0 0.0
  %1198 = vmatmul.mubr.f32.gmra.mrb[0].mxu0 %v992
  %v1199 = vpop.f32.mrb[0].mxu0
  %v1200 = vadd.f32 0.0, %v1199
  %v1201 = vpop.f32.mrb[0].mxu0
  %v1202 = vadd.f32 0.0, %v1201
  %1203 = vmatprep.mubr.f32.mxu0 0.0
  %1204 = vmatmul.mubr.f32.gmra.mrb[0].mxu0 %v994
  %v1205 = vpop.f32.mrb[0].mxu0
  %v1206 = vadd.f32 0.0, %v1205
  %v1207 = vpop.f32.mrb[0].mxu0
  %v1208 = vadd.f32 0.0, %v1207
  %1209 = vmatprep.mubr.f32.mxu0 0.0
  %1210 = vmatmul.mubr.f32.gmra.mrb[0].mxu0 %v996
  %v1211 = vpop.f32.mrb[0].mxu0
  %v1212 = vadd.f32 0.0, %v1211
  %v1213 = vpop.f32.mrb[0].mxu0
  %v1214 = vadd.f32 0.0, %v1213
  %1215 = vmatprep.mubr.f32.mxu0 0.0
  %1216 = vmatmul.mubr.f32.gmra.mrb[0].mxu0 %v998
  %v1217 = vpop.f32.mrb[0].mxu0
  %v1218 = vadd.f32 0.0, %v1217
  %v1219 = vpop.f32.mrb[0].mxu0
  %v1220 = vadd.f32 0.0, %v1219
  %1221 = vmatprep.mubr.f32.mxu0 0.0
  %1222 = vmatmul.mubr.f32.gmra.mrb[0].mxu0 %v1000
  %v1223 = vpop.f32.mrb[0].mxu0
  %v1224 = vadd.f32 0.0, %v1223
  %v1225 = vpop.f32.mrb[0].mxu0
  %v1226 = vadd.f32 0.0, %v1225
  %1227 = vmatprep.mubr.f32.mxu0 0.0
  %1228 = vmatmul.mubr.f32.gmra.mrb[0].mxu0 %v1002
  %v1229 = vpop.f32.mrb[0].mxu0
  %v1230 = vadd.f32 0.0, %v1229
  %v1231 = vpop.f32.mrb[0].mxu0
  %v1232 = vadd.f32 0.0, %v1231
  %1233 = vmatprep.mubr.f32.mxu0 0.0
  %1234 = vmatmul.mubr.f32.gmra.mrb[0].mxu0 %v1004
  %v1235 = vpop.f32.mrb[0].mxu0
  %v1236 = vadd.f32 0.0, %v1235
  %v1237 = vpop.f32.mrb[0].mxu0
  %v1238 = vadd.f32 0.0, %v1237
  %1239 = vmatprep.mubr.f32.mxu0 0.0
  %1240 = vmatmul.mubr.f32.gmra.mrb[0].mxu0 %v1006
  %v1241 = vpop.f32.mrb[0].mxu0
  %v1242 = vadd.f32 0.0, %v1241
  %v1243 = vpop.f32.mrb[0].mxu0
  %v1244 = vadd.f32 0.0, %v1243
  %1245 = vmatprep.mubr.f32.mxu0 0.0
  %1246 = vmatmul.mubr.f32.gmra.mrb[0].mxu0 %v1008
  %v1247 = vpop.f32.mrb[0].mxu0
  %v1248 = vadd.f32 0.0, %v1247
  %v1249 = vpop.f32.mrb[0].mxu0
  %v1250 = vadd.f32 0.0, %v1249
  %1251 = vmatprep.mubr.f32.mxu0 0.0
  %1252 = vmatmul.mubr.f32.gmra.mrb[0].mxu0 %v1010
  %v1253 = vpop.f32.mrb[0].mxu0
  %v1254 = vadd.f32 0.0, %v1253
  %v1255 = vpop.f32.mrb[0].mxu0
  %v1256 = vadd.f32 0.0, %v1255
  %1257 = vmatprep.mubr.f32.mxu0 0.0
  %1258 = vmatmul.mubr.f32.gmra.mrb[0].mxu0 %v1012
  %v1259 = vpop.f32.mrb[0].mxu0
  %v1260 = vadd.f32 0.0, %v1259
  %v1261 = vpop.f32.mrb[0].mxu0
  %v1262 = vadd.f32 0.0, %v1261
  %1263 = vmatprep.mubr.f32.mxu0 0.0
  %1264 = vmatmul.mubr.f32.gmra.mrb[0].mxu0 %v1014
  %v1265 = vpop.f32.mrb[0].mxu0
  %v1266 = vadd.f32 0.0, %v1265
  %v1267 = vpop.f32.mrb[0].mxu0
  %v1268 = vadd.f32 0.0, %v1267
  %1269 = vmatprep.mubr.f32.mxu0 0.0
  %1270 = vmatmul.mubr.f32.gmra.mrb[0].mxu0 %v1017
  %v1271 = vpop.f32.mrb[0].mxu0
  %v1272 = vadd.f32 0.0, %v1271
  %v1273 = vpop.f32.mrb[0].mxu0
  %v1274 = vadd.f32 0.0, %v1273
  %1275 = vdwg.mxu0
  %v1276 = vadd.f32 %v672, %v1086
  %v1277 = vadd.f32 %v674, %v1088
  %v1278 = vadd.f32 %v678, %v1092
  %v1279 = vadd.f32 %v680, %v1094
  %v1280 = vadd.f32 %v684, %v1098
  %v1281 = vadd.f32 %v686, %v1100
  %v1282 = vadd.f32 %v690, %v1104
  %v1283 = vadd.f32 %v692, %v1106
  %v1284 = vadd.f32 %v696, %v1110
  %v1285 = vadd.f32 %v698, %v1112
  %v1286 = vadd.f32 %v702, %v1116
  %v1287 = vadd.f32 %v704, %v1118
  %v1288 = vadd.f32 %v708, %v1122
  %v1289 = vadd.f32 %v710, %v1124
  %v1290 = vadd.f32 %v714, %v1128
  %v1291 = vadd.f32 %v716, %v1130
  %v1292 = vadd.f32 %v720, %v1134
  %v1293 = vadd.f32 %v722, %v1136
  %v1294 = vadd.f32 %v726, %v1140
  %v1295 = vadd.f32 %v728, %v1142
  %v1296 = vadd.f32 %v732, %v1146
  %v1297 = vadd.f32 %v734, %v1148
  %v1298 = vadd.f32 %v738, %v1152
  %v1299 = vadd.f32 %v740, %v1154
  %v1300 = vadd.f32 %v744, %v1158
  %v1301 = vadd.f32 %v746, %v1160
  %v1302 = vadd.f32 %v750, %v1164
  %v1303 = vadd.f32 %v752, %v1166
  %v1304 = vadd.f32 %v756, %v1170
  %v1305 = vadd.f32 %v758, %v1172
  %v1306 = vadd.f32 %v762, %v1176
  %v1307 = vadd.f32 %v764, %v1178
  %v1308 = vadd.f32 %v768, %v1182
  %v1309 = vadd.f32 %v770, %v1184
  %v1310 = vadd.f32 %v774, %v1188
  %v1311 = vadd.f32 %v776, %v1190
  %v1312 = vadd.f32 %v780, %v1194
  %v1313 = vadd.f32 %v782, %v1196
  %v1314 = vadd.f32 %v786, %v1200
  %v1315 = vadd.f32 %v788, %v1202
  %v1316 = vadd.f32 %v792, %v1206
  %v1317 = vadd.f32 %v794, %v1208
  %v1318 = vadd.f32 %v798, %v1212
  %v1319 = vadd.f32 %v800, %v1214
  %v1320 = vadd.f32 %v804, %v1218
  %v1321 = vadd.f32 %v806, %v1220
  %v1322 = vadd.f32 %v810, %v1224
  %v1323 = vadd.f32 %v812, %v1226
  %v1324 = vadd.f32 %v816, %v1230
  %v1325 = vadd.f32 %v818, %v1232
  %v1326 = vadd.f32 %v822, %v1236
  %v1327 = vadd.f32 %v824, %v1238
  %v1328 = vadd.f32 %v828, %v1242
  %v1329 = vadd.f32 %v830, %v1244
  %v1330 = vadd.f32 %v834, %v1248
  %v1331 = vadd.f32 %v836, %v1250
  %v1332 = vadd.f32 %v840, %v1254
  %v1333 = vadd.f32 %v842, %v1256
  %v1334 = vadd.f32 %v846, %v1260
  %v1335 = vadd.f32 %v848, %v1262
  %v1336 = vadd.f32 %v852, %v1266
  %v1337 = vadd.f32 %v854, %v1268
  %v1338 = vadd.f32 %v858, %v1272
  %v1339 = vadd.f32 %v860, %v1274
  %vm1340 = vcmask 1044480
  %v1341 = vrot.slane %v38, 3
  %v1342 = vrot.slane %v39, 3
  %v1343 = vsel %vm1340, %v1341, %v1342
  %v1344 = vrot.slane %v40, 3
  %v1345 = vsel %vm1340, %v1342, %v1344
  %v1346 = vrot.slane %v41, 3
  %v1347 = vsel %vm1340, %v1344, %v1346
  %v1348 = vrot.slane %v42, 3
  %v1349 = vsel %vm1340, %v1346, %v1348
  %v1350 = vrot.slane %v43, 3
  %v1351 = vsel %vm1340, %v1348, %v1350
  %v1352 = vrot.slane %v44, 3
  %v1353 = vsel %vm1340, %v1350, %v1352
  %v1354 = vrot.slane %v45, 3
  %v1355 = vsel %vm1340, %v1352, %v1354
  %v1356 = vrot.slane %v46, 3
  %v1357 = vsel %vm1340, %v1354, %v1356
  %v1358 = vrot.slane %v47, 3
  %v1359 = vsel %vm1340, %v1356, %v1358
  %v1360 = vrot.slane %v48, 3
  %v1361 = vsel %vm1340, %v1358, %v1360
  %v1362 = vrot.slane %v49, 3
  %v1363 = vsel %vm1340, %v1360, %v1362
  %v1364 = vrot.slane %v50, 3
  %v1365 = vsel %vm1340, %v1362, %v1364
  %v1366 = vrot.slane %v51, 3
  %v1367 = vsel %vm1340, %v1364, %v1366
  %v1368 = vrot.slane %v52, 3
  %v1369 = vsel %vm1340, %v1366, %v1368
  %v1370 = vrot.slane %v53, 3
  %v1371 = vsel %vm1340, %v1368, %v1370
  %v1372 = vrot.slane %v54, 3
  %v1373 = vsel %vm1340, %v1370, %v1372
  %v1374 = vrot.slane %v55, 3
  %v1375 = vsel %vm1340, %v1372, %v1374
  %v1376 = vrot.slane %v56, 3
  %v1377 = vsel %vm1340, %v1374, %v1376
  %v1378 = vrot.slane %v57, 3
  %v1379 = vsel %vm1340, %v1376, %v1378
  %v1380 = vrot.slane %v58, 3
  %v1381 = vsel %vm1340, %v1378, %v1380
  %v1382 = vrot.slane %v59, 3
  %v1383 = vsel %vm1340, %v1380, %v1382
  %v1384 = vrot.slane %v60, 3
  %v1385 = vsel %vm1340, %v1382, %v1384
  %v1386 = vrot.slane %v61, 3
  %v1387 = vsel %vm1340, %v1384, %v1386
  %v1388 = vrot.slane %v62, 3
  %v1389 = vsel %vm1340, %v1386, %v1388
  %v1390 = vrot.slane %v63, 3
  %v1391 = vsel %vm1340, %v1388, %v1390
  %v1392 = vrot.slane %v64, 3
  %v1393 = vsel %vm1340, %v1390, %v1392
  %v1394 = vrot.slane %v65, 3
  %v1395 = vsel %vm1340, %v1392, %v1394
  %v1396 = vrot.slane %v66, 3
  %v1397 = vsel %vm1340, %v1394, %v1396
  %v1398 = vrot.slane %v67, 3
  %v1399 = vsel %vm1340, %v1396, %v1398
  %v1400 = vrot.slane %v68, 3
  %v1401 = vsel %vm1340, %v1398, %v1400
  %v1402 = vrot.slane %v69, 3
  %v1403 = vsel %vm1340, %v1400, %v1402
  %v1406 = vsel %vm1340, %v1402, %v1341
  %s1407 = scalar_lea.vmem %s1, 576
  %v1408 = vld [vmem:[%s1407] sm:$0xff]
  %v1409 = vld [vmem:[%s1407 + $0x8] sm:$0xff]
  %v1410 = vld [vmem:[%s1407 + $0x10] sm:$0xff]
  %v1411 = vld [vmem:[%s1407 + $0x18] sm:$0xff]
  %v1412 = vld [vmem:[%s1407 + $0x20] sm:$0xff]
  %v1413 = vld [vmem:[%s1407 + $0x28] sm:$0xff]
  %v1414 = vld [vmem:[%s1407 + $0x30] sm:$0xff]
  %v1415 = vld [vmem:[%s1407 + $0x38] sm:$0xff]
  %v1416 = vld [vmem:[%s1407 + $0x40] sm:$0xff]
  %v1417 = vld [vmem:[%s1407 + $0x48] sm:$0xff]
  %v1418 = vld [vmem:[%s1407 + $0x50] sm:$0xff]
  %v1419 = vld [vmem:[%s1407 + $0x58] sm:$0xff]
  %v1420 = vld [vmem:[%s1407 + $0x60] sm:$0xff]
  %v1421 = vld [vmem:[%s1407 + $0x68] sm:$0xff]
  %v1422 = vld [vmem:[%s1407 + $0x70] sm:$0xff]
  %v1423 = vld [vmem:[%s1407 + $0x78] sm:$0xff]
  %v1424 = vld [vmem:[%s1407 + $0x80] sm:$0xff]
  %v1425 = vld [vmem:[%s1407 + $0x88] sm:$0xff]
  %v1426 = vld [vmem:[%s1407 + $0x90] sm:$0xff]
  %v1427 = vld [vmem:[%s1407 + $0x98] sm:$0xff]
  %v1428 = vld [vmem:[%s1407 + $0xa0] sm:$0xff]
  %v1429 = vld [vmem:[%s1407 + $0xa8] sm:$0xff]
  %v1430 = vld [vmem:[%s1407 + $0xb0] sm:$0xff]
  %v1431 = vld [vmem:[%s1407 + $0xb8] sm:$0xff]
  %v1432 = vsel %vm218, %v1343, 0
  %v1434 = vsel %vm218, %v1345, 0
  %v1436 = vsel %vm218, %v1347, 0
  %v1438 = vsel %vm218, %v1349, 0
  %v1440 = vsel %vm218, %v1351, 0
  %v1442 = vsel %vm218, %v1353, 0
  %v1444 = vsel %vm218, %v1355, 0
  %v1446 = vsel %vm218, %v1357, 0
  %v1448 = vsel %vm218, %v1359, 0
  %v1450 = vsel %vm218, %v1361, 0
  %v1452 = vsel %vm218, %v1363, 0
  %v1454 = vsel %vm218, %v1365, 0
  %v1456 = vsel %vm218, %v1367, 0
  %v1458 = vsel %vm218, %v1369, 0
  %v1460 = vsel %vm218, %v1371, 0
  %v1462 = vsel %vm218, %v1373, 0
  %v1464 = vsel %vm218, %v1375, 0
  %v1466 = vsel %vm218, %v1377, 0
  %v1468 = vsel %vm218, %v1379, 0
  %v1470 = vsel %vm218, %v1381, 0
  %v1472 = vsel %vm218, %v1383, 0
  %v1474 = vsel %vm218, %v1385, 0
  %v1476 = vsel %vm218, %v1387, 0
  %v1478 = vsel %vm218, %v1389, 0
  %v1480 = vsel %vm218, %v1391, 0
  %v1482 = vsel %vm218, %v1393, 0
  %v1484 = vsel %vm218, %v1395, 0
  %v1486 = vsel %vm218, %v1397, 0
  %v1488 = vsel %vm218, %v1399, 0
  %v1490 = vsel %vm218, %v1401, 0
  %v1492 = vsel %vm218, %v1403, 0
  %v1495 = vsel %vm218, %v1406, 0
  %1497 = vmatprep.subr.mxu0 %v1409
  %1498 = vmatpush1.msra.mxu0 %v1408
  %1499 = vmatprep.subr.mxu0 %v1411
  %1500 = vmatpush1.msra.mxu0 %v1410
  %1501 = vmatprep.subr.mxu0 %v1413
  %1502 = vmatpush1.msra.mxu0 %v1412
  %1503 = vmatprep.subr.mxu0 %v1415
  %1504 = vmatpush1.msra.mxu0 %v1414
  %1505 = vmatprep.subr.mxu0 %v1417
  %1506 = vmatpush1.msra.mxu0 %v1416
  %1507 = vmatprep.subr.mxu0 %v1419
  %1508 = vmatpush1.msra.mxu0 %v1418
  %1509 = vmatprep.subr.mxu0 %v1421
  %1510 = vmatpush1.msra.mxu0 %v1420
  %1511 = vmatprep.subr.mxu0 %v1423
  %1512 = vmatpush1.msra.mxu0 %v1422
  %1513 = vmatprep.subr.mxu0 %v1425
  %1514 = vmatpush1.msra.mxu0 %v1424
  %1515 = vmatprep.subr.mxu0 %v1427
  %1516 = vmatpush1.msra.mxu0 %v1426
  %1517 = vmatprep.subr.mxu0 %v1429
  %1518 = vmatpush1.msra.mxu0 %v1428
  %1519 = vmatprep.subr.mxu0 %v1431
  %1520 = vmatpush1.msra.mxu0 %v1430
  %1521 = vmatprep.subr.mxu0 0.0
  %1522 = vmatpush1.msra.mxu0 0.0
  %1523 = vmatprep.subr.mxu0 0.0
  %1524 = vmatpush1.msra.mxu0 0.0
  %1525 = vmatprep.subr.mxu0 0.0
  %1526 = vmatpush1.msra.mxu0 0.0
  %1527 = vmatprep.subr.mxu0 0.0
  %1528 = vmatpush1.msra.mxu0 0.0
  %1529 = vmatprep.subr.mxu0 0.0
  %1530 = vmatpush1.msra.mxu0 0.0
  %1531 = vmatprep.subr.mxu0 0.0
  %1532 = vmatpush1.msra.mxu0 0.0
  %1533 = vmatprep.subr.mxu0 0.0
  %1534 = vmatpush1.msra.mxu0 0.0
  %1535 = vmatprep.subr.mxu0 0.0
  %1536 = vmatpush1.msra.mxu0 0.0
  %1537 = vmatprep.subr.mxu0 0.0
  %1538 = vmatpush1.msra.mxu0 0.0
  %1539 = vmatprep.subr.mxu0 0.0
  %1540 = vmatpush1.msra.mxu0 0.0
  %1541 = vmatprep.subr.mxu0 0.0
  %1542 = vmatpush1.msra.mxu0 0.0
  %1543 = vmatprep.subr.mxu0 0.0
  %1544 = vmatpush1.msra.mxu0 0.0
  %1545 = vmatprep.subr.mxu0 0.0
  %1546 = vmatpush1.msra.mxu0 0.0
  %1547 = vmatprep.subr.mxu0 0.0
  %1548 = vmatpush1.msra.mxu0 0.0
  %1549 = vmatprep.subr.mxu0 0.0
  %1550 = vmatpush1.msra.mxu0 0.0
  %1551 = vmatprep.subr.mxu0 0.0
  %1552 = vmatpush1.msra.mxu0 0.0
  %1553 = vmatprep.subr.mxu0 0.0
  %1554 = vmatpush1.msra.mxu0 0.0
  %1555 = vmatprep.subr.mxu0 0.0
  %1556 = vmatpush1.msra.mxu0 0.0
  %1557 = vmatprep.subr.mxu0 0.0
  %1558 = vmatpush1.msra.mxu0 0.0
  %1559 = vmatprep.subr.mxu0 0.0
  %1560 = vmatpush1.msra.mxu0 0.0
  %1561 = vmatprep.mubr.f32.mxu0 0.0
  %1562 = vmatmul.mubr.f32.gmra.mrb[0].mxu0 %v1432
  %v1563 = vpop.f32.mrb[0].mxu0
  %v1564 = vadd.f32 0.0, %v1563
  %v1565 = vpop.f32.mrb[0].mxu0
  %v1566 = vadd.f32 0.0, %v1565
  %1567 = vmatprep.mubr.f32.mxu0 0.0
  %1568 = vmatmul.mubr.f32.gmra.mrb[0].mxu0 %v1434
  %v1569 = vpop.f32.mrb[0].mxu0
  %v1570 = vadd.f32 0.0, %v1569
  %v1571 = vpop.f32.mrb[0].mxu0
  %v1572 = vadd.f32 0.0, %v1571
  %1573 = vmatprep.mubr.f32.mxu0 0.0
  %1574 = vmatmul.mubr.f32.gmra.mrb[0].mxu0 %v1436
  %v1575 = vpop.f32.mrb[0].mxu0
  %v1576 = vadd.f32 0.0, %v1575
  %v1577 = vpop.f32.mrb[0].mxu0
  %v1578 = vadd.f32 0.0, %v1577
  %1579 = vmatprep.mubr.f32.mxu0 0.0
  %1580 = vmatmul.mubr.f32.gmra.mrb[0].mxu0 %v1438
  %v1581 = vpop.f32.mrb[0].mxu0
  %v1582 = vadd.f32 0.0, %v1581
  %v1583 = vpop.f32.mrb[0].mxu0
  %v1584 = vadd.f32 0.0, %v1583
  %1585 = vmatprep.mubr.f32.mxu0 0.0
  %1586 = vmatmul.mubr.f32.gmra.mrb[0].mxu0 %v1440
  %v1587 = vpop.f32.mrb[0].mxu0
  %v1588 = vadd.f32 0.0, %v1587
  %v1589 = vpop.f32.mrb[0].mxu0
  %v1590 = vadd.f32 0.0, %v1589
  %1591 = vmatprep.mubr.f32.mxu0 0.0
  %1592 = vmatmul.mubr.f32.gmra.mrb[0].mxu0 %v1442
  %v1593 = vpop.f32.mrb[0].mxu0
  %v1594 = vadd.f32 0.0, %v1593
  %v1595 = vpop.f32.mrb[0].mxu0
  %v1596 = vadd.f32 0.0, %v1595
  %1597 = vmatprep.mubr.f32.mxu0 0.0
  %1598 = vmatmul.mubr.f32.gmra.mrb[0].mxu0 %v1444
  %v1599 = vpop.f32.mrb[0].mxu0
  %v1600 = vadd.f32 0.0, %v1599
  %v1601 = vpop.f32.mrb[0].mxu0
  %v1602 = vadd.f32 0.0, %v1601
  %1603 = vmatprep.mubr.f32.mxu0 0.0
  %1604 = vmatmul.mubr.f32.gmra.mrb[0].mxu0 %v1446
  %v1605 = vpop.f32.mrb[0].mxu0
  %v1606 = vadd.f32 0.0, %v1605
  %v1607 = vpop.f32.mrb[0].mxu0
  %v1608 = vadd.f32 0.0, %v1607
  %1609 = vmatprep.mubr.f32.mxu0 0.0
  %1610 = vmatmul.mubr.f32.gmra.mrb[0].mxu0 %v1448
  %v1611 = vpop.f32.mrb[0].mxu0
  %v1612 = vadd.f32 0.0, %v1611
  %v1613 = vpop.f32.mrb[0].mxu0
  %v1614 = vadd.f32 0.0, %v1613
  %1615 = vmatprep.mubr.f32.mxu0 0.0
  %1616 = vmatmul.mubr.f32.gmra.mrb[0].mxu0 %v1450
  %v1617 = vpop.f32.mrb[0].mxu0
  %v1618 = vadd.f32 0.0, %v1617
  %v1619 = vpop.f32.mrb[0].mxu0
  %v1620 = vadd.f32 0.0, %v1619
  %1621 = vmatprep.mubr.f32.mxu0 0.0
  %1622 = vmatmul.mubr.f32.gmra.mrb[0].mxu0 %v1452
  %v1623 = vpop.f32.mrb[0].mxu0
  %v1624 = vadd.f32 0.0, %v1623
  %v1625 = vpop.f32.mrb[0].mxu0
  %v1626 = vadd.f32 0.0, %v1625
  %1627 = vmatprep.mubr.f32.mxu0 0.0
  %1628 = vmatmul.mubr.f32.gmra.mrb[0].mxu0 %v1454
  %v1629 = vpop.f32.mrb[0].mxu0
  %v1630 = vadd.f32 0.0, %v1629
  %v1631 = vpop.f32.mrb[0].mxu0
  %v1632 = vadd.f32 0.0, %v1631
  %1633 = vmatprep.mubr.f32.mxu0 0.0
  %1634 = vmatmul.mubr.f32.gmra.mrb[0].mxu0 %v1456
  %v1635 = vpop.f32.mrb[0].mxu0
  %v1636 = vadd.f32 0.0, %v1635
  %v1637 = vpop.f32.mrb[0].mxu0
  %v1638 = vadd.f32 0.0, %v1637
  %1639 = vmatprep.mubr.f32.mxu0 0.0
  %1640 = vmatmul.mubr.f32.gmra.mrb[0].mxu0 %v1458
  %v1641 = vpop.f32.mrb[0].mxu0
  %v1642 = vadd.f32 0.0, %v1641
  %v1643 = vpop.f32.mrb[0].mxu0
  %v1644 = vadd.f32 0.0, %v1643
  %1645 = vmatprep.mubr.f32.mxu0 0.0
  %1646 = vmatmul.mubr.f32.gmra.mrb[0].mxu0 %v1460
  %v1647 = vpop.f32.mrb[0].mxu0
  %v1648 = vadd.f32 0.0, %v1647
  %v1649 = vpop.f32.mrb[0].mxu0
  %v1650 = vadd.f32 0.0, %v1649
  %1651 = vmatprep.mubr.f32.mxu0 0.0
  %1652 = vmatmul.mubr.f32.gmra.mrb[0].mxu0 %v1462
  %v1653 = vpop.f32.mrb[0].mxu0
  %v1654 = vadd.f32 0.0, %v1653
  %v1655 = vpop.f32.mrb[0].mxu0
  %v1656 = vadd.f32 0.0, %v1655
  %1657 = vmatprep.mubr.f32.mxu0 0.0
  %1658 = vmatmul.mubr.f32.gmra.mrb[0].mxu0 %v1464
  %v1659 = vpop.f32.mrb[0].mxu0
  %v1660 = vadd.f32 0.0, %v1659
  %v1661 = vpop.f32.mrb[0].mxu0
  %v1662 = vadd.f32 0.0, %v1661
  %1663 = vmatprep.mubr.f32.mxu0 0.0
  %1664 = vmatmul.mubr.f32.gmra.mrb[0].mxu0 %v1466
  %v1665 = vpop.f32.mrb[0].mxu0
  %v1666 = vadd.f32 0.0, %v1665
  %v1667 = vpop.f32.mrb[0].mxu0
  %v1668 = vadd.f32 0.0, %v1667
  %1669 = vmatprep.mubr.f32.mxu0 0.0
  %1670 = vmatmul.mubr.f32.gmra.mrb[0].mxu0 %v1468
  %v1671 = vpop.f32.mrb[0].mxu0
  %v1672 = vadd.f32 0.0, %v1671
  %v1673 = vpop.f32.mrb[0].mxu0
  %v1674 = vadd.f32 0.0, %v1673
  %1675 = vmatprep.mubr.f32.mxu0 0.0
  %1676 = vmatmul.mubr.f32.gmra.mrb[0].mxu0 %v1470
  %v1677 = vpop.f32.mrb[0].mxu0
  %v1678 = vadd.f32 0.0, %v1677
  %v1679 = vpop.f32.mrb[0].mxu0
  %v1680 = vadd.f32 0.0, %v1679
  %1681 = vmatprep.mubr.f32.mxu0 0.0
  %1682 = vmatmul.mubr.f32.gmra.mrb[0].mxu0 %v1472
  %v1683 = vpop.f32.mrb[0].mxu0
  %v1684 = vadd.f32 0.0, %v1683
  %v1685 = vpop.f32.mrb[0].mxu0
  %v1686 = vadd.f32 0.0, %v1685
  %1687 = vmatprep.mubr.f32.mxu0 0.0
  %1688 = vmatmul.mubr.f32.gmra.mrb[0].mxu0 %v1474
  %v1689 = vpop.f32.mrb[0].mxu0
  %v1690 = vadd.f32 0.0, %v1689
  %v1691 = vpop.f32.mrb[0].mxu0
  %v1692 = vadd.f32 0.0, %v1691
  %1693 = vmatprep.mubr.f32.mxu0 0.0
  %1694 = vmatmul.mubr.f32.gmra.mrb[0].mxu0 %v1476
  %v1695 = vpop.f32.mrb[0].mxu0
  %v1696 = vadd.f32 0.0, %v1695
  %v1697 = vpop.f32.mrb[0].mxu0
  %v1698 = vadd.f32 0.0, %v1697
  %1699 = vmatprep.mubr.f32.mxu0 0.0
  %1700 = vmatmul.mubr.f32.gmra.mrb[0].mxu0 %v1478
  %v1701 = vpop.f32.mrb[0].mxu0
  %v1702 = vadd.f32 0.0, %v1701
  %v1703 = vpop.f32.mrb[0].mxu0
  %v1704 = vadd.f32 0.0, %v1703
  %1705 = vmatprep.mubr.f32.mxu0 0.0
  %1706 = vmatmul.mubr.f32.gmra.mrb[0].mxu0 %v1480
  %v1707 = vpop.f32.mrb[0].mxu0
  %v1708 = vadd.f32 0.0, %v1707
  %v1709 = vpop.f32.mrb[0].mxu0
  %v1710 = vadd.f32 0.0, %v1709
  %1711 = vmatprep.mubr.f32.mxu0 0.0
  %1712 = vmatmul.mubr.f32.gmra.mrb[0].mxu0 %v1482
  %v1713 = vpop.f32.mrb[0].mxu0
  %v1714 = vadd.f32 0.0, %v1713
  %v1715 = vpop.f32.mrb[0].mxu0
  %v1716 = vadd.f32 0.0, %v1715
  %1717 = vmatprep.mubr.f32.mxu0 0.0
  %1718 = vmatmul.mubr.f32.gmra.mrb[0].mxu0 %v1484
  %v1719 = vpop.f32.mrb[0].mxu0
  %v1720 = vadd.f32 0.0, %v1719
  %v1721 = vpop.f32.mrb[0].mxu0
  %v1722 = vadd.f32 0.0, %v1721
  %1723 = vmatprep.mubr.f32.mxu0 0.0
  %1724 = vmatmul.mubr.f32.gmra.mrb[0].mxu0 %v1486
  %v1725 = vpop.f32.mrb[0].mxu0
  %v1726 = vadd.f32 0.0, %v1725
  %v1727 = vpop.f32.mrb[0].mxu0
  %v1728 = vadd.f32 0.0, %v1727
  %1729 = vmatprep.mubr.f32.mxu0 0.0
  %1730 = vmatmul.mubr.f32.gmra.mrb[0].mxu0 %v1488
  %v1731 = vpop.f32.mrb[0].mxu0
  %v1732 = vadd.f32 0.0, %v1731
  %v1733 = vpop.f32.mrb[0].mxu0
  %v1734 = vadd.f32 0.0, %v1733
  %1735 = vmatprep.mubr.f32.mxu0 0.0
  %1736 = vmatmul.mubr.f32.gmra.mrb[0].mxu0 %v1490
  %v1737 = vpop.f32.mrb[0].mxu0
  %v1738 = vadd.f32 0.0, %v1737
  %v1739 = vpop.f32.mrb[0].mxu0
  %v1740 = vadd.f32 0.0, %v1739
  %1741 = vmatprep.mubr.f32.mxu0 0.0
  %1742 = vmatmul.mubr.f32.gmra.mrb[0].mxu0 %v1492
  %v1743 = vpop.f32.mrb[0].mxu0
  %v1744 = vadd.f32 0.0, %v1743
  %v1745 = vpop.f32.mrb[0].mxu0
  %v1746 = vadd.f32 0.0, %v1745
  %1747 = vmatprep.mubr.f32.mxu0 0.0
  %1748 = vmatmul.mubr.f32.gmra.mrb[0].mxu0 %v1495
  %v1749 = vpop.f32.mrb[0].mxu0
  %v1750 = vadd.f32 0.0, %v1749
  %v1751 = vpop.f32.mrb[0].mxu0
  %v1752 = vadd.f32 0.0, %v1751
  %1753 = vdwg.mxu0
  %v1754 = vadd.f32 %v1276, %v1564
  %v1755 = vadd.f32 %v1277, %v1566
  %v1756 = vadd.f32 %v1278, %v1570
  %v1757 = vadd.f32 %v1279, %v1572
  %v1758 = vadd.f32 %v1280, %v1576
  %v1759 = vadd.f32 %v1281, %v1578
  %v1760 = vadd.f32 %v1282, %v1582
  %v1761 = vadd.f32 %v1283, %v1584
  %v1762 = vadd.f32 %v1284, %v1588
  %v1763 = vadd.f32 %v1285, %v1590
  %v1764 = vadd.f32 %v1286, %v1594
  %v1765 = vadd.f32 %v1287, %v1596
  %v1766 = vadd.f32 %v1288, %v1600
  %v1767 = vadd.f32 %v1289, %v1602
  %v1768 = vadd.f32 %v1290, %v1606
  %v1769 = vadd.f32 %v1291, %v1608
  %v1770 = vadd.f32 %v1292, %v1612
  %v1771 = vadd.f32 %v1293, %v1614
  %v1772 = vadd.f32 %v1294, %v1618
  %v1773 = vadd.f32 %v1295, %v1620
  %v1774 = vadd.f32 %v1296, %v1624
  %v1775 = vadd.f32 %v1297, %v1626
  %v1776 = vadd.f32 %v1298, %v1630
  %v1777 = vadd.f32 %v1299, %v1632
  %v1778 = vadd.f32 %v1300, %v1636
  %v1779 = vadd.f32 %v1301, %v1638
  %v1780 = vadd.f32 %v1302, %v1642
  %v1781 = vadd.f32 %v1303, %v1644
  %v1782 = vadd.f32 %v1304, %v1648
  %v1783 = vadd.f32 %v1305, %v1650
  %v1784 = vadd.f32 %v1306, %v1654
  %v1785 = vadd.f32 %v1307, %v1656
  %v1786 = vadd.f32 %v1308, %v1660
  %v1787 = vadd.f32 %v1309, %v1662
  %v1788 = vadd.f32 %v1310, %v1666
  %v1789 = vadd.f32 %v1311, %v1668
  %v1790 = vadd.f32 %v1312, %v1672
  %v1791 = vadd.f32 %v1313, %v1674
  %v1792 = vadd.f32 %v1314, %v1678
  %v1793 = vadd.f32 %v1315, %v1680
  %v1794 = vadd.f32 %v1316, %v1684
  %v1795 = vadd.f32 %v1317, %v1686
  %v1796 = vadd.f32 %v1318, %v1690
  %v1797 = vadd.f32 %v1319, %v1692
  %v1798 = vadd.f32 %v1320, %v1696
  %v1799 = vadd.f32 %v1321, %v1698
  %v1800 = vadd.f32 %v1322, %v1702
  %v1801 = vadd.f32 %v1323, %v1704
  %v1802 = vadd.f32 %v1324, %v1708
  %v1803 = vadd.f32 %v1325, %v1710
  %v1804 = vadd.f32 %v1326, %v1714
  %v1805 = vadd.f32 %v1327, %v1716
  %v1806 = vadd.f32 %v1328, %v1720
  %v1807 = vadd.f32 %v1329, %v1722
  %v1808 = vadd.f32 %v1330, %v1726
  %v1809 = vadd.f32 %v1331, %v1728
  %v1810 = vadd.f32 %v1332, %v1732
  %v1811 = vadd.f32 %v1333, %v1734
  %v1812 = vadd.f32 %v1334, %v1738
  %v1813 = vadd.f32 %v1335, %v1740
  %v1814 = vadd.f32 %v1336, %v1744
  %v1815 = vadd.f32 %v1337, %v1746
  %v1816 = vadd.f32 %v1338, %v1750
  %v1817 = vadd.f32 %v1339, %v1752
  %vm1818 = vcmask 1043456
  %v1819 = vrot.slane %v38, 4
  %v1820 = vrot.slane %v39, 4
  %v1821 = vsel %vm1818, %v1819, %v1820
  %v1822 = vrot.slane %v40, 4
  %v1823 = vsel %vm1818, %v1820, %v1822
  %v1824 = vrot.slane %v41, 4
  %v1825 = vsel %vm1818, %v1822, %v1824
  %v1826 = vrot.slane %v42, 4
  %v1827 = vsel %vm1818, %v1824, %v1826
  %v1828 = vrot.slane %v43, 4
  %v1829 = vsel %vm1818, %v1826, %v1828
  %v1830 = vrot.slane %v44, 4
  %v1831 = vsel %vm1818, %v1828, %v1830
  %v1832 = vrot.slane %v45, 4
  %v1833 = vsel %vm1818, %v1830, %v1832
  %v1834 = vrot.slane %v46, 4
  %v1835 = vsel %vm1818, %v1832, %v1834
  %v1836 = vrot.slane %v47, 4
  %v1837 = vsel %vm1818, %v1834, %v1836
  %v1838 = vrot.slane %v48, 4
  %v1839 = vsel %vm1818, %v1836, %v1838
  %v1840 = vrot.slane %v49, 4
  %v1841 = vsel %vm1818, %v1838, %v1840
  %v1842 = vrot.slane %v50, 4
  %v1843 = vsel %vm1818, %v1840, %v1842
  %v1844 = vrot.slane %v51, 4
  %v1845 = vsel %vm1818, %v1842, %v1844
  %v1846 = vrot.slane %v52, 4
  %v1847 = vsel %vm1818, %v1844, %v1846
  %v1848 = vrot.slane %v53, 4
  %v1849 = vsel %vm1818, %v1846, %v1848
  %v1850 = vrot.slane %v54, 4
  %v1851 = vsel %vm1818, %v1848, %v1850
  %v1852 = vrot.slane %v55, 4
  %v1853 = vsel %vm1818, %v1850, %v1852
  %v1854 = vrot.slane %v56, 4
  %v1855 = vsel %vm1818, %v1852, %v1854
  %v1856 = vrot.slane %v57, 4
  %v1857 = vsel %vm1818, %v1854, %v1856
  %v1858 = vrot.slane %v58, 4
  %v1859 = vsel %vm1818, %v1856, %v1858
  %v1860 = vrot.slane %v59, 4
  %v1861 = vsel %vm1818, %v1858, %v1860
  %v1862 = vrot.slane %v60, 4
  %v1863 = vsel %vm1818, %v1860, %v1862
  %v1864 = vrot.slane %v61, 4
  %v1865 = vsel %vm1818, %v1862, %v1864
  %v1866 = vrot.slane %v62, 4
  %v1867 = vsel %vm1818, %v1864, %v1866
  %v1868 = vrot.slane %v63, 4
  %v1869 = vsel %vm1818, %v1866, %v1868
  %v1870 = vrot.slane %v64, 4
  %v1871 = vsel %vm1818, %v1868, %v1870
  %v1872 = vrot.slane %v65, 4
  %v1873 = vsel %vm1818, %v1870, %v1872
  %v1874 = vrot.slane %v66, 4
  %v1875 = vsel %vm1818, %v1872, %v1874
  %v1876 = vrot.slane %v67, 4
  %v1877 = vsel %vm1818, %v1874, %v1876
  %v1878 = vrot.slane %v68, 4
  %v1879 = vsel %vm1818, %v1876, %v1878
  %v1880 = vrot.slane %v69, 4
  %v1881 = vsel %vm1818, %v1878, %v1880
  %v1884 = vsel %vm1818, %v1880, %v1819
  %s1885 = scalar_lea.vmem %s1, 768
  %v1886 = vld [vmem:[%s1885] sm:$0xff]
  %v1887 = vld [vmem:[%s1885 + $0x8] sm:$0xff]
  %v1888 = vld [vmem:[%s1885 + $0x10] sm:$0xff]
  %v1889 = vld [vmem:[%s1885 + $0x18] sm:$0xff]
  %v1890 = vld [vmem:[%s1885 + $0x20] sm:$0xff]
  %v1891 = vld [vmem:[%s1885 + $0x28] sm:$0xff]
  %v1892 = vld [vmem:[%s1885 + $0x30] sm:$0xff]
  %v1893 = vld [vmem:[%s1885 + $0x38] sm:$0xff]
  %v1894 = vld [vmem:[%s1885 + $0x40] sm:$0xff]
  %v1895 = vld [vmem:[%s1885 + $0x48] sm:$0xff]
  %v1896 = vld [vmem:[%s1885 + $0x50] sm:$0xff]
  %v1897 = vld [vmem:[%s1885 + $0x58] sm:$0xff]
  %v1898 = vld [vmem:[%s1885 + $0x60] sm:$0xff]
  %v1899 = vld [vmem:[%s1885 + $0x68] sm:$0xff]
  %v1900 = vld [vmem:[%s1885 + $0x70] sm:$0xff]
  %v1901 = vld [vmem:[%s1885 + $0x78] sm:$0xff]
  %v1902 = vld [vmem:[%s1885 + $0x80] sm:$0xff]
  %v1903 = vld [vmem:[%s1885 + $0x88] sm:$0xff]
  %v1904 = vld [vmem:[%s1885 + $0x90] sm:$0xff]
  %v1905 = vld [vmem:[%s1885 + $0x98] sm:$0xff]
  %v1906 = vld [vmem:[%s1885 + $0xa0] sm:$0xff]
  %v1907 = vld [vmem:[%s1885 + $0xa8] sm:$0xff]
  %v1908 = vld [vmem:[%s1885 + $0xb0] sm:$0xff]
  %v1909 = vld [vmem:[%s1885 + $0xb8] sm:$0xff]
  %v1910 = vsel %vm218, %v1821, 0
  %v1912 = vsel %vm218, %v1823, 0
  %v1914 = vsel %vm218, %v1825, 0
  %v1916 = vsel %vm218, %v1827, 0
  %v1918 = vsel %vm218, %v1829, 0
  %v1920 = vsel %vm218, %v1831, 0
  %v1922 = vsel %vm218, %v1833, 0
  %v1924 = vsel %vm218, %v1835, 0
  %v1926 = vsel %vm218, %v1837, 0
  %v1928 = vsel %vm218, %v1839, 0
  %v1930 = vsel %vm218, %v1841, 0
  %v1932 = vsel %vm218, %v1843, 0
  %v1934 = vsel %vm218, %v1845, 0
  %v1936 = vsel %vm218, %v1847, 0
  %v1938 = vsel %vm218, %v1849, 0
  %v1940 = vsel %vm218, %v1851, 0
  %v1942 = vsel %vm218, %v1853, 0
  %v1944 = vsel %vm218, %v1855, 0
  %v1946 = vsel %vm218, %v1857, 0
  %v1948 = vsel %vm218, %v1859, 0
  %v1950 = vsel %vm218, %v1861, 0
  %v1952 = vsel %vm218, %v1863, 0
  %v1954 = vsel %vm218, %v1865, 0
  %v1956 = vsel %vm218, %v1867, 0
  %v1958 = vsel %vm218, %v1869, 0
  %v1960 = vsel %vm218, %v1871, 0
  %v1962 = vsel %vm218, %v1873, 0
  %v1964 = vsel %vm218, %v1875, 0
  %v1966 = vsel %vm218, %v1877, 0
  %v1968 = vsel %vm218, %v1879, 0
  %v1970 = vsel %vm218, %v1881, 0
  %v1973 = vsel %vm218, %v1884, 0
  %1975 = vmatprep.subr.mxu0 %v1887
  %1976 = vmatpush1.msra.mxu0 %v1886
  %1977 = vmatprep.subr.mxu0 %v1889
  %1978 = vmatpush1.msra.mxu0 %v1888
  %1979 = vmatprep.subr.mxu0 %v1891
  %1980 = vmatpush1.msra.mxu0 %v1890
  %1981 = vmatprep.subr.mxu0 %v1893
  %1982 = vmatpush1.msra.mxu0 %v1892
  %1983 = vmatprep.subr.mxu0 %v1895
  %1984 = vmatpush1.msra.mxu0 %v1894
  %1985 = vmatprep.subr.mxu0 %v1897
  %1986 = vmatpush1.msra.mxu0 %v1896
  %1987 = vmatprep.subr.mxu0 %v1899
  %1988 = vmatpush1.msra.mxu0 %v1898
  %1989 = vmatprep.subr.mxu0 %v1901
  %1990 = vmatpush1.msra.mxu0 %v1900
  %1991 = vmatprep.subr.mxu0 %v1903
  %1992 = vmatpush1.msra.mxu0 %v1902
  %1993 = vmatprep.subr.mxu0 %v1905
  %1994 = vmatpush1.msra.mxu0 %v1904
  %1995 = vmatprep.subr.mxu0 %v1907
  %1996 = vmatpush1.msra.mxu0 %v1906
  %1997 = vmatprep.subr.mxu0 %v1909
  %1998 = vmatpush1.msra.mxu0 %v1908
  %1999 = vmatprep.subr.mxu0 0.0
  %2000 = vmatpush1.msra.mxu0 0.0
  %2001 = vmatprep.subr.mxu0 0.0
  %2002 = vmatpush1.msra.mxu0 0.0
  %2003 = vmatprep.subr.mxu0 0.0
  %2004 = vmatpush1.msra.mxu0 0.0
  %2005 = vmatprep.subr.mxu0 0.0
  %2006 = vmatpush1.msra.mxu0 0.0
  %2007 = vmatprep.subr.mxu0 0.0
  %2008 = vmatpush1.msra.mxu0 0.0
  %2009 = vmatprep.subr.mxu0 0.0
  %2010 = vmatpush1.msra.mxu0 0.0
  %2011 = vmatprep.subr.mxu0 0.0
  %2012 = vmatpush1.msra.mxu0 0.0
  %2013 = vmatprep.subr.mxu0 0.0
  %2014 = vmatpush1.msra.mxu0 0.0
  %2015 = vmatprep.subr.mxu0 0.0
  %2016 = vmatpush1.msra.mxu0 0.0
  %2017 = vmatprep.subr.mxu0 0.0
  %2018 = vmatpush1.msra.mxu0 0.0
  %2019 = vmatprep.subr.mxu0 0.0
  %2020 = vmatpush1.msra.mxu0 0.0
  %2021 = vmatprep.subr.mxu0 0.0
  %2022 = vmatpush1.msra.mxu0 0.0
  %2023 = vmatprep.subr.mxu0 0.0
  %2024 = vmatpush1.msra.mxu0 0.0
  %2025 = vmatprep.subr.mxu0 0.0
  %2026 = vmatpush1.msra.mxu0 0.0
  %2027 = vmatprep.subr.mxu0 0.0
  %2028 = vmatpush1.msra.mxu0 0.0
  %2029 = vmatprep.subr.mxu0 0.0
  %2030 = vmatpush1.msra.mxu0 0.0
  %2031 = vmatprep.subr.mxu0 0.0
  %2032 = vmatpush1.msra.mxu0 0.0
  %2033 = vmatprep.subr.mxu0 0.0
  %2034 = vmatpush1.msra.mxu0 0.0
  %2035 = vmatprep.subr.mxu0 0.0
  %2036 = vmatpush1.msra.mxu0 0.0
  %2037 = vmatprep.subr.mxu0 0.0
  %2038 = vmatpush1.msra.mxu0 0.0
  %2039 = vmatprep.mubr.f32.mxu0 0.0
  %2040 = vmatmul.mubr.f32.gmra.mrb[0].mxu0 %v1910
  %v2041 = vpop.f32.mrb[0].mxu0
  %v2042 = vadd.f32 0.0, %v2041
  %v2043 = vpop.f32.mrb[0].mxu0
  %v2044 = vadd.f32 0.0, %v2043
  %2045 = vmatprep.mubr.f32.mxu0 0.0
  %2046 = vmatmul.mubr.f32.gmra.mrb[0].mxu0 %v1912
  %v2047 = vpop.f32.mrb[0].mxu0
  %v2048 = vadd.f32 0.0, %v2047
  %v2049 = vpop.f32.mrb[0].mxu0
  %v2050 = vadd.f32 0.0, %v2049
  %2051 = vmatprep.mubr.f32.mxu0 0.0
  %2052 = vmatmul.mubr.f32.gmra.mrb[0].mxu0 %v1914
  %v2053 = vpop.f32.mrb[0].mxu0
  %v2054 = vadd.f32 0.0, %v2053
  %v2055 = vpop.f32.mrb[0].mxu0
  %v2056 = vadd.f32 0.0, %v2055
  %2057 = vmatprep.mubr.f32.mxu0 0.0
  %2058 = vmatmul.mubr.f32.gmra.mrb[0].mxu0 %v1916
  %v2059 = vpop.f32.mrb[0].mxu0
  %v2060 = vadd.f32 0.0, %v2059
  %v2061 = vpop.f32.mrb[0].mxu0
  %v2062 = vadd.f32 0.0, %v2061
  %2063 = vmatprep.mubr.f32.mxu0 0.0
  %2064 = vmatmul.mubr.f32.gmra.mrb[0].mxu0 %v1918
  %v2065 = vpop.f32.mrb[0].mxu0
  %v2066 = vadd.f32 0.0, %v2065
  %v2067 = vpop.f32.mrb[0].mxu0
  %v2068 = vadd.f32 0.0, %v2067
  %2069 = vmatprep.mubr.f32.mxu0 0.0
  %2070 = vmatmul.mubr.f32.gmra.mrb[0].mxu0 %v1920
  %v2071 = vpop.f32.mrb[0].mxu0
  %v2072 = vadd.f32 0.0, %v2071
  %v2073 = vpop.f32.mrb[0].mxu0
  %v2074 = vadd.f32 0.0, %v2073
  %2075 = vmatprep.mubr.f32.mxu0 0.0
  %2076 = vmatmul.mubr.f32.gmra.mrb[0].mxu0 %v1922
  %v2077 = vpop.f32.mrb[0].mxu0
  %v2078 = vadd.f32 0.0, %v2077
  %v2079 = vpop.f32.mrb[0].mxu0
  %v2080 = vadd.f32 0.0, %v2079
  %2081 = vmatprep.mubr.f32.mxu0 0.0
  %2082 = vmatmul.mubr.f32.gmra.mrb[0].mxu0 %v1924
  %v2083 = vpop.f32.mrb[0].mxu0
  %v2084 = vadd.f32 0.0, %v2083
  %v2085 = vpop.f32.mrb[0].mxu0
  %v2086 = vadd.f32 0.0, %v2085
  %2087 = vmatprep.mubr.f32.mxu0 0.0
  %2088 = vmatmul.mubr.f32.gmra.mrb[0].mxu0 %v1926
  %v2089 = vpop.f32.mrb[0].mxu0
  %v2090 = vadd.f32 0.0, %v2089
  %v2091 = vpop.f32.mrb[0].mxu0
  %v2092 = vadd.f32 0.0, %v2091
  %2093 = vmatprep.mubr.f32.mxu0 0.0
  %2094 = vmatmul.mubr.f32.gmra.mrb[0].mxu0 %v1928
  %v2095 = vpop.f32.mrb[0].mxu0
  %v2096 = vadd.f32 0.0, %v2095
  %v2097 = vpop.f32.mrb[0].mxu0
  %v2098 = vadd.f32 0.0, %v2097
  %2099 = vmatprep.mubr.f32.mxu0 0.0
  %2100 = vmatmul.mubr.f32.gmra.mrb[0].mxu0 %v1930
  %v2101 = vpop.f32.mrb[0].mxu0
  %v2102 = vadd.f32 0.0, %v2101
  %v2103 = vpop.f32.mrb[0].mxu0
  %v2104 = vadd.f32 0.0, %v2103
  %2105 = vmatprep.mubr.f32.mxu0 0.0
  %2106 = vmatmul.mubr.f32.gmra.mrb[0].mxu0 %v1932
  %v2107 = vpop.f32.mrb[0].mxu0
  %v2108 = vadd.f32 0.0, %v2107
  %v2109 = vpop.f32.mrb[0].mxu0
  %v2110 = vadd.f32 0.0, %v2109
  %2111 = vmatprep.mubr.f32.mxu0 0.0
  %2112 = vmatmul.mubr.f32.gmra.mrb[0].mxu0 %v1934
  %v2113 = vpop.f32.mrb[0].mxu0
  %v2114 = vadd.f32 0.0, %v2113
  %v2115 = vpop.f32.mrb[0].mxu0
  %v2116 = vadd.f32 0.0, %v2115
  %2117 = vmatprep.mubr.f32.mxu0 0.0
  %2118 = vmatmul.mubr.f32.gmra.mrb[0].mxu0 %v1936
  %v2119 = vpop.f32.mrb[0].mxu0
  %v2120 = vadd.f32 0.0, %v2119
  %v2121 = vpop.f32.mrb[0].mxu0
  %v2122 = vadd.f32 0.0, %v2121
  %2123 = vmatprep.mubr.f32.mxu0 0.0
  %2124 = vmatmul.mubr.f32.gmra.mrb[0].mxu0 %v1938
  %v2125 = vpop.f32.mrb[0].mxu0
  %v2126 = vadd.f32 0.0, %v2125
  %v2127 = vpop.f32.mrb[0].mxu0
  %v2128 = vadd.f32 0.0, %v2127
  %2129 = vmatprep.mubr.f32.mxu0 0.0
  %2130 = vmatmul.mubr.f32.gmra.mrb[0].mxu0 %v1940
  %v2131 = vpop.f32.mrb[0].mxu0
  %v2132 = vadd.f32 0.0, %v2131
  %v2133 = vpop.f32.mrb[0].mxu0
  %v2134 = vadd.f32 0.0, %v2133
  %2135 = vmatprep.mubr.f32.mxu0 0.0
  %2136 = vmatmul.mubr.f32.gmra.mrb[0].mxu0 %v1942
  %v2137 = vpop.f32.mrb[0].mxu0
  %v2138 = vadd.f32 0.0, %v2137
  %v2139 = vpop.f32.mrb[0].mxu0
  %v2140 = vadd.f32 0.0, %v2139
  %2141 = vmatprep.mubr.f32.mxu0 0.0
  %2142 = vmatmul.mubr.f32.gmra.mrb[0].mxu0 %v1944
  %v2143 = vpop.f32.mrb[0].mxu0
  %v2144 = vadd.f32 0.0, %v2143
  %v2145 = vpop.f32.mrb[0].mxu0
  %v2146 = vadd.f32 0.0, %v2145
  %2147 = vmatprep.mubr.f32.mxu0 0.0
  %2148 = vmatmul.mubr.f32.gmra.mrb[0].mxu0 %v1946
  %v2149 = vpop.f32.mrb[0].mxu0
  %v2150 = vadd.f32 0.0, %v2149
  %v2151 = vpop.f32.mrb[0].mxu0
  %v2152 = vadd.f32 0.0, %v2151
  %2153 = vmatprep.mubr.f32.mxu0 0.0
  %2154 = vmatmul.mubr.f32.gmra.mrb[0].mxu0 %v1948
  %v2155 = vpop.f32.mrb[0].mxu0
  %v2156 = vadd.f32 0.0, %v2155
  %v2157 = vpop.f32.mrb[0].mxu0
  %v2158 = vadd.f32 0.0, %v2157
  %2159 = vmatprep.mubr.f32.mxu0 0.0
  %2160 = vmatmul.mubr.f32.gmra.mrb[0].mxu0 %v1950
  %v2161 = vpop.f32.mrb[0].mxu0
  %v2162 = vadd.f32 0.0, %v2161
  %v2163 = vpop.f32.mrb[0].mxu0
  %v2164 = vadd.f32 0.0, %v2163
  %2165 = vmatprep.mubr.f32.mxu0 0.0
  %2166 = vmatmul.mubr.f32.gmra.mrb[0].mxu0 %v1952
  %v2167 = vpop.f32.mrb[0].mxu0
  %v2168 = vadd.f32 0.0, %v2167
  %v2169 = vpop.f32.mrb[0].mxu0
  %v2170 = vadd.f32 0.0, %v2169
  %2171 = vmatprep.mubr.f32.mxu0 0.0
  %2172 = vmatmul.mubr.f32.gmra.mrb[0].mxu0 %v1954
  %v2173 = vpop.f32.mrb[0].mxu0
  %v2174 = vadd.f32 0.0, %v2173
  %v2175 = vpop.f32.mrb[0].mxu0
  %v2176 = vadd.f32 0.0, %v2175
  %2177 = vmatprep.mubr.f32.mxu0 0.0
  %2178 = vmatmul.mubr.f32.gmra.mrb[0].mxu0 %v1956
  %v2179 = vpop.f32.mrb[0].mxu0
  %v2180 = vadd.f32 0.0, %v2179
  %v2181 = vpop.f32.mrb[0].mxu0
  %v2182 = vadd.f32 0.0, %v2181
  %2183 = vmatprep.mubr.f32.mxu0 0.0
  %2184 = vmatmul.mubr.f32.gmra.mrb[0].mxu0 %v1958
  %v2185 = vpop.f32.mrb[0].mxu0
  %v2186 = vadd.f32 0.0, %v2185
  %v2187 = vpop.f32.mrb[0].mxu0
  %v2188 = vadd.f32 0.0, %v2187
  %2189 = vmatprep.mubr.f32.mxu0 0.0
  %2190 = vmatmul.mubr.f32.gmra.mrb[0].mxu0 %v1960
  %v2191 = vpop.f32.mrb[0].mxu0
  %v2192 = vadd.f32 0.0, %v2191
  %v2193 = vpop.f32.mrb[0].mxu0
  %v2194 = vadd.f32 0.0, %v2193
  %2195 = vmatprep.mubr.f32.mxu0 0.0
  %2196 = vmatmul.mubr.f32.gmra.mrb[0].mxu0 %v1962
  %v2197 = vpop.f32.mrb[0].mxu0
  %v2198 = vadd.f32 0.0, %v2197
  %v2199 = vpop.f32.mrb[0].mxu0
  %v2200 = vadd.f32 0.0, %v2199
  %2201 = vmatprep.mubr.f32.mxu0 0.0
  %2202 = vmatmul.mubr.f32.gmra.mrb[0].mxu0 %v1964
  %v2203 = vpop.f32.mrb[0].mxu0
  %v2204 = vadd.f32 0.0, %v2203
  %v2205 = vpop.f32.mrb[0].mxu0
  %v2206 = vadd.f32 0.0, %v2205
  %2207 = vmatprep.mubr.f32.mxu0 0.0
  %2208 = vmatmul.mubr.f32.gmra.mrb[0].mxu0 %v1966
  %v2209 = vpop.f32.mrb[0].mxu0
  %v2210 = vadd.f32 0.0, %v2209
  %v2211 = vpop.f32.mrb[0].mxu0
  %v2212 = vadd.f32 0.0, %v2211
  %2213 = vmatprep.mubr.f32.mxu0 0.0
  %2214 = vmatmul.mubr.f32.gmra.mrb[0].mxu0 %v1968
  %v2215 = vpop.f32.mrb[0].mxu0
  %v2216 = vadd.f32 0.0, %v2215
  %v2217 = vpop.f32.mrb[0].mxu0
  %v2218 = vadd.f32 0.0, %v2217
  %2219 = vmatprep.mubr.f32.mxu0 0.0
  %2220 = vmatmul.mubr.f32.gmra.mrb[0].mxu0 %v1970
  %v2221 = vpop.f32.mrb[0].mxu0
  %v2222 = vadd.f32 0.0, %v2221
  %v2223 = vpop.f32.mrb[0].mxu0
  %v2224 = vadd.f32 0.0, %v2223
  %2225 = vmatprep.mubr.f32.mxu0 0.0
  %2226 = vmatmul.mubr.f32.gmra.mrb[0].mxu0 %v1973
  %v2227 = vpop.f32.mrb[0].mxu0
  %v2228 = vadd.f32 0.0, %v2227
  %v2229 = vpop.f32.mrb[0].mxu0
  %v2230 = vadd.f32 0.0, %v2229
  %2231 = vdwg.mxu0
  %v2232 = vadd.f32 %v1754, %v2042
  %v2233 = vadd.f32 %v1755, %v2044
  %v2234 = vadd.f32 %v1756, %v2048
  %v2235 = vadd.f32 %v1757, %v2050
  %v2236 = vadd.f32 %v1758, %v2054
  %v2237 = vadd.f32 %v1759, %v2056
  %v2238 = vadd.f32 %v1760, %v2060
  %v2239 = vadd.f32 %v1761, %v2062
  %v2240 = vadd.f32 %v1762, %v2066
  %v2241 = vadd.f32 %v1763, %v2068
  %v2242 = vadd.f32 %v1764, %v2072
  %v2243 = vadd.f32 %v1765, %v2074
  %v2244 = vadd.f32 %v1766, %v2078
  %v2245 = vadd.f32 %v1767, %v2080
  %v2246 = vadd.f32 %v1768, %v2084
  %v2247 = vadd.f32 %v1769, %v2086
  %v2248 = vadd.f32 %v1770, %v2090
  %v2249 = vadd.f32 %v1771, %v2092
  %v2250 = vadd.f32 %v1772, %v2096
  %v2251 = vadd.f32 %v1773, %v2098
  %v2252 = vadd.f32 %v1774, %v2102
  %v2253 = vadd.f32 %v1775, %v2104
  %v2254 = vadd.f32 %v1776, %v2108
  %v2255 = vadd.f32 %v1777, %v2110
  %v2256 = vadd.f32 %v1778, %v2114
  %v2257 = vadd.f32 %v1779, %v2116
  %v2258 = vadd.f32 %v1780, %v2120
  %v2259 = vadd.f32 %v1781, %v2122
  %v2260 = vadd.f32 %v1782, %v2126
  %v2261 = vadd.f32 %v1783, %v2128
  %v2262 = vadd.f32 %v1784, %v2132
  %v2263 = vadd.f32 %v1785, %v2134
  %v2264 = vadd.f32 %v1786, %v2138
  %v2265 = vadd.f32 %v1787, %v2140
  %v2266 = vadd.f32 %v1788, %v2144
  %v2267 = vadd.f32 %v1789, %v2146
  %v2268 = vadd.f32 %v1790, %v2150
  %v2269 = vadd.f32 %v1791, %v2152
  %v2270 = vadd.f32 %v1792, %v2156
  %v2271 = vadd.f32 %v1793, %v2158
  %v2272 = vadd.f32 %v1794, %v2162
  %v2273 = vadd.f32 %v1795, %v2164
  %v2274 = vadd.f32 %v1796, %v2168
  %v2275 = vadd.f32 %v1797, %v2170
  %v2276 = vadd.f32 %v1798, %v2174
  %v2277 = vadd.f32 %v1799, %v2176
  %v2278 = vadd.f32 %v1800, %v2180
  %v2279 = vadd.f32 %v1801, %v2182
  %v2280 = vadd.f32 %v1802, %v2186
  %v2281 = vadd.f32 %v1803, %v2188
  %v2282 = vadd.f32 %v1804, %v2192
  %v2283 = vadd.f32 %v1805, %v2194
  %v2284 = vadd.f32 %v1806, %v2198
  %v2285 = vadd.f32 %v1807, %v2200
  %v2286 = vadd.f32 %v1808, %v2204
  %v2287 = vadd.f32 %v1809, %v2206
  %v2288 = vadd.f32 %v1810, %v2210
  %v2289 = vadd.f32 %v1811, %v2212
  %v2290 = vadd.f32 %v1812, %v2216
  %v2291 = vadd.f32 %v1813, %v2218
  %v2292 = vadd.f32 %v1814, %v2222
  %v2293 = vadd.f32 %v1815, %v2224
  %v2294 = vadd.f32 %v1816, %v2228
  %v2295 = vadd.f32 %v1817, %v2230
  %v2360 = vrot.slane %v2232, 1
  %v2361 = vrot.slane %v2234, 1
  %v2362 = vsel %vm126, %v2360, %v2361
  %v2363 = vrot.slane %v2233, 1
  %v2364 = vrot.slane %v2235, 1
  %v2365 = vsel %vm126, %v2363, %v2364
  %v2366 = vrot.slane %v2236, 1
  %v2367 = vsel %vm126, %v2361, %v2366
  %v2368 = vrot.slane %v2237, 1
  %v2369 = vsel %vm126, %v2364, %v2368
  %v2370 = vrot.slane %v2238, 1
  %v2371 = vsel %vm126, %v2366, %v2370
  %v2372 = vrot.slane %v2239, 1
  %v2373 = vsel %vm126, %v2368, %v2372
  %v2374 = vrot.slane %v2240, 1
  %v2375 = vsel %vm126, %v2370, %v2374
  %v2376 = vrot.slane %v2241, 1
  %v2377 = vsel %vm126, %v2372, %v2376
  %v2378 = vrot.slane %v2242, 1
  %v2379 = vsel %vm126, %v2374, %v2378
  %v2380 = vrot.slane %v2243, 1
  %v2381 = vsel %vm126, %v2376, %v2380
  %v2382 = vrot.slane %v2244, 1
  %v2383 = vsel %vm126, %v2378, %v2382
  %v2384 = vrot.slane %v2245, 1
  %v2385 = vsel %vm126, %v2380, %v2384
  %v2386 = vrot.slane %v2246, 1
  %v2387 = vsel %vm126, %v2382, %v2386
  %v2388 = vrot.slane %v2247, 1
  %v2389 = vsel %vm126, %v2384, %v2388
  %v2390 = vrot.slane %v2248, 1
  %v2391 = vsel %vm126, %v2386, %v2390
  %v2392 = vrot.slane %v2249, 1
  %v2393 = vsel %vm126, %v2388, %v2392
  %v2394 = vrot.slane %v2250, 1
  %v2395 = vsel %vm126, %v2390, %v2394
  %v2396 = vrot.slane %v2251, 1
  %v2397 = vsel %vm126, %v2392, %v2396
  %v2398 = vrot.slane %v2252, 1
  %v2399 = vsel %vm126, %v2394, %v2398
  %v2400 = vrot.slane %v2253, 1
  %v2401 = vsel %vm126, %v2396, %v2400
  %v2402 = vrot.slane %v2254, 1
  %v2403 = vsel %vm126, %v2398, %v2402
  %v2404 = vrot.slane %v2255, 1
  %v2405 = vsel %vm126, %v2400, %v2404
  %v2406 = vrot.slane %v2256, 1
  %v2407 = vsel %vm126, %v2402, %v2406
  %v2408 = vrot.slane %v2257, 1
  %v2409 = vsel %vm126, %v2404, %v2408
  %v2410 = vrot.slane %v2258, 1
  %v2411 = vsel %vm126, %v2406, %v2410
  %v2412 = vrot.slane %v2259, 1
  %v2413 = vsel %vm126, %v2408, %v2412
  %v2414 = vrot.slane %v2260, 1
  %v2415 = vsel %vm126, %v2410, %v2414
  %v2416 = vrot.slane %v2261, 1
  %v2417 = vsel %vm126, %v2412, %v2416
  %v2418 = vrot.slane %v2262, 1
  %v2419 = vsel %vm126, %v2414, %v2418
  %v2420 = vrot.slane %v2263, 1
  %v2421 = vsel %vm126, %v2416, %v2420
  %v2422 = vrot.slane %v2264, 1
  %v2423 = vsel %vm126, %v2418, %v2422
  %v2424 = vrot.slane %v2265, 1
  %v2425 = vsel %vm126, %v2420, %v2424
  %v2426 = vrot.slane %v2266, 1
  %v2427 = vsel %vm126, %v2422, %v2426
  %v2428 = vrot.slane %v2267, 1
  %v2429 = vsel %vm126, %v2424, %v2428
  %v2430 = vrot.slane %v2268, 1
  %v2431 = vsel %vm126, %v2426, %v2430
  %v2432 = vrot.slane %v2269, 1
  %v2433 = vsel %vm126, %v2428, %v2432
  %v2434 = vrot.slane %v2270, 1
  %v2435 = vsel %vm126, %v2430, %v2434
  %v2436 = vrot.slane %v2271, 1
  %v2437 = vsel %vm126, %v2432, %v2436
  %v2438 = vrot.slane %v2272, 1
  %v2439 = vsel %vm126, %v2434, %v2438
  %v2440 = vrot.slane %v2273, 1
  %v2441 = vsel %vm126, %v2436, %v2440
  %v2442 = vrot.slane %v2274, 1
  %v2443 = vsel %vm126, %v2438, %v2442
  %v2444 = vrot.slane %v2275, 1
  %v2445 = vsel %vm126, %v2440, %v2444
  %v2446 = vrot.slane %v2276, 1
  %v2447 = vsel %vm126, %v2442, %v2446
  %v2448 = vrot.slane %v2277, 1
  %v2449 = vsel %vm126, %v2444, %v2448
  %v2450 = vrot.slane %v2278, 1
  %v2451 = vsel %vm126, %v2446, %v2450
  %v2452 = vrot.slane %v2279, 1
  %v2453 = vsel %vm126, %v2448, %v2452
  %v2454 = vrot.slane %v2280, 1
  %v2455 = vsel %vm126, %v2450, %v2454
  %v2456 = vrot.slane %v2281, 1
  %v2457 = vsel %vm126, %v2452, %v2456
  %v2458 = vrot.slane %v2282, 1
  %v2459 = vsel %vm126, %v2454, %v2458
  %v2460 = vrot.slane %v2283, 1
  %v2461 = vsel %vm126, %v2456, %v2460
  %v2462 = vrot.slane %v2284, 1
  %v2463 = vsel %vm126, %v2458, %v2462
  %v2464 = vrot.slane %v2285, 1
  %v2465 = vsel %vm126, %v2460, %v2464
  %v2466 = vrot.slane %v2286, 1
  %v2467 = vsel %vm126, %v2462, %v2466
  %v2468 = vrot.slane %v2287, 1
  %v2469 = vsel %vm126, %v2464, %v2468
  %v2470 = vrot.slane %v2288, 1
  %v2471 = vsel %vm126, %v2466, %v2470
  %v2472 = vrot.slane %v2289, 1
  %v2473 = vsel %vm126, %v2468, %v2472
  %v2474 = vrot.slane %v2290, 1
  %v2475 = vsel %vm126, %v2470, %v2474
  %v2476 = vrot.slane %v2291, 1
  %v2477 = vsel %vm126, %v2472, %v2476
  %v2478 = vrot.slane %v2292, 1
  %v2479 = vsel %vm126, %v2474, %v2478
  %v2480 = vrot.slane %v2293, 1
  %v2481 = vsel %vm126, %v2476, %v2480
  %v2482 = vrot.slane %v2294, 1
  %v2483 = vsel %vm126, %v2478, %v2482
  %v2484 = vrot.slane %v2295, 1
  %v2485 = vsel %vm126, %v2480, %v2484
  %v2552 = vsel %vm126, %v2482, %v2360
  %v2553 = vsel %vm126, %v2484, %v2363
  %v2554 = vmax.f32 %v2232, %v2362
  %v2555 = vmax.f32 %v2233, %v2365
  %v2556 = vmax.f32 %v2234, %v2367
  %v2557 = vmax.f32 %v2235, %v2369
  %v2558 = vmax.f32 %v2236, %v2371
  %v2559 = vmax.f32 %v2237, %v2373
  %v2560 = vmax.f32 %v2238, %v2375
  %v2561 = vmax.f32 %v2239, %v2377
  %v2562 = vmax.f32 %v2240, %v2379
  %v2563 = vmax.f32 %v2241, %v2381
  %v2564 = vmax.f32 %v2242, %v2383
  %v2565 = vmax.f32 %v2243, %v2385
  %v2566 = vmax.f32 %v2244, %v2387
  %v2567 = vmax.f32 %v2245, %v2389
  %v2568 = vmax.f32 %v2246, %v2391
  %v2569 = vmax.f32 %v2247, %v2393
  %v2570 = vmax.f32 %v2248, %v2395
  %v2571 = vmax.f32 %v2249, %v2397
  %v2572 = vmax.f32 %v2250, %v2399
  %v2573 = vmax.f32 %v2251, %v2401
  %v2574 = vmax.f32 %v2252, %v2403
  %v2575 = vmax.f32 %v2253, %v2405
  %v2576 = vmax.f32 %v2254, %v2407
  %v2577 = vmax.f32 %v2255, %v2409
  %v2578 = vmax.f32 %v2256, %v2411
  %v2579 = vmax.f32 %v2257, %v2413
  %v2580 = vmax.f32 %v2258, %v2415
  %v2581 = vmax.f32 %v2259, %v2417
  %v2582 = vmax.f32 %v2260, %v2419
  %v2583 = vmax.f32 %v2261, %v2421
  %v2584 = vmax.f32 %v2262, %v2423
  %v2585 = vmax.f32 %v2263, %v2425
  %v2586 = vmax.f32 %v2264, %v2427
  %v2587 = vmax.f32 %v2265, %v2429
  %v2588 = vmax.f32 %v2266, %v2431
  %v2589 = vmax.f32 %v2267, %v2433
  %v2590 = vmax.f32 %v2268, %v2435
  %v2591 = vmax.f32 %v2269, %v2437
  %v2592 = vmax.f32 %v2270, %v2439
  %v2593 = vmax.f32 %v2271, %v2441
  %v2594 = vmax.f32 %v2272, %v2443
  %v2595 = vmax.f32 %v2273, %v2445
  %v2596 = vmax.f32 %v2274, %v2447
  %v2597 = vmax.f32 %v2275, %v2449
  %v2598 = vmax.f32 %v2276, %v2451
  %v2599 = vmax.f32 %v2277, %v2453
  %v2600 = vmax.f32 %v2278, %v2455
  %v2601 = vmax.f32 %v2279, %v2457
  %v2602 = vmax.f32 %v2280, %v2459
  %v2603 = vmax.f32 %v2281, %v2461
  %v2604 = vmax.f32 %v2282, %v2463
  %v2605 = vmax.f32 %v2283, %v2465
  %v2606 = vmax.f32 %v2284, %v2467
  %v2607 = vmax.f32 %v2285, %v2469
  %v2608 = vmax.f32 %v2286, %v2471
  %v2609 = vmax.f32 %v2287, %v2473
  %v2610 = vmax.f32 %v2288, %v2475
  %v2611 = vmax.f32 %v2289, %v2477
  %v2612 = vmax.f32 %v2290, %v2479
  %v2613 = vmax.f32 %v2291, %v2481
  %v2614 = vmax.f32 %v2292, %v2483
  %v2615 = vmax.f32 %v2293, %v2485
  %v2616 = vmax.f32 %v2294, %v2552
  %v2617 = vmax.f32 %v2295, %v2553
  %2682 = vrot.lane.b32.xlu0 %v2554, 122
  %v2683 = vpop.permute.xlu0 %2682
  %2684 = vrot.lane.b32.xlu0 %v2555, 122
  %v2685 = vpop.permute.xlu0 %2684
  %2686 = vrot.lane.b32.xlu0 %v2556, 122
  %v2687 = vpop.permute.xlu0 %2686
  %2688 = vrot.lane.b32.xlu0 %v2557, 122
  %v2689 = vpop.permute.xlu0 %2688
  %2690 = vrot.lane.b32.xlu0 %v2558, 122
  %v2691 = vpop.permute.xlu0 %2690
  %2692 = vrot.lane.b32.xlu0 %v2559, 122
  %v2693 = vpop.permute.xlu0 %2692
  %2694 = vrot.lane.b32.xlu0 %v2560, 122
  %v2695 = vpop.permute.xlu0 %2694
  %2696 = vrot.lane.b32.xlu0 %v2561, 122
  %v2697 = vpop.permute.xlu0 %2696
  %2698 = vrot.lane.b32.xlu0 %v2562, 122
  %v2699 = vpop.permute.xlu0 %2698
  %2700 = vrot.lane.b32.xlu0 %v2563, 122
  %v2701 = vpop.permute.xlu0 %2700
  %2702 = vrot.lane.b32.xlu0 %v2564, 122
  %v2703 = vpop.permute.xlu0 %2702
  %2704 = vrot.lane.b32.xlu0 %v2565, 122
  %v2705 = vpop.permute.xlu0 %2704
  %2706 = vrot.lane.b32.xlu0 %v2566, 122
  %v2707 = vpop.permute.xlu0 %2706
  %2708 = vrot.lane.b32.xlu0 %v2567, 122
  %v2709 = vpop.permute.xlu0 %2708
  %2710 = vrot.lane.b32.xlu0 %v2568, 122
  %v2711 = vpop.permute.xlu0 %2710
  %2712 = vrot.lane.b32.xlu0 %v2569, 122
  %v2713 = vpop.permute.xlu0 %2712
  %2714 = vrot.lane.b32.xlu0 %v2570, 122
  %v2715 = vpop.permute.xlu0 %2714
  %2716 = vrot.lane.b32.xlu0 %v2571, 122
  %v2717 = vpop.permute.xlu0 %2716
  %2718 = vrot.lane.b32.xlu0 %v2572, 122
  %v2719 = vpop.permute.xlu0 %2718
  %2720 = vrot.lane.b32.xlu0 %v2573, 122
  %v2721 = vpop.permute.xlu0 %2720
  %2722 = vrot.lane.b32.xlu0 %v2574, 122
  %v2723 = vpop.permute.xlu0 %2722
  %2724 = vrot.lane.b32.xlu0 %v2575, 122
  %v2725 = vpop.permute.xlu0 %2724
  %2726 = vrot.lane.b32.xlu0 %v2576, 122
  %v2727 = vpop.permute.xlu0 %2726
  %2728 = vrot.lane.b32.xlu0 %v2577, 122
  %v2729 = vpop.permute.xlu0 %2728
  %2730 = vrot.lane.b32.xlu0 %v2578, 122
  %v2731 = vpop.permute.xlu0 %2730
  %2732 = vrot.lane.b32.xlu0 %v2579, 122
  %v2733 = vpop.permute.xlu0 %2732
  %2734 = vrot.lane.b32.xlu0 %v2580, 122
  %v2735 = vpop.permute.xlu0 %2734
  %2736 = vrot.lane.b32.xlu0 %v2581, 122
  %v2737 = vpop.permute.xlu0 %2736
  %2738 = vrot.lane.b32.xlu0 %v2582, 122
  %v2739 = vpop.permute.xlu0 %2738
  %2740 = vrot.lane.b32.xlu0 %v2583, 122
  %v2741 = vpop.permute.xlu0 %2740
  %2742 = vrot.lane.b32.xlu0 %v2584, 122
  %v2743 = vpop.permute.xlu0 %2742
  %2744 = vrot.lane.b32.xlu0 %v2585, 122
  %v2745 = vpop.permute.xlu0 %2744
  %2746 = vrot.lane.b32.xlu0 %v2586, 122
  %v2747 = vpop.permute.xlu0 %2746
  %2748 = vrot.lane.b32.xlu0 %v2587, 122
  %v2749 = vpop.permute.xlu0 %2748
  %2750 = vrot.lane.b32.xlu0 %v2588, 122
  %v2751 = vpop.permute.xlu0 %2750
  %2752 = vrot.lane.b32.xlu0 %v2589, 122
  %v2753 = vpop.permute.xlu0 %2752
  %2754 = vrot.lane.b32.xlu0 %v2590, 122
  %v2755 = vpop.permute.xlu0 %2754
  %2756 = vrot.lane.b32.xlu0 %v2591, 122
  %v2757 = vpop.permute.xlu0 %2756
  %2758 = vrot.lane.b32.xlu0 %v2592, 122
  %v2759 = vpop.permute.xlu0 %2758
  %2760 = vrot.lane.b32.xlu0 %v2593, 122
  %v2761 = vpop.permute.xlu0 %2760
  %2762 = vrot.lane.b32.xlu0 %v2594, 122
  %v2763 = vpop.permute.xlu0 %2762
  %2764 = vrot.lane.b32.xlu0 %v2595, 122
  %v2765 = vpop.permute.xlu0 %2764
  %2766 = vrot.lane.b32.xlu0 %v2596, 122
  %v2767 = vpop.permute.xlu0 %2766
  %2768 = vrot.lane.b32.xlu0 %v2597, 122
  %v2769 = vpop.permute.xlu0 %2768
  %2770 = vrot.lane.b32.xlu0 %v2598, 122
  %v2771 = vpop.permute.xlu0 %2770
  %2772 = vrot.lane.b32.xlu0 %v2599, 122
  %v2773 = vpop.permute.xlu0 %2772
  %2774 = vrot.lane.b32.xlu0 %v2600, 122
  %v2775 = vpop.permute.xlu0 %2774
  %2776 = vrot.lane.b32.xlu0 %v2601, 122
  %v2777 = vpop.permute.xlu0 %2776
  %2778 = vrot.lane.b32.xlu0 %v2602, 122
  %v2779 = vpop.permute.xlu0 %2778
  %2780 = vrot.lane.b32.xlu0 %v2603, 122
  %v2781 = vpop.permute.xlu0 %2780
  %2782 = vrot.lane.b32.xlu0 %v2604, 122
  %v2783 = vpop.permute.xlu0 %2782
  %2784 = vrot.lane.b32.xlu0 %v2605, 122
  %v2785 = vpop.permute.xlu0 %2784
  %2786 = vrot.lane.b32.xlu0 %v2606, 122
  %v2787 = vpop.permute.xlu0 %2786
  %2788 = vrot.lane.b32.xlu0 %v2607, 122
  %v2789 = vpop.permute.xlu0 %2788
  %2790 = vrot.lane.b32.xlu0 %v2608, 122
  %v2791 = vpop.permute.xlu0 %2790
  %2792 = vrot.lane.b32.xlu0 %v2609, 122
  %v2793 = vpop.permute.xlu0 %2792
  %2794 = vrot.lane.b32.xlu0 %v2610, 122
  %v2795 = vpop.permute.xlu0 %2794
  %2796 = vrot.lane.b32.xlu0 %v2611, 122
  %v2797 = vpop.permute.xlu0 %2796
  %2798 = vrot.lane.b32.xlu0 %v2612, 122
  %v2799 = vpop.permute.xlu0 %2798
  %2800 = vrot.lane.b32.xlu0 %v2613, 122
  %v2801 = vpop.permute.xlu0 %2800
  %2802 = vrot.lane.b32.xlu0 %v2614, 122
  %v2803 = vpop.permute.xlu0 %2802
  %2804 = vrot.lane.b32.xlu0 %v2615, 122
  %v2805 = vpop.permute.xlu0 %2804
  %2806 = vrot.lane.b32.xlu0 %v2616, 122
  %v2807 = vpop.permute.xlu0 %2806
  %2808 = vrot.lane.b32.xlu0 %v2617, 122
  %v2809 = vpop.permute.xlu0 %2808
  %vm2810 = vcmask 998400
  %v2811 = vsel %vm2810, %v2683, %v2685
  %v2812 = vsel %vm2810, %v2687, %v2689
  %v2813 = vsel %vm2810, %v2691, %v2693
  %v2814 = vsel %vm2810, %v2695, %v2697
  %v2815 = vsel %vm2810, %v2699, %v2701
  %v2816 = vsel %vm2810, %v2703, %v2705
  %v2817 = vsel %vm2810, %v2707, %v2709
  %v2818 = vsel %vm2810, %v2711, %v2713
  %v2819 = vsel %vm2810, %v2715, %v2717
  %v2820 = vsel %vm2810, %v2719, %v2721
  %v2821 = vsel %vm2810, %v2723, %v2725
  %v2822 = vsel %vm2810, %v2727, %v2729
  %v2823 = vsel %vm2810, %v2731, %v2733
  %v2824 = vsel %vm2810, %v2735, %v2737
  %v2825 = vsel %vm2810, %v2739, %v2741
  %v2826 = vsel %vm2810, %v2743, %v2745
  %v2827 = vsel %vm2810, %v2747, %v2749
  %v2828 = vsel %vm2810, %v2751, %v2753
  %v2829 = vsel %vm2810, %v2755, %v2757
  %v2830 = vsel %vm2810, %v2759, %v2761
  %v2831 = vsel %vm2810, %v2763, %v2765
  %v2832 = vsel %vm2810, %v2767, %v2769
  %v2833 = vsel %vm2810, %v2771, %v2773
  %v2834 = vsel %vm2810, %v2775, %v2777
  %v2835 = vsel %vm2810, %v2779, %v2781
  %v2836 = vsel %vm2810, %v2783, %v2785
  %v2837 = vsel %vm2810, %v2787, %v2789
  %v2838 = vsel %vm2810, %v2791, %v2793
  %v2839 = vsel %vm2810, %v2795, %v2797
  %v2840 = vsel %vm2810, %v2799, %v2801
  %v2841 = vsel %vm2810, %v2803, %v2805
  %v2842 = vsel %vm2810, %v2807, %v2809
  %2907 = vrot.lane.b32.xlu0 %v2554, 34
  %v2908 = vpop.permute.xlu0 %2907
  %2909 = vrot.lane.b32.xlu0 %v2556, 34
  %v2910 = vpop.permute.xlu0 %2909
  %2911 = vrot.lane.b32.xlu0 %v2558, 34
  %v2912 = vpop.permute.xlu0 %2911
  %2913 = vrot.lane.b32.xlu0 %v2560, 34
  %v2914 = vpop.permute.xlu0 %2913
  %2915 = vrot.lane.b32.xlu0 %v2562, 34
  %v2916 = vpop.permute.xlu0 %2915
  %2917 = vrot.lane.b32.xlu0 %v2564, 34
  %v2918 = vpop.permute.xlu0 %2917
  %2919 = vrot.lane.b32.xlu0 %v2566, 34
  %v2920 = vpop.permute.xlu0 %2919
  %2921 = vrot.lane.b32.xlu0 %v2568, 34
  %v2922 = vpop.permute.xlu0 %2921
  %2923 = vrot.lane.b32.xlu0 %v2570, 34
  %v2924 = vpop.permute.xlu0 %2923
  %2925 = vrot.lane.b32.xlu0 %v2572, 34
  %v2926 = vpop.permute.xlu0 %2925
  %2927 = vrot.lane.b32.xlu0 %v2574, 34
  %v2928 = vpop.permute.xlu0 %2927
  %2929 = vrot.lane.b32.xlu0 %v2576, 34
  %v2930 = vpop.permute.xlu0 %2929
  %2931 = vrot.lane.b32.xlu0 %v2578, 34
  %v2932 = vpop.permute.xlu0 %2931
  %2933 = vrot.lane.b32.xlu0 %v2580, 34
  %v2934 = vpop.permute.xlu0 %2933
  %2935 = vrot.lane.b32.xlu0 %v2582, 34
  %v2936 = vpop.permute.xlu0 %2935
  %2937 = vrot.lane.b32.xlu0 %v2584, 34
  %v2938 = vpop.permute.xlu0 %2937
  %2939 = vrot.lane.b32.xlu0 %v2586, 34
  %v2940 = vpop.permute.xlu0 %2939
  %2941 = vrot.lane.b32.xlu0 %v2588, 34
  %v2942 = vpop.permute.xlu0 %2941
  %2943 = vrot.lane.b32.xlu0 %v2590, 34
  %v2944 = vpop.permute.xlu0 %2943
  %2945 = vrot.lane.b32.xlu0 %v2592, 34
  %v2946 = vpop.permute.xlu0 %2945
  %2947 = vrot.lane.b32.xlu0 %v2594, 34
  %v2948 = vpop.permute.xlu0 %2947
  %2949 = vrot.lane.b32.xlu0 %v2596, 34
  %v2950 = vpop.permute.xlu0 %2949
  %2951 = vrot.lane.b32.xlu0 %v2598, 34
  %v2952 = vpop.permute.xlu0 %2951
  %2953 = vrot.lane.b32.xlu0 %v2600, 34
  %v2954 = vpop.permute.xlu0 %2953
  %2955 = vrot.lane.b32.xlu0 %v2602, 34
  %v2956 = vpop.permute.xlu0 %2955
  %2957 = vrot.lane.b32.xlu0 %v2604, 34
  %v2958 = vpop.permute.xlu0 %2957
  %2959 = vrot.lane.b32.xlu0 %v2606, 34
  %v2960 = vpop.permute.xlu0 %2959
  %2961 = vrot.lane.b32.xlu0 %v2608, 34
  %v2962 = vpop.permute.xlu0 %2961
  %2963 = vrot.lane.b32.xlu0 %v2610, 34
  %v2964 = vpop.permute.xlu0 %2963
  %2965 = vrot.lane.b32.xlu0 %v2612, 34
  %v2966 = vpop.permute.xlu0 %2965
  %2967 = vrot.lane.b32.xlu0 %v2614, 34
  %v2968 = vpop.permute.xlu0 %2967
  %2969 = vrot.lane.b32.xlu0 %v2616, 34
  %v2970 = vpop.permute.xlu0 %2969
  %vm3003 = vcmask 277504
  %v3004 = vsel %vm3003, %v2685, %v2908
  %v3005 = vsel %vm3003, %v2689, %v2910
  %v3006 = vsel %vm3003, %v2693, %v2912
  %v3007 = vsel %vm3003, %v2697, %v2914
  %v3008 = vsel %vm3003, %v2701, %v2916
  %v3009 = vsel %vm3003, %v2705, %v2918
  %v3010 = vsel %vm3003, %v2709, %v2920
  %v3011 = vsel %vm3003, %v2713, %v2922
  %v3012 = vsel %vm3003, %v2717, %v2924
  %v3013 = vsel %vm3003, %v2721, %v2926
  %v3014 = vsel %vm3003, %v2725, %v2928
  %v3015 = vsel %vm3003, %v2729, %v2930
  %v3016 = vsel %vm3003, %v2733, %v2932
  %v3017 = vsel %vm3003, %v2737, %v2934
  %v3018 = vsel %vm3003, %v2741, %v2936
  %v3019 = vsel %vm3003, %v2745, %v2938
  %v3020 = vsel %vm3003, %v2749, %v2940
  %v3021 = vsel %vm3003, %v2753, %v2942
  %v3022 = vsel %vm3003, %v2757, %v2944
  %v3023 = vsel %vm3003, %v2761, %v2946
  %v3024 = vsel %vm3003, %v2765, %v2948
  %v3025 = vsel %vm3003, %v2769, %v2950
  %v3026 = vsel %vm3003, %v2773, %v2952
  %v3027 = vsel %vm3003, %v2777, %v2954
  %v3028 = vsel %vm3003, %v2781, %v2956
  %v3029 = vsel %vm3003, %v2785, %v2958
  %v3030 = vsel %vm3003, %v2789, %v2960
  %v3031 = vsel %vm3003, %v2793, %v2962
  %v3032 = vsel %vm3003, %v2797, %v2964
  %v3033 = vsel %vm3003, %v2801, %v2966
  %v3034 = vsel %vm3003, %v2805, %v2968
  %v3035 = vsel %vm3003, %v2809, %v2970
  %v3036 = vmax.f32 %v2554, %v2811
  %v3037 = vmax.f32 %v2555, %v3004
  %v3038 = vmax.f32 %v2556, %v2812
  %v3039 = vmax.f32 %v2557, %v3005
  %v3040 = vmax.f32 %v2558, %v2813
  %v3041 = vmax.f32 %v2559, %v3006
  %v3042 = vmax.f32 %v2560, %v2814
  %v3043 = vmax.f32 %v2561, %v3007
  %v3044 = vmax.f32 %v2562, %v2815
  %v3045 = vmax.f32 %v2563, %v3008
  %v3046 = vmax.f32 %v2564, %v2816
  %v3047 = vmax.f32 %v2565, %v3009
  %v3048 = vmax.f32 %v2566, %v2817
  %v3049 = vmax.f32 %v2567, %v3010
  %v3050 = vmax.f32 %v2568, %v2818
  %v3051 = vmax.f32 %v2569, %v3011
  %v3052 = vmax.f32 %v2570, %v2819
  %v3053 = vmax.f32 %v2571, %v3012
  %v3054 = vmax.f32 %v2572, %v2820
  %v3055 = vmax.f32 %v2573, %v3013
  %v3056 = vmax.f32 %v2574, %v2821
  %v3057 = vmax.f32 %v2575, %v3014
  %v3058 = vmax.f32 %v2576, %v2822
  %v3059 = vmax.f32 %v2577, %v3015
  %v3060 = vmax.f32 %v2578, %v2823
  %v3061 = vmax.f32 %v2579, %v3016
  %v3062 = vmax.f32 %v2580, %v2824
  %v3063 = vmax.f32 %v2581, %v3017
  %v3064 = vmax.f32 %v2582, %v2825
  %v3065 = vmax.f32 %v2583, %v3018
  %v3066 = vmax.f32 %v2584, %v2826
  %v3067 = vmax.f32 %v2585, %v3019
  %v3068 = vmax.f32 %v2586, %v2827
  %v3069 = vmax.f32 %v2587, %v3020
  %v3070 = vmax.f32 %v2588, %v2828
  %v3071 = vmax.f32 %v2589, %v3021
  %v3072 = vmax.f32 %v2590, %v2829
  %v3073 = vmax.f32 %v2591, %v3022
  %v3074 = vmax.f32 %v2592, %v2830
  %v3075 = vmax.f32 %v2593, %v3023
  %v3076 = vmax.f32 %v2594, %v2831
  %v3077 = vmax.f32 %v2595, %v3024
  %v3078 = vmax.f32 %v2596, %v2832
  %v3079 = vmax.f32 %v2597, %v3025
  %v3080 = vmax.f32 %v2598, %v2833
  %v3081 = vmax.f32 %v2599, %v3026
  %v3082 = vmax.f32 %v2600, %v2834
  %v3083 = vmax.f32 %v2601, %v3027
  %v3084 = vmax.f32 %v2602, %v2835
  %v3085 = vmax.f32 %v2603, %v3028
  %v3086 = vmax.f32 %v2604, %v2836
  %v3087 = vmax.f32 %v2605, %v3029
  %v3088 = vmax.f32 %v2606, %v2837
  %v3089 = vmax.f32 %v2607, %v3030
  %v3090 = vmax.f32 %v2608, %v2838
  %v3091 = vmax.f32 %v2609, %v3031
  %v3092 = vmax.f32 %v2610, %v2839
  %v3093 = vmax.f32 %v2611, %v3032
  %v3094 = vmax.f32 %v2612, %v2840
  %v3095 = vmax.f32 %v2613, %v3033
  %v3096 = vmax.f32 %v2614, %v2841
  %v3097 = vmax.f32 %v2615, %v3034
  %v3098 = vmax.f32 %v2616, %v2842
  %v3099 = vmax.f32 %v2617, %v3035
  %v3100 = vld [vmem:[%s2] sm:$0x3]
  %v3102 = vlaneseq
  %v3103 = vshrl.u32 %v3102, 7
  %v3104 = vsub.s32 0, %v3103
  %v3105 = vrot.slane %v3100, %v3104
  %v3106 = vlaneseq
  %v3107 = vshrl.u32 %v3106, 7
  %v3108 = vsub.s32 1, %v3107
  %v3109 = vrot.slane %v3100, %v3108
  %v3112 = vadd.f32 %v3036, %v3105
  %v3113 = vadd.f32 %v3037, %v3109
  %v3114 = vadd.f32 %v3038, %v3105
  %v3115 = vadd.f32 %v3039, %v3109
  %v3116 = vadd.f32 %v3040, %v3105
  %v3117 = vadd.f32 %v3041, %v3109
  %v3118 = vadd.f32 %v3042, %v3105
  %v3119 = vadd.f32 %v3043, %v3109
  %v3120 = vadd.f32 %v3044, %v3105
  %v3121 = vadd.f32 %v3045, %v3109
  %v3122 = vadd.f32 %v3046, %v3105
  %v3123 = vadd.f32 %v3047, %v3109
  %v3124 = vadd.f32 %v3048, %v3105
  %v3125 = vadd.f32 %v3049, %v3109
  %v3126 = vadd.f32 %v3050, %v3105
  %v3127 = vadd.f32 %v3051, %v3109
  %v3128 = vadd.f32 %v3052, %v3105
  %v3129 = vadd.f32 %v3053, %v3109
  %v3130 = vadd.f32 %v3054, %v3105
  %v3131 = vadd.f32 %v3055, %v3109
  %v3132 = vadd.f32 %v3056, %v3105
  %v3133 = vadd.f32 %v3057, %v3109
  %v3134 = vadd.f32 %v3058, %v3105
  %v3135 = vadd.f32 %v3059, %v3109
  %v3136 = vadd.f32 %v3060, %v3105
  %v3137 = vadd.f32 %v3061, %v3109
  %v3138 = vadd.f32 %v3062, %v3105
  %v3139 = vadd.f32 %v3063, %v3109
  %v3140 = vadd.f32 %v3064, %v3105
  %v3141 = vadd.f32 %v3065, %v3109
  %v3142 = vadd.f32 %v3066, %v3105
  %v3143 = vadd.f32 %v3067, %v3109
  %v3144 = vadd.f32 %v3068, %v3105
  %v3145 = vadd.f32 %v3069, %v3109
  %v3146 = vadd.f32 %v3070, %v3105
  %v3147 = vadd.f32 %v3071, %v3109
  %v3148 = vadd.f32 %v3072, %v3105
  %v3149 = vadd.f32 %v3073, %v3109
  %v3150 = vadd.f32 %v3074, %v3105
  %v3151 = vadd.f32 %v3075, %v3109
  %v3152 = vadd.f32 %v3076, %v3105
  %v3153 = vadd.f32 %v3077, %v3109
  %v3154 = vadd.f32 %v3078, %v3105
  %v3155 = vadd.f32 %v3079, %v3109
  %v3156 = vadd.f32 %v3080, %v3105
  %v3157 = vadd.f32 %v3081, %v3109
  %v3158 = vadd.f32 %v3082, %v3105
  %v3159 = vadd.f32 %v3083, %v3109
  %v3160 = vadd.f32 %v3084, %v3105
  %v3161 = vadd.f32 %v3085, %v3109
  %v3162 = vadd.f32 %v3086, %v3105
  %v3163 = vadd.f32 %v3087, %v3109
  %v3164 = vadd.f32 %v3088, %v3105
  %v3165 = vadd.f32 %v3089, %v3109
  %v3166 = vadd.f32 %v3090, %v3105
  %v3167 = vadd.f32 %v3091, %v3109
  %v3168 = vadd.f32 %v3092, %v3105
  %v3169 = vadd.f32 %v3093, %v3109
  %v3170 = vadd.f32 %v3094, %v3105
  %v3171 = vadd.f32 %v3095, %v3109
  %v3172 = vadd.f32 %v3096, %v3105
  %v3173 = vadd.f32 %v3097, %v3109
  %v3174 = vadd.f32 %v3098, %v3105
  %v3175 = vadd.f32 %v3099, %v3109
  %v3176 = vmax.f32 %v3112, 0.0
  %v3177 = vmax.f32 %v3113, 0.0
  %v3178 = vmax.f32 %v3114, 0.0
  %v3179 = vmax.f32 %v3115, 0.0
  %v3180 = vmax.f32 %v3116, 0.0
  %v3181 = vmax.f32 %v3117, 0.0
  %v3182 = vmax.f32 %v3118, 0.0
  %v3183 = vmax.f32 %v3119, 0.0
  %v3184 = vmax.f32 %v3120, 0.0
  %v3185 = vmax.f32 %v3121, 0.0
  %v3186 = vmax.f32 %v3122, 0.0
  %v3187 = vmax.f32 %v3123, 0.0
  %v3188 = vmax.f32 %v3124, 0.0
  %v3189 = vmax.f32 %v3125, 0.0
  %v3190 = vmax.f32 %v3126, 0.0
  %v3191 = vmax.f32 %v3127, 0.0
  %v3192 = vmax.f32 %v3128, 0.0
  %v3193 = vmax.f32 %v3129, 0.0
  %v3194 = vmax.f32 %v3130, 0.0
  %v3195 = vmax.f32 %v3131, 0.0
  %v3196 = vmax.f32 %v3132, 0.0
  %v3197 = vmax.f32 %v3133, 0.0
  %v3198 = vmax.f32 %v3134, 0.0
  %v3199 = vmax.f32 %v3135, 0.0
  %v3200 = vmax.f32 %v3136, 0.0
  %v3201 = vmax.f32 %v3137, 0.0
  %v3202 = vmax.f32 %v3138, 0.0
  %v3203 = vmax.f32 %v3139, 0.0
  %v3204 = vmax.f32 %v3140, 0.0
  %v3205 = vmax.f32 %v3141, 0.0
  %v3206 = vmax.f32 %v3142, 0.0
  %v3207 = vmax.f32 %v3143, 0.0
  %v3208 = vmax.f32 %v3144, 0.0
  %v3209 = vmax.f32 %v3145, 0.0
  %v3210 = vmax.f32 %v3146, 0.0
  %v3211 = vmax.f32 %v3147, 0.0
  %v3212 = vmax.f32 %v3148, 0.0
  %v3213 = vmax.f32 %v3149, 0.0
  %v3214 = vmax.f32 %v3150, 0.0
  %v3215 = vmax.f32 %v3151, 0.0
  %v3216 = vmax.f32 %v3152, 0.0
  %v3217 = vmax.f32 %v3153, 0.0
  %v3218 = vmax.f32 %v3154, 0.0
  %v3219 = vmax.f32 %v3155, 0.0
  %v3220 = vmax.f32 %v3156, 0.0
  %v3221 = vmax.f32 %v3157, 0.0
  %v3222 = vmax.f32 %v3158, 0.0
  %v3223 = vmax.f32 %v3159, 0.0
  %v3224 = vmax.f32 %v3160, 0.0
  %v3225 = vmax.f32 %v3161, 0.0
  %v3226 = vmax.f32 %v3162, 0.0
  %v3227 = vmax.f32 %v3163, 0.0
  %v3228 = vmax.f32 %v3164, 0.0
  %v3229 = vmax.f32 %v3165, 0.0
  %v3230 = vmax.f32 %v3166, 0.0
  %v3231 = vmax.f32 %v3167, 0.0
  %v3232 = vmax.f32 %v3168, 0.0
  %v3233 = vmax.f32 %v3169, 0.0
  %v3234 = vmax.f32 %v3170, 0.0
  %v3235 = vmax.f32 %v3171, 0.0
  %v3236 = vmax.f32 %v3172, 0.0
  %v3237 = vmax.f32 %v3173, 0.0
  %v3238 = vmax.f32 %v3174, 0.0
  %v3239 = vmax.f32 %v3175, 0.0
  %v3240 = vld [vmem:[%s3] sm:$0xff]
  %v3241 = vld [vmem:[%s3 + $0x8] sm:$0xff]
  %v3242 = vld [vmem:[%s3 + $0x10] sm:$0xff]
  %v3243 = vld [vmem:[%s3 + $0x18] sm:$0xff]
  %v3244 = vld [vmem:[%s3 + $0x20] sm:$0xff]
  %v3245 = vld [vmem:[%s3 + $0x28] sm:$0xff]
  %v3246 = vld [vmem:[%s3 + $0x30] sm:$0xff]
  %v3247 = vld [vmem:[%s3 + $0x38] sm:$0xff]
  %v3248 = vld [vmem:[%s3 + $0x40] sm:$0xff]
  %v3249 = vld [vmem:[%s3 + $0x48] sm:$0xff]
  %v3250 = vld [vmem:[%s3 + $0x50] sm:$0xff]
  %v3251 = vld [vmem:[%s3 + $0x58] sm:$0xff]
  %v3252 = vld [vmem:[%s3 + $0x60] sm:$0xff]
  %v3253 = vld [vmem:[%s3 + $0x68] sm:$0xff]
  %v3254 = vld [vmem:[%s3 + $0x70] sm:$0xff]
  %v3255 = vld [vmem:[%s3 + $0x78] sm:$0xff]
  %v3256 = vld [vmem:[%s3 + $0x80] sm:$0xff]
  %v3257 = vld [vmem:[%s3 + $0x88] sm:$0xff]
  %v3258 = vld [vmem:[%s3 + $0x90] sm:$0xff]
  %v3259 = vld [vmem:[%s3 + $0x98] sm:$0xff]
  %v3260 = vld [vmem:[%s3 + $0xa0] sm:$0xff]
  %v3261 = vld [vmem:[%s3 + $0xa8] sm:$0xff]
  %v3262 = vld [vmem:[%s3 + $0xb0] sm:$0xff]
  %v3263 = vld [vmem:[%s3 + $0xb8] sm:$0xff]
  %v3264 = vld [vmem:[%s3 + $0xc0] sm:$0xff]
  %v3265 = vld [vmem:[%s3 + $0xc8] sm:$0xff]
  %v3266 = vld [vmem:[%s3 + $0xd0] sm:$0xff]
  %v3267 = vld [vmem:[%s3 + $0xd8] sm:$0xff]
  %v3268 = vld [vmem:[%s3 + $0xe0] sm:$0xff]
  %v3269 = vld [vmem:[%s3 + $0xe8] sm:$0xff]
  %v3270 = vld [vmem:[%s3 + $0xf0] sm:$0xff]
  %v3271 = vld [vmem:[%s3 + $0xf8] sm:$0xff]
  %v3272 = vld [vmem:[%s3 + $0x100] sm:$0xff]
  %v3273 = vld [vmem:[%s3 + $0x108] sm:$0xff]
  %v3274 = vld [vmem:[%s3 + $0x110] sm:$0xff]
  %v3275 = vld [vmem:[%s3 + $0x118] sm:$0xff]
  %v3276 = vld [vmem:[%s3 + $0x120] sm:$0xff]
  %v3277 = vld [vmem:[%s3 + $0x128] sm:$0xff]
  %v3278 = vld [vmem:[%s3 + $0x130] sm:$0xff]
  %v3279 = vld [vmem:[%s3 + $0x138] sm:$0xff]
  %v3280 = vld [vmem:[%s3 + $0x140] sm:$0xff]
  %v3281 = vld [vmem:[%s3 + $0x148] sm:$0xff]
  %v3346 = vrot.slane %v3176, 2
  %v3347 = vrot.slane %v3178, 2
  %v3348 = vsel %vm862, %v3346, %v3347
  %v3349 = vrot.slane %v3177, 2
  %v3350 = vrot.slane %v3179, 2
  %v3351 = vsel %vm862, %v3349, %v3350
  %v3352 = vrot.slane %v3180, 2
  %v3353 = vsel %vm862, %v3347, %v3352
  %v3354 = vrot.slane %v3181, 2
  %v3355 = vsel %vm862, %v3350, %v3354
  %v3356 = vrot.slane %v3182, 2
  %v3357 = vsel %vm862, %v3352, %v3356
  %v3358 = vrot.slane %v3183, 2
  %v3359 = vsel %vm862, %v3354, %v3358
  %v3360 = vrot.slane %v3184, 2
  %v3361 = vsel %vm862, %v3356, %v3360
  %v3362 = vrot.slane %v3185, 2
  %v3363 = vsel %vm862, %v3358, %v3362
  %v3364 = vrot.slane %v3186, 2
  %v3365 = vsel %vm862, %v3360, %v3364
  %v3366 = vrot.slane %v3187, 2
  %v3367 = vsel %vm862, %v3362, %v3366
  %v3368 = vrot.slane %v3188, 2
  %v3369 = vsel %vm862, %v3364, %v3368
  %v3370 = vrot.slane %v3189, 2
  %v3371 = vsel %vm862, %v3366, %v3370
  %v3372 = vrot.slane %v3190, 2
  %v3373 = vsel %vm862, %v3368, %v3372
  %v3374 = vrot.slane %v3191, 2
  %v3375 = vsel %vm862, %v3370, %v3374
  %v3376 = vrot.slane %v3192, 2
  %v3377 = vsel %vm862, %v3372, %v3376
  %v3378 = vrot.slane %v3193, 2
  %v3379 = vsel %vm862, %v3374, %v3378
  %v3380 = vrot.slane %v3194, 2
  %v3381 = vsel %vm862, %v3376, %v3380
  %v3382 = vrot.slane %v3195, 2
  %v3383 = vsel %vm862, %v3378, %v3382
  %v3384 = vrot.slane %v3196, 2
  %v3385 = vsel %vm862, %v3380, %v3384
  %v3386 = vrot.slane %v3197, 2
  %v3387 = vsel %vm862, %v3382, %v3386
  %v3388 = vrot.slane %v3198, 2
  %v3389 = vsel %vm862, %v3384, %v3388
  %v3390 = vrot.slane %v3199, 2
  %v3391 = vsel %vm862, %v3386, %v3390
  %v3392 = vrot.slane %v3200, 2
  %v3393 = vsel %vm862, %v3388, %v3392
  %v3394 = vrot.slane %v3201, 2
  %v3395 = vsel %vm862, %v3390, %v3394
  %v3396 = vrot.slane %v3202, 2
  %v3397 = vsel %vm862, %v3392, %v3396
  %v3398 = vrot.slane %v3203, 2
  %v3399 = vsel %vm862, %v3394, %v3398
  %v3400 = vrot.slane %v3204, 2
  %v3401 = vsel %vm862, %v3396, %v3400
  %v3402 = vrot.slane %v3205, 2
  %v3403 = vsel %vm862, %v3398, %v3402
  %v3404 = vrot.slane %v3206, 2
  %v3405 = vsel %vm862, %v3400, %v3404
  %v3406 = vrot.slane %v3207, 2
  %v3407 = vsel %vm862, %v3402, %v3406
  %v3408 = vrot.slane %v3208, 2
  %v3409 = vsel %vm862, %v3404, %v3408
  %v3410 = vrot.slane %v3209, 2
  %v3411 = vsel %vm862, %v3406, %v3410
  %v3412 = vrot.slane %v3210, 2
  %v3413 = vsel %vm862, %v3408, %v3412
  %v3414 = vrot.slane %v3211, 2
  %v3415 = vsel %vm862, %v3410, %v3414
  %v3416 = vrot.slane %v3212, 2
  %v3417 = vsel %vm862, %v3412, %v3416
  %v3418 = vrot.slane %v3213, 2
  %v3419 = vsel %vm862, %v3414, %v3418
  %v3420 = vrot.slane %v3214, 2
  %v3421 = vsel %vm862, %v3416, %v3420
  %v3422 = vrot.slane %v3215, 2
  %v3423 = vsel %vm862, %v3418, %v3422
  %v3424 = vrot.slane %v3216, 2
  %v3425 = vsel %vm862, %v3420, %v3424
  %v3426 = vrot.slane %v3217, 2
  %v3427 = vsel %vm862, %v3422, %v3426
  %v3428 = vrot.slane %v3218, 2
  %v3429 = vsel %vm862, %v3424, %v3428
  %v3430 = vrot.slane %v3219, 2
  %v3431 = vsel %vm862, %v3426, %v3430
  %v3432 = vrot.slane %v3220, 2
  %v3433 = vsel %vm862, %v3428, %v3432
  %v3434 = vrot.slane %v3221, 2
  %v3435 = vsel %vm862, %v3430, %v3434
  %v3436 = vrot.slane %v3222, 2
  %v3437 = vsel %vm862, %v3432, %v3436
  %v3438 = vrot.slane %v3223, 2
  %v3439 = vsel %vm862, %v3434, %v3438
  %v3440 = vrot.slane %v3224, 2
  %v3441 = vsel %vm862, %v3436, %v3440
  %v3442 = vrot.slane %v3225, 2
  %v3443 = vsel %vm862, %v3438, %v3442
  %v3444 = vrot.slane %v3226, 2
  %v3445 = vsel %vm862, %v3440, %v3444
  %v3446 = vrot.slane %v3227, 2
  %v3447 = vsel %vm862, %v3442, %v3446
  %v3448 = vrot.slane %v3228, 2
  %v3449 = vsel %vm862, %v3444, %v3448
  %v3450 = vrot.slane %v3229, 2
  %v3451 = vsel %vm862, %v3446, %v3450
  %v3452 = vrot.slane %v3230, 2
  %v3453 = vsel %vm862, %v3448, %v3452
  %v3454 = vrot.slane %v3231, 2
  %v3455 = vsel %vm862, %v3450, %v3454
  %v3456 = vrot.slane %v3232, 2
  %v3457 = vsel %vm862, %v3452, %v3456
  %v3458 = vrot.slane %v3233, 2
  %v3459 = vsel %vm862, %v3454, %v3458
  %v3460 = vrot.slane %v3234, 2
  %v3461 = vsel %vm862, %v3456, %v3460
  %v3462 = vrot.slane %v3235, 2
  %v3463 = vsel %vm862, %v3458, %v3462
  %v3464 = vrot.slane %v3236, 2
  %v3465 = vsel %vm862, %v3460, %v3464
  %v3466 = vrot.slane %v3237, 2
  %v3467 = vsel %vm862, %v3462, %v3466
  %v3468 = vrot.slane %v3238, 2
  %v3469 = vsel %vm862, %v3464, %v3468
  %v3470 = vrot.slane %v3239, 2
  %v3471 = vsel %vm862, %v3466, %v3470
  %v3507 = vsel %vm862, %v3468, %v3346
  %v3508 = vsel %vm862, %v3470, %v3349
  %s3509 = scalar_lea.vmem %s3, 336
  %v3510 = vld [vmem:[%s3509] sm:$0xff]
  %v3511 = vld [vmem:[%s3509 + $0x8] sm:$0xff]
  %v3512 = vld [vmem:[%s3509 + $0x10] sm:$0xff]
  %v3513 = vld [vmem:[%s3509 + $0x18] sm:$0xff]
  %v3514 = vld [vmem:[%s3509 + $0x20] sm:$0xff]
  %v3515 = vld [vmem:[%s3509 + $0x28] sm:$0xff]
  %v3516 = vld [vmem:[%s3509 + $0x30] sm:$0xff]
  %v3517 = vld [vmem:[%s3509 + $0x38] sm:$0xff]
  %v3518 = vld [vmem:[%s3509 + $0x40] sm:$0xff]
  %v3519 = vld [vmem:[%s3509 + $0x48] sm:$0xff]
  %v3520 = vld [vmem:[%s3509 + $0x50] sm:$0xff]
  %v3521 = vld [vmem:[%s3509 + $0x58] sm:$0xff]
  %v3522 = vld [vmem:[%s3509 + $0x60] sm:$0xff]
  %v3523 = vld [vmem:[%s3509 + $0x68] sm:$0xff]
  %v3524 = vld [vmem:[%s3509 + $0x70] sm:$0xff]
  %v3525 = vld [vmem:[%s3509 + $0x78] sm:$0xff]
  %v3526 = vld [vmem:[%s3509 + $0x80] sm:$0xff]
  %v3527 = vld [vmem:[%s3509 + $0x88] sm:$0xff]
  %v3528 = vld [vmem:[%s3509 + $0x90] sm:$0xff]
  %v3529 = vld [vmem:[%s3509 + $0x98] sm:$0xff]
  %v3530 = vld [vmem:[%s3509 + $0xa0] sm:$0xff]
  %v3531 = vld [vmem:[%s3509 + $0xa8] sm:$0xff]
  %v3532 = vld [vmem:[%s3509 + $0xb0] sm:$0xff]
  %v3533 = vld [vmem:[%s3509 + $0xb8] sm:$0xff]
  %v3534 = vld [vmem:[%s3509 + $0xc0] sm:$0xff]
  %v3535 = vld [vmem:[%s3509 + $0xc8] sm:$0xff]
  %v3536 = vld [vmem:[%s3509 + $0xd0] sm:$0xff]
  %v3537 = vld [vmem:[%s3509 + $0xd8] sm:$0xff]
  %v3538 = vld [vmem:[%s3509 + $0xe0] sm:$0xff]
  %v3539 = vld [vmem:[%s3509 + $0xe8] sm:$0xff]
  %v3540 = vld [vmem:[%s3509 + $0xf0] sm:$0xff]
  %v3541 = vld [vmem:[%s3509 + $0xf8] sm:$0xff]
  %v3542 = vld [vmem:[%s3509 + $0x100] sm:$0xff]
  %v3543 = vld [vmem:[%s3509 + $0x108] sm:$0xff]
  %v3544 = vld [vmem:[%s3509 + $0x110] sm:$0xff]
  %v3545 = vld [vmem:[%s3509 + $0x118] sm:$0xff]
  %v3546 = vld [vmem:[%s3509 + $0x120] sm:$0xff]
  %v3547 = vld [vmem:[%s3509 + $0x128] sm:$0xff]
  %v3548 = vld [vmem:[%s3509 + $0x130] sm:$0xff]
  %v3549 = vld [vmem:[%s3509 + $0x138] sm:$0xff]
  %v3550 = vld [vmem:[%s3509 + $0x140] sm:$0xff]
  %v3551 = vld [vmem:[%s3509 + $0x148] sm:$0xff]
  %vm3552 = vcmask 326656
  %v3553 = vsel %vm3552, %v3351, 0
  %v3555 = vsel %vm3552, %v3355, 0
  %v3557 = vsel %vm3552, %v3359, 0
  %v3559 = vsel %vm3552, %v3363, 0
  %v3561 = vsel %vm3552, %v3367, 0
  %v3563 = vsel %vm3552, %v3371, 0
  %v3565 = vsel %vm3552, %v3375, 0
  %v3567 = vsel %vm3552, %v3379, 0
  %v3569 = vsel %vm3552, %v3383, 0
  %v3571 = vsel %vm3552, %v3387, 0
  %v3573 = vsel %vm3552, %v3391, 0
  %v3575 = vsel %vm3552, %v3395, 0
  %v3577 = vsel %vm3552, %v3399, 0
  %v3579 = vsel %vm3552, %v3403, 0
  %v3581 = vsel %vm3552, %v3407, 0
  %v3583 = vsel %vm3552, %v3411, 0
  %v3585 = vsel %vm3552, %v3415, 0
  %v3587 = vsel %vm3552, %v3419, 0
  %v3589 = vsel %vm3552, %v3423, 0
  %v3591 = vsel %vm3552, %v3427, 0
  %v3593 = vsel %vm3552, %v3431, 0
  %v3595 = vsel %vm3552, %v3435, 0
  %v3597 = vsel %vm3552, %v3439, 0
  %v3599 = vsel %vm3552, %v3443, 0
  %v3601 = vsel %vm3552, %v3447, 0
  %v3603 = vsel %vm3552, %v3451, 0
  %v3605 = vsel %vm3552, %v3455, 0
  %v3607 = vsel %vm3552, %v3459, 0
  %v3609 = vsel %vm3552, %v3463, 0
  %v3611 = vsel %vm3552, %v3467, 0
  %v3613 = vsel %vm3552, %v3471, 0
  %v3616 = vsel %vm3552, %v3508, 0
  %3618 = vmatprep.subr.mxu0 %v3511
  %3619 = vmatpush1.msra.mxu0 %v3510
  %3620 = vmatprep.subr.mxu0 %v3513
  %3621 = vmatpush1.msra.mxu0 %v3512
  %3622 = vmatprep.subr.mxu0 %v3515
  %3623 = vmatpush1.msra.mxu0 %v3514
  %3624 = vmatprep.subr.mxu0 %v3517
  %3625 = vmatpush1.msra.mxu0 %v3516
  %3626 = vmatprep.subr.mxu0 %v3519
  %3627 = vmatpush1.msra.mxu0 %v3518
  %3628 = vmatprep.subr.mxu0 %v3521
  %3629 = vmatpush1.msra.mxu0 %v3520
  %3630 = vmatprep.subr.mxu0 %v3523
  %3631 = vmatpush1.msra.mxu0 %v3522
  %3632 = vmatprep.subr.mxu0 %v3525
  %3633 = vmatpush1.msra.mxu0 %v3524
  %3634 = vmatprep.subr.mxu0 %v3527
  %3635 = vmatpush1.msra.mxu0 %v3526
  %3636 = vmatprep.subr.mxu0 %v3529
  %3637 = vmatpush1.msra.mxu0 %v3528
  %3638 = vmatprep.subr.mxu0 %v3531
  %3639 = vmatpush1.msra.mxu0 %v3530
  %3640 = vmatprep.subr.mxu0 %v3533
  %3641 = vmatpush1.msra.mxu0 %v3532
  %3642 = vmatprep.subr.mxu0 %v3535
  %3643 = vmatpush1.msra.mxu0 %v3534
  %3644 = vmatprep.subr.mxu0 %v3537
  %3645 = vmatpush1.msra.mxu0 %v3536
  %3646 = vmatprep.subr.mxu0 %v3539
  %3647 = vmatpush1.msra.mxu0 %v3538
  %3648 = vmatprep.subr.mxu0 %v3541
  %3649 = vmatpush1.msra.mxu0 %v3540
  %3650 = vmatprep.subr.mxu0 %v3543
  %3651 = vmatpush1.msra.mxu0 %v3542
  %3652 = vmatprep.subr.mxu0 %v3545
  %3653 = vmatpush1.msra.mxu0 %v3544
  %3654 = vmatprep.subr.mxu0 %v3547
  %3655 = vmatpush1.msra.mxu0 %v3546
  %3656 = vmatprep.subr.mxu0 %v3549
  %3657 = vmatpush1.msra.mxu0 %v3548
  %3658 = vmatprep.subr.mxu0 %v3551
  %3659 = vmatpush1.msra.mxu0 %v3550
  %3660 = vmatprep.subr.mxu0 0.0
  %3661 = vmatpush1.msra.mxu0 0.0
  %3662 = vmatprep.subr.mxu0 0.0
  %3663 = vmatpush1.msra.mxu0 0.0
  %3664 = vmatprep.subr.mxu0 0.0
  %3665 = vmatpush1.msra.mxu0 0.0
  %3666 = vmatprep.subr.mxu0 0.0
  %3667 = vmatpush1.msra.mxu0 0.0
  %3668 = vmatprep.subr.mxu0 0.0
  %3669 = vmatpush1.msra.mxu0 0.0
  %3670 = vmatprep.subr.mxu0 0.0
  %3671 = vmatpush1.msra.mxu0 0.0
  %3672 = vmatprep.subr.mxu0 0.0
  %3673 = vmatpush1.msra.mxu0 0.0
  %3674 = vmatprep.subr.mxu0 0.0
  %3675 = vmatpush1.msra.mxu0 0.0
  %3676 = vmatprep.subr.mxu0 0.0
  %3677 = vmatpush1.msra.mxu0 0.0
  %3678 = vmatprep.subr.mxu0 0.0
  %3679 = vmatpush1.msra.mxu0 0.0
  %3680 = vmatprep.subr.mxu0 0.0
  %3681 = vmatpush1.msra.mxu0 0.0
  %3682 = vmatprep.mubr.f32.mxu0 %v3553
  %3683 = vmatmul.mubr.f32.gmra.mrb[0].mxu0 %v3348
  %v3684 = vpop.f32.mrb[0].mxu0
  %v3685 = vadd.f32 0.0, %v3684
  %v3686 = vpop.f32.mrb[0].mxu0
  %v3687 = vadd.f32 0.0, %v3686
  %3688 = vmatprep.mubr.f32.mxu0 %v3555
  %3689 = vmatmul.mubr.f32.gmra.mrb[0].mxu0 %v3353
  %v3690 = vpop.f32.mrb[0].mxu0
  %v3691 = vadd.f32 0.0, %v3690
  %v3692 = vpop.f32.mrb[0].mxu0
  %v3693 = vadd.f32 0.0, %v3692
  %3694 = vmatprep.mubr.f32.mxu0 %v3557
  %3695 = vmatmul.mubr.f32.gmra.mrb[0].mxu0 %v3357
  %v3696 = vpop.f32.mrb[0].mxu0
  %v3697 = vadd.f32 0.0, %v3696
  %v3698 = vpop.f32.mrb[0].mxu0
  %v3699 = vadd.f32 0.0, %v3698
  %3700 = vmatprep.mubr.f32.mxu0 %v3559
  %3701 = vmatmul.mubr.f32.gmra.mrb[0].mxu0 %v3361
  %v3702 = vpop.f32.mrb[0].mxu0
  %v3703 = vadd.f32 0.0, %v3702
  %v3704 = vpop.f32.mrb[0].mxu0
  %v3705 = vadd.f32 0.0, %v3704
  %3706 = vmatprep.mubr.f32.mxu0 %v3561
  %3707 = vmatmul.mubr.f32.gmra.mrb[0].mxu0 %v3365
  %v3708 = vpop.f32.mrb[0].mxu0
  %v3709 = vadd.f32 0.0, %v3708
  %v3710 = vpop.f32.mrb[0].mxu0
  %v3711 = vadd.f32 0.0, %v3710
  %3712 = vmatprep.mubr.f32.mxu0 %v3563
  %3713 = vmatmul.mubr.f32.gmra.mrb[0].mxu0 %v3369
  %v3714 = vpop.f32.mrb[0].mxu0
  %v3715 = vadd.f32 0.0, %v3714
  %v3716 = vpop.f32.mrb[0].mxu0
  %v3717 = vadd.f32 0.0, %v3716
  %3718 = vmatprep.mubr.f32.mxu0 %v3565
  %3719 = vmatmul.mubr.f32.gmra.mrb[0].mxu0 %v3373
  %v3720 = vpop.f32.mrb[0].mxu0
  %v3721 = vadd.f32 0.0, %v3720
  %v3722 = vpop.f32.mrb[0].mxu0
  %v3723 = vadd.f32 0.0, %v3722
  %3724 = vmatprep.mubr.f32.mxu0 %v3567
  %3725 = vmatmul.mubr.f32.gmra.mrb[0].mxu0 %v3377
  %v3726 = vpop.f32.mrb[0].mxu0
  %v3727 = vadd.f32 0.0, %v3726
  %v3728 = vpop.f32.mrb[0].mxu0
  %v3729 = vadd.f32 0.0, %v3728
  %3730 = vmatprep.mubr.f32.mxu0 %v3569
  %3731 = vmatmul.mubr.f32.gmra.mrb[0].mxu0 %v3381
  %v3732 = vpop.f32.mrb[0].mxu0
  %v3733 = vadd.f32 0.0, %v3732
  %v3734 = vpop.f32.mrb[0].mxu0
  %v3735 = vadd.f32 0.0, %v3734
  %3736 = vmatprep.mubr.f32.mxu0 %v3571
  %3737 = vmatmul.mubr.f32.gmra.mrb[0].mxu0 %v3385
  %v3738 = vpop.f32.mrb[0].mxu0
  %v3739 = vadd.f32 0.0, %v3738
  %v3740 = vpop.f32.mrb[0].mxu0
  %v3741 = vadd.f32 0.0, %v3740
  %3742 = vmatprep.mubr.f32.mxu0 %v3573
  %3743 = vmatmul.mubr.f32.gmra.mrb[0].mxu0 %v3389
  %v3744 = vpop.f32.mrb[0].mxu0
  %v3745 = vadd.f32 0.0, %v3744
  %v3746 = vpop.f32.mrb[0].mxu0
  %v3747 = vadd.f32 0.0, %v3746
  %3748 = vmatprep.mubr.f32.mxu0 %v3575
  %3749 = vmatmul.mubr.f32.gmra.mrb[0].mxu0 %v3393
  %v3750 = vpop.f32.mrb[0].mxu0
  %v3751 = vadd.f32 0.0, %v3750
  %v3752 = vpop.f32.mrb[0].mxu0
  %v3753 = vadd.f32 0.0, %v3752
  %3754 = vmatprep.mubr.f32.mxu0 %v3577
  %3755 = vmatmul.mubr.f32.gmra.mrb[0].mxu0 %v3397
  %v3756 = vpop.f32.mrb[0].mxu0
  %v3757 = vadd.f32 0.0, %v3756
  %v3758 = vpop.f32.mrb[0].mxu0
  %v3759 = vadd.f32 0.0, %v3758
  %3760 = vmatprep.mubr.f32.mxu0 %v3579
  %3761 = vmatmul.mubr.f32.gmra.mrb[0].mxu0 %v3401
  %v3762 = vpop.f32.mrb[0].mxu0
  %v3763 = vadd.f32 0.0, %v3762
  %v3764 = vpop.f32.mrb[0].mxu0
  %v3765 = vadd.f32 0.0, %v3764
  %3766 = vmatprep.mubr.f32.mxu0 %v3581
  %3767 = vmatmul.mubr.f32.gmra.mrb[0].mxu0 %v3405
  %v3768 = vpop.f32.mrb[0].mxu0
  %v3769 = vadd.f32 0.0, %v3768
  %v3770 = vpop.f32.mrb[0].mxu0
  %v3771 = vadd.f32 0.0, %v3770
  %3772 = vmatprep.mubr.f32.mxu0 %v3583
  %3773 = vmatmul.mubr.f32.gmra.mrb[0].mxu0 %v3409
  %v3774 = vpop.f32.mrb[0].mxu0
  %v3775 = vadd.f32 0.0, %v3774
  %v3776 = vpop.f32.mrb[0].mxu0
  %v3777 = vadd.f32 0.0, %v3776
  %3778 = vmatprep.mubr.f32.mxu0 %v3585
  %3779 = vmatmul.mubr.f32.gmra.mrb[0].mxu0 %v3413
  %v3780 = vpop.f32.mrb[0].mxu0
  %v3781 = vadd.f32 0.0, %v3780
  %v3782 = vpop.f32.mrb[0].mxu0
  %v3783 = vadd.f32 0.0, %v3782
  %3784 = vmatprep.mubr.f32.mxu0 %v3587
  %3785 = vmatmul.mubr.f32.gmra.mrb[0].mxu0 %v3417
  %v3786 = vpop.f32.mrb[0].mxu0
  %v3787 = vadd.f32 0.0, %v3786
  %v3788 = vpop.f32.mrb[0].mxu0
  %v3789 = vadd.f32 0.0, %v3788
  %3790 = vmatprep.mubr.f32.mxu0 %v3589
  %3791 = vmatmul.mubr.f32.gmra.mrb[0].mxu0 %v3421
  %v3792 = vpop.f32.mrb[0].mxu0
  %v3793 = vadd.f32 0.0, %v3792
  %v3794 = vpop.f32.mrb[0].mxu0
  %v3795 = vadd.f32 0.0, %v3794
  %3796 = vmatprep.mubr.f32.mxu0 %v3591
  %3797 = vmatmul.mubr.f32.gmra.mrb[0].mxu0 %v3425
  %v3798 = vpop.f32.mrb[0].mxu0
  %v3799 = vadd.f32 0.0, %v3798
  %v3800 = vpop.f32.mrb[0].mxu0
  %v3801 = vadd.f32 0.0, %v3800
  %3802 = vmatprep.mubr.f32.mxu0 %v3593
  %3803 = vmatmul.mubr.f32.gmra.mrb[0].mxu0 %v3429
  %v3804 = vpop.f32.mrb[0].mxu0
  %v3805 = vadd.f32 0.0, %v3804
  %v3806 = vpop.f32.mrb[0].mxu0
  %v3807 = vadd.f32 0.0, %v3806
  %3808 = vmatprep.mubr.f32.mxu0 %v3595
  %3809 = vmatmul.mubr.f32.gmra.mrb[0].mxu0 %v3433
  %v3810 = vpop.f32.mrb[0].mxu0
  %v3811 = vadd.f32 0.0, %v3810
  %v3812 = vpop.f32.mrb[0].mxu0
  %v3813 = vadd.f32 0.0, %v3812
  %3814 = vmatprep.mubr.f32.mxu0 %v3597
  %3815 = vmatmul.mubr.f32.gmra.mrb[0].mxu0 %v3437
  %v3816 = vpop.f32.mrb[0].mxu0
  %v3817 = vadd.f32 0.0, %v3816
  %v3818 = vpop.f32.mrb[0].mxu0
  %v3819 = vadd.f32 0.0, %v3818
  %3820 = vmatprep.mubr.f32.mxu0 %v3599
  %3821 = vmatmul.mubr.f32.gmra.mrb[0].mxu0 %v3441
  %v3822 = vpop.f32.mrb[0].mxu0
  %v3823 = vadd.f32 0.0, %v3822
  %v3824 = vpop.f32.mrb[0].mxu0
  %v3825 = vadd.f32 0.0, %v3824
  %3826 = vmatprep.mubr.f32.mxu0 %v3601
  %3827 = vmatmul.mubr.f32.gmra.mrb[0].mxu0 %v3445
  %v3828 = vpop.f32.mrb[0].mxu0
  %v3829 = vadd.f32 0.0, %v3828
  %v3830 = vpop.f32.mrb[0].mxu0
  %v3831 = vadd.f32 0.0, %v3830
  %3832 = vmatprep.mubr.f32.mxu0 %v3603
  %3833 = vmatmul.mubr.f32.gmra.mrb[0].mxu0 %v3449
  %v3834 = vpop.f32.mrb[0].mxu0
  %v3835 = vadd.f32 0.0, %v3834
  %v3836 = vpop.f32.mrb[0].mxu0
  %v3837 = vadd.f32 0.0, %v3836
  %3838 = vmatprep.mubr.f32.mxu0 %v3605
  %3839 = vmatmul.mubr.f32.gmra.mrb[0].mxu0 %v3453
  %v3840 = vpop.f32.mrb[0].mxu0
  %v3841 = vadd.f32 0.0, %v3840
  %v3842 = vpop.f32.mrb[0].mxu0
  %v3843 = vadd.f32 0.0, %v3842
  %3844 = vmatprep.mubr.f32.mxu0 %v3607
  %3845 = vmatmul.mubr.f32.gmra.mrb[0].mxu0 %v3457
  %v3846 = vpop.f32.mrb[0].mxu0
  %v3847 = vadd.f32 0.0, %v3846
  %v3848 = vpop.f32.mrb[0].mxu0
  %v3849 = vadd.f32 0.0, %v3848
  %3850 = vmatprep.mubr.f32.mxu0 %v3609
  %3851 = vmatmul.mubr.f32.gmra.mrb[0].mxu0 %v3461
  %v3852 = vpop.f32.mrb[0].mxu0
  %v3853 = vadd.f32 0.0, %v3852
  %v3854 = vpop.f32.mrb[0].mxu0
  %v3855 = vadd.f32 0.0, %v3854
  %3856 = vmatprep.mubr.f32.mxu0 %v3611
  %3857 = vmatmul.mubr.f32.gmra.mrb[0].mxu0 %v3465
  %v3858 = vpop.f32.mrb[0].mxu0
  %v3859 = vadd.f32 0.0, %v3858
  %v3860 = vpop.f32.mrb[0].mxu0
  %v3861 = vadd.f32 0.0, %v3860
  %3862 = vmatprep.mubr.f32.mxu0 %v3613
  %3863 = vmatmul.mubr.f32.gmra.mrb[0].mxu0 %v3469
  %v3864 = vpop.f32.mrb[0].mxu0
  %v3865 = vadd.f32 0.0, %v3864
  %v3866 = vpop.f32.mrb[0].mxu0
  %v3867 = vadd.f32 0.0, %v3866
  %3868 = vmatprep.mubr.f32.mxu0 %v3616
  %3869 = vmatmul.mubr.f32.gmra.mrb[0].mxu0 %v3507
  %v3870 = vpop.f32.mrb[0].mxu0
  %v3871 = vadd.f32 0.0, %v3870
  %v3872 = vpop.f32.mrb[0].mxu0
  %v3873 = vadd.f32 0.0, %v3872
  %3874 = vdwg.mxu0
  %v3875 = vsel %vm3552, %v3177, 0
  %v3877 = vsel %vm3552, %v3179, 0
  %v3879 = vsel %vm3552, %v3181, 0
  %v3881 = vsel %vm3552, %v3183, 0
  %v3883 = vsel %vm3552, %v3185, 0
  %v3885 = vsel %vm3552, %v3187, 0
  %v3887 = vsel %vm3552, %v3189, 0
  %v3889 = vsel %vm3552, %v3191, 0
  %v3891 = vsel %vm3552, %v3193, 0
  %v3893 = vsel %vm3552, %v3195, 0
  %v3895 = vsel %vm3552, %v3197, 0
  %v3897 = vsel %vm3552, %v3199, 0
  %v3899 = vsel %vm3552, %v3201, 0
  %v3901 = vsel %vm3552, %v3203, 0
  %v3903 = vsel %vm3552, %v3205, 0
  %v3905 = vsel %vm3552, %v3207, 0
  %v3907 = vsel %vm3552, %v3209, 0
  %v3909 = vsel %vm3552, %v3211, 0
  %v3911 = vsel %vm3552, %v3213, 0
  %v3913 = vsel %vm3552, %v3215, 0
  %v3915 = vsel %vm3552, %v3217, 0
  %v3917 = vsel %vm3552, %v3219, 0
  %v3919 = vsel %vm3552, %v3221, 0
  %v3921 = vsel %vm3552, %v3223, 0
  %v3923 = vsel %vm3552, %v3225, 0
  %v3925 = vsel %vm3552, %v3227, 0
  %v3927 = vsel %vm3552, %v3229, 0
  %v3929 = vsel %vm3552, %v3231, 0
  %v3931 = vsel %vm3552, %v3233, 0
  %v3933 = vsel %vm3552, %v3235, 0
  %v3935 = vsel %vm3552, %v3237, 0
  %v3937 = vsel %vm3552, %v3239, 0
  %3939 = vmatprep.subr.mxu0 %v3241
  %3940 = vmatpush1.msra.mxu0 %v3240
  %3941 = vmatprep.subr.mxu0 %v3243
  %3942 = vmatpush1.msra.mxu0 %v3242
  %3943 = vmatprep.subr.mxu0 %v3245
  %3944 = vmatpush1.msra.mxu0 %v3244
  %3945 = vmatprep.subr.mxu0 %v3247
  %3946 = vmatpush1.msra.mxu0 %v3246
  %3947 = vmatprep.subr.mxu0 %v3249
  %3948 = vmatpush1.msra.mxu0 %v3248
  %3949 = vmatprep.subr.mxu0 %v3251
  %3950 = vmatpush1.msra.mxu0 %v3250
  %3951 = vmatprep.subr.mxu0 %v3253
  %3952 = vmatpush1.msra.mxu0 %v3252
  %3953 = vmatprep.subr.mxu0 %v3255
  %3954 = vmatpush1.msra.mxu0 %v3254
  %3955 = vmatprep.subr.mxu0 %v3257
  %3956 = vmatpush1.msra.mxu0 %v3256
  %3957 = vmatprep.subr.mxu0 %v3259
  %3958 = vmatpush1.msra.mxu0 %v3258
  %3959 = vmatprep.subr.mxu0 %v3261
  %3960 = vmatpush1.msra.mxu0 %v3260
  %3961 = vmatprep.subr.mxu0 %v3263
  %3962 = vmatpush1.msra.mxu0 %v3262
  %3963 = vmatprep.subr.mxu0 %v3265
  %3964 = vmatpush1.msra.mxu0 %v3264
  %3965 = vmatprep.subr.mxu0 %v3267
  %3966 = vmatpush1.msra.mxu0 %v3266
  %3967 = vmatprep.subr.mxu0 %v3269
  %3968 = vmatpush1.msra.mxu0 %v3268
  %3969 = vmatprep.subr.mxu0 %v3271
  %3970 = vmatpush1.msra.mxu0 %v3270
  %3971 = vmatprep.subr.mxu0 %v3273
  %3972 = vmatpush1.msra.mxu0 %v3272
  %3973 = vmatprep.subr.mxu0 %v3275
  %3974 = vmatpush1.msra.mxu0 %v3274
  %3975 = vmatprep.subr.mxu0 %v3277
  %3976 = vmatpush1.msra.mxu0 %v3276
  %3977 = vmatprep.subr.mxu0 %v3279
  %3978 = vmatpush1.msra.mxu0 %v3278
  %3979 = vmatprep.subr.mxu0 %v3281
  %3980 = vmatpush1.msra.mxu0 %v3280
  %3981 = vmatprep.subr.mxu0 0.0
  %3982 = vmatpush1.msra.mxu0 0.0
  %3983 = vmatprep.subr.mxu0 0.0
  %3984 = vmatpush1.msra.mxu0 0.0
  %3985 = vmatprep.subr.mxu0 0.0
  %3986 = vmatpush1.msra.mxu0 0.0
  %3987 = vmatprep.subr.mxu0 0.0
  %3988 = vmatpush1.msra.mxu0 0.0
  %3989 = vmatprep.subr.mxu0 0.0
  %3990 = vmatpush1.msra.mxu0 0.0
  %3991 = vmatprep.subr.mxu0 0.0
  %3992 = vmatpush1.msra.mxu0 0.0
  %3993 = vmatprep.subr.mxu0 0.0
  %3994 = vmatpush1.msra.mxu0 0.0
  %3995 = vmatprep.subr.mxu0 0.0
  %3996 = vmatpush1.msra.mxu0 0.0
  %3997 = vmatprep.subr.mxu0 0.0
  %3998 = vmatpush1.msra.mxu0 0.0
  %3999 = vmatprep.subr.mxu0 0.0
  %4000 = vmatpush1.msra.mxu0 0.0
  %4001 = vmatprep.subr.mxu0 0.0
  %4002 = vmatpush1.msra.mxu0 0.0
  %4003 = vmatprep.mubr.f32.mxu0 %v3875
  %4004 = vmatmul.mubr.f32.gmra.mrb[0].mxu0 %v3176
  %v4005 = vpop.f32.mrb[0].mxu0
  %v4006 = vadd.f32 %v3685, %v4005
  %v4007 = vpop.f32.mrb[0].mxu0
  %v4008 = vadd.f32 %v3687, %v4007
  %4009 = vmatprep.mubr.f32.mxu0 %v3877
  %4010 = vmatmul.mubr.f32.gmra.mrb[0].mxu0 %v3178
  %v4011 = vpop.f32.mrb[0].mxu0
  %v4012 = vadd.f32 %v3691, %v4011
  %v4013 = vpop.f32.mrb[0].mxu0
  %v4014 = vadd.f32 %v3693, %v4013
  %4015 = vmatprep.mubr.f32.mxu0 %v3879
  %4016 = vmatmul.mubr.f32.gmra.mrb[0].mxu0 %v3180
  %v4017 = vpop.f32.mrb[0].mxu0
  %v4018 = vadd.f32 %v3697, %v4017
  %v4019 = vpop.f32.mrb[0].mxu0
  %v4020 = vadd.f32 %v3699, %v4019
  %4021 = vmatprep.mubr.f32.mxu0 %v3881
  %4022 = vmatmul.mubr.f32.gmra.mrb[0].mxu0 %v3182
  %v4023 = vpop.f32.mrb[0].mxu0
  %v4024 = vadd.f32 %v3703, %v4023
  %v4025 = vpop.f32.mrb[0].mxu0
  %v4026 = vadd.f32 %v3705, %v4025
  %4027 = vmatprep.mubr.f32.mxu0 %v3883
  %4028 = vmatmul.mubr.f32.gmra.mrb[0].mxu0 %v3184
  %v4029 = vpop.f32.mrb[0].mxu0
  %v4030 = vadd.f32 %v3709, %v4029
  %v4031 = vpop.f32.mrb[0].mxu0
  %v4032 = vadd.f32 %v3711, %v4031
  %4033 = vmatprep.mubr.f32.mxu0 %v3885
  %4034 = vmatmul.mubr.f32.gmra.mrb[0].mxu0 %v3186
  %v4035 = vpop.f32.mrb[0].mxu0
  %v4036 = vadd.f32 %v3715, %v4035
  %v4037 = vpop.f32.mrb[0].mxu0
  %v4038 = vadd.f32 %v3717, %v4037
  %4039 = vmatprep.mubr.f32.mxu0 %v3887
  %4040 = vmatmul.mubr.f32.gmra.mrb[0].mxu0 %v3188
  %v4041 = vpop.f32.mrb[0].mxu0
  %v4042 = vadd.f32 %v3721, %v4041
  %v4043 = vpop.f32.mrb[0].mxu0
  %v4044 = vadd.f32 %v3723, %v4043
  %4045 = vmatprep.mubr.f32.mxu0 %v3889
  %4046 = vmatmul.mubr.f32.gmra.mrb[0].mxu0 %v3190
  %v4047 = vpop.f32.mrb[0].mxu0
  %v4048 = vadd.f32 %v3727, %v4047
  %v4049 = vpop.f32.mrb[0].mxu0
  %v4050 = vadd.f32 %v3729, %v4049
  %4051 = vmatprep.mubr.f32.mxu0 %v3891
  %4052 = vmatmul.mubr.f32.gmra.mrb[0].mxu0 %v3192
  %v4053 = vpop.f32.mrb[0].mxu0
  %v4054 = vadd.f32 %v3733, %v4053
  %v4055 = vpop.f32.mrb[0].mxu0
  %v4056 = vadd.f32 %v3735, %v4055
  %4057 = vmatprep.mubr.f32.mxu0 %v3893
  %4058 = vmatmul.mubr.f32.gmra.mrb[0].mxu0 %v3194
  %v4059 = vpop.f32.mrb[0].mxu0
  %v4060 = vadd.f32 %v3739, %v4059
  %v4061 = vpop.f32.mrb[0].mxu0
  %v4062 = vadd.f32 %v3741, %v4061
  %4063 = vmatprep.mubr.f32.mxu0 %v3895
  %4064 = vmatmul.mubr.f32.gmra.mrb[0].mxu0 %v3196
  %v4065 = vpop.f32.mrb[0].mxu0
  %v4066 = vadd.f32 %v3745, %v4065
  %v4067 = vpop.f32.mrb[0].mxu0
  %v4068 = vadd.f32 %v3747, %v4067
  %4069 = vmatprep.mubr.f32.mxu0 %v3897
  %4070 = vmatmul.mubr.f32.gmra.mrb[0].mxu0 %v3198
  %v4071 = vpop.f32.mrb[0].mxu0
  %v4072 = vadd.f32 %v3751, %v4071
  %v4073 = vpop.f32.mrb[0].mxu0
  %v4074 = vadd.f32 %v3753, %v4073
  %4075 = vmatprep.mubr.f32.mxu0 %v3899
  %4076 = vmatmul.mubr.f32.gmra.mrb[0].mxu0 %v3200
  %v4077 = vpop.f32.mrb[0].mxu0
  %v4078 = vadd.f32 %v3757, %v4077
  %v4079 = vpop.f32.mrb[0].mxu0
  %v4080 = vadd.f32 %v3759, %v4079
  %4081 = vmatprep.mubr.f32.mxu0 %v3901
  %4082 = vmatmul.mubr.f32.gmra.mrb[0].mxu0 %v3202
  %v4083 = vpop.f32.mrb[0].mxu0
  %v4084 = vadd.f32 %v3763, %v4083
  %v4085 = vpop.f32.mrb[0].mxu0
  %v4086 = vadd.f32 %v3765, %v4085
  %4087 = vmatprep.mubr.f32.mxu0 %v3903
  %4088 = vmatmul.mubr.f32.gmra.mrb[0].mxu0 %v3204
  %v4089 = vpop.f32.mrb[0].mxu0
  %v4090 = vadd.f32 %v3769, %v4089
  %v4091 = vpop.f32.mrb[0].mxu0
  %v4092 = vadd.f32 %v3771, %v4091
  %4093 = vmatprep.mubr.f32.mxu0 %v3905
  %4094 = vmatmul.mubr.f32.gmra.mrb[0].mxu0 %v3206
  %v4095 = vpop.f32.mrb[0].mxu0
  %v4096 = vadd.f32 %v3775, %v4095
  %v4097 = vpop.f32.mrb[0].mxu0
  %v4098 = vadd.f32 %v3777, %v4097
  %4099 = vmatprep.mubr.f32.mxu0 %v3907
  %4100 = vmatmul.mubr.f32.gmra.mrb[0].mxu0 %v3208
  %v4101 = vpop.f32.mrb[0].mxu0
  %v4102 = vadd.f32 %v3781, %v4101
  %v4103 = vpop.f32.mrb[0].mxu0
  %v4104 = vadd.f32 %v3783, %v4103
  %4105 = vmatprep.mubr.f32.mxu0 %v3909
  %4106 = vmatmul.mubr.f32.gmra.mrb[0].mxu0 %v3210
  %v4107 = vpop.f32.mrb[0].mxu0
  %v4108 = vadd.f32 %v3787, %v4107
  %v4109 = vpop.f32.mrb[0].mxu0
  %v4110 = vadd.f32 %v3789, %v4109
  %4111 = vmatprep.mubr.f32.mxu0 %v3911
  %4112 = vmatmul.mubr.f32.gmra.mrb[0].mxu0 %v3212
  %v4113 = vpop.f32.mrb[0].mxu0
  %v4114 = vadd.f32 %v3793, %v4113
  %v4115 = vpop.f32.mrb[0].mxu0
  %v4116 = vadd.f32 %v3795, %v4115
  %4117 = vmatprep.mubr.f32.mxu0 %v3913
  %4118 = vmatmul.mubr.f32.gmra.mrb[0].mxu0 %v3214
  %v4119 = vpop.f32.mrb[0].mxu0
  %v4120 = vadd.f32 %v3799, %v4119
  %v4121 = vpop.f32.mrb[0].mxu0
  %v4122 = vadd.f32 %v3801, %v4121
  %4123 = vmatprep.mubr.f32.mxu0 %v3915
  %4124 = vmatmul.mubr.f32.gmra.mrb[0].mxu0 %v3216
  %v4125 = vpop.f32.mrb[0].mxu0
  %v4126 = vadd.f32 %v3805, %v4125
  %v4127 = vpop.f32.mrb[0].mxu0
  %v4128 = vadd.f32 %v3807, %v4127
  %4129 = vmatprep.mubr.f32.mxu0 %v3917
  %4130 = vmatmul.mubr.f32.gmra.mrb[0].mxu0 %v3218
  %v4131 = vpop.f32.mrb[0].mxu0
  %v4132 = vadd.f32 %v3811, %v4131
  %v4133 = vpop.f32.mrb[0].mxu0
  %v4134 = vadd.f32 %v3813, %v4133
  %4135 = vmatprep.mubr.f32.mxu0 %v3919
  %4136 = vmatmul.mubr.f32.gmra.mrb[0].mxu0 %v3220
  %v4137 = vpop.f32.mrb[0].mxu0
  %v4138 = vadd.f32 %v3817, %v4137
  %v4139 = vpop.f32.mrb[0].mxu0
  %v4140 = vadd.f32 %v3819, %v4139
  %4141 = vmatprep.mubr.f32.mxu0 %v3921
  %4142 = vmatmul.mubr.f32.gmra.mrb[0].mxu0 %v3222
  %v4143 = vpop.f32.mrb[0].mxu0
  %v4144 = vadd.f32 %v3823, %v4143
  %v4145 = vpop.f32.mrb[0].mxu0
  %v4146 = vadd.f32 %v3825, %v4145
  %4147 = vmatprep.mubr.f32.mxu0 %v3923
  %4148 = vmatmul.mubr.f32.gmra.mrb[0].mxu0 %v3224
  %v4149 = vpop.f32.mrb[0].mxu0
  %v4150 = vadd.f32 %v3829, %v4149
  %v4151 = vpop.f32.mrb[0].mxu0
  %v4152 = vadd.f32 %v3831, %v4151
  %4153 = vmatprep.mubr.f32.mxu0 %v3925
  %4154 = vmatmul.mubr.f32.gmra.mrb[0].mxu0 %v3226
  %v4155 = vpop.f32.mrb[0].mxu0
  %v4156 = vadd.f32 %v3835, %v4155
  %v4157 = vpop.f32.mrb[0].mxu0
  %v4158 = vadd.f32 %v3837, %v4157
  %4159 = vmatprep.mubr.f32.mxu0 %v3927
  %4160 = vmatmul.mubr.f32.gmra.mrb[0].mxu0 %v3228
  %v4161 = vpop.f32.mrb[0].mxu0
  %v4162 = vadd.f32 %v3841, %v4161
  %v4163 = vpop.f32.mrb[0].mxu0
  %v4164 = vadd.f32 %v3843, %v4163
  %4165 = vmatprep.mubr.f32.mxu0 %v3929
  %4166 = vmatmul.mubr.f32.gmra.mrb[0].mxu0 %v3230
  %v4167 = vpop.f32.mrb[0].mxu0
  %v4168 = vadd.f32 %v3847, %v4167
  %v4169 = vpop.f32.mrb[0].mxu0
  %v4170 = vadd.f32 %v3849, %v4169
  %4171 = vmatprep.mubr.f32.mxu0 %v3931
  %4172 = vmatmul.mubr.f32.gmra.mrb[0].mxu0 %v3232
  %v4173 = vpop.f32.mrb[0].mxu0
  %v4174 = vadd.f32 %v3853, %v4173
  %v4175 = vpop.f32.mrb[0].mxu0
  %v4176 = vadd.f32 %v3855, %v4175
  %4177 = vmatprep.mubr.f32.mxu0 %v3933
  %4178 = vmatmul.mubr.f32.gmra.mrb[0].mxu0 %v3234
  %v4179 = vpop.f32.mrb[0].mxu0
  %v4180 = vadd.f32 %v3859, %v4179
  %v4181 = vpop.f32.mrb[0].mxu0
  %v4182 = vadd.f32 %v3861, %v4181
  %4183 = vmatprep.mubr.f32.mxu0 %v3935
  %4184 = vmatmul.mubr.f32.gmra.mrb[0].mxu0 %v3236
  %v4185 = vpop.f32.mrb[0].mxu0
  %v4186 = vadd.f32 %v3865, %v4185
  %v4187 = vpop.f32.mrb[0].mxu0
  %v4188 = vadd.f32 %v3867, %v4187
  %4189 = vmatprep.mubr.f32.mxu0 %v3937
  %4190 = vmatmul.mubr.f32.gmra.mrb[0].mxu0 %v3238
  %v4191 = vpop.f32.mrb[0].mxu0
  %v4192 = vadd.f32 %v3871, %v4191
  %v4193 = vpop.f32.mrb[0].mxu0
  %v4194 = vadd.f32 %v3873, %v4193
  %4195 = vdwg.mxu0
  %v4196 = vrot.slane %v3176, 4
  %v4197 = vrot.slane %v3178, 4
  %v4198 = vsel %vm1818, %v4196, %v4197
  %v4199 = vrot.slane %v3177, 4
  %v4200 = vrot.slane %v3179, 4
  %v4201 = vsel %vm1818, %v4199, %v4200
  %v4202 = vrot.slane %v3180, 4
  %v4203 = vsel %vm1818, %v4197, %v4202
  %v4204 = vrot.slane %v3181, 4
  %v4205 = vsel %vm1818, %v4200, %v4204
  %v4206 = vrot.slane %v3182, 4
  %v4207 = vsel %vm1818, %v4202, %v4206
  %v4208 = vrot.slane %v3183, 4
  %v4209 = vsel %vm1818, %v4204, %v4208
  %v4210 = vrot.slane %v3184, 4
  %v4211 = vsel %vm1818, %v4206, %v4210
  %v4212 = vrot.slane %v3185, 4
  %v4213 = vsel %vm1818, %v4208, %v4212
  %v4214 = vrot.slane %v3186, 4
  %v4215 = vsel %vm1818, %v4210, %v4214
  %v4216 = vrot.slane %v3187, 4
  %v4217 = vsel %vm1818, %v4212, %v4216
  %v4218 = vrot.slane %v3188, 4
  %v4219 = vsel %vm1818, %v4214, %v4218
  %v4220 = vrot.slane %v3189, 4
  %v4221 = vsel %vm1818, %v4216, %v4220
  %v4222 = vrot.slane %v3190, 4
  %v4223 = vsel %vm1818, %v4218, %v4222
  %v4224 = vrot.slane %v3191, 4
  %v4225 = vsel %vm1818, %v4220, %v4224
  %v4226 = vrot.slane %v3192, 4
  %v4227 = vsel %vm1818, %v4222, %v4226
  %v4228 = vrot.slane %v3193, 4
  %v4229 = vsel %vm1818, %v4224, %v4228
  %v4230 = vrot.slane %v3194, 4
  %v4231 = vsel %vm1818, %v4226, %v4230
  %v4232 = vrot.slane %v3195, 4
  %v4233 = vsel %vm1818, %v4228, %v4232
  %v4234 = vrot.slane %v3196, 4
  %v4235 = vsel %vm1818, %v4230, %v4234
  %v4236 = vrot.slane %v3197, 4
  %v4237 = vsel %vm1818, %v4232, %v4236
  %v4238 = vrot.slane %v3198, 4
  %v4239 = vsel %vm1818, %v4234, %v4238
  %v4240 = vrot.slane %v3199, 4
  %v4241 = vsel %vm1818, %v4236, %v4240
  %v4242 = vrot.slane %v3200, 4
  %v4243 = vsel %vm1818, %v4238, %v4242
  %v4244 = vrot.slane %v3201, 4
  %v4245 = vsel %vm1818, %v4240, %v4244
  %v4246 = vrot.slane %v3202, 4
  %v4247 = vsel %vm1818, %v4242, %v4246
  %v4248 = vrot.slane %v3203, 4
  %v4249 = vsel %vm1818, %v4244, %v4248
  %v4250 = vrot.slane %v3204, 4
  %v4251 = vsel %vm1818, %v4246, %v4250
  %v4252 = vrot.slane %v3205, 4
  %v4253 = vsel %vm1818, %v4248, %v4252
  %v4254 = vrot.slane %v3206, 4
  %v4255 = vsel %vm1818, %v4250, %v4254
  %v4256 = vrot.slane %v3207, 4
  %v4257 = vsel %vm1818, %v4252, %v4256
  %v4258 = vrot.slane %v3208, 4
  %v4259 = vsel %vm1818, %v4254, %v4258
  %v4260 = vrot.slane %v3209, 4
  %v4261 = vsel %vm1818, %v4256, %v4260
  %v4262 = vrot.slane %v3210, 4
  %v4263 = vsel %vm1818, %v4258, %v4262
  %v4264 = vrot.slane %v3211, 4
  %v4265 = vsel %vm1818, %v4260, %v4264
  %v4266 = vrot.slane %v3212, 4
  %v4267 = vsel %vm1818, %v4262, %v4266
  %v4268 = vrot.slane %v3213, 4
  %v4269 = vsel %vm1818, %v4264, %v4268
  %v4270 = vrot.slane %v3214, 4
  %v4271 = vsel %vm1818, %v4266, %v4270
  %v4272 = vrot.slane %v3215, 4
  %v4273 = vsel %vm1818, %v4268, %v4272
  %v4274 = vrot.slane %v3216, 4
  %v4275 = vsel %vm1818, %v4270, %v4274
  %v4276 = vrot.slane %v3217, 4
  %v4277 = vsel %vm1818, %v4272, %v4276
  %v4278 = vrot.slane %v3218, 4
  %v4279 = vsel %vm1818, %v4274, %v4278
  %v4280 = vrot.slane %v3219, 4
  %v4281 = vsel %vm1818, %v4276, %v4280
  %v4282 = vrot.slane %v3220, 4
  %v4283 = vsel %vm1818, %v4278, %v4282
  %v4284 = vrot.slane %v3221, 4
  %v4285 = vsel %vm1818, %v4280, %v4284
  %v4286 = vrot.slane %v3222, 4
  %v4287 = vsel %vm1818, %v4282, %v4286
  %v4288 = vrot.slane %v3223, 4
  %v4289 = vsel %vm1818, %v4284, %v4288
  %v4290 = vrot.slane %v3224, 4
  %v4291 = vsel %vm1818, %v4286, %v4290
  %v4292 = vrot.slane %v3225, 4
  %v4293 = vsel %vm1818, %v4288, %v4292
  %v4294 = vrot.slane %v3226, 4
  %v4295 = vsel %vm1818, %v4290, %v4294
  %v4296 = vrot.slane %v3227, 4
  %v4297 = vsel %vm1818, %v4292, %v4296
  %v4298 = vrot.slane %v3228, 4
  %v4299 = vsel %vm1818, %v4294, %v4298
  %v4300 = vrot.slane %v3229, 4
  %v4301 = vsel %vm1818, %v4296, %v4300
  %v4302 = vrot.slane %v3230, 4
  %v4303 = vsel %vm1818, %v4298, %v4302
  %v4304 = vrot.slane %v3231, 4
  %v4305 = vsel %vm1818, %v4300, %v4304
  %v4306 = vrot.slane %v3232, 4
  %v4307 = vsel %vm1818, %v4302, %v4306
  %v4308 = vrot.slane %v3233, 4
  %v4309 = vsel %vm1818, %v4304, %v4308
  %v4310 = vrot.slane %v3234, 4
  %v4311 = vsel %vm1818, %v4306, %v4310
  %v4312 = vrot.slane %v3235, 4
  %v4313 = vsel %vm1818, %v4308, %v4312
  %v4314 = vrot.slane %v3236, 4
  %v4315 = vsel %vm1818, %v4310, %v4314
  %v4316 = vrot.slane %v3237, 4
  %v4317 = vsel %vm1818, %v4312, %v4316
  %v4318 = vrot.slane %v3238, 4
  %v4319 = vsel %vm1818, %v4314, %v4318
  %v4320 = vrot.slane %v3239, 4
  %v4321 = vsel %vm1818, %v4316, %v4320
  %v4357 = vsel %vm1818, %v4318, %v4196
  %v4358 = vsel %vm1818, %v4320, %v4199
  %s4359 = scalar_lea.vmem %s3, 672
  %v4360 = vld [vmem:[%s4359] sm:$0xff]
  %v4361 = vld [vmem:[%s4359 + $0x8] sm:$0xff]
  %v4362 = vld [vmem:[%s4359 + $0x10] sm:$0xff]
  %v4363 = vld [vmem:[%s4359 + $0x18] sm:$0xff]
  %v4364 = vld [vmem:[%s4359 + $0x20] sm:$0xff]
  %v4365 = vld [vmem:[%s4359 + $0x28] sm:$0xff]
  %v4366 = vld [vmem:[%s4359 + $0x30] sm:$0xff]
  %v4367 = vld [vmem:[%s4359 + $0x38] sm:$0xff]
  %v4368 = vld [vmem:[%s4359 + $0x40] sm:$0xff]
  %v4369 = vld [vmem:[%s4359 + $0x48] sm:$0xff]
  %v4370 = vld [vmem:[%s4359 + $0x50] sm:$0xff]
  %v4371 = vld [vmem:[%s4359 + $0x58] sm:$0xff]
  %v4372 = vld [vmem:[%s4359 + $0x60] sm:$0xff]
  %v4373 = vld [vmem:[%s4359 + $0x68] sm:$0xff]
  %v4374 = vld [vmem:[%s4359 + $0x70] sm:$0xff]
  %v4375 = vld [vmem:[%s4359 + $0x78] sm:$0xff]
  %v4376 = vld [vmem:[%s4359 + $0x80] sm:$0xff]
  %v4377 = vld [vmem:[%s4359 + $0x88] sm:$0xff]
  %v4378 = vld [vmem:[%s4359 + $0x90] sm:$0xff]
  %v4379 = vld [vmem:[%s4359 + $0x98] sm:$0xff]
  %v4380 = vld [vmem:[%s4359 + $0xa0] sm:$0xff]
  %v4381 = vld [vmem:[%s4359 + $0xa8] sm:$0xff]
  %v4382 = vld [vmem:[%s4359 + $0xb0] sm:$0xff]
  %v4383 = vld [vmem:[%s4359 + $0xb8] sm:$0xff]
  %v4384 = vld [vmem:[%s4359 + $0xc0] sm:$0xff]
  %v4385 = vld [vmem:[%s4359 + $0xc8] sm:$0xff]
  %v4386 = vld [vmem:[%s4359 + $0xd0] sm:$0xff]
  %v4387 = vld [vmem:[%s4359 + $0xd8] sm:$0xff]
  %v4388 = vld [vmem:[%s4359 + $0xe0] sm:$0xff]
  %v4389 = vld [vmem:[%s4359 + $0xe8] sm:$0xff]
  %v4390 = vld [vmem:[%s4359 + $0xf0] sm:$0xff]
  %v4391 = vld [vmem:[%s4359 + $0xf8] sm:$0xff]
  %v4392 = vld [vmem:[%s4359 + $0x100] sm:$0xff]
  %v4393 = vld [vmem:[%s4359 + $0x108] sm:$0xff]
  %v4394 = vld [vmem:[%s4359 + $0x110] sm:$0xff]
  %v4395 = vld [vmem:[%s4359 + $0x118] sm:$0xff]
  %v4396 = vld [vmem:[%s4359 + $0x120] sm:$0xff]
  %v4397 = vld [vmem:[%s4359 + $0x128] sm:$0xff]
  %v4398 = vld [vmem:[%s4359 + $0x130] sm:$0xff]
  %v4399 = vld [vmem:[%s4359 + $0x138] sm:$0xff]
  %v4400 = vld [vmem:[%s4359 + $0x140] sm:$0xff]
  %v4401 = vld [vmem:[%s4359 + $0x148] sm:$0xff]
  %v4402 = vsel %vm3552, %v4201, 0
  %v4404 = vsel %vm3552, %v4205, 0
  %v4406 = vsel %vm3552, %v4209, 0
  %v4408 = vsel %vm3552, %v4213, 0
  %v4410 = vsel %vm3552, %v4217, 0
  %v4412 = vsel %vm3552, %v4221, 0
  %v4414 = vsel %vm3552, %v4225, 0
  %v4416 = vsel %vm3552, %v4229, 0
  %v4418 = vsel %vm3552, %v4233, 0
  %v4420 = vsel %vm3552, %v4237, 0
  %v4422 = vsel %vm3552, %v4241, 0
  %v4424 = vsel %vm3552, %v4245, 0
  %v4426 = vsel %vm3552, %v4249, 0
  %v4428 = vsel %vm3552, %v4253, 0
  %v4430 = vsel %vm3552, %v4257, 0
  %v4432 = vsel %vm3552, %v4261, 0
  %v4434 = vsel %vm3552, %v4265, 0
  %v4436 = vsel %vm3552, %v4269, 0
  %v4438 = vsel %vm3552, %v4273, 0
  %v4440 = vsel %vm3552, %v4277, 0
  %v4442 = vsel %vm3552, %v4281, 0
  %v4444 = vsel %vm3552, %v4285, 0
  %v4446 = vsel %vm3552, %v4289, 0
  %v4448 = vsel %vm3552, %v4293, 0
  %v4450 = vsel %vm3552, %v4297, 0
  %v4452 = vsel %vm3552, %v4301, 0
  %v4454 = vsel %vm3552, %v4305, 0
  %v4456 = vsel %vm3552, %v4309, 0
  %v4458 = vsel %vm3552, %v4313, 0
  %v4460 = vsel %vm3552, %v4317, 0
  %v4462 = vsel %vm3552, %v4321, 0
  %v4465 = vsel %vm3552, %v4358, 0
  %4467 = vmatprep.subr.mxu0 %v4361
  %4468 = vmatpush1.msra.mxu0 %v4360
  %4469 = vmatprep.subr.mxu0 %v4363
  %4470 = vmatpush1.msra.mxu0 %v4362
  %4471 = vmatprep.subr.mxu0 %v4365
  %4472 = vmatpush1.msra.mxu0 %v4364
  %4473 = vmatprep.subr.mxu0 %v4367
  %4474 = vmatpush1.msra.mxu0 %v4366
  %4475 = vmatprep.subr.mxu0 %v4369
  %4476 = vmatpush1.msra.mxu0 %v4368
  %4477 = vmatprep.subr.mxu0 %v4371
  %4478 = vmatpush1.msra.mxu0 %v4370
  %4479 = vmatprep.subr.mxu0 %v4373
  %4480 = vmatpush1.msra.mxu0 %v4372
  %4481 = vmatprep.subr.mxu0 %v4375
  %4482 = vmatpush1.msra.mxu0 %v4374
  %4483 = vmatprep.subr.mxu0 %v4377
  %4484 = vmatpush1.msra.mxu0 %v4376
  %4485 = vmatprep.subr.mxu0 %v4379
  %4486 = vmatpush1.msra.mxu0 %v4378
  %4487 = vmatprep.subr.mxu0 %v4381
  %4488 = vmatpush1.msra.mxu0 %v4380
  %4489 = vmatprep.subr.mxu0 %v4383
  %4490 = vmatpush1.msra.mxu0 %v4382
  %4491 = vmatprep.subr.mxu0 %v4385
  %4492 = vmatpush1.msra.mxu0 %v4384
  %4493 = vmatprep.subr.mxu0 %v4387
  %4494 = vmatpush1.msra.mxu0 %v4386
  %4495 = vmatprep.subr.mxu0 %v4389
  %4496 = vmatpush1.msra.mxu0 %v4388
  %4497 = vmatprep.subr.mxu0 %v4391
  %4498 = vmatpush1.msra.mxu0 %v4390
  %4499 = vmatprep.subr.mxu0 %v4393
  %4500 = vmatpush1.msra.mxu0 %v4392
  %4501 = vmatprep.subr.mxu0 %v4395
  %4502 = vmatpush1.msra.mxu0 %v4394
  %4503 = vmatprep.subr.mxu0 %v4397
  %4504 = vmatpush1.msra.mxu0 %v4396
  %4505 = vmatprep.subr.mxu0 %v4399
  %4506 = vmatpush1.msra.mxu0 %v4398
  %4507 = vmatprep.subr.mxu0 %v4401
  %4508 = vmatpush1.msra.mxu0 %v4400
  %4509 = vmatprep.subr.mxu0 0.0
  %4510 = vmatpush1.msra.mxu0 0.0
  %4511 = vmatprep.subr.mxu0 0.0
  %4512 = vmatpush1.msra.mxu0 0.0
  %4513 = vmatprep.subr.mxu0 0.0
  %4514 = vmatpush1.msra.mxu0 0.0
  %4515 = vmatprep.subr.mxu0 0.0
  %4516 = vmatpush1.msra.mxu0 0.0
  %4517 = vmatprep.subr.mxu0 0.0
  %4518 = vmatpush1.msra.mxu0 0.0
  %4519 = vmatprep.subr.mxu0 0.0
  %4520 = vmatpush1.msra.mxu0 0.0
  %4521 = vmatprep.subr.mxu0 0.0
  %4522 = vmatpush1.msra.mxu0 0.0
  %4523 = vmatprep.subr.mxu0 0.0
  %4524 = vmatpush1.msra.mxu0 0.0
  %4525 = vmatprep.subr.mxu0 0.0
  %4526 = vmatpush1.msra.mxu0 0.0
  %4527 = vmatprep.subr.mxu0 0.0
  %4528 = vmatpush1.msra.mxu0 0.0
  %4529 = vmatprep.subr.mxu0 0.0
  %4530 = vmatpush1.msra.mxu0 0.0
  %4531 = vmatprep.mubr.f32.mxu0 %v4402
  %4532 = vmatmul.mubr.f32.gmra.mrb[0].mxu0 %v4198
  %v4533 = vpop.f32.mrb[0].mxu0
  %v4534 = vadd.f32 0.0, %v4533
  %v4535 = vpop.f32.mrb[0].mxu0
  %v4536 = vadd.f32 0.0, %v4535
  %4537 = vmatprep.mubr.f32.mxu0 %v4404
  %4538 = vmatmul.mubr.f32.gmra.mrb[0].mxu0 %v4203
  %v4539 = vpop.f32.mrb[0].mxu0
  %v4540 = vadd.f32 0.0, %v4539
  %v4541 = vpop.f32.mrb[0].mxu0
  %v4542 = vadd.f32 0.0, %v4541
  %4543 = vmatprep.mubr.f32.mxu0 %v4406
  %4544 = vmatmul.mubr.f32.gmra.mrb[0].mxu0 %v4207
  %v4545 = vpop.f32.mrb[0].mxu0
  %v4546 = vadd.f32 0.0, %v4545
  %v4547 = vpop.f32.mrb[0].mxu0
  %v4548 = vadd.f32 0.0, %v4547
  %4549 = vmatprep.mubr.f32.mxu0 %v4408
  %4550 = vmatmul.mubr.f32.gmra.mrb[0].mxu0 %v4211
  %v4551 = vpop.f32.mrb[0].mxu0
  %v4552 = vadd.f32 0.0, %v4551
  %v4553 = vpop.f32.mrb[0].mxu0
  %v4554 = vadd.f32 0.0, %v4553
  %4555 = vmatprep.mubr.f32.mxu0 %v4410
  %4556 = vmatmul.mubr.f32.gmra.mrb[0].mxu0 %v4215
  %v4557 = vpop.f32.mrb[0].mxu0
  %v4558 = vadd.f32 0.0, %v4557
  %v4559 = vpop.f32.mrb[0].mxu0
  %v4560 = vadd.f32 0.0, %v4559
  %4561 = vmatprep.mubr.f32.mxu0 %v4412
  %4562 = vmatmul.mubr.f32.gmra.mrb[0].mxu0 %v4219
  %v4563 = vpop.f32.mrb[0].mxu0
  %v4564 = vadd.f32 0.0, %v4563
  %v4565 = vpop.f32.mrb[0].mxu0
  %v4566 = vadd.f32 0.0, %v4565
  %4567 = vmatprep.mubr.f32.mxu0 %v4414
  %4568 = vmatmul.mubr.f32.gmra.mrb[0].mxu0 %v4223
  %v4569 = vpop.f32.mrb[0].mxu0
  %v4570 = vadd.f32 0.0, %v4569
  %v4571 = vpop.f32.mrb[0].mxu0
  %v4572 = vadd.f32 0.0, %v4571
  %4573 = vmatprep.mubr.f32.mxu0 %v4416
  %4574 = vmatmul.mubr.f32.gmra.mrb[0].mxu0 %v4227
  %v4575 = vpop.f32.mrb[0].mxu0
  %v4576 = vadd.f32 0.0, %v4575
  %v4577 = vpop.f32.mrb[0].mxu0
  %v4578 = vadd.f32 0.0, %v4577
  %4579 = vmatprep.mubr.f32.mxu0 %v4418
  %4580 = vmatmul.mubr.f32.gmra.mrb[0].mxu0 %v4231
  %v4581 = vpop.f32.mrb[0].mxu0
  %v4582 = vadd.f32 0.0, %v4581
  %v4583 = vpop.f32.mrb[0].mxu0
  %v4584 = vadd.f32 0.0, %v4583
  %4585 = vmatprep.mubr.f32.mxu0 %v4420
  %4586 = vmatmul.mubr.f32.gmra.mrb[0].mxu0 %v4235
  %v4587 = vpop.f32.mrb[0].mxu0
  %v4588 = vadd.f32 0.0, %v4587
  %v4589 = vpop.f32.mrb[0].mxu0
  %v4590 = vadd.f32 0.0, %v4589
  %4591 = vmatprep.mubr.f32.mxu0 %v4422
  %4592 = vmatmul.mubr.f32.gmra.mrb[0].mxu0 %v4239
  %v4593 = vpop.f32.mrb[0].mxu0
  %v4594 = vadd.f32 0.0, %v4593
  %v4595 = vpop.f32.mrb[0].mxu0
  %v4596 = vadd.f32 0.0, %v4595
  %4597 = vmatprep.mubr.f32.mxu0 %v4424
  %4598 = vmatmul.mubr.f32.gmra.mrb[0].mxu0 %v4243
  %v4599 = vpop.f32.mrb[0].mxu0
  %v4600 = vadd.f32 0.0, %v4599
  %v4601 = vpop.f32.mrb[0].mxu0
  %v4602 = vadd.f32 0.0, %v4601
  %4603 = vmatprep.mubr.f32.mxu0 %v4426
  %4604 = vmatmul.mubr.f32.gmra.mrb[0].mxu0 %v4247
  %v4605 = vpop.f32.mrb[0].mxu0
  %v4606 = vadd.f32 0.0, %v4605
  %v4607 = vpop.f32.mrb[0].mxu0
  %v4608 = vadd.f32 0.0, %v4607
  %4609 = vmatprep.mubr.f32.mxu0 %v4428
  %4610 = vmatmul.mubr.f32.gmra.mrb[0].mxu0 %v4251
  %v4611 = vpop.f32.mrb[0].mxu0
  %v4612 = vadd.f32 0.0, %v4611
  %v4613 = vpop.f32.mrb[0].mxu0
  %v4614 = vadd.f32 0.0, %v4613
  %4615 = vmatprep.mubr.f32.mxu0 %v4430
  %4616 = vmatmul.mubr.f32.gmra.mrb[0].mxu0 %v4255
  %v4617 = vpop.f32.mrb[0].mxu0
  %v4618 = vadd.f32 0.0, %v4617
  %v4619 = vpop.f32.mrb[0].mxu0
  %v4620 = vadd.f32 0.0, %v4619
  %4621 = vmatprep.mubr.f32.mxu0 %v4432
  %4622 = vmatmul.mubr.f32.gmra.mrb[0].mxu0 %v4259
  %v4623 = vpop.f32.mrb[0].mxu0
  %v4624 = vadd.f32 0.0, %v4623
  %v4625 = vpop.f32.mrb[0].mxu0
  %v4626 = vadd.f32 0.0, %v4625
  %4627 = vmatprep.mubr.f32.mxu0 %v4434
  %4628 = vmatmul.mubr.f32.gmra.mrb[0].mxu0 %v4263
  %v4629 = vpop.f32.mrb[0].mxu0
  %v4630 = vadd.f32 0.0, %v4629
  %v4631 = vpop.f32.mrb[0].mxu0
  %v4632 = vadd.f32 0.0, %v4631
  %4633 = vmatprep.mubr.f32.mxu0 %v4436
  %4634 = vmatmul.mubr.f32.gmra.mrb[0].mxu0 %v4267
  %v4635 = vpop.f32.mrb[0].mxu0
  %v4636 = vadd.f32 0.0, %v4635
  %v4637 = vpop.f32.mrb[0].mxu0
  %v4638 = vadd.f32 0.0, %v4637
  %4639 = vmatprep.mubr.f32.mxu0 %v4438
  %4640 = vmatmul.mubr.f32.gmra.mrb[0].mxu0 %v4271
  %v4641 = vpop.f32.mrb[0].mxu0
  %v4642 = vadd.f32 0.0, %v4641
  %v4643 = vpop.f32.mrb[0].mxu0
  %v4644 = vadd.f32 0.0, %v4643
  %4645 = vmatprep.mubr.f32.mxu0 %v4440
  %4646 = vmatmul.mubr.f32.gmra.mrb[0].mxu0 %v4275
  %v4647 = vpop.f32.mrb[0].mxu0
  %v4648 = vadd.f32 0.0, %v4647
  %v4649 = vpop.f32.mrb[0].mxu0
  %v4650 = vadd.f32 0.0, %v4649
  %4651 = vmatprep.mubr.f32.mxu0 %v4442
  %4652 = vmatmul.mubr.f32.gmra.mrb[0].mxu0 %v4279
  %v4653 = vpop.f32.mrb[0].mxu0
  %v4654 = vadd.f32 0.0, %v4653
  %v4655 = vpop.f32.mrb[0].mxu0
  %v4656 = vadd.f32 0.0, %v4655
  %4657 = vmatprep.mubr.f32.mxu0 %v4444
  %4658 = vmatmul.mubr.f32.gmra.mrb[0].mxu0 %v4283
  %v4659 = vpop.f32.mrb[0].mxu0
  %v4660 = vadd.f32 0.0, %v4659
  %v4661 = vpop.f32.mrb[0].mxu0
  %v4662 = vadd.f32 0.0, %v4661
  %4663 = vmatprep.mubr.f32.mxu0 %v4446
  %4664 = vmatmul.mubr.f32.gmra.mrb[0].mxu0 %v4287
  %v4665 = vpop.f32.mrb[0].mxu0
  %v4666 = vadd.f32 0.0, %v4665
  %v4667 = vpop.f32.mrb[0].mxu0
  %v4668 = vadd.f32 0.0, %v4667
  %4669 = vmatprep.mubr.f32.mxu0 %v4448
  %4670 = vmatmul.mubr.f32.gmra.mrb[0].mxu0 %v4291
  %v4671 = vpop.f32.mrb[0].mxu0
  %v4672 = vadd.f32 0.0, %v4671
  %v4673 = vpop.f32.mrb[0].mxu0
  %v4674 = vadd.f32 0.0, %v4673
  %4675 = vmatprep.mubr.f32.mxu0 %v4450
  %4676 = vmatmul.mubr.f32.gmra.mrb[0].mxu0 %v4295
  %v4677 = vpop.f32.mrb[0].mxu0
  %v4678 = vadd.f32 0.0, %v4677
  %v4679 = vpop.f32.mrb[0].mxu0
  %v4680 = vadd.f32 0.0, %v4679
  %4681 = vmatprep.mubr.f32.mxu0 %v4452
  %4682 = vmatmul.mubr.f32.gmra.mrb[0].mxu0 %v4299
  %v4683 = vpop.f32.mrb[0].mxu0
  %v4684 = vadd.f32 0.0, %v4683
  %v4685 = vpop.f32.mrb[0].mxu0
  %v4686 = vadd.f32 0.0, %v4685
  %4687 = vmatprep.mubr.f32.mxu0 %v4454
  %4688 = vmatmul.mubr.f32.gmra.mrb[0].mxu0 %v4303
  %v4689 = vpop.f32.mrb[0].mxu0
  %v4690 = vadd.f32 0.0, %v4689
  %v4691 = vpop.f32.mrb[0].mxu0
  %v4692 = vadd.f32 0.0, %v4691
  %4693 = vmatprep.mubr.f32.mxu0 %v4456
  %4694 = vmatmul.mubr.f32.gmra.mrb[0].mxu0 %v4307
  %v4695 = vpop.f32.mrb[0].mxu0
  %v4696 = vadd.f32 0.0, %v4695
  %v4697 = vpop.f32.mrb[0].mxu0
  %v4698 = vadd.f32 0.0, %v4697
  %4699 = vmatprep.mubr.f32.mxu0 %v4458
  %4700 = vmatmul.mubr.f32.gmra.mrb[0].mxu0 %v4311
  %v4701 = vpop.f32.mrb[0].mxu0
  %v4702 = vadd.f32 0.0, %v4701
  %v4703 = vpop.f32.mrb[0].mxu0
  %v4704 = vadd.f32 0.0, %v4703
  %4705 = vmatprep.mubr.f32.mxu0 %v4460
  %4706 = vmatmul.mubr.f32.gmra.mrb[0].mxu0 %v4315
  %v4707 = vpop.f32.mrb[0].mxu0
  %v4708 = vadd.f32 0.0, %v4707
  %v4709 = vpop.f32.mrb[0].mxu0
  %v4710 = vadd.f32 0.0, %v4709
  %4711 = vmatprep.mubr.f32.mxu0 %v4462
  %4712 = vmatmul.mubr.f32.gmra.mrb[0].mxu0 %v4319
  %v4713 = vpop.f32.mrb[0].mxu0
  %v4714 = vadd.f32 0.0, %v4713
  %v4715 = vpop.f32.mrb[0].mxu0
  %v4716 = vadd.f32 0.0, %v4715
  %4717 = vmatprep.mubr.f32.mxu0 %v4465
  %4718 = vmatmul.mubr.f32.gmra.mrb[0].mxu0 %v4357
  %v4719 = vpop.f32.mrb[0].mxu0
  %v4720 = vadd.f32 0.0, %v4719
  %v4721 = vpop.f32.mrb[0].mxu0
  %v4722 = vadd.f32 0.0, %v4721
  %4723 = vdwg.mxu0
  %v4724 = vadd.f32 %v4006, %v4534
  %v4725 = vadd.f32 %v4008, %v4536
  %v4726 = vadd.f32 %v4012, %v4540
  %v4727 = vadd.f32 %v4014, %v4542
  %v4728 = vadd.f32 %v4018, %v4546
  %v4729 = vadd.f32 %v4020, %v4548
  %v4730 = vadd.f32 %v4024, %v4552
  %v4731 = vadd.f32 %v4026, %v4554
  %v4732 = vadd.f32 %v4030, %v4558
  %v4733 = vadd.f32 %v4032, %v4560
  %v4734 = vadd.f32 %v4036, %v4564
  %v4735 = vadd.f32 %v4038, %v4566
  %v4736 = vadd.f32 %v4042, %v4570
  %v4737 = vadd.f32 %v4044, %v4572
  %v4738 = vadd.f32 %v4048, %v4576
  %v4739 = vadd.f32 %v4050, %v4578
  %v4740 = vadd.f32 %v4054, %v4582
  %v4741 = vadd.f32 %v4056, %v4584
  %v4742 = vadd.f32 %v4060, %v4588
  %v4743 = vadd.f32 %v4062, %v4590
  %v4744 = vadd.f32 %v4066, %v4594
  %v4745 = vadd.f32 %v4068, %v4596
  %v4746 = vadd.f32 %v4072, %v4600
  %v4747 = vadd.f32 %v4074, %v4602
  %v4748 = vadd.f32 %v4078, %v4606
  %v4749 = vadd.f32 %v4080, %v4608
  %v4750 = vadd.f32 %v4084, %v4612
  %v4751 = vadd.f32 %v4086, %v4614
  %v4752 = vadd.f32 %v4090, %v4618
  %v4753 = vadd.f32 %v4092, %v4620
  %v4754 = vadd.f32 %v4096, %v4624
  %v4755 = vadd.f32 %v4098, %v4626
  %v4756 = vadd.f32 %v4102, %v4630
  %v4757 = vadd.f32 %v4104, %v4632
  %v4758 = vadd.f32 %v4108, %v4636
  %v4759 = vadd.f32 %v4110, %v4638
  %v4760 = vadd.f32 %v4114, %v4642
  %v4761 = vadd.f32 %v4116, %v4644
  %v4762 = vadd.f32 %v4120, %v4648
  %v4763 = vadd.f32 %v4122, %v4650
  %v4764 = vadd.f32 %v4126, %v4654
  %v4765 = vadd.f32 %v4128, %v4656
  %v4766 = vadd.f32 %v4132, %v4660
  %v4767 = vadd.f32 %v4134, %v4662
  %v4768 = vadd.f32 %v4138, %v4666
  %v4769 = vadd.f32 %v4140, %v4668
  %v4770 = vadd.f32 %v4144, %v4672
  %v4771 = vadd.f32 %v4146, %v4674
  %v4772 = vadd.f32 %v4150, %v4678
  %v4773 = vadd.f32 %v4152, %v4680
  %v4774 = vadd.f32 %v4156, %v4684
  %v4775 = vadd.f32 %v4158, %v4686
  %v4776 = vadd.f32 %v4162, %v4690
  %v4777 = vadd.f32 %v4164, %v4692
  %v4778 = vadd.f32 %v4168, %v4696
  %v4779 = vadd.f32 %v4170, %v4698
  %v4780 = vadd.f32 %v4174, %v4702
  %v4781 = vadd.f32 %v4176, %v4704
  %v4782 = vadd.f32 %v4180, %v4708
  %v4783 = vadd.f32 %v4182, %v4710
  %v4784 = vadd.f32 %v4186, %v4714
  %v4785 = vadd.f32 %v4188, %v4716
  %v4786 = vadd.f32 %v4192, %v4720
  %v4787 = vadd.f32 %v4194, %v4722
  %vm4788 = vcmask 1041408
  %v4789 = vrot.slane %v3176, 6
  %v4790 = vrot.slane %v3178, 6
  %v4791 = vsel %vm4788, %v4789, %v4790
  %v4792 = vrot.slane %v3177, 6
  %v4793 = vrot.slane %v3179, 6
  %v4794 = vsel %vm4788, %v4792, %v4793
  %v4795 = vrot.slane %v3180, 6
  %v4796 = vsel %vm4788, %v4790, %v4795
  %v4797 = vrot.slane %v3181, 6
  %v4798 = vsel %vm4788, %v4793, %v4797
  %v4799 = vrot.slane %v3182, 6
  %v4800 = vsel %vm4788, %v4795, %v4799
  %v4801 = vrot.slane %v3183, 6
  %v4802 = vsel %vm4788, %v4797, %v4801
  %v4803 = vrot.slane %v3184, 6
  %v4804 = vsel %vm4788, %v4799, %v4803
  %v4805 = vrot.slane %v3185, 6
  %v4806 = vsel %vm4788, %v4801, %v4805
  %v4807 = vrot.slane %v3186, 6
  %v4808 = vsel %vm4788, %v4803, %v4807
  %v4809 = vrot.slane %v3187, 6
  %v4810 = vsel %vm4788, %v4805, %v4809
  %v4811 = vrot.slane %v3188, 6
  %v4812 = vsel %vm4788, %v4807, %v4811
  %v4813 = vrot.slane %v3189, 6
  %v4814 = vsel %vm4788, %v4809, %v4813
  %v4815 = vrot.slane %v3190, 6
  %v4816 = vsel %vm4788, %v4811, %v4815
  %v4817 = vrot.slane %v3191, 6
  %v4818 = vsel %vm4788, %v4813, %v4817
  %v4819 = vrot.slane %v3192, 6
  %v4820 = vsel %vm4788, %v4815, %v4819
  %v4821 = vrot.slane %v3193, 6
  %v4822 = vsel %vm4788, %v4817, %v4821
  %v4823 = vrot.slane %v3194, 6
  %v4824 = vsel %vm4788, %v4819, %v4823
  %v4825 = vrot.slane %v3195, 6
  %v4826 = vsel %vm4788, %v4821, %v4825
  %v4827 = vrot.slane %v3196, 6
  %v4828 = vsel %vm4788, %v4823, %v4827
  %v4829 = vrot.slane %v3197, 6
  %v4830 = vsel %vm4788, %v4825, %v4829
  %v4831 = vrot.slane %v3198, 6
  %v4832 = vsel %vm4788, %v4827, %v4831
  %v4833 = vrot.slane %v3199, 6
  %v4834 = vsel %vm4788, %v4829, %v4833
  %v4835 = vrot.slane %v3200, 6
  %v4836 = vsel %vm4788, %v4831, %v4835
  %v4837 = vrot.slane %v3201, 6
  %v4838 = vsel %vm4788, %v4833, %v4837
  %v4839 = vrot.slane %v3202, 6
  %v4840 = vsel %vm4788, %v4835, %v4839
  %v4841 = vrot.slane %v3203, 6
  %v4842 = vsel %vm4788, %v4837, %v4841
  %v4843 = vrot.slane %v3204, 6
  %v4844 = vsel %vm4788, %v4839, %v4843
  %v4845 = vrot.slane %v3205, 6
  %v4846 = vsel %vm4788, %v4841, %v4845
  %v4847 = vrot.slane %v3206, 6
  %v4848 = vsel %vm4788, %v4843, %v4847
  %v4849 = vrot.slane %v3207, 6
  %v4850 = vsel %vm4788, %v4845, %v4849
  %v4851 = vrot.slane %v3208, 6
  %v4852 = vsel %vm4788, %v4847, %v4851
  %v4853 = vrot.slane %v3209, 6
  %v4854 = vsel %vm4788, %v4849, %v4853
  %v4855 = vrot.slane %v3210, 6
  %v4856 = vsel %vm4788, %v4851, %v4855
  %v4857 = vrot.slane %v3211, 6
  %v4858 = vsel %vm4788, %v4853, %v4857
  %v4859 = vrot.slane %v3212, 6
  %v4860 = vsel %vm4788, %v4855, %v4859
  %v4861 = vrot.slane %v3213, 6
  %v4862 = vsel %vm4788, %v4857, %v4861
  %v4863 = vrot.slane %v3214, 6
  %v4864 = vsel %vm4788, %v4859, %v4863
  %v4865 = vrot.slane %v3215, 6
  %v4866 = vsel %vm4788, %v4861, %v4865
  %v4867 = vrot.slane %v3216, 6
  %v4868 = vsel %vm4788, %v4863, %v4867
  %v4869 = vrot.slane %v3217, 6
  %v4870 = vsel %vm4788, %v4865, %v4869
  %v4871 = vrot.slane %v3218, 6
  %v4872 = vsel %vm4788, %v4867, %v4871
  %v4873 = vrot.slane %v3219, 6
  %v4874 = vsel %vm4788, %v4869, %v4873
  %v4875 = vrot.slane %v3220, 6
  %v4876 = vsel %vm4788, %v4871, %v4875
  %v4877 = vrot.slane %v3221, 6
  %v4878 = vsel %vm4788, %v4873, %v4877
  %v4879 = vrot.slane %v3222, 6
  %v4880 = vsel %vm4788, %v4875, %v4879
  %v4881 = vrot.slane %v3223, 6
  %v4882 = vsel %vm4788, %v4877, %v4881
  %v4883 = vrot.slane %v3224, 6
  %v4884 = vsel %vm4788, %v4879, %v4883
  %v4885 = vrot.slane %v3225, 6
  %v4886 = vsel %vm4788, %v4881, %v4885
  %v4887 = vrot.slane %v3226, 6
  %v4888 = vsel %vm4788, %v4883, %v4887
  %v4889 = vrot.slane %v3227, 6
  %v4890 = vsel %vm4788, %v4885, %v4889
  %v4891 = vrot.slane %v3228, 6
  %v4892 = vsel %vm4788, %v4887, %v4891
  %v4893 = vrot.slane %v3229, 6
  %v4894 = vsel %vm4788, %v4889, %v4893
  %v4895 = vrot.slane %v3230, 6
  %v4896 = vsel %vm4788, %v4891, %v4895
  %v4897 = vrot.slane %v3231, 6
  %v4898 = vsel %vm4788, %v4893, %v4897
  %v4899 = vrot.slane %v3232, 6
  %v4900 = vsel %vm4788, %v4895, %v4899
  %v4901 = vrot.slane %v3233, 6
  %v4902 = vsel %vm4788, %v4897, %v4901
  %v4903 = vrot.slane %v3234, 6
  %v4904 = vsel %vm4788, %v4899, %v4903
  %v4905 = vrot.slane %v3235, 6
  %v4906 = vsel %vm4788, %v4901, %v4905
  %v4907 = vrot.slane %v3236, 6
  %v4908 = vsel %vm4788, %v4903, %v4907
  %v4909 = vrot.slane %v3237, 6
  %v4910 = vsel %vm4788, %v4905, %v4909
  %v4911 = vrot.slane %v3238, 6
  %v4912 = vsel %vm4788, %v4907, %v4911
  %v4913 = vrot.slane %v3239, 6
  %v4914 = vsel %vm4788, %v4909, %v4913
  %v4950 = vsel %vm4788, %v4911, %v4789
  %v4951 = vsel %vm4788, %v4913, %v4792
  %s4952 = scalar_lea.vmem %s3, 1008
  %v4953 = vld [vmem:[%s4952] sm:$0xff]
  %v4954 = vld [vmem:[%s4952 + $0x8] sm:$0xff]
  %v4955 = vld [vmem:[%s4952 + $0x10] sm:$0xff]
  %v4956 = vld [vmem:[%s4952 + $0x18] sm:$0xff]
  %v4957 = vld [vmem:[%s4952 + $0x20] sm:$0xff]
  %v4958 = vld [vmem:[%s4952 + $0x28] sm:$0xff]
  %v4959 = vld [vmem:[%s4952 + $0x30] sm:$0xff]
  %v4960 = vld [vmem:[%s4952 + $0x38] sm:$0xff]
  %v4961 = vld [vmem:[%s4952 + $0x40] sm:$0xff]
  %v4962 = vld [vmem:[%s4952 + $0x48] sm:$0xff]
  %v4963 = vld [vmem:[%s4952 + $0x50] sm:$0xff]
  %v4964 = vld [vmem:[%s4952 + $0x58] sm:$0xff]
  %v4965 = vld [vmem:[%s4952 + $0x60] sm:$0xff]
  %v4966 = vld [vmem:[%s4952 + $0x68] sm:$0xff]
  %v4967 = vld [vmem:[%s4952 + $0x70] sm:$0xff]
  %v4968 = vld [vmem:[%s4952 + $0x78] sm:$0xff]
  %v4969 = vld [vmem:[%s4952 + $0x80] sm:$0xff]
  %v4970 = vld [vmem:[%s4952 + $0x88] sm:$0xff]
  %v4971 = vld [vmem:[%s4952 + $0x90] sm:$0xff]
  %v4972 = vld [vmem:[%s4952 + $0x98] sm:$0xff]
  %v4973 = vld [vmem:[%s4952 + $0xa0] sm:$0xff]
  %v4974 = vld [vmem:[%s4952 + $0xa8] sm:$0xff]
  %v4975 = vld [vmem:[%s4952 + $0xb0] sm:$0xff]
  %v4976 = vld [vmem:[%s4952 + $0xb8] sm:$0xff]
  %v4977 = vld [vmem:[%s4952 + $0xc0] sm:$0xff]
  %v4978 = vld [vmem:[%s4952 + $0xc8] sm:$0xff]
  %v4979 = vld [vmem:[%s4952 + $0xd0] sm:$0xff]
  %v4980 = vld [vmem:[%s4952 + $0xd8] sm:$0xff]
  %v4981 = vld [vmem:[%s4952 + $0xe0] sm:$0xff]
  %v4982 = vld [vmem:[%s4952 + $0xe8] sm:$0xff]
  %v4983 = vld [vmem:[%s4952 + $0xf0] sm:$0xff]
  %v4984 = vld [vmem:[%s4952 + $0xf8] sm:$0xff]
  %v4985 = vld [vmem:[%s4952 + $0x100] sm:$0xff]
  %v4986 = vld [vmem:[%s4952 + $0x108] sm:$0xff]
  %v4987 = vld [vmem:[%s4952 + $0x110] sm:$0xff]
  %v4988 = vld [vmem:[%s4952 + $0x118] sm:$0xff]
  %v4989 = vld [vmem:[%s4952 + $0x120] sm:$0xff]
  %v4990 = vld [vmem:[%s4952 + $0x128] sm:$0xff]
  %v4991 = vld [vmem:[%s4952 + $0x130] sm:$0xff]
  %v4992 = vld [vmem:[%s4952 + $0x138] sm:$0xff]
  %v4993 = vld [vmem:[%s4952 + $0x140] sm:$0xff]
  %v4994 = vld [vmem:[%s4952 + $0x148] sm:$0xff]
  %v4995 = vsel %vm3552, %v4794, 0
  %v4997 = vsel %vm3552, %v4798, 0
  %v4999 = vsel %vm3552, %v4802, 0
  %v5001 = vsel %vm3552, %v4806, 0
  %v5003 = vsel %vm3552, %v4810, 0
  %v5005 = vsel %vm3552, %v4814, 0
  %v5007 = vsel %vm3552, %v4818, 0
  %v5009 = vsel %vm3552, %v4822, 0
  %v5011 = vsel %vm3552, %v4826, 0
  %v5013 = vsel %vm3552, %v4830, 0
  %v5015 = vsel %vm3552, %v4834, 0
  %v5017 = vsel %vm3552, %v4838, 0
  %v5019 = vsel %vm3552, %v4842, 0
  %v5021 = vsel %vm3552, %v4846, 0
  %v5023 = vsel %vm3552, %v4850, 0
  %v5025 = vsel %vm3552, %v4854, 0
  %v5027 = vsel %vm3552, %v4858, 0
  %v5029 = vsel %vm3552, %v4862, 0
  %v5031 = vsel %vm3552, %v4866, 0
  %v5033 = vsel %vm3552, %v4870, 0
  %v5035 = vsel %vm3552, %v4874, 0
  %v5037 = vsel %vm3552, %v4878, 0
  %v5039 = vsel %vm3552, %v4882, 0
  %v5041 = vsel %vm3552, %v4886, 0
  %v5043 = vsel %vm3552, %v4890, 0
  %v5045 = vsel %vm3552, %v4894, 0
  %v5047 = vsel %vm3552, %v4898, 0
  %v5049 = vsel %vm3552, %v4902, 0
  %v5051 = vsel %vm3552, %v4906, 0
  %v5053 = vsel %vm3552, %v4910, 0
  %v5055 = vsel %vm3552, %v4914, 0
  %v5058 = vsel %vm3552, %v4951, 0
  %5060 = vmatprep.subr.mxu0 %v4954
  %5061 = vmatpush1.msra.mxu0 %v4953
  %5062 = vmatprep.subr.mxu0 %v4956
  %5063 = vmatpush1.msra.mxu0 %v4955
  %5064 = vmatprep.subr.mxu0 %v4958
  %5065 = vmatpush1.msra.mxu0 %v4957
  %5066 = vmatprep.subr.mxu0 %v4960
  %5067 = vmatpush1.msra.mxu0 %v4959
  %5068 = vmatprep.subr.mxu0 %v4962
  %5069 = vmatpush1.msra.mxu0 %v4961
  %5070 = vmatprep.subr.mxu0 %v4964
  %5071 = vmatpush1.msra.mxu0 %v4963
  %5072 = vmatprep.subr.mxu0 %v4966
  %5073 = vmatpush1.msra.mxu0 %v4965
  %5074 = vmatprep.subr.mxu0 %v4968
  %5075 = vmatpush1.msra.mxu0 %v4967
  %5076 = vmatprep.subr.mxu0 %v4970
  %5077 = vmatpush1.msra.mxu0 %v4969
  %5078 = vmatprep.subr.mxu0 %v4972
  %5079 = vmatpush1.msra.mxu0 %v4971
  %5080 = vmatprep.subr.mxu0 %v4974
  %5081 = vmatpush1.msra.mxu0 %v4973
  %5082 = vmatprep.subr.mxu0 %v4976
  %5083 = vmatpush1.msra.mxu0 %v4975
  %5084 = vmatprep.subr.mxu0 %v4978
  %5085 = vmatpush1.msra.mxu0 %v4977
  %5086 = vmatprep.subr.mxu0 %v4980
  %5087 = vmatpush1.msra.mxu0 %v4979
  %5088 = vmatprep.subr.mxu0 %v4982
  %5089 = vmatpush1.msra.mxu0 %v4981
  %5090 = vmatprep.subr.mxu0 %v4984
  %5091 = vmatpush1.msra.mxu0 %v4983
  %5092 = vmatprep.subr.mxu0 %v4986
  %5093 = vmatpush1.msra.mxu0 %v4985
  %5094 = vmatprep.subr.mxu0 %v4988
  %5095 = vmatpush1.msra.mxu0 %v4987
  %5096 = vmatprep.subr.mxu0 %v4990
  %5097 = vmatpush1.msra.mxu0 %v4989
  %5098 = vmatprep.subr.mxu0 %v4992
  %5099 = vmatpush1.msra.mxu0 %v4991
  %5100 = vmatprep.subr.mxu0 %v4994
  %5101 = vmatpush1.msra.mxu0 %v4993
  %5102 = vmatprep.subr.mxu0 0.0
  %5103 = vmatpush1.msra.mxu0 0.0
  %5104 = vmatprep.subr.mxu0 0.0
  %5105 = vmatpush1.msra.mxu0 0.0
  %5106 = vmatprep.subr.mxu0 0.0
  %5107 = vmatpush1.msra.mxu0 0.0
  %5108 = vmatprep.subr.mxu0 0.0
  %5109 = vmatpush1.msra.mxu0 0.0
  %5110 = vmatprep.subr.mxu0 0.0
  %5111 = vmatpush1.msra.mxu0 0.0
  %5112 = vmatprep.subr.mxu0 0.0
  %5113 = vmatpush1.msra.mxu0 0.0
  %5114 = vmatprep.subr.mxu0 0.0
  %5115 = vmatpush1.msra.mxu0 0.0
  %5116 = vmatprep.subr.mxu0 0.0
  %5117 = vmatpush1.msra.mxu0 0.0
  %5118 = vmatprep.subr.mxu0 0.0
  %5119 = vmatpush1.msra.mxu0 0.0
  %5120 = vmatprep.subr.mxu0 0.0
  %5121 = vmatpush1.msra.mxu0 0.0
  %5122 = vmatprep.subr.mxu0 0.0
  %5123 = vmatpush1.msra.mxu0 0.0
  %5124 = vmatprep.mubr.f32.mxu0 %v4995
  %5125 = vmatmul.mubr.f32.gmra.mrb[0].mxu0 %v4791
  %v5126 = vpop.f32.mrb[0].mxu0
  %v5127 = vadd.f32 0.0, %v5126
  %v5128 = vpop.f32.mrb[0].mxu0
  %v5129 = vadd.f32 0.0, %v5128
  %5130 = vmatprep.mubr.f32.mxu0 %v4997
  %5131 = vmatmul.mubr.f32.gmra.mrb[0].mxu0 %v4796
  %v5132 = vpop.f32.mrb[0].mxu0
  %v5133 = vadd.f32 0.0, %v5132
  %v5134 = vpop.f32.mrb[0].mxu0
  %v5135 = vadd.f32 0.0, %v5134
  %5136 = vmatprep.mubr.f32.mxu0 %v4999
  %5137 = vmatmul.mubr.f32.gmra.mrb[0].mxu0 %v4800
  %v5138 = vpop.f32.mrb[0].mxu0
  %v5139 = vadd.f32 0.0, %v5138
  %v5140 = vpop.f32.mrb[0].mxu0
  %v5141 = vadd.f32 0.0, %v5140
  %5142 = vmatprep.mubr.f32.mxu0 %v5001
  %5143 = vmatmul.mubr.f32.gmra.mrb[0].mxu0 %v4804
  %v5144 = vpop.f32.mrb[0].mxu0
  %v5145 = vadd.f32 0.0, %v5144
  %v5146 = vpop.f32.mrb[0].mxu0
  %v5147 = vadd.f32 0.0, %v5146
  %5148 = vmatprep.mubr.f32.mxu0 %v5003
  %5149 = vmatmul.mubr.f32.gmra.mrb[0].mxu0 %v4808
  %v5150 = vpop.f32.mrb[0].mxu0
  %v5151 = vadd.f32 0.0, %v5150
  %v5152 = vpop.f32.mrb[0].mxu0
  %v5153 = vadd.f32 0.0, %v5152
  %5154 = vmatprep.mubr.f32.mxu0 %v5005
  %5155 = vmatmul.mubr.f32.gmra.mrb[0].mxu0 %v4812
  %v5156 = vpop.f32.mrb[0].mxu0
  %v5157 = vadd.f32 0.0, %v5156
  %v5158 = vpop.f32.mrb[0].mxu0
  %v5159 = vadd.f32 0.0, %v5158
  %5160 = vmatprep.mubr.f32.mxu0 %v5007
  %5161 = vmatmul.mubr.f32.gmra.mrb[0].mxu0 %v4816
  %v5162 = vpop.f32.mrb[0].mxu0
  %v5163 = vadd.f32 0.0, %v5162
  %v5164 = vpop.f32.mrb[0].mxu0
  %v5165 = vadd.f32 0.0, %v5164
  %5166 = vmatprep.mubr.f32.mxu0 %v5009
  %5167 = vmatmul.mubr.f32.gmra.mrb[0].mxu0 %v4820
  %v5168 = vpop.f32.mrb[0].mxu0
  %v5169 = vadd.f32 0.0, %v5168
  %v5170 = vpop.f32.mrb[0].mxu0
  %v5171 = vadd.f32 0.0, %v5170
  %5172 = vmatprep.mubr.f32.mxu0 %v5011
  %5173 = vmatmul.mubr.f32.gmra.mrb[0].mxu0 %v4824
  %v5174 = vpop.f32.mrb[0].mxu0
  %v5175 = vadd.f32 0.0, %v5174
  %v5176 = vpop.f32.mrb[0].mxu0
  %v5177 = vadd.f32 0.0, %v5176
  %5178 = vmatprep.mubr.f32.mxu0 %v5013
  %5179 = vmatmul.mubr.f32.gmra.mrb[0].mxu0 %v4828
  %v5180 = vpop.f32.mrb[0].mxu0
  %v5181 = vadd.f32 0.0, %v5180
  %v5182 = vpop.f32.mrb[0].mxu0
  %v5183 = vadd.f32 0.0, %v5182
  %5184 = vmatprep.mubr.f32.mxu0 %v5015
  %5185 = vmatmul.mubr.f32.gmra.mrb[0].mxu0 %v4832
  %v5186 = vpop.f32.mrb[0].mxu0
  %v5187 = vadd.f32 0.0, %v5186
  %v5188 = vpop.f32.mrb[0].mxu0
  %v5189 = vadd.f32 0.0, %v5188
  %5190 = vmatprep.mubr.f32.mxu0 %v5017
  %5191 = vmatmul.mubr.f32.gmra.mrb[0].mxu0 %v4836
  %v5192 = vpop.f32.mrb[0].mxu0
  %v5193 = vadd.f32 0.0, %v5192
  %v5194 = vpop.f32.mrb[0].mxu0
  %v5195 = vadd.f32 0.0, %v5194
  %5196 = vmatprep.mubr.f32.mxu0 %v5019
  %5197 = vmatmul.mubr.f32.gmra.mrb[0].mxu0 %v4840
  %v5198 = vpop.f32.mrb[0].mxu0
  %v5199 = vadd.f32 0.0, %v5198
  %v5200 = vpop.f32.mrb[0].mxu0
  %v5201 = vadd.f32 0.0, %v5200
  %5202 = vmatprep.mubr.f32.mxu0 %v5021
  %5203 = vmatmul.mubr.f32.gmra.mrb[0].mxu0 %v4844
  %v5204 = vpop.f32.mrb[0].mxu0
  %v5205 = vadd.f32 0.0, %v5204
  %v5206 = vpop.f32.mrb[0].mxu0
  %v5207 = vadd.f32 0.0, %v5206
  %5208 = vmatprep.mubr.f32.mxu0 %v5023
  %5209 = vmatmul.mubr.f32.gmra.mrb[0].mxu0 %v4848
  %v5210 = vpop.f32.mrb[0].mxu0
  %v5211 = vadd.f32 0.0, %v5210
  %v5212 = vpop.f32.mrb[0].mxu0
  %v5213 = vadd.f32 0.0, %v5212
  %5214 = vmatprep.mubr.f32.mxu0 %v5025
  %5215 = vmatmul.mubr.f32.gmra.mrb[0].mxu0 %v4852
  %v5216 = vpop.f32.mrb[0].mxu0
  %v5217 = vadd.f32 0.0, %v5216
  %v5218 = vpop.f32.mrb[0].mxu0
  %v5219 = vadd.f32 0.0, %v5218
  %5220 = vmatprep.mubr.f32.mxu0 %v5027
  %5221 = vmatmul.mubr.f32.gmra.mrb[0].mxu0 %v4856
  %v5222 = vpop.f32.mrb[0].mxu0
  %v5223 = vadd.f32 0.0, %v5222
  %v5224 = vpop.f32.mrb[0].mxu0
  %v5225 = vadd.f32 0.0, %v5224
  %5226 = vmatprep.mubr.f32.mxu0 %v5029
  %5227 = vmatmul.mubr.f32.gmra.mrb[0].mxu0 %v4860
  %v5228 = vpop.f32.mrb[0].mxu0
  %v5229 = vadd.f32 0.0, %v5228
  %v5230 = vpop.f32.mrb[0].mxu0
  %v5231 = vadd.f32 0.0, %v5230
  %5232 = vmatprep.mubr.f32.mxu0 %v5031
  %5233 = vmatmul.mubr.f32.gmra.mrb[0].mxu0 %v4864
  %v5234 = vpop.f32.mrb[0].mxu0
  %v5235 = vadd.f32 0.0, %v5234
  %v5236 = vpop.f32.mrb[0].mxu0
  %v5237 = vadd.f32 0.0, %v5236
  %5238 = vmatprep.mubr.f32.mxu0 %v5033
  %5239 = vmatmul.mubr.f32.gmra.mrb[0].mxu0 %v4868
  %v5240 = vpop.f32.mrb[0].mxu0
  %v5241 = vadd.f32 0.0, %v5240
  %v5242 = vpop.f32.mrb[0].mxu0
  %v5243 = vadd.f32 0.0, %v5242
  %5244 = vmatprep.mubr.f32.mxu0 %v5035
  %5245 = vmatmul.mubr.f32.gmra.mrb[0].mxu0 %v4872
  %v5246 = vpop.f32.mrb[0].mxu0
  %v5247 = vadd.f32 0.0, %v5246
  %v5248 = vpop.f32.mrb[0].mxu0
  %v5249 = vadd.f32 0.0, %v5248
  %5250 = vmatprep.mubr.f32.mxu0 %v5037
  %5251 = vmatmul.mubr.f32.gmra.mrb[0].mxu0 %v4876
  %v5252 = vpop.f32.mrb[0].mxu0
  %v5253 = vadd.f32 0.0, %v5252
  %v5254 = vpop.f32.mrb[0].mxu0
  %v5255 = vadd.f32 0.0, %v5254
  %5256 = vmatprep.mubr.f32.mxu0 %v5039
  %5257 = vmatmul.mubr.f32.gmra.mrb[0].mxu0 %v4880
  %v5258 = vpop.f32.mrb[0].mxu0
  %v5259 = vadd.f32 0.0, %v5258
  %v5260 = vpop.f32.mrb[0].mxu0
  %v5261 = vadd.f32 0.0, %v5260
  %5262 = vmatprep.mubr.f32.mxu0 %v5041
  %5263 = vmatmul.mubr.f32.gmra.mrb[0].mxu0 %v4884
  %v5264 = vpop.f32.mrb[0].mxu0
  %v5265 = vadd.f32 0.0, %v5264
  %v5266 = vpop.f32.mrb[0].mxu0
  %v5267 = vadd.f32 0.0, %v5266
  %5268 = vmatprep.mubr.f32.mxu0 %v5043
  %5269 = vmatmul.mubr.f32.gmra.mrb[0].mxu0 %v4888
  %v5270 = vpop.f32.mrb[0].mxu0
  %v5271 = vadd.f32 0.0, %v5270
  %v5272 = vpop.f32.mrb[0].mxu0
  %v5273 = vadd.f32 0.0, %v5272
  %5274 = vmatprep.mubr.f32.mxu0 %v5045
  %5275 = vmatmul.mubr.f32.gmra.mrb[0].mxu0 %v4892
  %v5276 = vpop.f32.mrb[0].mxu0
  %v5277 = vadd.f32 0.0, %v5276
  %v5278 = vpop.f32.mrb[0].mxu0
  %v5279 = vadd.f32 0.0, %v5278
  %5280 = vmatprep.mubr.f32.mxu0 %v5047
  %5281 = vmatmul.mubr.f32.gmra.mrb[0].mxu0 %v4896
  %v5282 = vpop.f32.mrb[0].mxu0
  %v5283 = vadd.f32 0.0, %v5282
  %v5284 = vpop.f32.mrb[0].mxu0
  %v5285 = vadd.f32 0.0, %v5284
  %5286 = vmatprep.mubr.f32.mxu0 %v5049
  %5287 = vmatmul.mubr.f32.gmra.mrb[0].mxu0 %v4900
  %v5288 = vpop.f32.mrb[0].mxu0
  %v5289 = vadd.f32 0.0, %v5288
  %v5290 = vpop.f32.mrb[0].mxu0
  %v5291 = vadd.f32 0.0, %v5290
  %5292 = vmatprep.mubr.f32.mxu0 %v5051
  %5293 = vmatmul.mubr.f32.gmra.mrb[0].mxu0 %v4904
  %v5294 = vpop.f32.mrb[0].mxu0
  %v5295 = vadd.f32 0.0, %v5294
  %v5296 = vpop.f32.mrb[0].mxu0
  %v5297 = vadd.f32 0.0, %v5296
  %5298 = vmatprep.mubr.f32.mxu0 %v5053
  %5299 = vmatmul.mubr.f32.gmra.mrb[0].mxu0 %v4908
  %v5300 = vpop.f32.mrb[0].mxu0
  %v5301 = vadd.f32 0.0, %v5300
  %v5302 = vpop.f32.mrb[0].mxu0
  %v5303 = vadd.f32 0.0, %v5302
  %5304 = vmatprep.mubr.f32.mxu0 %v5055
  %5305 = vmatmul.mubr.f32.gmra.mrb[0].mxu0 %v4912
  %v5306 = vpop.f32.mrb[0].mxu0
  %v5307 = vadd.f32 0.0, %v5306
  %v5308 = vpop.f32.mrb[0].mxu0
  %v5309 = vadd.f32 0.0, %v5308
  %5310 = vmatprep.mubr.f32.mxu0 %v5058
  %5311 = vmatmul.mubr.f32.gmra.mrb[0].mxu0 %v4950
  %v5312 = vpop.f32.mrb[0].mxu0
  %v5313 = vadd.f32 0.0, %v5312
  %v5314 = vpop.f32.mrb[0].mxu0
  %v5315 = vadd.f32 0.0, %v5314
  %5316 = vdwg.mxu0
  %v5317 = vadd.f32 %v4724, %v5127
  %v5318 = vadd.f32 %v4725, %v5129
  %v5319 = vadd.f32 %v4726, %v5133
  %v5320 = vadd.f32 %v4727, %v5135
  %v5321 = vadd.f32 %v4728, %v5139
  %v5322 = vadd.f32 %v4729, %v5141
  %v5323 = vadd.f32 %v4730, %v5145
  %v5324 = vadd.f32 %v4731, %v5147
  %v5325 = vadd.f32 %v4732, %v5151
  %v5326 = vadd.f32 %v4733, %v5153
  %v5327 = vadd.f32 %v4734, %v5157
  %v5328 = vadd.f32 %v4735, %v5159
  %v5329 = vadd.f32 %v4736, %v5163
  %v5330 = vadd.f32 %v4737, %v5165
  %v5331 = vadd.f32 %v4738, %v5169
  %v5332 = vadd.f32 %v4739, %v5171
  %v5333 = vadd.f32 %v4740, %v5175
  %v5334 = vadd.f32 %v4741, %v5177
  %v5335 = vadd.f32 %v4742, %v5181
  %v5336 = vadd.f32 %v4743, %v5183
  %v5337 = vadd.f32 %v4744, %v5187
  %v5338 = vadd.f32 %v4745, %v5189
  %v5339 = vadd.f32 %v4746, %v5193
  %v5340 = vadd.f32 %v4747, %v5195
  %v5341 = vadd.f32 %v4748, %v5199
  %v5342 = vadd.f32 %v4749, %v5201
  %v5343 = vadd.f32 %v4750, %v5205
  %v5344 = vadd.f32 %v4751, %v5207
  %v5345 = vadd.f32 %v4752, %v5211
  %v5346 = vadd.f32 %v4753, %v5213
  %v5347 = vadd.f32 %v4754, %v5217
  %v5348 = vadd.f32 %v4755, %v5219
  %v5349 = vadd.f32 %v4756, %v5223
  %v5350 = vadd.f32 %v4757, %v5225
  %v5351 = vadd.f32 %v4758, %v5229
  %v5352 = vadd.f32 %v4759, %v5231
  %v5353 = vadd.f32 %v4760, %v5235
  %v5354 = vadd.f32 %v4761, %v5237
  %v5355 = vadd.f32 %v4762, %v5241
  %v5356 = vadd.f32 %v4763, %v5243
  %v5357 = vadd.f32 %v4764, %v5247
  %v5358 = vadd.f32 %v4765, %v5249
  %v5359 = vadd.f32 %v4766, %v5253
  %v5360 = vadd.f32 %v4767, %v5255
  %v5361 = vadd.f32 %v4768, %v5259
  %v5362 = vadd.f32 %v4769, %v5261
  %v5363 = vadd.f32 %v4770, %v5265
  %v5364 = vadd.f32 %v4771, %v5267
  %v5365 = vadd.f32 %v4772, %v5271
  %v5366 = vadd.f32 %v4773, %v5273
  %v5367 = vadd.f32 %v4774, %v5277
  %v5368 = vadd.f32 %v4775, %v5279
  %v5369 = vadd.f32 %v4776, %v5283
  %v5370 = vadd.f32 %v4777, %v5285
  %v5371 = vadd.f32 %v4778, %v5289
  %v5372 = vadd.f32 %v4779, %v5291
  %v5373 = vadd.f32 %v4780, %v5295
  %v5374 = vadd.f32 %v4781, %v5297
  %v5375 = vadd.f32 %v4782, %v5301
  %v5376 = vadd.f32 %v4783, %v5303
  %v5377 = vadd.f32 %v4784, %v5307
  %v5378 = vadd.f32 %v4785, %v5309
  %v5379 = vadd.f32 %v4786, %v5313
  %v5380 = vadd.f32 %v4787, %v5315
  %s5381 = scalar_lea.vmem %s3, 1344
  %v5382 = vld [vmem:[%s5381] sm:$0xff]
  %v5383 = vld [vmem:[%s5381 + $0x8] sm:$0xff]
  %v5384 = vld [vmem:[%s5381 + $0x10] sm:$0xff]
  %v5385 = vld [vmem:[%s5381 + $0x18] sm:$0xff]
  %v5386 = vld [vmem:[%s5381 + $0x20] sm:$0xff]
  %v5387 = vld [vmem:[%s5381 + $0x28] sm:$0xff]
  %v5388 = vld [vmem:[%s5381 + $0x30] sm:$0xff]
  %v5389 = vld [vmem:[%s5381 + $0x38] sm:$0xff]
  %v5390 = vld [vmem:[%s5381 + $0x40] sm:$0xff]
  %v5391 = vld [vmem:[%s5381 + $0x48] sm:$0xff]
  %v5392 = vld [vmem:[%s5381 + $0x50] sm:$0xff]
  %v5393 = vld [vmem:[%s5381 + $0x58] sm:$0xff]
  %v5394 = vld [vmem:[%s5381 + $0x60] sm:$0xff]
  %v5395 = vld [vmem:[%s5381 + $0x68] sm:$0xff]
  %v5396 = vld [vmem:[%s5381 + $0x70] sm:$0xff]
  %v5397 = vld [vmem:[%s5381 + $0x78] sm:$0xff]
  %v5398 = vld [vmem:[%s5381 + $0x80] sm:$0xff]
  %v5399 = vld [vmem:[%s5381 + $0x88] sm:$0xff]
  %v5400 = vld [vmem:[%s5381 + $0x90] sm:$0xff]
  %v5401 = vld [vmem:[%s5381 + $0x98] sm:$0xff]
  %v5402 = vld [vmem:[%s5381 + $0xa0] sm:$0xff]
  %v5403 = vld [vmem:[%s5381 + $0xa8] sm:$0xff]
  %v5404 = vld [vmem:[%s5381 + $0xb0] sm:$0xff]
  %v5405 = vld [vmem:[%s5381 + $0xb8] sm:$0xff]
  %v5406 = vld [vmem:[%s5381 + $0xc0] sm:$0xff]
  %v5407 = vld [vmem:[%s5381 + $0xc8] sm:$0xff]
  %v5408 = vld [vmem:[%s5381 + $0xd0] sm:$0xff]
  %v5409 = vld [vmem:[%s5381 + $0xd8] sm:$0xff]
  %v5410 = vld [vmem:[%s5381 + $0xe0] sm:$0xff]
  %v5411 = vld [vmem:[%s5381 + $0xe8] sm:$0xff]
  %v5412 = vld [vmem:[%s5381 + $0xf0] sm:$0xff]
  %v5413 = vld [vmem:[%s5381 + $0xf8] sm:$0xff]
  %v5414 = vld [vmem:[%s5381 + $0x100] sm:$0xff]
  %v5415 = vld [vmem:[%s5381 + $0x108] sm:$0xff]
  %v5416 = vld [vmem:[%s5381 + $0x110] sm:$0xff]
  %v5417 = vld [vmem:[%s5381 + $0x118] sm:$0xff]
  %v5418 = vld [vmem:[%s5381 + $0x120] sm:$0xff]
  %v5419 = vld [vmem:[%s5381 + $0x128] sm:$0xff]
  %v5420 = vld [vmem:[%s5381 + $0x130] sm:$0xff]
  %v5421 = vld [vmem:[%s5381 + $0x138] sm:$0xff]
  %v5422 = vld [vmem:[%s5381 + $0x140] sm:$0xff]
  %v5423 = vld [vmem:[%s5381 + $0x148] sm:$0xff]
  %5424 = vmatprep.subr.mxu0 %v5383
  %5425 = vmatpush1.msra.mxu0 %v5382
  %5426 = vmatprep.subr.mxu0 %v5385
  %5427 = vmatpush1.msra.mxu0 %v5384
  %5428 = vmatprep.subr.mxu0 %v5387
  %5429 = vmatpush1.msra.mxu0 %v5386
  %5430 = vmatprep.subr.mxu0 %v5389
  %5431 = vmatpush1.msra.mxu0 %v5388
  %5432 = vmatprep.subr.mxu0 %v5391
  %5433 = vmatpush1.msra.mxu0 %v5390
  %5434 = vmatprep.subr.mxu0 %v5393
  %5435 = vmatpush1.msra.mxu0 %v5392
  %5436 = vmatprep.subr.mxu0 %v5395
  %5437 = vmatpush1.msra.mxu0 %v5394
  %5438 = vmatprep.subr.mxu0 %v5397
  %5439 = vmatpush1.msra.mxu0 %v5396
  %5440 = vmatprep.subr.mxu0 %v5399
  %5441 = vmatpush1.msra.mxu0 %v5398
  %5442 = vmatprep.subr.mxu0 %v5401
  %5443 = vmatpush1.msra.mxu0 %v5400
  %5444 = vmatprep.subr.mxu0 %v5403
  %5445 = vmatpush1.msra.mxu0 %v5402
  %5446 = vmatprep.subr.mxu0 %v5405
  %5447 = vmatpush1.msra.mxu0 %v5404
  %5448 = vmatprep.subr.mxu0 %v5407
  %5449 = vmatpush1.msra.mxu0 %v5406
  %5450 = vmatprep.subr.mxu0 %v5409
  %5451 = vmatpush1.msra.mxu0 %v5408
  %5452 = vmatprep.subr.mxu0 %v5411
  %5453 = vmatpush1.msra.mxu0 %v5410
  %5454 = vmatprep.subr.mxu0 %v5413
  %5455 = vmatpush1.msra.mxu0 %v5412
  %5456 = vmatprep.subr.mxu0 %v5415
  %5457 = vmatpush1.msra.mxu0 %v5414
  %5458 = vmatprep.subr.mxu0 %v5417
  %5459 = vmatpush1.msra.mxu0 %v5416
  %5460 = vmatprep.subr.mxu0 %v5419
  %5461 = vmatpush1.msra.mxu0 %v5418
  %5462 = vmatprep.subr.mxu0 %v5421
  %5463 = vmatpush1.msra.mxu0 %v5420
  %5464 = vmatprep.subr.mxu0 %v5423
  %5465 = vmatpush1.msra.mxu0 %v5422
  %5466 = vmatprep.subr.mxu0 0.0
  %5467 = vmatpush1.msra.mxu0 0.0
  %5468 = vmatprep.subr.mxu0 0.0
  %5469 = vmatpush1.msra.mxu0 0.0
  %5470 = vmatprep.subr.mxu0 0.0
  %5471 = vmatpush1.msra.mxu0 0.0
  %5472 = vmatprep.subr.mxu0 0.0
  %5473 = vmatpush1.msra.mxu0 0.0
  %5474 = vmatprep.subr.mxu0 0.0
  %5475 = vmatpush1.msra.mxu0 0.0
  %5476 = vmatprep.subr.mxu0 0.0
  %5477 = vmatpush1.msra.mxu0 0.0
  %5478 = vmatprep.subr.mxu0 0.0
  %5479 = vmatpush1.msra.mxu0 0.0
  %5480 = vmatprep.subr.mxu0 0.0
  %5481 = vmatpush1.msra.mxu0 0.0
  %5482 = vmatprep.subr.mxu0 0.0
  %5483 = vmatpush1.msra.mxu0 0.0
  %5484 = vmatprep.subr.mxu0 0.0
  %5485 = vmatpush1.msra.mxu0 0.0
  %5486 = vmatprep.subr.mxu0 0.0
  %5487 = vmatpush1.msra.mxu0 0.0
  %5488 = vmatprep.mubr.f32.mxu0 %v3877
  %5489 = vmatmul.mubr.f32.gmra.mrb[0].mxu0 %v3178
  %v5490 = vpop.f32.mrb[0].mxu0
  %v5491 = vadd.f32 0.0, %v5490
  %v5492 = vpop.f32.mrb[0].mxu0
  %v5493 = vadd.f32 0.0, %v5492
  %5494 = vmatprep.mubr.f32.mxu0 %v3879
  %5495 = vmatmul.mubr.f32.gmra.mrb[0].mxu0 %v3180
  %v5496 = vpop.f32.mrb[0].mxu0
  %v5497 = vadd.f32 0.0, %v5496
  %v5498 = vpop.f32.mrb[0].mxu0
  %v5499 = vadd.f32 0.0, %v5498
  %5500 = vmatprep.mubr.f32.mxu0 %v3881
  %5501 = vmatmul.mubr.f32.gmra.mrb[0].mxu0 %v3182
  %v5502 = vpop.f32.mrb[0].mxu0
  %v5503 = vadd.f32 0.0, %v5502
  %v5504 = vpop.f32.mrb[0].mxu0
  %v5505 = vadd.f32 0.0, %v5504
  %5506 = vmatprep.mubr.f32.mxu0 %v3883
  %5507 = vmatmul.mubr.f32.gmra.mrb[0].mxu0 %v3184
  %v5508 = vpop.f32.mrb[0].mxu0
  %v5509 = vadd.f32 0.0, %v5508
  %v5510 = vpop.f32.mrb[0].mxu0
  %v5511 = vadd.f32 0.0, %v5510
  %5512 = vmatprep.mubr.f32.mxu0 %v3885
  %5513 = vmatmul.mubr.f32.gmra.mrb[0].mxu0 %v3186
  %v5514 = vpop.f32.mrb[0].mxu0
  %v5515 = vadd.f32 0.0, %v5514
  %v5516 = vpop.f32.mrb[0].mxu0
  %v5517 = vadd.f32 0.0, %v5516
  %5518 = vmatprep.mubr.f32.mxu0 %v3887
  %5519 = vmatmul.mubr.f32.gmra.mrb[0].mxu0 %v3188
  %v5520 = vpop.f32.mrb[0].mxu0
  %v5521 = vadd.f32 0.0, %v5520
  %v5522 = vpop.f32.mrb[0].mxu0
  %v5523 = vadd.f32 0.0, %v5522
  %5524 = vmatprep.mubr.f32.mxu0 %v3889
  %5525 = vmatmul.mubr.f32.gmra.mrb[0].mxu0 %v3190
  %v5526 = vpop.f32.mrb[0].mxu0
  %v5527 = vadd.f32 0.0, %v5526
  %v5528 = vpop.f32.mrb[0].mxu0
  %v5529 = vadd.f32 0.0, %v5528
  %5530 = vmatprep.mubr.f32.mxu0 %v3891
  %5531 = vmatmul.mubr.f32.gmra.mrb[0].mxu0 %v3192
  %v5532 = vpop.f32.mrb[0].mxu0
  %v5533 = vadd.f32 0.0, %v5532
  %v5534 = vpop.f32.mrb[0].mxu0
  %v5535 = vadd.f32 0.0, %v5534
  %5536 = vmatprep.mubr.f32.mxu0 %v3893
  %5537 = vmatmul.mubr.f32.gmra.mrb[0].mxu0 %v3194
  %v5538 = vpop.f32.mrb[0].mxu0
  %v5539 = vadd.f32 0.0, %v5538
  %v5540 = vpop.f32.mrb[0].mxu0
  %v5541 = vadd.f32 0.0, %v5540
  %5542 = vmatprep.mubr.f32.mxu0 %v3895
  %5543 = vmatmul.mubr.f32.gmra.mrb[0].mxu0 %v3196
  %v5544 = vpop.f32.mrb[0].mxu0
  %v5545 = vadd.f32 0.0, %v5544
  %v5546 = vpop.f32.mrb[0].mxu0
  %v5547 = vadd.f32 0.0, %v5546
  %5548 = vmatprep.mubr.f32.mxu0 %v3897
  %5549 = vmatmul.mubr.f32.gmra.mrb[0].mxu0 %v3198
  %v5550 = vpop.f32.mrb[0].mxu0
  %v5551 = vadd.f32 0.0, %v5550
  %v5552 = vpop.f32.mrb[0].mxu0
  %v5553 = vadd.f32 0.0, %v5552
  %5554 = vmatprep.mubr.f32.mxu0 %v3899
  %5555 = vmatmul.mubr.f32.gmra.mrb[0].mxu0 %v3200
  %v5556 = vpop.f32.mrb[0].mxu0
  %v5557 = vadd.f32 0.0, %v5556
  %v5558 = vpop.f32.mrb[0].mxu0
  %v5559 = vadd.f32 0.0, %v5558
  %5560 = vmatprep.mubr.f32.mxu0 %v3901
  %5561 = vmatmul.mubr.f32.gmra.mrb[0].mxu0 %v3202
  %v5562 = vpop.f32.mrb[0].mxu0
  %v5563 = vadd.f32 0.0, %v5562
  %v5564 = vpop.f32.mrb[0].mxu0
  %v5565 = vadd.f32 0.0, %v5564
  %5566 = vmatprep.mubr.f32.mxu0 %v3903
  %5567 = vmatmul.mubr.f32.gmra.mrb[0].mxu0 %v3204
  %v5568 = vpop.f32.mrb[0].mxu0
  %v5569 = vadd.f32 0.0, %v5568
  %v5570 = vpop.f32.mrb[0].mxu0
  %v5571 = vadd.f32 0.0, %v5570
  %5572 = vmatprep.mubr.f32.mxu0 %v3905
  %5573 = vmatmul.mubr.f32.gmra.mrb[0].mxu0 %v3206
  %v5574 = vpop.f32.mrb[0].mxu0
  %v5575 = vadd.f32 0.0, %v5574
  %v5576 = vpop.f32.mrb[0].mxu0
  %v5577 = vadd.f32 0.0, %v5576
  %5578 = vmatprep.mubr.f32.mxu0 %v3907
  %5579 = vmatmul.mubr.f32.gmra.mrb[0].mxu0 %v3208
  %v5580 = vpop.f32.mrb[0].mxu0
  %v5581 = vadd.f32 0.0, %v5580
  %v5582 = vpop.f32.mrb[0].mxu0
  %v5583 = vadd.f32 0.0, %v5582
  %5584 = vmatprep.mubr.f32.mxu0 %v3909
  %5585 = vmatmul.mubr.f32.gmra.mrb[0].mxu0 %v3210
  %v5586 = vpop.f32.mrb[0].mxu0
  %v5587 = vadd.f32 0.0, %v5586
  %v5588 = vpop.f32.mrb[0].mxu0
  %v5589 = vadd.f32 0.0, %v5588
  %5590 = vmatprep.mubr.f32.mxu0 %v3911
  %5591 = vmatmul.mubr.f32.gmra.mrb[0].mxu0 %v3212
  %v5592 = vpop.f32.mrb[0].mxu0
  %v5593 = vadd.f32 0.0, %v5592
  %v5594 = vpop.f32.mrb[0].mxu0
  %v5595 = vadd.f32 0.0, %v5594
  %5596 = vmatprep.mubr.f32.mxu0 %v3913
  %5597 = vmatmul.mubr.f32.gmra.mrb[0].mxu0 %v3214
  %v5598 = vpop.f32.mrb[0].mxu0
  %v5599 = vadd.f32 0.0, %v5598
  %v5600 = vpop.f32.mrb[0].mxu0
  %v5601 = vadd.f32 0.0, %v5600
  %5602 = vmatprep.mubr.f32.mxu0 %v3915
  %5603 = vmatmul.mubr.f32.gmra.mrb[0].mxu0 %v3216
  %v5604 = vpop.f32.mrb[0].mxu0
  %v5605 = vadd.f32 0.0, %v5604
  %v5606 = vpop.f32.mrb[0].mxu0
  %v5607 = vadd.f32 0.0, %v5606
  %5608 = vmatprep.mubr.f32.mxu0 %v3917
  %5609 = vmatmul.mubr.f32.gmra.mrb[0].mxu0 %v3218
  %v5610 = vpop.f32.mrb[0].mxu0
  %v5611 = vadd.f32 0.0, %v5610
  %v5612 = vpop.f32.mrb[0].mxu0
  %v5613 = vadd.f32 0.0, %v5612
  %5614 = vmatprep.mubr.f32.mxu0 %v3919
  %5615 = vmatmul.mubr.f32.gmra.mrb[0].mxu0 %v3220
  %v5616 = vpop.f32.mrb[0].mxu0
  %v5617 = vadd.f32 0.0, %v5616
  %v5618 = vpop.f32.mrb[0].mxu0
  %v5619 = vadd.f32 0.0, %v5618
  %5620 = vmatprep.mubr.f32.mxu0 %v3921
  %5621 = vmatmul.mubr.f32.gmra.mrb[0].mxu0 %v3222
  %v5622 = vpop.f32.mrb[0].mxu0
  %v5623 = vadd.f32 0.0, %v5622
  %v5624 = vpop.f32.mrb[0].mxu0
  %v5625 = vadd.f32 0.0, %v5624
  %5626 = vmatprep.mubr.f32.mxu0 %v3923
  %5627 = vmatmul.mubr.f32.gmra.mrb[0].mxu0 %v3224
  %v5628 = vpop.f32.mrb[0].mxu0
  %v5629 = vadd.f32 0.0, %v5628
  %v5630 = vpop.f32.mrb[0].mxu0
  %v5631 = vadd.f32 0.0, %v5630
  %5632 = vmatprep.mubr.f32.mxu0 %v3925
  %5633 = vmatmul.mubr.f32.gmra.mrb[0].mxu0 %v3226
  %v5634 = vpop.f32.mrb[0].mxu0
  %v5635 = vadd.f32 0.0, %v5634
  %v5636 = vpop.f32.mrb[0].mxu0
  %v5637 = vadd.f32 0.0, %v5636
  %5638 = vmatprep.mubr.f32.mxu0 %v3927
  %5639 = vmatmul.mubr.f32.gmra.mrb[0].mxu0 %v3228
  %v5640 = vpop.f32.mrb[0].mxu0
  %v5641 = vadd.f32 0.0, %v5640
  %v5642 = vpop.f32.mrb[0].mxu0
  %v5643 = vadd.f32 0.0, %v5642
  %5644 = vmatprep.mubr.f32.mxu0 %v3929
  %5645 = vmatmul.mubr.f32.gmra.mrb[0].mxu0 %v3230
  %v5646 = vpop.f32.mrb[0].mxu0
  %v5647 = vadd.f32 0.0, %v5646
  %v5648 = vpop.f32.mrb[0].mxu0
  %v5649 = vadd.f32 0.0, %v5648
  %5650 = vmatprep.mubr.f32.mxu0 %v3931
  %5651 = vmatmul.mubr.f32.gmra.mrb[0].mxu0 %v3232
  %v5652 = vpop.f32.mrb[0].mxu0
  %v5653 = vadd.f32 0.0, %v5652
  %v5654 = vpop.f32.mrb[0].mxu0
  %v5655 = vadd.f32 0.0, %v5654
  %5656 = vmatprep.mubr.f32.mxu0 %v3933
  %5657 = vmatmul.mubr.f32.gmra.mrb[0].mxu0 %v3234
  %v5658 = vpop.f32.mrb[0].mxu0
  %v5659 = vadd.f32 0.0, %v5658
  %v5660 = vpop.f32.mrb[0].mxu0
  %v5661 = vadd.f32 0.0, %v5660
  %5662 = vmatprep.mubr.f32.mxu0 %v3935
  %5663 = vmatmul.mubr.f32.gmra.mrb[0].mxu0 %v3236
  %v5664 = vpop.f32.mrb[0].mxu0
  %v5665 = vadd.f32 0.0, %v5664
  %v5666 = vpop.f32.mrb[0].mxu0
  %v5667 = vadd.f32 0.0, %v5666
  %5668 = vmatprep.mubr.f32.mxu0 %v3937
  %5669 = vmatmul.mubr.f32.gmra.mrb[0].mxu0 %v3238
  %v5670 = vpop.f32.mrb[0].mxu0
  %v5671 = vadd.f32 0.0, %v5670
  %v5672 = vpop.f32.mrb[0].mxu0
  %v5673 = vadd.f32 0.0, %v5672
  %5674 = vmatprep.mubr.f32.mxu0 %v3875
  %5675 = vmatmul.mubr.f32.gmra.mrb[0].mxu0 %v3176
  %v5676 = vpop.f32.mrb[0].mxu0
  %v5677 = vadd.f32 0.0, %v5676
  %v5678 = vpop.f32.mrb[0].mxu0
  %v5679 = vadd.f32 0.0, %v5678
  %5680 = vdwg.mxu0
  %v5681 = vadd.f32 %v5317, %v5491
  %v5682 = vadd.f32 %v5318, %v5493
  %v5683 = vadd.f32 %v5319, %v5497
  %v5684 = vadd.f32 %v5320, %v5499
  %v5685 = vadd.f32 %v5321, %v5503
  %v5686 = vadd.f32 %v5322, %v5505
  %v5687 = vadd.f32 %v5323, %v5509
  %v5688 = vadd.f32 %v5324, %v5511
  %v5689 = vadd.f32 %v5325, %v5515
  %v5690 = vadd.f32 %v5326, %v5517
  %v5691 = vadd.f32 %v5327, %v5521
  %v5692 = vadd.f32 %v5328, %v5523
  %v5693 = vadd.f32 %v5329, %v5527
  %v5694 = vadd.f32 %v5330, %v5529
  %v5695 = vadd.f32 %v5331, %v5533
  %v5696 = vadd.f32 %v5332, %v5535
  %v5697 = vadd.f32 %v5333, %v5539
  %v5698 = vadd.f32 %v5334, %v5541
  %v5699 = vadd.f32 %v5335, %v5545
  %v5700 = vadd.f32 %v5336, %v5547
  %v5701 = vadd.f32 %v5337, %v5551
  %v5702 = vadd.f32 %v5338, %v5553
  %v5703 = vadd.f32 %v5339, %v5557
  %v5704 = vadd.f32 %v5340, %v5559
  %v5705 = vadd.f32 %v5341, %v5563
  %v5706 = vadd.f32 %v5342, %v5565
  %v5707 = vadd.f32 %v5343, %v5569
  %v5708 = vadd.f32 %v5344, %v5571
  %v5709 = vadd.f32 %v5345, %v5575
  %v5710 = vadd.f32 %v5346, %v5577
  %v5711 = vadd.f32 %v5347, %v5581
  %v5712 = vadd.f32 %v5348, %v5583
  %v5713 = vadd.f32 %v5349, %v5587
  %v5714 = vadd.f32 %v5350, %v5589
  %v5715 = vadd.f32 %v5351, %v5593
  %v5716 = vadd.f32 %v5352, %v5595
  %v5717 = vadd.f32 %v5353, %v5599
  %v5718 = vadd.f32 %v5354, %v5601
  %v5719 = vadd.f32 %v5355, %v5605
  %v5720 = vadd.f32 %v5356, %v5607
  %v5721 = vadd.f32 %v5357, %v5611
  %v5722 = vadd.f32 %v5358, %v5613
  %v5723 = vadd.f32 %v5359, %v5617
  %v5724 = vadd.f32 %v5360, %v5619
  %v5725 = vadd.f32 %v5361, %v5623
  %v5726 = vadd.f32 %v5362, %v5625
  %v5727 = vadd.f32 %v5363, %v5629
  %v5728 = vadd.f32 %v5364, %v5631
  %v5729 = vadd.f32 %v5365, %v5635
  %v5730 = vadd.f32 %v5366, %v5637
  %v5731 = vadd.f32 %v5367, %v5641
  %v5732 = vadd.f32 %v5368, %v5643
  %v5733 = vadd.f32 %v5369, %v5647
  %v5734 = vadd.f32 %v5370, %v5649
  %v5735 = vadd.f32 %v5371, %v5653
  %v5736 = vadd.f32 %v5372, %v5655
  %v5737 = vadd.f32 %v5373, %v5659
  %v5738 = vadd.f32 %v5374, %v5661
  %v5739 = vadd.f32 %v5375, %v5665
  %v5740 = vadd.f32 %v5376, %v5667
  %v5741 = vadd.f32 %v5377, %v5671
  %v5742 = vadd.f32 %v5378, %v5673
  %v5743 = vadd.f32 %v5379, %v5677
  %v5744 = vadd.f32 %v5380, %v5679
  %v5809 = vrot.slane %v5681, 2
  %v5810 = vrot.slane %v5683, 2
  %v5811 = vsel %vm862, %v5809, %v5810
  %v5812 = vrot.slane %v5682, 2
  %v5813 = vrot.slane %v5684, 2
  %v5814 = vsel %vm862, %v5812, %v5813
  %v5815 = vrot.slane %v5685, 2
  %v5816 = vsel %vm862, %v5810, %v5815
  %v5817 = vrot.slane %v5686, 2
  %v5818 = vsel %vm862, %v5813, %v5817
  %v5819 = vrot.slane %v5687, 2
  %v5820 = vsel %vm862, %v5815, %v5819
  %v5821 = vrot.slane %v5688, 2
  %v5822 = vsel %vm862, %v5817, %v5821
  %v5823 = vrot.slane %v5689, 2
  %v5824 = vsel %vm862, %v5819, %v5823
  %v5825 = vrot.slane %v5690, 2
  %v5826 = vsel %vm862, %v5821, %v5825
  %v5827 = vrot.slane %v5691, 2
  %v5828 = vsel %vm862, %v5823, %v5827
  %v5829 = vrot.slane %v5692, 2
  %v5830 = vsel %vm862, %v5825, %v5829
  %v5831 = vrot.slane %v5693, 2
  %v5832 = vsel %vm862, %v5827, %v5831
  %v5833 = vrot.slane %v5694, 2
  %v5834 = vsel %vm862, %v5829, %v5833
  %v5835 = vrot.slane %v5695, 2
  %v5836 = vsel %vm862, %v5831, %v5835
  %v5837 = vrot.slane %v5696, 2
  %v5838 = vsel %vm862, %v5833, %v5837
  %v5839 = vrot.slane %v5697, 2
  %v5840 = vsel %vm862, %v5835, %v5839
  %v5841 = vrot.slane %v5698, 2
  %v5842 = vsel %vm862, %v5837, %v5841
  %v5843 = vrot.slane %v5699, 2
  %v5844 = vsel %vm862, %v5839, %v5843
  %v5845 = vrot.slane %v5700, 2
  %v5846 = vsel %vm862, %v5841, %v5845
  %v5847 = vrot.slane %v5701, 2
  %v5848 = vsel %vm862, %v5843, %v5847
  %v5849 = vrot.slane %v5702, 2
  %v5850 = vsel %vm862, %v5845, %v5849
  %v5851 = vrot.slane %v5703, 2
  %v5852 = vsel %vm862, %v5847, %v5851
  %v5853 = vrot.slane %v5704, 2
  %v5854 = vsel %vm862, %v5849, %v5853
  %v5855 = vrot.slane %v5705, 2
  %v5856 = vsel %vm862, %v5851, %v5855
  %v5857 = vrot.slane %v5706, 2
  %v5858 = vsel %vm862, %v5853, %v5857
  %v5859 = vrot.slane %v5707, 2
  %v5860 = vsel %vm862, %v5855, %v5859
  %v5861 = vrot.slane %v5708, 2
  %v5862 = vsel %vm862, %v5857, %v5861
  %v5863 = vrot.slane %v5709, 2
  %v5864 = vsel %vm862, %v5859, %v5863
  %v5865 = vrot.slane %v5710, 2
  %v5866 = vsel %vm862, %v5861, %v5865
  %v5867 = vrot.slane %v5711, 2
  %v5868 = vsel %vm862, %v5863, %v5867
  %v5869 = vrot.slane %v5712, 2
  %v5870 = vsel %vm862, %v5865, %v5869
  %v5871 = vrot.slane %v5713, 2
  %v5872 = vsel %vm862, %v5867, %v5871
  %v5873 = vrot.slane %v5714, 2
  %v5874 = vsel %vm862, %v5869, %v5873
  %v5875 = vrot.slane %v5715, 2
  %v5876 = vsel %vm862, %v5871, %v5875
  %v5877 = vrot.slane %v5716, 2
  %v5878 = vsel %vm862, %v5873, %v5877
  %v5879 = vrot.slane %v5717, 2
  %v5880 = vsel %vm862, %v5875, %v5879
  %v5881 = vrot.slane %v5718, 2
  %v5882 = vsel %vm862, %v5877, %v5881
  %v5883 = vrot.slane %v5719, 2
  %v5884 = vsel %vm862, %v5879, %v5883
  %v5885 = vrot.slane %v5720, 2
  %v5886 = vsel %vm862, %v5881, %v5885
  %v5887 = vrot.slane %v5721, 2
  %v5888 = vsel %vm862, %v5883, %v5887
  %v5889 = vrot.slane %v5722, 2
  %v5890 = vsel %vm862, %v5885, %v5889
  %v5891 = vrot.slane %v5723, 2
  %v5892 = vsel %vm862, %v5887, %v5891
  %v5893 = vrot.slane %v5724, 2
  %v5894 = vsel %vm862, %v5889, %v5893
  %v5895 = vrot.slane %v5725, 2
  %v5896 = vsel %vm862, %v5891, %v5895
  %v5897 = vrot.slane %v5726, 2
  %v5898 = vsel %vm862, %v5893, %v5897
  %v5899 = vrot.slane %v5727, 2
  %v5900 = vsel %vm862, %v5895, %v5899
  %v5901 = vrot.slane %v5728, 2
  %v5902 = vsel %vm862, %v5897, %v5901
  %v5903 = vrot.slane %v5729, 2
  %v5904 = vsel %vm862, %v5899, %v5903
  %v5905 = vrot.slane %v5730, 2
  %v5906 = vsel %vm862, %v5901, %v5905
  %v5907 = vrot.slane %v5731, 2
  %v5908 = vsel %vm862, %v5903, %v5907
  %v5909 = vrot.slane %v5732, 2
  %v5910 = vsel %vm862, %v5905, %v5909
  %v5911 = vrot.slane %v5733, 2
  %v5912 = vsel %vm862, %v5907, %v5911
  %v5913 = vrot.slane %v5734, 2
  %v5914 = vsel %vm862, %v5909, %v5913
  %v5915 = vrot.slane %v5735, 2
  %v5916 = vsel %vm862, %v5911, %v5915
  %v5917 = vrot.slane %v5736, 2
  %v5918 = vsel %vm862, %v5913, %v5917
  %v5919 = vrot.slane %v5737, 2
  %v5920 = vsel %vm862, %v5915, %v5919
  %v5921 = vrot.slane %v5738, 2
  %v5922 = vsel %vm862, %v5917, %v5921
  %v5923 = vrot.slane %v5739, 2
  %v5924 = vsel %vm862, %v5919, %v5923
  %v5925 = vrot.slane %v5740, 2
  %v5926 = vsel %vm862, %v5921, %v5925
  %v5927 = vrot.slane %v5741, 2
  %v5928 = vsel %vm862, %v5923, %v5927
  %v5929 = vrot.slane %v5742, 2
  %v5930 = vsel %vm862, %v5925, %v5929
  %v5931 = vrot.slane %v5743, 2
  %v5932 = vsel %vm862, %v5927, %v5931
  %v5933 = vrot.slane %v5744, 2
  %v5934 = vsel %vm862, %v5929, %v5933
  %v6001 = vsel %vm862, %v5931, %v5809
  %v6002 = vsel %vm862, %v5933, %v5812
  %v6003 = vmax.f32 %v5681, %v5811
  %v6004 = vmax.f32 %v5682, %v5814
  %v6005 = vmax.f32 %v5683, %v5816
  %v6006 = vmax.f32 %v5684, %v5818
  %v6007 = vmax.f32 %v5685, %v5820
  %v6008 = vmax.f32 %v5686, %v5822
  %v6009 = vmax.f32 %v5687, %v5824
  %v6010 = vmax.f32 %v5688, %v5826
  %v6011 = vmax.f32 %v5689, %v5828
  %v6012 = vmax.f32 %v5690, %v5830
  %v6013 = vmax.f32 %v5691, %v5832
  %v6014 = vmax.f32 %v5692, %v5834
  %v6015 = vmax.f32 %v5693, %v5836
  %v6016 = vmax.f32 %v5694, %v5838
  %v6017 = vmax.f32 %v5695, %v5840
  %v6018 = vmax.f32 %v5696, %v5842
  %v6019 = vmax.f32 %v5697, %v5844
  %v6020 = vmax.f32 %v5698, %v5846
  %v6021 = vmax.f32 %v5699, %v5848
  %v6022 = vmax.f32 %v5700, %v5850
  %v6023 = vmax.f32 %v5701, %v5852
  %v6024 = vmax.f32 %v5702, %v5854
  %v6025 = vmax.f32 %v5703, %v5856
  %v6026 = vmax.f32 %v5704, %v5858
  %v6027 = vmax.f32 %v5705, %v5860
  %v6028 = vmax.f32 %v5706, %v5862
  %v6029 = vmax.f32 %v5707, %v5864
  %v6030 = vmax.f32 %v5708, %v5866
  %v6031 = vmax.f32 %v5709, %v5868
  %v6032 = vmax.f32 %v5710, %v5870
  %v6033 = vmax.f32 %v5711, %v5872
  %v6034 = vmax.f32 %v5712, %v5874
  %v6035 = vmax.f32 %v5713, %v5876
  %v6036 = vmax.f32 %v5714, %v5878
  %v6037 = vmax.f32 %v5715, %v5880
  %v6038 = vmax.f32 %v5716, %v5882
  %v6039 = vmax.f32 %v5717, %v5884
  %v6040 = vmax.f32 %v5718, %v5886
  %v6041 = vmax.f32 %v5719, %v5888
  %v6042 = vmax.f32 %v5720, %v5890
  %v6043 = vmax.f32 %v5721, %v5892
  %v6044 = vmax.f32 %v5722, %v5894
  %v6045 = vmax.f32 %v5723, %v5896
  %v6046 = vmax.f32 %v5724, %v5898
  %v6047 = vmax.f32 %v5725, %v5900
  %v6048 = vmax.f32 %v5726, %v5902
  %v6049 = vmax.f32 %v5727, %v5904
  %v6050 = vmax.f32 %v5728, %v5906
  %v6051 = vmax.f32 %v5729, %v5908
  %v6052 = vmax.f32 %v5730, %v5910
  %v6053 = vmax.f32 %v5731, %v5912
  %v6054 = vmax.f32 %v5732, %v5914
  %v6055 = vmax.f32 %v5733, %v5916
  %v6056 = vmax.f32 %v5734, %v5918
  %v6057 = vmax.f32 %v5735, %v5920
  %v6058 = vmax.f32 %v5736, %v5922
  %v6059 = vmax.f32 %v5737, %v5924
  %v6060 = vmax.f32 %v5738, %v5926
  %v6061 = vmax.f32 %v5739, %v5928
  %v6062 = vmax.f32 %v5740, %v5930
  %v6063 = vmax.f32 %v5741, %v5932
  %v6064 = vmax.f32 %v5742, %v5934
  %v6065 = vmax.f32 %v5743, %v6001
  %v6066 = vmax.f32 %v5744, %v6002
  %6131 = vrot.lane.b32.xlu0 %v6003, 112
  %v6132 = vpop.permute.xlu0 %6131
  %6133 = vrot.lane.b32.xlu0 %v6004, 112
  %v6134 = vpop.permute.xlu0 %6133
  %6135 = vrot.lane.b32.xlu0 %v6005, 112
  %v6136 = vpop.permute.xlu0 %6135
  %6137 = vrot.lane.b32.xlu0 %v6006, 112
  %v6138 = vpop.permute.xlu0 %6137
  %6139 = vrot.lane.b32.xlu0 %v6007, 112
  %v6140 = vpop.permute.xlu0 %6139
  %6141 = vrot.lane.b32.xlu0 %v6008, 112
  %v6142 = vpop.permute.xlu0 %6141
  %6143 = vrot.lane.b32.xlu0 %v6009, 112
  %v6144 = vpop.permute.xlu0 %6143
  %6145 = vrot.lane.b32.xlu0 %v6010, 112
  %v6146 = vpop.permute.xlu0 %6145
  %6147 = vrot.lane.b32.xlu0 %v6011, 112
  %v6148 = vpop.permute.xlu0 %6147
  %6149 = vrot.lane.b32.xlu0 %v6012, 112
  %v6150 = vpop.permute.xlu0 %6149
  %6151 = vrot.lane.b32.xlu0 %v6013, 112
  %v6152 = vpop.permute.xlu0 %6151
  %6153 = vrot.lane.b32.xlu0 %v6014, 112
  %v6154 = vpop.permute.xlu0 %6153
  %6155 = vrot.lane.b32.xlu0 %v6015, 112
  %v6156 = vpop.permute.xlu0 %6155
  %6157 = vrot.lane.b32.xlu0 %v6016, 112
  %v6158 = vpop.permute.xlu0 %6157
  %6159 = vrot.lane.b32.xlu0 %v6017, 112
  %v6160 = vpop.permute.xlu0 %6159
  %6161 = vrot.lane.b32.xlu0 %v6018, 112
  %v6162 = vpop.permute.xlu0 %6161
  %6163 = vrot.lane.b32.xlu0 %v6019, 112
  %v6164 = vpop.permute.xlu0 %6163
  %6165 = vrot.lane.b32.xlu0 %v6020, 112
  %v6166 = vpop.permute.xlu0 %6165
  %6167 = vrot.lane.b32.xlu0 %v6021, 112
  %v6168 = vpop.permute.xlu0 %6167
  %6169 = vrot.lane.b32.xlu0 %v6022, 112
  %v6170 = vpop.permute.xlu0 %6169
  %6171 = vrot.lane.b32.xlu0 %v6023, 112
  %v6172 = vpop.permute.xlu0 %6171
  %6173 = vrot.lane.b32.xlu0 %v6024, 112
  %v6174 = vpop.permute.xlu0 %6173
  %6175 = vrot.lane.b32.xlu0 %v6025, 112
  %v6176 = vpop.permute.xlu0 %6175
  %6177 = vrot.lane.b32.xlu0 %v6026, 112
  %v6178 = vpop.permute.xlu0 %6177
  %6179 = vrot.lane.b32.xlu0 %v6027, 112
  %v6180 = vpop.permute.xlu0 %6179
  %6181 = vrot.lane.b32.xlu0 %v6028, 112
  %v6182 = vpop.permute.xlu0 %6181
  %6183 = vrot.lane.b32.xlu0 %v6029, 112
  %v6184 = vpop.permute.xlu0 %6183
  %6185 = vrot.lane.b32.xlu0 %v6030, 112
  %v6186 = vpop.permute.xlu0 %6185
  %6187 = vrot.lane.b32.xlu0 %v6031, 112
  %v6188 = vpop.permute.xlu0 %6187
  %6189 = vrot.lane.b32.xlu0 %v6032, 112
  %v6190 = vpop.permute.xlu0 %6189
  %6191 = vrot.lane.b32.xlu0 %v6033, 112
  %v6192 = vpop.permute.xlu0 %6191
  %6193 = vrot.lane.b32.xlu0 %v6034, 112
  %v6194 = vpop.permute.xlu0 %6193
  %6195 = vrot.lane.b32.xlu0 %v6035, 112
  %v6196 = vpop.permute.xlu0 %6195
  %6197 = vrot.lane.b32.xlu0 %v6036, 112
  %v6198 = vpop.permute.xlu0 %6197
  %6199 = vrot.lane.b32.xlu0 %v6037, 112
  %v6200 = vpop.permute.xlu0 %6199
  %6201 = vrot.lane.b32.xlu0 %v6038, 112
  %v6202 = vpop.permute.xlu0 %6201
  %6203 = vrot.lane.b32.xlu0 %v6039, 112
  %v6204 = vpop.permute.xlu0 %6203
  %6205 = vrot.lane.b32.xlu0 %v6040, 112
  %v6206 = vpop.permute.xlu0 %6205
  %6207 = vrot.lane.b32.xlu0 %v6041, 112
  %v6208 = vpop.permute.xlu0 %6207
  %6209 = vrot.lane.b32.xlu0 %v6042, 112
  %v6210 = vpop.permute.xlu0 %6209
  %6211 = vrot.lane.b32.xlu0 %v6043, 112
  %v6212 = vpop.permute.xlu0 %6211
  %6213 = vrot.lane.b32.xlu0 %v6044, 112
  %v6214 = vpop.permute.xlu0 %6213
  %6215 = vrot.lane.b32.xlu0 %v6045, 112
  %v6216 = vpop.permute.xlu0 %6215
  %6217 = vrot.lane.b32.xlu0 %v6046, 112
  %v6218 = vpop.permute.xlu0 %6217
  %6219 = vrot.lane.b32.xlu0 %v6047, 112
  %v6220 = vpop.permute.xlu0 %6219
  %6221 = vrot.lane.b32.xlu0 %v6048, 112
  %v6222 = vpop.permute.xlu0 %6221
  %6223 = vrot.lane.b32.xlu0 %v6049, 112
  %v6224 = vpop.permute.xlu0 %6223
  %6225 = vrot.lane.b32.xlu0 %v6050, 112
  %v6226 = vpop.permute.xlu0 %6225
  %6227 = vrot.lane.b32.xlu0 %v6051, 112
  %v6228 = vpop.permute.xlu0 %6227
  %6229 = vrot.lane.b32.xlu0 %v6052, 112
  %v6230 = vpop.permute.xlu0 %6229
  %6231 = vrot.lane.b32.xlu0 %v6053, 112
  %v6232 = vpop.permute.xlu0 %6231
  %6233 = vrot.lane.b32.xlu0 %v6054, 112
  %v6234 = vpop.permute.xlu0 %6233
  %6235 = vrot.lane.b32.xlu0 %v6055, 112
  %v6236 = vpop.permute.xlu0 %6235
  %6237 = vrot.lane.b32.xlu0 %v6056, 112
  %v6238 = vpop.permute.xlu0 %6237
  %6239 = vrot.lane.b32.xlu0 %v6057, 112
  %v6240 = vpop.permute.xlu0 %6239
  %6241 = vrot.lane.b32.xlu0 %v6058, 112
  %v6242 = vpop.permute.xlu0 %6241
  %6243 = vrot.lane.b32.xlu0 %v6059, 112
  %v6244 = vpop.permute.xlu0 %6243
  %6245 = vrot.lane.b32.xlu0 %v6060, 112
  %v6246 = vpop.permute.xlu0 %6245
  %6247 = vrot.lane.b32.xlu0 %v6061, 112
  %v6248 = vpop.permute.xlu0 %6247
  %6249 = vrot.lane.b32.xlu0 %v6062, 112
  %v6250 = vpop.permute.xlu0 %6249
  %6251 = vrot.lane.b32.xlu0 %v6063, 112
  %v6252 = vpop.permute.xlu0 %6251
  %6253 = vrot.lane.b32.xlu0 %v6064, 112
  %v6254 = vpop.permute.xlu0 %6253
  %6255 = vrot.lane.b32.xlu0 %v6065, 112
  %v6256 = vpop.permute.xlu0 %6255
  %6257 = vrot.lane.b32.xlu0 %v6066, 112
  %v6258 = vpop.permute.xlu0 %6257
  %vm6259 = vcmask 916480
  %v6260 = vsel %vm6259, %v6132, %v6134
  %v6261 = vsel %vm6259, %v6136, %v6138
  %v6262 = vsel %vm6259, %v6140, %v6142
  %v6263 = vsel %vm6259, %v6144, %v6146
  %v6264 = vsel %vm6259, %v6148, %v6150
  %v6265 = vsel %vm6259, %v6152, %v6154
  %v6266 = vsel %vm6259, %v6156, %v6158
  %v6267 = vsel %vm6259, %v6160, %v6162
  %v6268 = vsel %vm6259, %v6164, %v6166
  %v6269 = vsel %vm6259, %v6168, %v6170
  %v6270 = vsel %vm6259, %v6172, %v6174
  %v6271 = vsel %vm6259, %v6176, %v6178
  %v6272 = vsel %vm6259, %v6180, %v6182
  %v6273 = vsel %vm6259, %v6184, %v6186
  %v6274 = vsel %vm6259, %v6188, %v6190
  %v6275 = vsel %vm6259, %v6192, %v6194
  %v6276 = vsel %vm6259, %v6196, %v6198
  %v6277 = vsel %vm6259, %v6200, %v6202
  %v6278 = vsel %vm6259, %v6204, %v6206
  %v6279 = vsel %vm6259, %v6208, %v6210
  %v6280 = vsel %vm6259, %v6212, %v6214
  %v6281 = vsel %vm6259, %v6216, %v6218
  %v6282 = vsel %vm6259, %v6220, %v6222
  %v6283 = vsel %vm6259, %v6224, %v6226
  %v6284 = vsel %vm6259, %v6228, %v6230
  %v6285 = vsel %vm6259, %v6232, %v6234
  %v6286 = vsel %vm6259, %v6236, %v6238
  %v6287 = vsel %vm6259, %v6240, %v6242
  %v6288 = vsel %vm6259, %v6244, %v6246
  %v6289 = vsel %vm6259, %v6248, %v6250
  %v6290 = vsel %vm6259, %v6252, %v6254
  %v6291 = vsel %vm6259, %v6256, %v6258
  %6356 = vrot.lane.b32.xlu0 %v6003, 16
  %v6357 = vpop.permute.xlu0 %6356
  %6358 = vrot.lane.b32.xlu0 %v6005, 16
  %v6359 = vpop.permute.xlu0 %6358
  %6360 = vrot.lane.b32.xlu0 %v6007, 16
  %v6361 = vpop.permute.xlu0 %6360
  %6362 = vrot.lane.b32.xlu0 %v6009, 16
  %v6363 = vpop.permute.xlu0 %6362
  %6364 = vrot.lane.b32.xlu0 %v6011, 16
  %v6365 = vpop.permute.xlu0 %6364
  %6366 = vrot.lane.b32.xlu0 %v6013, 16
  %v6367 = vpop.permute.xlu0 %6366
  %6368 = vrot.lane.b32.xlu0 %v6015, 16
  %v6369 = vpop.permute.xlu0 %6368
  %6370 = vrot.lane.b32.xlu0 %v6017, 16
  %v6371 = vpop.permute.xlu0 %6370
  %6372 = vrot.lane.b32.xlu0 %v6019, 16
  %v6373 = vpop.permute.xlu0 %6372
  %6374 = vrot.lane.b32.xlu0 %v6021, 16
  %v6375 = vpop.permute.xlu0 %6374
  %6376 = vrot.lane.b32.xlu0 %v6023, 16
  %v6377 = vpop.permute.xlu0 %6376
  %6378 = vrot.lane.b32.xlu0 %v6025, 16
  %v6379 = vpop.permute.xlu0 %6378
  %6380 = vrot.lane.b32.xlu0 %v6027, 16
  %v6381 = vpop.permute.xlu0 %6380
  %6382 = vrot.lane.b32.xlu0 %v6029, 16
  %v6383 = vpop.permute.xlu0 %6382
  %6384 = vrot.lane.b32.xlu0 %v6031, 16
  %v6385 = vpop.permute.xlu0 %6384
  %6386 = vrot.lane.b32.xlu0 %v6033, 16
  %v6387 = vpop.permute.xlu0 %6386
  %6388 = vrot.lane.b32.xlu0 %v6035, 16
  %v6389 = vpop.permute.xlu0 %6388
  %6390 = vrot.lane.b32.xlu0 %v6037, 16
  %v6391 = vpop.permute.xlu0 %6390
  %6392 = vrot.lane.b32.xlu0 %v6039, 16
  %v6393 = vpop.permute.xlu0 %6392
  %6394 = vrot.lane.b32.xlu0 %v6041, 16
  %v6395 = vpop.permute.xlu0 %6394
  %6396 = vrot.lane.b32.xlu0 %v6043, 16
  %v6397 = vpop.permute.xlu0 %6396
  %6398 = vrot.lane.b32.xlu0 %v6045, 16
  %v6399 = vpop.permute.xlu0 %6398
  %6400 = vrot.lane.b32.xlu0 %v6047, 16
  %v6401 = vpop.permute.xlu0 %6400
  %6402 = vrot.lane.b32.xlu0 %v6049, 16
  %v6403 = vpop.permute.xlu0 %6402
  %6404 = vrot.lane.b32.xlu0 %v6051, 16
  %v6405 = vpop.permute.xlu0 %6404
  %6406 = vrot.lane.b32.xlu0 %v6053, 16
  %v6407 = vpop.permute.xlu0 %6406
  %6408 = vrot.lane.b32.xlu0 %v6055, 16
  %v6409 = vpop.permute.xlu0 %6408
  %6410 = vrot.lane.b32.xlu0 %v6057, 16
  %v6411 = vpop.permute.xlu0 %6410
  %6412 = vrot.lane.b32.xlu0 %v6059, 16
  %v6413 = vpop.permute.xlu0 %6412
  %6414 = vrot.lane.b32.xlu0 %v6061, 16
  %v6415 = vpop.permute.xlu0 %6414
  %6416 = vrot.lane.b32.xlu0 %v6063, 16
  %v6417 = vpop.permute.xlu0 %6416
  %6418 = vrot.lane.b32.xlu0 %v6065, 16
  %v6419 = vpop.permute.xlu0 %6418
  %vm6452 = vcmask 130048
  %v6453 = vsel %vm6452, %v6134, %v6357
  %v6454 = vsel %vm6452, %v6138, %v6359
  %v6455 = vsel %vm6452, %v6142, %v6361
  %v6456 = vsel %vm6452, %v6146, %v6363
  %v6457 = vsel %vm6452, %v6150, %v6365
  %v6458 = vsel %vm6452, %v6154, %v6367
  %v6459 = vsel %vm6452, %v6158, %v6369
  %v6460 = vsel %vm6452, %v6162, %v6371
  %v6461 = vsel %vm6452, %v6166, %v6373
  %v6462 = vsel %vm6452, %v6170, %v6375
  %v6463 = vsel %vm6452, %v6174, %v6377
  %v6464 = vsel %vm6452, %v6178, %v6379
  %v6465 = vsel %vm6452, %v6182, %v6381
  %v6466 = vsel %vm6452, %v6186, %v6383
  %v6467 = vsel %vm6452, %v6190, %v6385
  %v6468 = vsel %vm6452, %v6194, %v6387
  %v6469 = vsel %vm6452, %v6198, %v6389
  %v6470 = vsel %vm6452, %v6202, %v6391
  %v6471 = vsel %vm6452, %v6206, %v6393
  %v6472 = vsel %vm6452, %v6210, %v6395
  %v6473 = vsel %vm6452, %v6214, %v6397
  %v6474 = vsel %vm6452, %v6218, %v6399
  %v6475 = vsel %vm6452, %v6222, %v6401
  %v6476 = vsel %vm6452, %v6226, %v6403
  %v6477 = vsel %vm6452, %v6230, %v6405
  %v6478 = vsel %vm6452, %v6234, %v6407
  %v6479 = vsel %vm6452, %v6238, %v6409
  %v6480 = vsel %vm6452, %v6242, %v6411
  %v6481 = vsel %vm6452, %v6246, %v6413
  %v6482 = vsel %vm6452, %v6250, %v6415
  %v6483 = vsel %vm6452, %v6254, %v6417
  %v6484 = vsel %vm6452, %v6258, %v6419
  %v6485 = vmax.f32 %v6003, %v6260
  %v6486 = vmax.f32 %v6004, %v6453
  %v6487 = vmax.f32 %v6005, %v6261
  %v6488 = vmax.f32 %v6006, %v6454
  %v6489 = vmax.f32 %v6007, %v6262
  %v6490 = vmax.f32 %v6008, %v6455
  %v6491 = vmax.f32 %v6009, %v6263
  %v6492 = vmax.f32 %v6010, %v6456
  %v6493 = vmax.f32 %v6011, %v6264
  %v6494 = vmax.f32 %v6012, %v6457
  %v6495 = vmax.f32 %v6013, %v6265
  %v6496 = vmax.f32 %v6014, %v6458
  %v6497 = vmax.f32 %v6015, %v6266
  %v6498 = vmax.f32 %v6016, %v6459
  %v6499 = vmax.f32 %v6017, %v6267
  %v6500 = vmax.f32 %v6018, %v6460
  %v6501 = vmax.f32 %v6019, %v6268
  %v6502 = vmax.f32 %v6020, %v6461
  %v6503 = vmax.f32 %v6021, %v6269
  %v6504 = vmax.f32 %v6022, %v6462
  %v6505 = vmax.f32 %v6023, %v6270
  %v6506 = vmax.f32 %v6024, %v6463
  %v6507 = vmax.f32 %v6025, %v6271
  %v6508 = vmax.f32 %v6026, %v6464
  %v6509 = vmax.f32 %v6027, %v6272
  %v6510 = vmax.f32 %v6028, %v6465
  %v6511 = vmax.f32 %v6029, %v6273
  %v6512 = vmax.f32 %v6030, %v6466
  %v6513 = vmax.f32 %v6031, %v6274
  %v6514 = vmax.f32 %v6032, %v6467
  %v6515 = vmax.f32 %v6033, %v6275
  %v6516 = vmax.f32 %v6034, %v6468
  %v6517 = vmax.f32 %v6035, %v6276
  %v6518 = vmax.f32 %v6036, %v6469
  %v6519 = vmax.f32 %v6037, %v6277
  %v6520 = vmax.f32 %v6038, %v6470
  %v6521 = vmax.f32 %v6039, %v6278
  %v6522 = vmax.f32 %v6040, %v6471
  %v6523 = vmax.f32 %v6041, %v6279
  %v6524 = vmax.f32 %v6042, %v6472
  %v6525 = vmax.f32 %v6043, %v6280
  %v6526 = vmax.f32 %v6044, %v6473
  %v6527 = vmax.f32 %v6045, %v6281
  %v6528 = vmax.f32 %v6046, %v6474
  %v6529 = vmax.f32 %v6047, %v6282
  %v6530 = vmax.f32 %v6048, %v6475
  %v6531 = vmax.f32 %v6049, %v6283
  %v6532 = vmax.f32 %v6050, %v6476
  %v6533 = vmax.f32 %v6051, %v6284
  %v6534 = vmax.f32 %v6052, %v6477
  %v6535 = vmax.f32 %v6053, %v6285
  %v6536 = vmax.f32 %v6054, %v6478
  %v6537 = vmax.f32 %v6055, %v6286
  %v6538 = vmax.f32 %v6056, %v6479
  %v6539 = vmax.f32 %v6057, %v6287
  %v6540 = vmax.f32 %v6058, %v6480
  %v6541 = vmax.f32 %v6059, %v6288
  %v6542 = vmax.f32 %v6060, %v6481
  %v6543 = vmax.f32 %v6061, %v6289
  %v6544 = vmax.f32 %v6062, %v6482
  %v6545 = vmax.f32 %v6063, %v6290
  %v6546 = vmax.f32 %v6064, %v6483
  %v6547 = vmax.f32 %v6065, %v6291
  %v6548 = vmax.f32 %v6066, %v6484
  %v6549 = vld [vmem:[%s4] sm:$0x3]
  %v6551 = vlaneseq
  %v6552 = vshrl.u32 %v6551, 7
  %v6553 = vsub.s32 0, %v6552
  %v6554 = vrot.slane %v6549, %v6553
  %v6555 = vlaneseq
  %v6556 = vshrl.u32 %v6555, 7
  %v6557 = vsub.s32 1, %v6556
  %v6558 = vrot.slane %v6549, %v6557
  %v6561 = vadd.f32 %v6485, %v6554
  %v6562 = vadd.f32 %v6486, %v6558
  %v6563 = vadd.f32 %v6487, %v6554
  %v6564 = vadd.f32 %v6488, %v6558
  %v6565 = vadd.f32 %v6489, %v6554
  %v6566 = vadd.f32 %v6490, %v6558
  %v6567 = vadd.f32 %v6491, %v6554
  %v6568 = vadd.f32 %v6492, %v6558
  %v6569 = vadd.f32 %v6493, %v6554
  %v6570 = vadd.f32 %v6494, %v6558
  %v6571 = vadd.f32 %v6495, %v6554
  %v6572 = vadd.f32 %v6496, %v6558
  %v6573 = vadd.f32 %v6497, %v6554
  %v6574 = vadd.f32 %v6498, %v6558
  %v6575 = vadd.f32 %v6499, %v6554
  %v6576 = vadd.f32 %v6500, %v6558
  %v6577 = vadd.f32 %v6501, %v6554
  %v6578 = vadd.f32 %v6502, %v6558
  %v6579 = vadd.f32 %v6503, %v6554
  %v6580 = vadd.f32 %v6504, %v6558
  %v6581 = vadd.f32 %v6505, %v6554
  %v6582 = vadd.f32 %v6506, %v6558
  %v6583 = vadd.f32 %v6507, %v6554
  %v6584 = vadd.f32 %v6508, %v6558
  %v6585 = vadd.f32 %v6509, %v6554
  %v6586 = vadd.f32 %v6510, %v6558
  %v6587 = vadd.f32 %v6511, %v6554
  %v6588 = vadd.f32 %v6512, %v6558
  %v6589 = vadd.f32 %v6513, %v6554
  %v6590 = vadd.f32 %v6514, %v6558
  %v6591 = vadd.f32 %v6515, %v6554
  %v6592 = vadd.f32 %v6516, %v6558
  %v6593 = vadd.f32 %v6517, %v6554
  %v6594 = vadd.f32 %v6518, %v6558
  %v6595 = vadd.f32 %v6519, %v6554
  %v6596 = vadd.f32 %v6520, %v6558
  %v6597 = vadd.f32 %v6521, %v6554
  %v6598 = vadd.f32 %v6522, %v6558
  %v6599 = vadd.f32 %v6523, %v6554
  %v6600 = vadd.f32 %v6524, %v6558
  %v6601 = vadd.f32 %v6525, %v6554
  %v6602 = vadd.f32 %v6526, %v6558
  %v6603 = vadd.f32 %v6527, %v6554
  %v6604 = vadd.f32 %v6528, %v6558
  %v6605 = vadd.f32 %v6529, %v6554
  %v6606 = vadd.f32 %v6530, %v6558
  %v6607 = vadd.f32 %v6531, %v6554
  %v6608 = vadd.f32 %v6532, %v6558
  %v6609 = vadd.f32 %v6533, %v6554
  %v6610 = vadd.f32 %v6534, %v6558
  %v6611 = vadd.f32 %v6535, %v6554
  %v6612 = vadd.f32 %v6536, %v6558
  %v6613 = vadd.f32 %v6537, %v6554
  %v6614 = vadd.f32 %v6538, %v6558
  %v6615 = vadd.f32 %v6539, %v6554
  %v6616 = vadd.f32 %v6540, %v6558
  %v6617 = vadd.f32 %v6541, %v6554
  %v6618 = vadd.f32 %v6542, %v6558
  %v6619 = vadd.f32 %v6543, %v6554
  %v6620 = vadd.f32 %v6544, %v6558
  %v6621 = vadd.f32 %v6545, %v6554
  %v6622 = vadd.f32 %v6546, %v6558
  %v6623 = vadd.f32 %v6547, %v6554
  %v6624 = vadd.f32 %v6548, %v6558
  %v6625 = vmax.f32 %v6561, 0.0
  %v6626 = vmax.f32 %v6562, 0.0
  %v6627 = vmax.f32 %v6563, 0.0
  %v6628 = vmax.f32 %v6564, 0.0
  %v6629 = vmax.f32 %v6565, 0.0
  %v6630 = vmax.f32 %v6566, 0.0
  %v6631 = vmax.f32 %v6567, 0.0
  %v6632 = vmax.f32 %v6568, 0.0
  %v6633 = vmax.f32 %v6569, 0.0
  %v6634 = vmax.f32 %v6570, 0.0
  %v6635 = vmax.f32 %v6571, 0.0
  %v6636 = vmax.f32 %v6572, 0.0
  %v6637 = vmax.f32 %v6573, 0.0
  %v6638 = vmax.f32 %v6574, 0.0
  %v6639 = vmax.f32 %v6575, 0.0
  %v6640 = vmax.f32 %v6576, 0.0
  %v6641 = vmax.f32 %v6577, 0.0
  %v6642 = vmax.f32 %v6578, 0.0
  %v6643 = vmax.f32 %v6579, 0.0
  %v6644 = vmax.f32 %v6580, 0.0
  %v6645 = vmax.f32 %v6581, 0.0
  %v6646 = vmax.f32 %v6582, 0.0
  %v6647 = vmax.f32 %v6583, 0.0
  %v6648 = vmax.f32 %v6584, 0.0
  %v6649 = vmax.f32 %v6585, 0.0
  %v6650 = vmax.f32 %v6586, 0.0
  %v6651 = vmax.f32 %v6587, 0.0
  %v6652 = vmax.f32 %v6588, 0.0
  %v6653 = vmax.f32 %v6589, 0.0
  %v6654 = vmax.f32 %v6590, 0.0
  %v6655 = vmax.f32 %v6591, 0.0
  %v6656 = vmax.f32 %v6592, 0.0
  %v6657 = vmax.f32 %v6593, 0.0
  %v6658 = vmax.f32 %v6594, 0.0
  %v6659 = vmax.f32 %v6595, 0.0
  %v6660 = vmax.f32 %v6596, 0.0
  %v6661 = vmax.f32 %v6597, 0.0
  %v6662 = vmax.f32 %v6598, 0.0
  %v6663 = vmax.f32 %v6599, 0.0
  %v6664 = vmax.f32 %v6600, 0.0
  %v6665 = vmax.f32 %v6601, 0.0
  %v6666 = vmax.f32 %v6602, 0.0
  %v6667 = vmax.f32 %v6603, 0.0
  %v6668 = vmax.f32 %v6604, 0.0
  %v6669 = vmax.f32 %v6605, 0.0
  %v6670 = vmax.f32 %v6606, 0.0
  %v6671 = vmax.f32 %v6607, 0.0
  %v6672 = vmax.f32 %v6608, 0.0
  %v6673 = vmax.f32 %v6609, 0.0
  %v6674 = vmax.f32 %v6610, 0.0
  %v6675 = vmax.f32 %v6611, 0.0
  %v6676 = vmax.f32 %v6612, 0.0
  %v6677 = vmax.f32 %v6613, 0.0
  %v6678 = vmax.f32 %v6614, 0.0
  %v6679 = vmax.f32 %v6615, 0.0
  %v6680 = vmax.f32 %v6616, 0.0
  %v6681 = vmax.f32 %v6617, 0.0
  %v6682 = vmax.f32 %v6618, 0.0
  %v6683 = vmax.f32 %v6619, 0.0
  %v6684 = vmax.f32 %v6620, 0.0
  %v6685 = vmax.f32 %v6621, 0.0
  %v6686 = vmax.f32 %v6622, 0.0
  %v6687 = vmax.f32 %v6623, 0.0
  %v6688 = vmax.f32 %v6624, 0.0
  %v6689 = vld [vmem:[%s5] sm:$0xff]
  %v6690 = vld [vmem:[%s5 + $0x8] sm:$0xff]
  %v6691 = vld [vmem:[%s5 + $0x10] sm:$0xff]
  %v6692 = vld [vmem:[%s5 + $0x18] sm:$0xff]
  %v6693 = vld [vmem:[%s5 + $0x20] sm:$0xff]
  %v6694 = vld [vmem:[%s5 + $0x28] sm:$0xff]
  %v6695 = vld [vmem:[%s5 + $0x30] sm:$0xff]
  %v6696 = vld [vmem:[%s5 + $0x38] sm:$0xff]
  %v6697 = vld [vmem:[%s5 + $0x40] sm:$0xff]
  %v6698 = vld [vmem:[%s5 + $0x48] sm:$0xff]
  %v6699 = vld [vmem:[%s5 + $0x50] sm:$0xff]
  %v6700 = vld [vmem:[%s5 + $0x58] sm:$0xff]
  %v6701 = vld [vmem:[%s5 + $0x60] sm:$0xff]
  %v6702 = vld [vmem:[%s5 + $0x68] sm:$0xff]
  %v6703 = vld [vmem:[%s5 + $0x70] sm:$0xff]
  %v6704 = vld [vmem:[%s5 + $0x78] sm:$0xff]
  %v6705 = vld [vmem:[%s5 + $0x80] sm:$0xff]
  %v6706 = vld [vmem:[%s5 + $0x88] sm:$0xff]
  %v6707 = vld [vmem:[%s5 + $0x90] sm:$0xff]
  %v6708 = vld [vmem:[%s5 + $0x98] sm:$0xff]
  %v6773 = vrot.slane %v6625, 4
  %v6774 = vrot.slane %v6627, 4
  %v6775 = vsel %vm1818, %v6773, %v6774
  %v6776 = vrot.slane %v6626, 4
  %v6777 = vrot.slane %v6628, 4
  %v6778 = vsel %vm1818, %v6776, %v6777
  %v6779 = vrot.slane %v6629, 4
  %v6780 = vsel %vm1818, %v6774, %v6779
  %v6781 = vrot.slane %v6630, 4
  %v6782 = vsel %vm1818, %v6777, %v6781
  %v6783 = vrot.slane %v6631, 4
  %v6784 = vsel %vm1818, %v6779, %v6783
  %v6785 = vrot.slane %v6632, 4
  %v6786 = vsel %vm1818, %v6781, %v6785
  %v6787 = vrot.slane %v6633, 4
  %v6788 = vsel %vm1818, %v6783, %v6787
  %v6789 = vrot.slane %v6634, 4
  %v6790 = vsel %vm1818, %v6785, %v6789
  %v6791 = vrot.slane %v6635, 4
  %v6792 = vsel %vm1818, %v6787, %v6791
  %v6793 = vrot.slane %v6636, 4
  %v6794 = vsel %vm1818, %v6789, %v6793
  %v6795 = vrot.slane %v6637, 4
  %v6796 = vsel %vm1818, %v6791, %v6795
  %v6797 = vrot.slane %v6638, 4
  %v6798 = vsel %vm1818, %v6793, %v6797
  %v6799 = vrot.slane %v6639, 4
  %v6800 = vsel %vm1818, %v6795, %v6799
  %v6801 = vrot.slane %v6640, 4
  %v6802 = vsel %vm1818, %v6797, %v6801
  %v6803 = vrot.slane %v6641, 4
  %v6804 = vsel %vm1818, %v6799, %v6803
  %v6805 = vrot.slane %v6642, 4
  %v6806 = vsel %vm1818, %v6801, %v6805
  %v6807 = vrot.slane %v6643, 4
  %v6808 = vsel %vm1818, %v6803, %v6807
  %v6809 = vrot.slane %v6644, 4
  %v6810 = vsel %vm1818, %v6805, %v6809
  %v6811 = vrot.slane %v6645, 4
  %v6812 = vsel %vm1818, %v6807, %v6811
  %v6813 = vrot.slane %v6646, 4
  %v6814 = vsel %vm1818, %v6809, %v6813
  %v6815 = vrot.slane %v6647, 4
  %v6816 = vsel %vm1818, %v6811, %v6815
  %v6817 = vrot.slane %v6648, 4
  %v6818 = vsel %vm1818, %v6813, %v6817
  %v6819 = vrot.slane %v6649, 4
  %v6820 = vsel %vm1818, %v6815, %v6819
  %v6821 = vrot.slane %v6650, 4
  %v6822 = vsel %vm1818, %v6817, %v6821
  %v6823 = vrot.slane %v6651, 4
  %v6824 = vsel %vm1818, %v6819, %v6823
  %v6825 = vrot.slane %v6652, 4
  %v6826 = vsel %vm1818, %v6821, %v6825
  %v6827 = vrot.slane %v6653, 4
  %v6828 = vsel %vm1818, %v6823, %v6827
  %v6829 = vrot.slane %v6654, 4
  %v6830 = vsel %vm1818, %v6825, %v6829
  %v6831 = vrot.slane %v6655, 4
  %v6832 = vsel %vm1818, %v6827, %v6831
  %v6833 = vrot.slane %v6656, 4
  %v6834 = vsel %vm1818, %v6829, %v6833
  %v6835 = vrot.slane %v6657, 4
  %v6836 = vsel %vm1818, %v6831, %v6835
  %v6837 = vrot.slane %v6658, 4
  %v6838 = vsel %vm1818, %v6833, %v6837
  %v6839 = vrot.slane %v6659, 4
  %v6840 = vsel %vm1818, %v6835, %v6839
  %v6841 = vrot.slane %v6660, 4
  %v6842 = vsel %vm1818, %v6837, %v6841
  %v6843 = vrot.slane %v6661, 4
  %v6844 = vsel %vm1818, %v6839, %v6843
  %v6845 = vrot.slane %v6662, 4
  %v6846 = vsel %vm1818, %v6841, %v6845
  %v6847 = vrot.slane %v6663, 4
  %v6848 = vsel %vm1818, %v6843, %v6847
  %v6849 = vrot.slane %v6664, 4
  %v6850 = vsel %vm1818, %v6845, %v6849
  %v6851 = vrot.slane %v6665, 4
  %v6852 = vsel %vm1818, %v6847, %v6851
  %v6853 = vrot.slane %v6666, 4
  %v6854 = vsel %vm1818, %v6849, %v6853
  %v6855 = vrot.slane %v6667, 4
  %v6856 = vsel %vm1818, %v6851, %v6855
  %v6857 = vrot.slane %v6668, 4
  %v6858 = vsel %vm1818, %v6853, %v6857
  %v6859 = vrot.slane %v6669, 4
  %v6860 = vsel %vm1818, %v6855, %v6859
  %v6861 = vrot.slane %v6670, 4
  %v6862 = vsel %vm1818, %v6857, %v6861
  %v6863 = vrot.slane %v6671, 4
  %v6864 = vsel %vm1818, %v6859, %v6863
  %v6865 = vrot.slane %v6672, 4
  %v6866 = vsel %vm1818, %v6861, %v6865
  %v6867 = vrot.slane %v6673, 4
  %v6868 = vsel %vm1818, %v6863, %v6867
  %v6869 = vrot.slane %v6674, 4
  %v6870 = vsel %vm1818, %v6865, %v6869
  %v6871 = vrot.slane %v6675, 4
  %v6872 = vsel %vm1818, %v6867, %v6871
  %v6873 = vrot.slane %v6676, 4
  %v6874 = vsel %vm1818, %v6869, %v6873
  %v6875 = vrot.slane %v6677, 4
  %v6876 = vsel %vm1818, %v6871, %v6875
  %v6877 = vrot.slane %v6678, 4
  %v6878 = vsel %vm1818, %v6873, %v6877
  %v6879 = vrot.slane %v6679, 4
  %v6880 = vsel %vm1818, %v6875, %v6879
  %v6881 = vrot.slane %v6680, 4
  %v6882 = vsel %vm1818, %v6877, %v6881
  %v6883 = vrot.slane %v6681, 4
  %v6884 = vsel %vm1818, %v6879, %v6883
  %v6885 = vrot.slane %v6682, 4
  %v6886 = vsel %vm1818, %v6881, %v6885
  %v6887 = vrot.slane %v6683, 4
  %v6888 = vsel %vm1818, %v6883, %v6887
  %v6889 = vrot.slane %v6684, 4
  %v6890 = vsel %vm1818, %v6885, %v6889
  %v6891 = vrot.slane %v6685, 4
  %v6892 = vsel %vm1818, %v6887, %v6891
  %v6893 = vrot.slane %v6686, 4
  %v6894 = vsel %vm1818, %v6889, %v6893
  %v6895 = vrot.slane %v6687, 4
  %v6896 = vsel %vm1818, %v6891, %v6895
  %v6897 = vrot.slane %v6688, 4
  %v6898 = vsel %vm1818, %v6893, %v6897
  %v6934 = vsel %vm1818, %v6895, %v6773
  %v6935 = vsel %vm1818, %v6897, %v6776
  %s6936 = scalar_lea.vmem %s5, 160
  %v6937 = vld [vmem:[%s6936] sm:$0xff]
  %v6938 = vld [vmem:[%s6936 + $0x8] sm:$0xff]
  %v6939 = vld [vmem:[%s6936 + $0x10] sm:$0xff]
  %v6940 = vld [vmem:[%s6936 + $0x18] sm:$0xff]
  %v6941 = vld [vmem:[%s6936 + $0x20] sm:$0xff]
  %v6942 = vld [vmem:[%s6936 + $0x28] sm:$0xff]
  %v6943 = vld [vmem:[%s6936 + $0x30] sm:$0xff]
  %v6944 = vld [vmem:[%s6936 + $0x38] sm:$0xff]
  %v6945 = vld [vmem:[%s6936 + $0x40] sm:$0xff]
  %v6946 = vld [vmem:[%s6936 + $0x48] sm:$0xff]
  %v6947 = vld [vmem:[%s6936 + $0x50] sm:$0xff]
  %v6948 = vld [vmem:[%s6936 + $0x58] sm:$0xff]
  %v6949 = vld [vmem:[%s6936 + $0x60] sm:$0xff]
  %v6950 = vld [vmem:[%s6936 + $0x68] sm:$0xff]
  %v6951 = vld [vmem:[%s6936 + $0x70] sm:$0xff]
  %v6952 = vld [vmem:[%s6936 + $0x78] sm:$0xff]
  %v6953 = vld [vmem:[%s6936 + $0x80] sm:$0xff]
  %v6954 = vld [vmem:[%s6936 + $0x88] sm:$0xff]
  %v6955 = vld [vmem:[%s6936 + $0x90] sm:$0xff]
  %v6956 = vld [vmem:[%s6936 + $0x98] sm:$0xff]
  %vm6957 = vcmask 261120
  %v6958 = vsel %vm6957, %v6778, 0
  %v6960 = vsel %vm6957, %v6782, 0
  %v6962 = vsel %vm6957, %v6786, 0
  %v6964 = vsel %vm6957, %v6790, 0
  %v6966 = vsel %vm6957, %v6794, 0
  %v6968 = vsel %vm6957, %v6798, 0
  %v6970 = vsel %vm6957, %v6802, 0
  %v6972 = vsel %vm6957, %v6806, 0
  %v6974 = vsel %vm6957, %v6810, 0
  %v6976 = vsel %vm6957, %v6814, 0
  %v6978 = vsel %vm6957, %v6818, 0
  %v6980 = vsel %vm6957, %v6822, 0
  %v6982 = vsel %vm6957, %v6826, 0
  %v6984 = vsel %vm6957, %v6830, 0
  %v6986 = vsel %vm6957, %v6834, 0
  %v6988 = vsel %vm6957, %v6838, 0
  %v6990 = vsel %vm6957, %v6842, 0
  %v6992 = vsel %vm6957, %v6846, 0
  %v6994 = vsel %vm6957, %v6850, 0
  %v6996 = vsel %vm6957, %v6854, 0
  %v6998 = vsel %vm6957, %v6858, 0
  %v7000 = vsel %vm6957, %v6862, 0
  %v7002 = vsel %vm6957, %v6866, 0
  %v7004 = vsel %vm6957, %v6870, 0
  %v7006 = vsel %vm6957, %v6874, 0
  %v7008 = vsel %vm6957, %v6878, 0
  %v7010 = vsel %vm6957, %v6882, 0
  %v7012 = vsel %vm6957, %v6886, 0
  %v7014 = vsel %vm6957, %v6890, 0
  %v7016 = vsel %vm6957, %v6894, 0
  %v7018 = vsel %vm6957, %v6898, 0
  %v7021 = vsel %vm6957, %v6935, 0
  %7023 = vmatprep.subr.mxu0 0.0
  %7024 = vmatpush1.msra.mxu0 %v6937
  %7025 = vmatprep.subr.mxu0 0.0
  %7026 = vmatpush1.msra.mxu0 %v6938
  %7027 = vmatprep.subr.mxu0 0.0
  %7028 = vmatpush1.msra.mxu0 %v6939
  %7029 = vmatprep.subr.mxu0 0.0
  %7030 = vmatpush1.msra.mxu0 %v6940
  %7031 = vmatprep.subr.mxu0 0.0
  %7032 = vmatpush1.msra.mxu0 %v6941
  %7033 = vmatprep.subr.mxu0 0.0
  %7034 = vmatpush1.msra.mxu0 %v6942
  %7035 = vmatprep.subr.mxu0 0.0
  %7036 = vmatpush1.msra.mxu0 %v6943
  %7037 = vmatprep.subr.mxu0 0.0
  %7038 = vmatpush1.msra.mxu0 %v6944
  %7039 = vmatprep.subr.mxu0 0.0
  %7040 = vmatpush1.msra.mxu0 %v6945
  %7041 = vmatprep.subr.mxu0 0.0
  %7042 = vmatpush1.msra.mxu0 %v6946
  %7043 = vmatprep.subr.mxu0 0.0
  %7044 = vmatpush1.msra.mxu0 %v6947
  %7045 = vmatprep.subr.mxu0 0.0
  %7046 = vmatpush1.msra.mxu0 %v6948
  %7047 = vmatprep.subr.mxu0 0.0
  %7048 = vmatpush1.msra.mxu0 %v6949
  %7049 = vmatprep.subr.mxu0 0.0
  %7050 = vmatpush1.msra.mxu0 %v6950
  %7051 = vmatprep.subr.mxu0 0.0
  %7052 = vmatpush1.msra.mxu0 %v6951
  %7053 = vmatprep.subr.mxu0 0.0
  %7054 = vmatpush1.msra.mxu0 %v6952
  %7055 = vmatprep.subr.mxu0 0.0
  %7056 = vmatpush1.msra.mxu0 %v6953
  %7057 = vmatprep.subr.mxu0 0.0
  %7058 = vmatpush1.msra.mxu0 %v6954
  %7059 = vmatprep.subr.mxu0 0.0
  %7060 = vmatpush1.msra.mxu0 %v6955
  %7061 = vmatprep.subr.mxu0 0.0
  %7062 = vmatpush1.msra.mxu0 %v6956
  %7063 = vmatprep.subr.mxu0 0.0
  %7064 = vmatpush1.msra.mxu0 0.0
  %7065 = vmatprep.subr.mxu0 0.0
  %7066 = vmatpush1.msra.mxu0 0.0
  %7067 = vmatprep.subr.mxu0 0.0
  %7068 = vmatpush1.msra.mxu0 0.0
  %7069 = vmatprep.subr.mxu0 0.0
  %7070 = vmatpush1.msra.mxu0 0.0
  %7071 = vmatprep.subr.mxu0 0.0
  %7072 = vmatpush1.msra.mxu0 0.0
  %7073 = vmatprep.subr.mxu0 0.0
  %7074 = vmatpush1.msra.mxu0 0.0
  %7075 = vmatprep.subr.mxu0 0.0
  %7076 = vmatpush1.msra.mxu0 0.0
  %7077 = vmatprep.subr.mxu0 0.0
  %7078 = vmatpush1.msra.mxu0 0.0
  %7079 = vmatprep.subr.mxu0 0.0
  %7080 = vmatpush1.msra.mxu0 0.0
  %7081 = vmatprep.subr.mxu0 0.0
  %7082 = vmatpush1.msra.mxu0 0.0
  %7083 = vmatprep.subr.mxu0 0.0
  %7084 = vmatpush1.msra.mxu0 0.0
  %7085 = vmatprep.subr.mxu0 0.0
  %7086 = vmatpush1.msra.mxu0 0.0
  %7087 = vmatprep.mubr.f32.mxu0 %v6958
  %7088 = vmatmul.mubr.f32.gmra.mrb[0].mxu0 %v6775
  %v7089 = vpop.f32.mrb[0].mxu0
  %v7090 = vadd.f32 0.0, %v7089
  %v7091 = vpop.f32.mrb[0].mxu0
  %7092 = vmatprep.mubr.f32.mxu0 %v6960
  %7093 = vmatmul.mubr.f32.gmra.mrb[0].mxu0 %v6780
  %v7094 = vpop.f32.mrb[0].mxu0
  %v7095 = vadd.f32 0.0, %v7094
  %v7096 = vpop.f32.mrb[0].mxu0
  %7097 = vmatprep.mubr.f32.mxu0 %v6962
  %7098 = vmatmul.mubr.f32.gmra.mrb[0].mxu0 %v6784
  %v7099 = vpop.f32.mrb[0].mxu0
  %v7100 = vadd.f32 0.0, %v7099
  %v7101 = vpop.f32.mrb[0].mxu0
  %7102 = vmatprep.mubr.f32.mxu0 %v6964
  %7103 = vmatmul.mubr.f32.gmra.mrb[0].mxu0 %v6788
  %v7104 = vpop.f32.mrb[0].mxu0
  %v7105 = vadd.f32 0.0, %v7104
  %v7106 = vpop.f32.mrb[0].mxu0
  %7107 = vmatprep.mubr.f32.mxu0 %v6966
  %7108 = vmatmul.mubr.f32.gmra.mrb[0].mxu0 %v6792
  %v7109 = vpop.f32.mrb[0].mxu0
  %v7110 = vadd.f32 0.0, %v7109
  %v7111 = vpop.f32.mrb[0].mxu0
  %7112 = vmatprep.mubr.f32.mxu0 %v6968
  %7113 = vmatmul.mubr.f32.gmra.mrb[0].mxu0 %v6796
  %v7114 = vpop.f32.mrb[0].mxu0
  %v7115 = vadd.f32 0.0, %v7114
  %v7116 = vpop.f32.mrb[0].mxu0
  %7117 = vmatprep.mubr.f32.mxu0 %v6970
  %7118 = vmatmul.mubr.f32.gmra.mrb[0].mxu0 %v6800
  %v7119 = vpop.f32.mrb[0].mxu0
  %v7120 = vadd.f32 0.0, %v7119
  %v7121 = vpop.f32.mrb[0].mxu0
  %7122 = vmatprep.mubr.f32.mxu0 %v6972
  %7123 = vmatmul.mubr.f32.gmra.mrb[0].mxu0 %v6804
  %v7124 = vpop.f32.mrb[0].mxu0
  %v7125 = vadd.f32 0.0, %v7124
  %v7126 = vpop.f32.mrb[0].mxu0
  %7127 = vmatprep.mubr.f32.mxu0 %v6974
  %7128 = vmatmul.mubr.f32.gmra.mrb[0].mxu0 %v6808
  %v7129 = vpop.f32.mrb[0].mxu0
  %v7130 = vadd.f32 0.0, %v7129
  %v7131 = vpop.f32.mrb[0].mxu0
  %7132 = vmatprep.mubr.f32.mxu0 %v6976
  %7133 = vmatmul.mubr.f32.gmra.mrb[0].mxu0 %v6812
  %v7134 = vpop.f32.mrb[0].mxu0
  %v7135 = vadd.f32 0.0, %v7134
  %v7136 = vpop.f32.mrb[0].mxu0
  %7137 = vmatprep.mubr.f32.mxu0 %v6978
  %7138 = vmatmul.mubr.f32.gmra.mrb[0].mxu0 %v6816
  %v7139 = vpop.f32.mrb[0].mxu0
  %v7140 = vadd.f32 0.0, %v7139
  %v7141 = vpop.f32.mrb[0].mxu0
  %7142 = vmatprep.mubr.f32.mxu0 %v6980
  %7143 = vmatmul.mubr.f32.gmra.mrb[0].mxu0 %v6820
  %v7144 = vpop.f32.mrb[0].mxu0
  %v7145 = vadd.f32 0.0, %v7144
  %v7146 = vpop.f32.mrb[0].mxu0
  %7147 = vmatprep.mubr.f32.mxu0 %v6982
  %7148 = vmatmul.mubr.f32.gmra.mrb[0].mxu0 %v6824
  %v7149 = vpop.f32.mrb[0].mxu0
  %v7150 = vadd.f32 0.0, %v7149
  %v7151 = vpop.f32.mrb[0].mxu0
  %7152 = vmatprep.mubr.f32.mxu0 %v6984
  %7153 = vmatmul.mubr.f32.gmra.mrb[0].mxu0 %v6828
  %v7154 = vpop.f32.mrb[0].mxu0
  %v7155 = vadd.f32 0.0, %v7154
  %v7156 = vpop.f32.mrb[0].mxu0
  %7157 = vmatprep.mubr.f32.mxu0 %v6986
  %7158 = vmatmul.mubr.f32.gmra.mrb[0].mxu0 %v6832
  %v7159 = vpop.f32.mrb[0].mxu0
  %v7160 = vadd.f32 0.0, %v7159
  %v7161 = vpop.f32.mrb[0].mxu0
  %7162 = vmatprep.mubr.f32.mxu0 %v6988
  %7163 = vmatmul.mubr.f32.gmra.mrb[0].mxu0 %v6836
  %v7164 = vpop.f32.mrb[0].mxu0
  %v7165 = vadd.f32 0.0, %v7164
  %v7166 = vpop.f32.mrb[0].mxu0
  %7167 = vmatprep.mubr.f32.mxu0 %v6990
  %7168 = vmatmul.mubr.f32.gmra.mrb[0].mxu0 %v6840
  %v7169 = vpop.f32.mrb[0].mxu0
  %v7170 = vadd.f32 0.0, %v7169
  %v7171 = vpop.f32.mrb[0].mxu0
  %7172 = vmatprep.mubr.f32.mxu0 %v6992
  %7173 = vmatmul.mubr.f32.gmra.mrb[0].mxu0 %v6844
  %v7174 = vpop.f32.mrb[0].mxu0
  %v7175 = vadd.f32 0.0, %v7174
  %v7176 = vpop.f32.mrb[0].mxu0
  %7177 = vmatprep.mubr.f32.mxu0 %v6994
  %7178 = vmatmul.mubr.f32.gmra.mrb[0].mxu0 %v6848
  %v7179 = vpop.f32.mrb[0].mxu0
  %v7180 = vadd.f32 0.0, %v7179
  %v7181 = vpop.f32.mrb[0].mxu0
  %7182 = vmatprep.mubr.f32.mxu0 %v6996
  %7183 = vmatmul.mubr.f32.gmra.mrb[0].mxu0 %v6852
  %v7184 = vpop.f32.mrb[0].mxu0
  %v7185 = vadd.f32 0.0, %v7184
  %v7186 = vpop.f32.mrb[0].mxu0
  %7187 = vmatprep.mubr.f32.mxu0 %v6998
  %7188 = vmatmul.mubr.f32.gmra.mrb[0].mxu0 %v6856
  %v7189 = vpop.f32.mrb[0].mxu0
  %v7190 = vadd.f32 0.0, %v7189
  %v7191 = vpop.f32.mrb[0].mxu0
  %7192 = vmatprep.mubr.f32.mxu0 %v7000
  %7193 = vmatmul.mubr.f32.gmra.mrb[0].mxu0 %v6860
  %v7194 = vpop.f32.mrb[0].mxu0
  %v7195 = vadd.f32 0.0, %v7194
  %v7196 = vpop.f32.mrb[0].mxu0
  %7197 = vmatprep.mubr.f32.mxu0 %v7002
  %7198 = vmatmul.mubr.f32.gmra.mrb[0].mxu0 %v6864
  %v7199 = vpop.f32.mrb[0].mxu0
  %v7200 = vadd.f32 0.0, %v7199
  %v7201 = vpop.f32.mrb[0].mxu0
  %7202 = vmatprep.mubr.f32.mxu0 %v7004
  %7203 = vmatmul.mubr.f32.gmra.mrb[0].mxu0 %v6868
  %v7204 = vpop.f32.mrb[0].mxu0
  %v7205 = vadd.f32 0.0, %v7204
  %v7206 = vpop.f32.mrb[0].mxu0
  %7207 = vmatprep.mubr.f32.mxu0 %v7006
  %7208 = vmatmul.mubr.f32.gmra.mrb[0].mxu0 %v6872
  %v7209 = vpop.f32.mrb[0].mxu0
  %v7210 = vadd.f32 0.0, %v7209
  %v7211 = vpop.f32.mrb[0].mxu0
  %7212 = vmatprep.mubr.f32.mxu0 %v7008
  %7213 = vmatmul.mubr.f32.gmra.mrb[0].mxu0 %v6876
  %v7214 = vpop.f32.mrb[0].mxu0
  %v7215 = vadd.f32 0.0, %v7214
  %v7216 = vpop.f32.mrb[0].mxu0
  %7217 = vmatprep.mubr.f32.mxu0 %v7010
  %7218 = vmatmul.mubr.f32.gmra.mrb[0].mxu0 %v6880
  %v7219 = vpop.f32.mrb[0].mxu0
  %v7220 = vadd.f32 0.0, %v7219
  %v7221 = vpop.f32.mrb[0].mxu0
  %7222 = vmatprep.mubr.f32.mxu0 %v7012
  %7223 = vmatmul.mubr.f32.gmra.mrb[0].mxu0 %v6884
  %v7224 = vpop.f32.mrb[0].mxu0
  %v7225 = vadd.f32 0.0, %v7224
  %v7226 = vpop.f32.mrb[0].mxu0
  %7227 = vmatprep.mubr.f32.mxu0 %v7014
  %7228 = vmatmul.mubr.f32.gmra.mrb[0].mxu0 %v6888
  %v7229 = vpop.f32.mrb[0].mxu0
  %v7230 = vadd.f32 0.0, %v7229
  %v7231 = vpop.f32.mrb[0].mxu0
  %7232 = vmatprep.mubr.f32.mxu0 %v7016
  %7233 = vmatmul.mubr.f32.gmra.mrb[0].mxu0 %v6892
  %v7234 = vpop.f32.mrb[0].mxu0
  %v7235 = vadd.f32 0.0, %v7234
  %v7236 = vpop.f32.mrb[0].mxu0
  %7237 = vmatprep.mubr.f32.mxu0 %v7018
  %7238 = vmatmul.mubr.f32.gmra.mrb[0].mxu0 %v6896
  %v7239 = vpop.f32.mrb[0].mxu0
  %v7240 = vadd.f32 0.0, %v7239
  %v7241 = vpop.f32.mrb[0].mxu0
  %7242 = vmatprep.mubr.f32.mxu0 %v7021
  %7243 = vmatmul.mubr.f32.gmra.mrb[0].mxu0 %v6934
  %v7244 = vpop.f32.mrb[0].mxu0
  %v7245 = vadd.f32 0.0, %v7244
  %v7246 = vpop.f32.mrb[0].mxu0
  %7247 = vdwg.mxu0
  %v7248 = vsel %vm6957, %v6626, 0
  %v7250 = vsel %vm6957, %v6628, 0
  %v7252 = vsel %vm6957, %v6630, 0
  %v7254 = vsel %vm6957, %v6632, 0
  %v7256 = vsel %vm6957, %v6634, 0
  %v7258 = vsel %vm6957, %v6636, 0
  %v7260 = vsel %vm6957, %v6638, 0
  %v7262 = vsel %vm6957, %v6640, 0
  %v7264 = vsel %vm6957, %v6642, 0
  %v7266 = vsel %vm6957, %v6644, 0
  %v7268 = vsel %vm6957, %v6646, 0
  %v7270 = vsel %vm6957, %v6648, 0
  %v7272 = vsel %vm6957, %v6650, 0
  %v7274 = vsel %vm6957, %v6652, 0
  %v7276 = vsel %vm6957, %v6654, 0
  %v7278 = vsel %vm6957, %v6656, 0
  %v7280 = vsel %vm6957, %v6658, 0
  %v7282 = vsel %vm6957, %v6660, 0
  %v7284 = vsel %vm6957, %v6662, 0
  %v7286 = vsel %vm6957, %v6664, 0
  %v7288 = vsel %vm6957, %v6666, 0
  %v7290 = vsel %vm6957, %v6668, 0
  %v7292 = vsel %vm6957, %v6670, 0
  %v7294 = vsel %vm6957, %v6672, 0
  %v7296 = vsel %vm6957, %v6674, 0
  %v7298 = vsel %vm6957, %v6676, 0
  %v7300 = vsel %vm6957, %v6678, 0
  %v7302 = vsel %vm6957, %v6680, 0
  %v7304 = vsel %vm6957, %v6682, 0
  %v7306 = vsel %vm6957, %v6684, 0
  %v7308 = vsel %vm6957, %v6686, 0
  %v7310 = vsel %vm6957, %v6688, 0
  %7312 = vmatprep.subr.mxu0 0.0
  %7313 = vmatpush1.msra.mxu0 %v6689
  %7314 = vmatprep.subr.mxu0 0.0
  %7315 = vmatpush1.msra.mxu0 %v6690
  %7316 = vmatprep.subr.mxu0 0.0
  %7317 = vmatpush1.msra.mxu0 %v6691
  %7318 = vmatprep.subr.mxu0 0.0
  %7319 = vmatpush1.msra.mxu0 %v6692
  %7320 = vmatprep.subr.mxu0 0.0
  %7321 = vmatpush1.msra.mxu0 %v6693
  %7322 = vmatprep.subr.mxu0 0.0
  %7323 = vmatpush1.msra.mxu0 %v6694
  %7324 = vmatprep.subr.mxu0 0.0
  %7325 = vmatpush1.msra.mxu0 %v6695
  %7326 = vmatprep.subr.mxu0 0.0
  %7327 = vmatpush1.msra.mxu0 %v6696
  %7328 = vmatprep.subr.mxu0 0.0
  %7329 = vmatpush1.msra.mxu0 %v6697
  %7330 = vmatprep.subr.mxu0 0.0
  %7331 = vmatpush1.msra.mxu0 %v6698
  %7332 = vmatprep.subr.mxu0 0.0
  %7333 = vmatpush1.msra.mxu0 %v6699
  %7334 = vmatprep.subr.mxu0 0.0
  %7335 = vmatpush1.msra.mxu0 %v6700
  %7336 = vmatprep.subr.mxu0 0.0
  %7337 = vmatpush1.msra.mxu0 %v6701
  %7338 = vmatprep.subr.mxu0 0.0
  %7339 = vmatpush1.msra.mxu0 %v6702
  %7340 = vmatprep.subr.mxu0 0.0
  %7341 = vmatpush1.msra.mxu0 %v6703
  %7342 = vmatprep.subr.mxu0 0.0
  %7343 = vmatpush1.msra.mxu0 %v6704
  %7344 = vmatprep.subr.mxu0 0.0
  %7345 = vmatpush1.msra.mxu0 %v6705
  %7346 = vmatprep.subr.mxu0 0.0
  %7347 = vmatpush1.msra.mxu0 %v6706
  %7348 = vmatprep.subr.mxu0 0.0
  %7349 = vmatpush1.msra.mxu0 %v6707
  %7350 = vmatprep.subr.mxu0 0.0
  %7351 = vmatpush1.msra.mxu0 %v6708
  %7352 = vmatprep.subr.mxu0 0.0
  %7353 = vmatpush1.msra.mxu0 0.0
  %7354 = vmatprep.subr.mxu0 0.0
  %7355 = vmatpush1.msra.mxu0 0.0
  %7356 = vmatprep.subr.mxu0 0.0
  %7357 = vmatpush1.msra.mxu0 0.0
  %7358 = vmatprep.subr.mxu0 0.0
  %7359 = vmatpush1.msra.mxu0 0.0
  %7360 = vmatprep.subr.mxu0 0.0
  %7361 = vmatpush1.msra.mxu0 0.0
  %7362 = vmatprep.subr.mxu0 0.0
  %7363 = vmatpush1.msra.mxu0 0.0
  %7364 = vmatprep.subr.mxu0 0.0
  %7365 = vmatpush1.msra.mxu0 0.0
  %7366 = vmatprep.subr.mxu0 0.0
  %7367 = vmatpush1.msra.mxu0 0.0
  %7368 = vmatprep.subr.mxu0 0.0
  %7369 = vmatpush1.msra.mxu0 0.0
  %7370 = vmatprep.subr.mxu0 0.0
  %7371 = vmatpush1.msra.mxu0 0.0
  %7372 = vmatprep.subr.mxu0 0.0
  %7373 = vmatpush1.msra.mxu0 0.0
  %7374 = vmatprep.subr.mxu0 0.0
  %7375 = vmatpush1.msra.mxu0 0.0
  %7376 = vmatprep.mubr.f32.mxu0 %v7248
  %7377 = vmatmul.mubr.f32.gmra.mrb[0].mxu0 %v6625
  %v7378 = vpop.f32.mrb[0].mxu0
  %v7379 = vadd.f32 %v7090, %v7378
  %v7380 = vpop.f32.mrb[0].mxu0
  %7381 = vmatprep.mubr.f32.mxu0 %v7250
  %7382 = vmatmul.mubr.f32.gmra.mrb[0].mxu0 %v6627
  %v7383 = vpop.f32.mrb[0].mxu0
  %v7384 = vadd.f32 %v7095, %v7383
  %v7385 = vpop.f32.mrb[0].mxu0
  %7386 = vmatprep.mubr.f32.mxu0 %v7252
  %7387 = vmatmul.mubr.f32.gmra.mrb[0].mxu0 %v6629
  %v7388 = vpop.f32.mrb[0].mxu0
  %v7389 = vadd.f32 %v7100, %v7388
  %v7390 = vpop.f32.mrb[0].mxu0
  %7391 = vmatprep.mubr.f32.mxu0 %v7254
  %7392 = vmatmul.mubr.f32.gmra.mrb[0].mxu0 %v6631
  %v7393 = vpop.f32.mrb[0].mxu0
  %v7394 = vadd.f32 %v7105, %v7393
  %v7395 = vpop.f32.mrb[0].mxu0
  %7396 = vmatprep.mubr.f32.mxu0 %v7256
  %7397 = vmatmul.mubr.f32.gmra.mrb[0].mxu0 %v6633
  %v7398 = vpop.f32.mrb[0].mxu0
  %v7399 = vadd.f32 %v7110, %v7398
  %v7400 = vpop.f32.mrb[0].mxu0
  %7401 = vmatprep.mubr.f32.mxu0 %v7258
  %7402 = vmatmul.mubr.f32.gmra.mrb[0].mxu0 %v6635
  %v7403 = vpop.f32.mrb[0].mxu0
  %v7404 = vadd.f32 %v7115, %v7403
  %v7405 = vpop.f32.mrb[0].mxu0
  %7406 = vmatprep.mubr.f32.mxu0 %v7260
  %7407 = vmatmul.mubr.f32.gmra.mrb[0].mxu0 %v6637
  %v7408 = vpop.f32.mrb[0].mxu0
  %v7409 = vadd.f32 %v7120, %v7408
  %v7410 = vpop.f32.mrb[0].mxu0
  %7411 = vmatprep.mubr.f32.mxu0 %v7262
  %7412 = vmatmul.mubr.f32.gmra.mrb[0].mxu0 %v6639
  %v7413 = vpop.f32.mrb[0].mxu0
  %v7414 = vadd.f32 %v7125, %v7413
  %v7415 = vpop.f32.mrb[0].mxu0
  %7416 = vmatprep.mubr.f32.mxu0 %v7264
  %7417 = vmatmul.mubr.f32.gmra.mrb[0].mxu0 %v6641
  %v7418 = vpop.f32.mrb[0].mxu0
  %v7419 = vadd.f32 %v7130, %v7418
  %v7420 = vpop.f32.mrb[0].mxu0
  %7421 = vmatprep.mubr.f32.mxu0 %v7266
  %7422 = vmatmul.mubr.f32.gmra.mrb[0].mxu0 %v6643
  %v7423 = vpop.f32.mrb[0].mxu0
  %v7424 = vadd.f32 %v7135, %v7423
  %v7425 = vpop.f32.mrb[0].mxu0
  %7426 = vmatprep.mubr.f32.mxu0 %v7268
  %7427 = vmatmul.mubr.f32.gmra.mrb[0].mxu0 %v6645
  %v7428 = vpop.f32.mrb[0].mxu0
  %v7429 = vadd.f32 %v7140, %v7428
  %v7430 = vpop.f32.mrb[0].mxu0
  %7431 = vmatprep.mubr.f32.mxu0 %v7270
  %7432 = vmatmul.mubr.f32.gmra.mrb[0].mxu0 %v6647
  %v7433 = vpop.f32.mrb[0].mxu0
  %v7434 = vadd.f32 %v7145, %v7433
  %v7435 = vpop.f32.mrb[0].mxu0
  %7436 = vmatprep.mubr.f32.mxu0 %v7272
  %7437 = vmatmul.mubr.f32.gmra.mrb[0].mxu0 %v6649
  %v7438 = vpop.f32.mrb[0].mxu0
  %v7439 = vadd.f32 %v7150, %v7438
  %v7440 = vpop.f32.mrb[0].mxu0
  %7441 = vmatprep.mubr.f32.mxu0 %v7274
  %7442 = vmatmul.mubr.f32.gmra.mrb[0].mxu0 %v6651
  %v7443 = vpop.f32.mrb[0].mxu0
  %v7444 = vadd.f32 %v7155, %v7443
  %v7445 = vpop.f32.mrb[0].mxu0
  %7446 = vmatprep.mubr.f32.mxu0 %v7276
  %7447 = vmatmul.mubr.f32.gmra.mrb[0].mxu0 %v6653
  %v7448 = vpop.f32.mrb[0].mxu0
  %v7449 = vadd.f32 %v7160, %v7448
  %v7450 = vpop.f32.mrb[0].mxu0
  %7451 = vmatprep.mubr.f32.mxu0 %v7278
  %7452 = vmatmul.mubr.f32.gmra.mrb[0].mxu0 %v6655
  %v7453 = vpop.f32.mrb[0].mxu0
  %v7454 = vadd.f32 %v7165, %v7453
  %v7455 = vpop.f32.mrb[0].mxu0
  %7456 = vmatprep.mubr.f32.mxu0 %v7280
  %7457 = vmatmul.mubr.f32.gmra.mrb[0].mxu0 %v6657
  %v7458 = vpop.f32.mrb[0].mxu0
  %v7459 = vadd.f32 %v7170, %v7458
  %v7460 = vpop.f32.mrb[0].mxu0
  %7461 = vmatprep.mubr.f32.mxu0 %v7282
  %7462 = vmatmul.mubr.f32.gmra.mrb[0].mxu0 %v6659
  %v7463 = vpop.f32.mrb[0].mxu0
  %v7464 = vadd.f32 %v7175, %v7463
  %v7465 = vpop.f32.mrb[0].mxu0
  %7466 = vmatprep.mubr.f32.mxu0 %v7284
  %7467 = vmatmul.mubr.f32.gmra.mrb[0].mxu0 %v6661
  %v7468 = vpop.f32.mrb[0].mxu0
  %v7469 = vadd.f32 %v7180, %v7468
  %v7470 = vpop.f32.mrb[0].mxu0
  %7471 = vmatprep.mubr.f32.mxu0 %v7286
  %7472 = vmatmul.mubr.f32.gmra.mrb[0].mxu0 %v6663
  %v7473 = vpop.f32.mrb[0].mxu0
  %v7474 = vadd.f32 %v7185, %v7473
  %v7475 = vpop.f32.mrb[0].mxu0
  %7476 = vmatprep.mubr.f32.mxu0 %v7288
  %7477 = vmatmul.mubr.f32.gmra.mrb[0].mxu0 %v6665
  %v7478 = vpop.f32.mrb[0].mxu0
  %v7479 = vadd.f32 %v7190, %v7478
  %v7480 = vpop.f32.mrb[0].mxu0
  %7481 = vmatprep.mubr.f32.mxu0 %v7290
  %7482 = vmatmul.mubr.f32.gmra.mrb[0].mxu0 %v6667
  %v7483 = vpop.f32.mrb[0].mxu0
  %v7484 = vadd.f32 %v7195, %v7483
  %v7485 = vpop.f32.mrb[0].mxu0
  %7486 = vmatprep.mubr.f32.mxu0 %v7292
  %7487 = vmatmul.mubr.f32.gmra.mrb[0].mxu0 %v6669
  %v7488 = vpop.f32.mrb[0].mxu0
  %v7489 = vadd.f32 %v7200, %v7488
  %v7490 = vpop.f32.mrb[0].mxu0
  %7491 = vmatprep.mubr.f32.mxu0 %v7294
  %7492 = vmatmul.mubr.f32.gmra.mrb[0].mxu0 %v6671
  %v7493 = vpop.f32.mrb[0].mxu0
  %v7494 = vadd.f32 %v7205, %v7493
  %v7495 = vpop.f32.mrb[0].mxu0
  %7496 = vmatprep.mubr.f32.mxu0 %v7296
  %7497 = vmatmul.mubr.f32.gmra.mrb[0].mxu0 %v6673
  %v7498 = vpop.f32.mrb[0].mxu0
  %v7499 = vadd.f32 %v7210, %v7498
  %v7500 = vpop.f32.mrb[0].mxu0
  %7501 = vmatprep.mubr.f32.mxu0 %v7298
  %7502 = vmatmul.mubr.f32.gmra.mrb[0].mxu0 %v6675
  %v7503 = vpop.f32.mrb[0].mxu0
  %v7504 = vadd.f32 %v7215, %v7503
  %v7505 = vpop.f32.mrb[0].mxu0
  %7506 = vmatprep.mubr.f32.mxu0 %v7300
  %7507 = vmatmul.mubr.f32.gmra.mrb[0].mxu0 %v6677
  %v7508 = vpop.f32.mrb[0].mxu0
  %v7509 = vadd.f32 %v7220, %v7508
  %v7510 = vpop.f32.mrb[0].mxu0
  %7511 = vmatprep.mubr.f32.mxu0 %v7302
  %7512 = vmatmul.mubr.f32.gmra.mrb[0].mxu0 %v6679
  %v7513 = vpop.f32.mrb[0].mxu0
  %v7514 = vadd.f32 %v7225, %v7513
  %v7515 = vpop.f32.mrb[0].mxu0
  %7516 = vmatprep.mubr.f32.mxu0 %v7304
  %7517 = vmatmul.mubr.f32.gmra.mrb[0].mxu0 %v6681
  %v7518 = vpop.f32.mrb[0].mxu0
  %v7519 = vadd.f32 %v7230, %v7518
  %v7520 = vpop.f32.mrb[0].mxu0
  %7521 = vmatprep.mubr.f32.mxu0 %v7306
  %7522 = vmatmul.mubr.f32.gmra.mrb[0].mxu0 %v6683
  %v7523 = vpop.f32.mrb[0].mxu0
  %v7524 = vadd.f32 %v7235, %v7523
  %v7525 = vpop.f32.mrb[0].mxu0
  %7526 = vmatprep.mubr.f32.mxu0 %v7308
  %7527 = vmatmul.mubr.f32.gmra.mrb[0].mxu0 %v6685
  %v7528 = vpop.f32.mrb[0].mxu0
  %v7529 = vadd.f32 %v7240, %v7528
  %v7530 = vpop.f32.mrb[0].mxu0
  %7531 = vmatprep.mubr.f32.mxu0 %v7310
  %7532 = vmatmul.mubr.f32.gmra.mrb[0].mxu0 %v6687
  %v7533 = vpop.f32.mrb[0].mxu0
  %v7534 = vadd.f32 %v7245, %v7533
  %v7535 = vpop.f32.mrb[0].mxu0
  %7536 = vdwg.mxu0
  %s7537 = scalar_lea.vmem %s5, 320
  %v7538 = vld [vmem:[%s7537] sm:$0xff]
  %v7539 = vld [vmem:[%s7537 + $0x8] sm:$0xff]
  %v7540 = vld [vmem:[%s7537 + $0x10] sm:$0xff]
  %v7541 = vld [vmem:[%s7537 + $0x18] sm:$0xff]
  %v7542 = vld [vmem:[%s7537 + $0x20] sm:$0xff]
  %v7543 = vld [vmem:[%s7537 + $0x28] sm:$0xff]
  %v7544 = vld [vmem:[%s7537 + $0x30] sm:$0xff]
  %v7545 = vld [vmem:[%s7537 + $0x38] sm:$0xff]
  %v7546 = vld [vmem:[%s7537 + $0x40] sm:$0xff]
  %v7547 = vld [vmem:[%s7537 + $0x48] sm:$0xff]
  %v7548 = vld [vmem:[%s7537 + $0x50] sm:$0xff]
  %v7549 = vld [vmem:[%s7537 + $0x58] sm:$0xff]
  %v7550 = vld [vmem:[%s7537 + $0x60] sm:$0xff]
  %v7551 = vld [vmem:[%s7537 + $0x68] sm:$0xff]
  %v7552 = vld [vmem:[%s7537 + $0x70] sm:$0xff]
  %v7553 = vld [vmem:[%s7537 + $0x78] sm:$0xff]
  %v7554 = vld [vmem:[%s7537 + $0x80] sm:$0xff]
  %v7555 = vld [vmem:[%s7537 + $0x88] sm:$0xff]
  %v7556 = vld [vmem:[%s7537 + $0x90] sm:$0xff]
  %v7557 = vld [vmem:[%s7537 + $0x98] sm:$0xff]
  %7558 = vmatprep.subr.mxu0 0.0
  %7559 = vmatpush1.msra.mxu0 %v7538
  %7560 = vmatprep.subr.mxu0 0.0
  %7561 = vmatpush1.msra.mxu0 %v7539
  %7562 = vmatprep.subr.mxu0 0.0
  %7563 = vmatpush1.msra.mxu0 %v7540
  %7564 = vmatprep.subr.mxu0 0.0
  %7565 = vmatpush1.msra.mxu0 %v7541
  %7566 = vmatprep.subr.mxu0 0.0
  %7567 = vmatpush1.msra.mxu0 %v7542
  %7568 = vmatprep.subr.mxu0 0.0
  %7569 = vmatpush1.msra.mxu0 %v7543
  %7570 = vmatprep.subr.mxu0 0.0
  %7571 = vmatpush1.msra.mxu0 %v7544
  %7572 = vmatprep.subr.mxu0 0.0
  %7573 = vmatpush1.msra.mxu0 %v7545
  %7574 = vmatprep.subr.mxu0 0.0
  %7575 = vmatpush1.msra.mxu0 %v7546
  %7576 = vmatprep.subr.mxu0 0.0
  %7577 = vmatpush1.msra.mxu0 %v7547
  %7578 = vmatprep.subr.mxu0 0.0
  %7579 = vmatpush1.msra.mxu0 %v7548
  %7580 = vmatprep.subr.mxu0 0.0
  %7581 = vmatpush1.msra.mxu0 %v7549
  %7582 = vmatprep.subr.mxu0 0.0
  %7583 = vmatpush1.msra.mxu0 %v7550
  %7584 = vmatprep.subr.mxu0 0.0
  %7585 = vmatpush1.msra.mxu0 %v7551
  %7586 = vmatprep.subr.mxu0 0.0
  %7587 = vmatpush1.msra.mxu0 %v7552
  %7588 = vmatprep.subr.mxu0 0.0
  %7589 = vmatpush1.msra.mxu0 %v7553
  %7590 = vmatprep.subr.mxu0 0.0
  %7591 = vmatpush1.msra.mxu0 %v7554
  %7592 = vmatprep.subr.mxu0 0.0
  %7593 = vmatpush1.msra.mxu0 %v7555
  %7594 = vmatprep.subr.mxu0 0.0
  %7595 = vmatpush1.msra.mxu0 %v7556
  %7596 = vmatprep.subr.mxu0 0.0
  %7597 = vmatpush1.msra.mxu0 %v7557
  %7598 = vmatprep.subr.mxu0 0.0
  %7599 = vmatpush1.msra.mxu0 0.0
  %7600 = vmatprep.subr.mxu0 0.0
  %7601 = vmatpush1.msra.mxu0 0.0
  %7602 = vmatprep.subr.mxu0 0.0
  %7603 = vmatpush1.msra.mxu0 0.0
  %7604 = vmatprep.subr.mxu0 0.0
  %7605 = vmatpush1.msra.mxu0 0.0
  %7606 = vmatprep.subr.mxu0 0.0
  %7607 = vmatpush1.msra.mxu0 0.0
  %7608 = vmatprep.subr.mxu0 0.0
  %7609 = vmatpush1.msra.mxu0 0.0
  %7610 = vmatprep.subr.mxu0 0.0
  %7611 = vmatpush1.msra.mxu0 0.0
  %7612 = vmatprep.subr.mxu0 0.0
  %7613 = vmatpush1.msra.mxu0 0.0
  %7614 = vmatprep.subr.mxu0 0.0
  %7615 = vmatpush1.msra.mxu0 0.0
  %7616 = vmatprep.subr.mxu0 0.0
  %7617 = vmatpush1.msra.mxu0 0.0
  %7618 = vmatprep.subr.mxu0 0.0
  %7619 = vmatpush1.msra.mxu0 0.0
  %7620 = vmatprep.subr.mxu0 0.0
  %7621 = vmatpush1.msra.mxu0 0.0
  %7622 = vmatprep.mubr.f32.mxu0 %v7250
  %7623 = vmatmul.mubr.f32.gmra.mrb[0].mxu0 %v6627
  %v7624 = vpop.f32.mrb[0].mxu0
  %v7625 = vadd.f32 0.0, %v7624
  %v7626 = vpop.f32.mrb[0].mxu0
  %7627 = vmatprep.mubr.f32.mxu0 %v7252
  %7628 = vmatmul.mubr.f32.gmra.mrb[0].mxu0 %v6629
  %v7629 = vpop.f32.mrb[0].mxu0
  %v7630 = vadd.f32 0.0, %v7629
  %v7631 = vpop.f32.mrb[0].mxu0
  %7632 = vmatprep.mubr.f32.mxu0 %v7254
  %7633 = vmatmul.mubr.f32.gmra.mrb[0].mxu0 %v6631
  %v7634 = vpop.f32.mrb[0].mxu0
  %v7635 = vadd.f32 0.0, %v7634
  %v7636 = vpop.f32.mrb[0].mxu0
  %7637 = vmatprep.mubr.f32.mxu0 %v7256
  %7638 = vmatmul.mubr.f32.gmra.mrb[0].mxu0 %v6633
  %v7639 = vpop.f32.mrb[0].mxu0
  %v7640 = vadd.f32 0.0, %v7639
  %v7641 = vpop.f32.mrb[0].mxu0
  %7642 = vmatprep.mubr.f32.mxu0 %v7258
  %7643 = vmatmul.mubr.f32.gmra.mrb[0].mxu0 %v6635
  %v7644 = vpop.f32.mrb[0].mxu0
  %v7645 = vadd.f32 0.0, %v7644
  %v7646 = vpop.f32.mrb[0].mxu0
  %7647 = vmatprep.mubr.f32.mxu0 %v7260
  %7648 = vmatmul.mubr.f32.gmra.mrb[0].mxu0 %v6637
  %v7649 = vpop.f32.mrb[0].mxu0
  %v7650 = vadd.f32 0.0, %v7649
  %v7651 = vpop.f32.mrb[0].mxu0
  %7652 = vmatprep.mubr.f32.mxu0 %v7262
  %7653 = vmatmul.mubr.f32.gmra.mrb[0].mxu0 %v6639
  %v7654 = vpop.f32.mrb[0].mxu0
  %v7655 = vadd.f32 0.0, %v7654
  %v7656 = vpop.f32.mrb[0].mxu0
  %7657 = vmatprep.mubr.f32.mxu0 %v7264
  %7658 = vmatmul.mubr.f32.gmra.mrb[0].mxu0 %v6641
  %v7659 = vpop.f32.mrb[0].mxu0
  %v7660 = vadd.f32 0.0, %v7659
  %v7661 = vpop.f32.mrb[0].mxu0
  %7662 = vmatprep.mubr.f32.mxu0 %v7266
  %7663 = vmatmul.mubr.f32.gmra.mrb[0].mxu0 %v6643
  %v7664 = vpop.f32.mrb[0].mxu0
  %v7665 = vadd.f32 0.0, %v7664
  %v7666 = vpop.f32.mrb[0].mxu0
  %7667 = vmatprep.mubr.f32.mxu0 %v7268
  %7668 = vmatmul.mubr.f32.gmra.mrb[0].mxu0 %v6645
  %v7669 = vpop.f32.mrb[0].mxu0
  %v7670 = vadd.f32 0.0, %v7669
  %v7671 = vpop.f32.mrb[0].mxu0
  %7672 = vmatprep.mubr.f32.mxu0 %v7270
  %7673 = vmatmul.mubr.f32.gmra.mrb[0].mxu0 %v6647
  %v7674 = vpop.f32.mrb[0].mxu0
  %v7675 = vadd.f32 0.0, %v7674
  %v7676 = vpop.f32.mrb[0].mxu0
  %7677 = vmatprep.mubr.f32.mxu0 %v7272
  %7678 = vmatmul.mubr.f32.gmra.mrb[0].mxu0 %v6649
  %v7679 = vpop.f32.mrb[0].mxu0
  %v7680 = vadd.f32 0.0, %v7679
  %v7681 = vpop.f32.mrb[0].mxu0
  %7682 = vmatprep.mubr.f32.mxu0 %v7274
  %7683 = vmatmul.mubr.f32.gmra.mrb[0].mxu0 %v6651
  %v7684 = vpop.f32.mrb[0].mxu0
  %v7685 = vadd.f32 0.0, %v7684
  %v7686 = vpop.f32.mrb[0].mxu0
  %7687 = vmatprep.mubr.f32.mxu0 %v7276
  %7688 = vmatmul.mubr.f32.gmra.mrb[0].mxu0 %v6653
  %v7689 = vpop.f32.mrb[0].mxu0
  %v7690 = vadd.f32 0.0, %v7689
  %v7691 = vpop.f32.mrb[0].mxu0
  %7692 = vmatprep.mubr.f32.mxu0 %v7278
  %7693 = vmatmul.mubr.f32.gmra.mrb[0].mxu0 %v6655
  %v7694 = vpop.f32.mrb[0].mxu0
  %v7695 = vadd.f32 0.0, %v7694
  %v7696 = vpop.f32.mrb[0].mxu0
  %7697 = vmatprep.mubr.f32.mxu0 %v7280
  %7698 = vmatmul.mubr.f32.gmra.mrb[0].mxu0 %v6657
  %v7699 = vpop.f32.mrb[0].mxu0
  %v7700 = vadd.f32 0.0, %v7699
  %v7701 = vpop.f32.mrb[0].mxu0
  %7702 = vmatprep.mubr.f32.mxu0 %v7282
  %7703 = vmatmul.mubr.f32.gmra.mrb[0].mxu0 %v6659
  %v7704 = vpop.f32.mrb[0].mxu0
  %v7705 = vadd.f32 0.0, %v7704
  %v7706 = vpop.f32.mrb[0].mxu0
  %7707 = vmatprep.mubr.f32.mxu0 %v7284
  %7708 = vmatmul.mubr.f32.gmra.mrb[0].mxu0 %v6661
  %v7709 = vpop.f32.mrb[0].mxu0
  %v7710 = vadd.f32 0.0, %v7709
  %v7711 = vpop.f32.mrb[0].mxu0
  %7712 = vmatprep.mubr.f32.mxu0 %v7286
  %7713 = vmatmul.mubr.f32.gmra.mrb[0].mxu0 %v6663
  %v7714 = vpop.f32.mrb[0].mxu0
  %v7715 = vadd.f32 0.0, %v7714
  %v7716 = vpop.f32.mrb[0].mxu0
  %7717 = vmatprep.mubr.f32.mxu0 %v7288
  %7718 = vmatmul.mubr.f32.gmra.mrb[0].mxu0 %v6665
  %v7719 = vpop.f32.mrb[0].mxu0
  %v7720 = vadd.f32 0.0, %v7719
  %v7721 = vpop.f32.mrb[0].mxu0
  %7722 = vmatprep.mubr.f32.mxu0 %v7290
  %7723 = vmatmul.mubr.f32.gmra.mrb[0].mxu0 %v6667
  %v7724 = vpop.f32.mrb[0].mxu0
  %v7725 = vadd.f32 0.0, %v7724
  %v7726 = vpop.f32.mrb[0].mxu0
  %7727 = vmatprep.mubr.f32.mxu0 %v7292
  %7728 = vmatmul.mubr.f32.gmra.mrb[0].mxu0 %v6669
  %v7729 = vpop.f32.mrb[0].mxu0
  %v7730 = vadd.f32 0.0, %v7729
  %v7731 = vpop.f32.mrb[0].mxu0
  %7732 = vmatprep.mubr.f32.mxu0 %v7294
  %7733 = vmatmul.mubr.f32.gmra.mrb[0].mxu0 %v6671
  %v7734 = vpop.f32.mrb[0].mxu0
  %v7735 = vadd.f32 0.0, %v7734
  %v7736 = vpop.f32.mrb[0].mxu0
  %7737 = vmatprep.mubr.f32.mxu0 %v7296
  %7738 = vmatmul.mubr.f32.gmra.mrb[0].mxu0 %v6673
  %v7739 = vpop.f32.mrb[0].mxu0
  %v7740 = vadd.f32 0.0, %v7739
  %v7741 = vpop.f32.mrb[0].mxu0
  %7742 = vmatprep.mubr.f32.mxu0 %v7298
  %7743 = vmatmul.mubr.f32.gmra.mrb[0].mxu0 %v6675
  %v7744 = vpop.f32.mrb[0].mxu0
  %v7745 = vadd.f32 0.0, %v7744
  %v7746 = vpop.f32.mrb[0].mxu0
  %7747 = vmatprep.mubr.f32.mxu0 %v7300
  %7748 = vmatmul.mubr.f32.gmra.mrb[0].mxu0 %v6677
  %v7749 = vpop.f32.mrb[0].mxu0
  %v7750 = vadd.f32 0.0, %v7749
  %v7751 = vpop.f32.mrb[0].mxu0
  %7752 = vmatprep.mubr.f32.mxu0 %v7302
  %7753 = vmatmul.mubr.f32.gmra.mrb[0].mxu0 %v6679
  %v7754 = vpop.f32.mrb[0].mxu0
  %v7755 = vadd.f32 0.0, %v7754
  %v7756 = vpop.f32.mrb[0].mxu0
  %7757 = vmatprep.mubr.f32.mxu0 %v7304
  %7758 = vmatmul.mubr.f32.gmra.mrb[0].mxu0 %v6681
  %v7759 = vpop.f32.mrb[0].mxu0
  %v7760 = vadd.f32 0.0, %v7759
  %v7761 = vpop.f32.mrb[0].mxu0
  %7762 = vmatprep.mubr.f32.mxu0 %v7306
  %7763 = vmatmul.mubr.f32.gmra.mrb[0].mxu0 %v6683
  %v7764 = vpop.f32.mrb[0].mxu0
  %v7765 = vadd.f32 0.0, %v7764
  %v7766 = vpop.f32.mrb[0].mxu0
  %7767 = vmatprep.mubr.f32.mxu0 %v7308
  %7768 = vmatmul.mubr.f32.gmra.mrb[0].mxu0 %v6685
  %v7769 = vpop.f32.mrb[0].mxu0
  %v7770 = vadd.f32 0.0, %v7769
  %v7771 = vpop.f32.mrb[0].mxu0
  %7772 = vmatprep.mubr.f32.mxu0 %v7310
  %7773 = vmatmul.mubr.f32.gmra.mrb[0].mxu0 %v6687
  %v7774 = vpop.f32.mrb[0].mxu0
  %v7775 = vadd.f32 0.0, %v7774
  %v7776 = vpop.f32.mrb[0].mxu0
  %7777 = vmatprep.mubr.f32.mxu0 %v7248
  %7778 = vmatmul.mubr.f32.gmra.mrb[0].mxu0 %v6625
  %v7779 = vpop.f32.mrb[0].mxu0
  %v7780 = vadd.f32 0.0, %v7779
  %v7781 = vpop.f32.mrb[0].mxu0
  %7782 = vdwg.mxu0
  %v7783 = vadd.f32 %v7379, %v7625
  %v7784 = vadd.f32 %v7384, %v7630
  %v7785 = vadd.f32 %v7389, %v7635
  %v7786 = vadd.f32 %v7394, %v7640
  %v7787 = vadd.f32 %v7399, %v7645
  %v7788 = vadd.f32 %v7404, %v7650
  %v7789 = vadd.f32 %v7409, %v7655
  %v7790 = vadd.f32 %v7414, %v7660
  %v7791 = vadd.f32 %v7419, %v7665
  %v7792 = vadd.f32 %v7424, %v7670
  %v7793 = vadd.f32 %v7429, %v7675
  %v7794 = vadd.f32 %v7434, %v7680
  %v7795 = vadd.f32 %v7439, %v7685
  %v7796 = vadd.f32 %v7444, %v7690
  %v7797 = vadd.f32 %v7449, %v7695
  %v7798 = vadd.f32 %v7454, %v7700
  %v7799 = vadd.f32 %v7459, %v7705
  %v7800 = vadd.f32 %v7464, %v7710
  %v7801 = vadd.f32 %v7469, %v7715
  %v7802 = vadd.f32 %v7474, %v7720
  %v7803 = vadd.f32 %v7479, %v7725
  %v7804 = vadd.f32 %v7484, %v7730
  %v7805 = vadd.f32 %v7489, %v7735
  %v7806 = vadd.f32 %v7494, %v7740
  %v7807 = vadd.f32 %v7499, %v7745
  %v7808 = vadd.f32 %v7504, %v7750
  %v7809 = vadd.f32 %v7509, %v7755
  %v7810 = vadd.f32 %v7514, %v7760
  %v7811 = vadd.f32 %v7519, %v7765
  %v7812 = vadd.f32 %v7524, %v7770
  %v7813 = vadd.f32 %v7529, %v7775
  %v7814 = vadd.f32 %v7534, %v7780
  %s7815 = scalar_lea.vmem %s5, 480
  %v7816 = vld [vmem:[%s7815] sm:$0xff]
  %v7817 = vld [vmem:[%s7815 + $0x8] sm:$0xff]
  %v7818 = vld [vmem:[%s7815 + $0x10] sm:$0xff]
  %v7819 = vld [vmem:[%s7815 + $0x18] sm:$0xff]
  %v7820 = vld [vmem:[%s7815 + $0x20] sm:$0xff]
  %v7821 = vld [vmem:[%s7815 + $0x28] sm:$0xff]
  %v7822 = vld [vmem:[%s7815 + $0x30] sm:$0xff]
  %v7823 = vld [vmem:[%s7815 + $0x38] sm:$0xff]
  %v7824 = vld [vmem:[%s7815 + $0x40] sm:$0xff]
  %v7825 = vld [vmem:[%s7815 + $0x48] sm:$0xff]
  %v7826 = vld [vmem:[%s7815 + $0x50] sm:$0xff]
  %v7827 = vld [vmem:[%s7815 + $0x58] sm:$0xff]
  %v7828 = vld [vmem:[%s7815 + $0x60] sm:$0xff]
  %v7829 = vld [vmem:[%s7815 + $0x68] sm:$0xff]
  %v7830 = vld [vmem:[%s7815 + $0x70] sm:$0xff]
  %v7831 = vld [vmem:[%s7815 + $0x78] sm:$0xff]
  %v7832 = vld [vmem:[%s7815 + $0x80] sm:$0xff]
  %v7833 = vld [vmem:[%s7815 + $0x88] sm:$0xff]
  %v7834 = vld [vmem:[%s7815 + $0x90] sm:$0xff]
  %v7835 = vld [vmem:[%s7815 + $0x98] sm:$0xff]
  %7836 = vmatprep.subr.mxu0 0.0
  %7837 = vmatpush1.msra.mxu0 %v7816
  %7838 = vmatprep.subr.mxu0 0.0
  %7839 = vmatpush1.msra.mxu0 %v7817
  %7840 = vmatprep.subr.mxu0 0.0
  %7841 = vmatpush1.msra.mxu0 %v7818
  %7842 = vmatprep.subr.mxu0 0.0
  %7843 = vmatpush1.msra.mxu0 %v7819
  %7844 = vmatprep.subr.mxu0 0.0
  %7845 = vmatpush1.msra.mxu0 %v7820
  %7846 = vmatprep.subr.mxu0 0.0
  %7847 = vmatpush1.msra.mxu0 %v7821
  %7848 = vmatprep.subr.mxu0 0.0
  %7849 = vmatpush1.msra.mxu0 %v7822
  %7850 = vmatprep.subr.mxu0 0.0
  %7851 = vmatpush1.msra.mxu0 %v7823
  %7852 = vmatprep.subr.mxu0 0.0
  %7853 = vmatpush1.msra.mxu0 %v7824
  %7854 = vmatprep.subr.mxu0 0.0
  %7855 = vmatpush1.msra.mxu0 %v7825
  %7856 = vmatprep.subr.mxu0 0.0
  %7857 = vmatpush1.msra.mxu0 %v7826
  %7858 = vmatprep.subr.mxu0 0.0
  %7859 = vmatpush1.msra.mxu0 %v7827
  %7860 = vmatprep.subr.mxu0 0.0
  %7861 = vmatpush1.msra.mxu0 %v7828
  %7862 = vmatprep.subr.mxu0 0.0
  %7863 = vmatpush1.msra.mxu0 %v7829
  %7864 = vmatprep.subr.mxu0 0.0
  %7865 = vmatpush1.msra.mxu0 %v7830
  %7866 = vmatprep.subr.mxu0 0.0
  %7867 = vmatpush1.msra.mxu0 %v7831
  %7868 = vmatprep.subr.mxu0 0.0
  %7869 = vmatpush1.msra.mxu0 %v7832
  %7870 = vmatprep.subr.mxu0 0.0
  %7871 = vmatpush1.msra.mxu0 %v7833
  %7872 = vmatprep.subr.mxu0 0.0
  %7873 = vmatpush1.msra.mxu0 %v7834
  %7874 = vmatprep.subr.mxu0 0.0
  %7875 = vmatpush1.msra.mxu0 %v7835
  %7876 = vmatprep.subr.mxu0 0.0
  %7877 = vmatpush1.msra.mxu0 0.0
  %7878 = vmatprep.subr.mxu0 0.0
  %7879 = vmatpush1.msra.mxu0 0.0
  %7880 = vmatprep.subr.mxu0 0.0
  %7881 = vmatpush1.msra.mxu0 0.0
  %7882 = vmatprep.subr.mxu0 0.0
  %7883 = vmatpush1.msra.mxu0 0.0
  %7884 = vmatprep.subr.mxu0 0.0
  %7885 = vmatpush1.msra.mxu0 0.0
  %7886 = vmatprep.subr.mxu0 0.0
  %7887 = vmatpush1.msra.mxu0 0.0
  %7888 = vmatprep.subr.mxu0 0.0
  %7889 = vmatpush1.msra.mxu0 0.0
  %7890 = vmatprep.subr.mxu0 0.0
  %7891 = vmatpush1.msra.mxu0 0.0
  %7892 = vmatprep.subr.mxu0 0.0
  %7893 = vmatpush1.msra.mxu0 0.0
  %7894 = vmatprep.subr.mxu0 0.0
  %7895 = vmatpush1.msra.mxu0 0.0
  %7896 = vmatprep.subr.mxu0 0.0
  %7897 = vmatpush1.msra.mxu0 0.0
  %7898 = vmatprep.subr.mxu0 0.0
  %7899 = vmatpush1.msra.mxu0 0.0
  %7900 = vmatprep.mubr.f32.mxu0 %v6960
  %7901 = vmatmul.mubr.f32.gmra.mrb[0].mxu0 %v6780
  %v7902 = vpop.f32.mrb[0].mxu0
  %v7903 = vadd.f32 0.0, %v7902
  %v7904 = vpop.f32.mrb[0].mxu0
  %7905 = vmatprep.mubr.f32.mxu0 %v6962
  %7906 = vmatmul.mubr.f32.gmra.mrb[0].mxu0 %v6784
  %v7907 = vpop.f32.mrb[0].mxu0
  %v7908 = vadd.f32 0.0, %v7907
  %v7909 = vpop.f32.mrb[0].mxu0
  %7910 = vmatprep.mubr.f32.mxu0 %v6964
  %7911 = vmatmul.mubr.f32.gmra.mrb[0].mxu0 %v6788
  %v7912 = vpop.f32.mrb[0].mxu0
  %v7913 = vadd.f32 0.0, %v7912
  %v7914 = vpop.f32.mrb[0].mxu0
  %7915 = vmatprep.mubr.f32.mxu0 %v6966
  %7916 = vmatmul.mubr.f32.gmra.mrb[0].mxu0 %v6792
  %v7917 = vpop.f32.mrb[0].mxu0
  %v7918 = vadd.f32 0.0, %v7917
  %v7919 = vpop.f32.mrb[0].mxu0
  %7920 = vmatprep.mubr.f32.mxu0 %v6968
  %7921 = vmatmul.mubr.f32.gmra.mrb[0].mxu0 %v6796
  %v7922 = vpop.f32.mrb[0].mxu0
  %v7923 = vadd.f32 0.0, %v7922
  %v7924 = vpop.f32.mrb[0].mxu0
  %7925 = vmatprep.mubr.f32.mxu0 %v6970
  %7926 = vmatmul.mubr.f32.gmra.mrb[0].mxu0 %v6800
  %v7927 = vpop.f32.mrb[0].mxu0
  %v7928 = vadd.f32 0.0, %v7927
  %v7929 = vpop.f32.mrb[0].mxu0
  %7930 = vmatprep.mubr.f32.mxu0 %v6972
  %7931 = vmatmul.mubr.f32.gmra.mrb[0].mxu0 %v6804
  %v7932 = vpop.f32.mrb[0].mxu0
  %v7933 = vadd.f32 0.0, %v7932
  %v7934 = vpop.f32.mrb[0].mxu0
  %7935 = vmatprep.mubr.f32.mxu0 %v6974
  %7936 = vmatmul.mubr.f32.gmra.mrb[0].mxu0 %v6808
  %v7937 = vpop.f32.mrb[0].mxu0
  %v7938 = vadd.f32 0.0, %v7937
  %v7939 = vpop.f32.mrb[0].mxu0
  %7940 = vmatprep.mubr.f32.mxu0 %v6976
  %7941 = vmatmul.mubr.f32.gmra.mrb[0].mxu0 %v6812
  %v7942 = vpop.f32.mrb[0].mxu0
  %v7943 = vadd.f32 0.0, %v7942
  %v7944 = vpop.f32.mrb[0].mxu0
  %7945 = vmatprep.mubr.f32.mxu0 %v6978
  %7946 = vmatmul.mubr.f32.gmra.mrb[0].mxu0 %v6816
  %v7947 = vpop.f32.mrb[0].mxu0
  %v7948 = vadd.f32 0.0, %v7947
  %v7949 = vpop.f32.mrb[0].mxu0
  %7950 = vmatprep.mubr.f32.mxu0 %v6980
  %7951 = vmatmul.mubr.f32.gmra.mrb[0].mxu0 %v6820
  %v7952 = vpop.f32.mrb[0].mxu0
  %v7953 = vadd.f32 0.0, %v7952
  %v7954 = vpop.f32.mrb[0].mxu0
  %7955 = vmatprep.mubr.f32.mxu0 %v6982
  %7956 = vmatmul.mubr.f32.gmra.mrb[0].mxu0 %v6824
  %v7957 = vpop.f32.mrb[0].mxu0
  %v7958 = vadd.f32 0.0, %v7957
  %v7959 = vpop.f32.mrb[0].mxu0
  %7960 = vmatprep.mubr.f32.mxu0 %v6984
  %7961 = vmatmul.mubr.f32.gmra.mrb[0].mxu0 %v6828
  %v7962 = vpop.f32.mrb[0].mxu0
  %v7963 = vadd.f32 0.0, %v7962
  %v7964 = vpop.f32.mrb[0].mxu0
  %7965 = vmatprep.mubr.f32.mxu0 %v6986
  %7966 = vmatmul.mubr.f32.gmra.mrb[0].mxu0 %v6832
  %v7967 = vpop.f32.mrb[0].mxu0
  %v7968 = vadd.f32 0.0, %v7967
  %v7969 = vpop.f32.mrb[0].mxu0
  %7970 = vmatprep.mubr.f32.mxu0 %v6988
  %7971 = vmatmul.mubr.f32.gmra.mrb[0].mxu0 %v6836
  %v7972 = vpop.f32.mrb[0].mxu0
  %v7973 = vadd.f32 0.0, %v7972
  %v7974 = vpop.f32.mrb[0].mxu0
  %7975 = vmatprep.mubr.f32.mxu0 %v6990
  %7976 = vmatmul.mubr.f32.gmra.mrb[0].mxu0 %v6840
  %v7977 = vpop.f32.mrb[0].mxu0
  %v7978 = vadd.f32 0.0, %v7977
  %v7979 = vpop.f32.mrb[0].mxu0
  %7980 = vmatprep.mubr.f32.mxu0 %v6992
  %7981 = vmatmul.mubr.f32.gmra.mrb[0].mxu0 %v6844
  %v7982 = vpop.f32.mrb[0].mxu0
  %v7983 = vadd.f32 0.0, %v7982
  %v7984 = vpop.f32.mrb[0].mxu0
  %7985 = vmatprep.mubr.f32.mxu0 %v6994
  %7986 = vmatmul.mubr.f32.gmra.mrb[0].mxu0 %v6848
  %v7987 = vpop.f32.mrb[0].mxu0
  %v7988 = vadd.f32 0.0, %v7987
  %v7989 = vpop.f32.mrb[0].mxu0
  %7990 = vmatprep.mubr.f32.mxu0 %v6996
  %7991 = vmatmul.mubr.f32.gmra.mrb[0].mxu0 %v6852
  %v7992 = vpop.f32.mrb[0].mxu0
  %v7993 = vadd.f32 0.0, %v7992
  %v7994 = vpop.f32.mrb[0].mxu0
  %7995 = vmatprep.mubr.f32.mxu0 %v6998
  %7996 = vmatmul.mubr.f32.gmra.mrb[0].mxu0 %v6856
  %v7997 = vpop.f32.mrb[0].mxu0
  %v7998 = vadd.f32 0.0, %v7997
  %v7999 = vpop.f32.mrb[0].mxu0
  %8000 = vmatprep.mubr.f32.mxu0 %v7000
  %8001 = vmatmul.mubr.f32.gmra.mrb[0].mxu0 %v6860
  %v8002 = vpop.f32.mrb[0].mxu0
  %v8003 = vadd.f32 0.0, %v8002
  %v8004 = vpop.f32.mrb[0].mxu0
  %8005 = vmatprep.mubr.f32.mxu0 %v7002
  %8006 = vmatmul.mubr.f32.gmra.mrb[0].mxu0 %v6864
  %v8007 = vpop.f32.mrb[0].mxu0
  %v8008 = vadd.f32 0.0, %v8007
  %v8009 = vpop.f32.mrb[0].mxu0
  %8010 = vmatprep.mubr.f32.mxu0 %v7004
  %8011 = vmatmul.mubr.f32.gmra.mrb[0].mxu0 %v6868
  %v8012 = vpop.f32.mrb[0].mxu0
  %v8013 = vadd.f32 0.0, %v8012
  %v8014 = vpop.f32.mrb[0].mxu0
  %8015 = vmatprep.mubr.f32.mxu0 %v7006
  %8016 = vmatmul.mubr.f32.gmra.mrb[0].mxu0 %v6872
  %v8017 = vpop.f32.mrb[0].mxu0
  %v8018 = vadd.f32 0.0, %v8017
  %v8019 = vpop.f32.mrb[0].mxu0
  %8020 = vmatprep.mubr.f32.mxu0 %v7008
  %8021 = vmatmul.mubr.f32.gmra.mrb[0].mxu0 %v6876
  %v8022 = vpop.f32.mrb[0].mxu0
  %v8023 = vadd.f32 0.0, %v8022
  %v8024 = vpop.f32.mrb[0].mxu0
  %8025 = vmatprep.mubr.f32.mxu0 %v7010
  %8026 = vmatmul.mubr.f32.gmra.mrb[0].mxu0 %v6880
  %v8027 = vpop.f32.mrb[0].mxu0
  %v8028 = vadd.f32 0.0, %v8027
  %v8029 = vpop.f32.mrb[0].mxu0
  %8030 = vmatprep.mubr.f32.mxu0 %v7012
  %8031 = vmatmul.mubr.f32.gmra.mrb[0].mxu0 %v6884
  %v8032 = vpop.f32.mrb[0].mxu0
  %v8033 = vadd.f32 0.0, %v8032
  %v8034 = vpop.f32.mrb[0].mxu0
  %8035 = vmatprep.mubr.f32.mxu0 %v7014
  %8036 = vmatmul.mubr.f32.gmra.mrb[0].mxu0 %v6888
  %v8037 = vpop.f32.mrb[0].mxu0
  %v8038 = vadd.f32 0.0, %v8037
  %v8039 = vpop.f32.mrb[0].mxu0
  %8040 = vmatprep.mubr.f32.mxu0 %v7016
  %8041 = vmatmul.mubr.f32.gmra.mrb[0].mxu0 %v6892
  %v8042 = vpop.f32.mrb[0].mxu0
  %v8043 = vadd.f32 0.0, %v8042
  %v8044 = vpop.f32.mrb[0].mxu0
  %8045 = vmatprep.mubr.f32.mxu0 %v7018
  %8046 = vmatmul.mubr.f32.gmra.mrb[0].mxu0 %v6896
  %v8047 = vpop.f32.mrb[0].mxu0
  %v8048 = vadd.f32 0.0, %v8047
  %v8049 = vpop.f32.mrb[0].mxu0
  %8050 = vmatprep.mubr.f32.mxu0 %v7021
  %8051 = vmatmul.mubr.f32.gmra.mrb[0].mxu0 %v6934
  %v8052 = vpop.f32.mrb[0].mxu0
  %v8053 = vadd.f32 0.0, %v8052
  %v8054 = vpop.f32.mrb[0].mxu0
  %8055 = vmatprep.mubr.f32.mxu0 %v6958
  %8056 = vmatmul.mubr.f32.gmra.mrb[0].mxu0 %v6775
  %v8057 = vpop.f32.mrb[0].mxu0
  %v8058 = vadd.f32 0.0, %v8057
  %v8059 = vpop.f32.mrb[0].mxu0
  %8060 = vdwg.mxu0
  %v8061 = vadd.f32 %v7783, %v7903
  %v8062 = vadd.f32 %v7784, %v7908
  %v8063 = vadd.f32 %v7785, %v7913
  %v8064 = vadd.f32 %v7786, %v7918
  %v8065 = vadd.f32 %v7787, %v7923
  %v8066 = vadd.f32 %v7788, %v7928
  %v8067 = vadd.f32 %v7789, %v7933
  %v8068 = vadd.f32 %v7790, %v7938
  %v8069 = vadd.f32 %v7791, %v7943
  %v8070 = vadd.f32 %v7792, %v7948
  %v8071 = vadd.f32 %v7793, %v7953
  %v8072 = vadd.f32 %v7794, %v7958
  %v8073 = vadd.f32 %v7795, %v7963
  %v8074 = vadd.f32 %v7796, %v7968
  %v8075 = vadd.f32 %v7797, %v7973
  %v8076 = vadd.f32 %v7798, %v7978
  %v8077 = vadd.f32 %v7799, %v7983
  %v8078 = vadd.f32 %v7800, %v7988
  %v8079 = vadd.f32 %v7801, %v7993
  %v8080 = vadd.f32 %v7802, %v7998
  %v8081 = vadd.f32 %v7803, %v8003
  %v8082 = vadd.f32 %v7804, %v8008
  %v8083 = vadd.f32 %v7805, %v8013
  %v8084 = vadd.f32 %v7806, %v8018
  %v8085 = vadd.f32 %v7807, %v8023
  %v8086 = vadd.f32 %v7808, %v8028
  %v8087 = vadd.f32 %v7809, %v8033
  %v8088 = vadd.f32 %v7810, %v8038
  %v8089 = vadd.f32 %v7811, %v8043
  %v8090 = vadd.f32 %v7812, %v8048
  %v8091 = vadd.f32 %v7813, %v8053
  %v8092 = vadd.f32 %v7814, %v8058
  %s8093 = scalar_lea.vmem %s5, 640
  %v8094 = vld [vmem:[%s8093] sm:$0xff]
  %v8095 = vld [vmem:[%s8093 + $0x8] sm:$0xff]
  %v8096 = vld [vmem:[%s8093 + $0x10] sm:$0xff]
  %v8097 = vld [vmem:[%s8093 + $0x18] sm:$0xff]
  %v8098 = vld [vmem:[%s8093 + $0x20] sm:$0xff]
  %v8099 = vld [vmem:[%s8093 + $0x28] sm:$0xff]
  %v8100 = vld [vmem:[%s8093 + $0x30] sm:$0xff]
  %v8101 = vld [vmem:[%s8093 + $0x38] sm:$0xff]
  %v8102 = vld [vmem:[%s8093 + $0x40] sm:$0xff]
  %v8103 = vld [vmem:[%s8093 + $0x48] sm:$0xff]
  %v8104 = vld [vmem:[%s8093 + $0x50] sm:$0xff]
  %v8105 = vld [vmem:[%s8093 + $0x58] sm:$0xff]
  %v8106 = vld [vmem:[%s8093 + $0x60] sm:$0xff]
  %v8107 = vld [vmem:[%s8093 + $0x68] sm:$0xff]
  %v8108 = vld [vmem:[%s8093 + $0x70] sm:$0xff]
  %v8109 = vld [vmem:[%s8093 + $0x78] sm:$0xff]
  %v8110 = vld [vmem:[%s8093 + $0x80] sm:$0xff]
  %v8111 = vld [vmem:[%s8093 + $0x88] sm:$0xff]
  %v8112 = vld [vmem:[%s8093 + $0x90] sm:$0xff]
  %v8113 = vld [vmem:[%s8093 + $0x98] sm:$0xff]
  %8114 = vmatprep.subr.mxu0 0.0
  %8115 = vmatpush1.msra.mxu0 %v8094
  %8116 = vmatprep.subr.mxu0 0.0
  %8117 = vmatpush1.msra.mxu0 %v8095
  %8118 = vmatprep.subr.mxu0 0.0
  %8119 = vmatpush1.msra.mxu0 %v8096
  %8120 = vmatprep.subr.mxu0 0.0
  %8121 = vmatpush1.msra.mxu0 %v8097
  %8122 = vmatprep.subr.mxu0 0.0
  %8123 = vmatpush1.msra.mxu0 %v8098
  %8124 = vmatprep.subr.mxu0 0.0
  %8125 = vmatpush1.msra.mxu0 %v8099
  %8126 = vmatprep.subr.mxu0 0.0
  %8127 = vmatpush1.msra.mxu0 %v8100
  %8128 = vmatprep.subr.mxu0 0.0
  %8129 = vmatpush1.msra.mxu0 %v8101
  %8130 = vmatprep.subr.mxu0 0.0
  %8131 = vmatpush1.msra.mxu0 %v8102
  %8132 = vmatprep.subr.mxu0 0.0
  %8133 = vmatpush1.msra.mxu0 %v8103
  %8134 = vmatprep.subr.mxu0 0.0
  %8135 = vmatpush1.msra.mxu0 %v8104
  %8136 = vmatprep.subr.mxu0 0.0
  %8137 = vmatpush1.msra.mxu0 %v8105
  %8138 = vmatprep.subr.mxu0 0.0
  %8139 = vmatpush1.msra.mxu0 %v8106
  %8140 = vmatprep.subr.mxu0 0.0
  %8141 = vmatpush1.msra.mxu0 %v8107
  %8142 = vmatprep.subr.mxu0 0.0
  %8143 = vmatpush1.msra.mxu0 %v8108
  %8144 = vmatprep.subr.mxu0 0.0
  %8145 = vmatpush1.msra.mxu0 %v8109
  %8146 = vmatprep.subr.mxu0 0.0
  %8147 = vmatpush1.msra.mxu0 %v8110
  %8148 = vmatprep.subr.mxu0 0.0
  %8149 = vmatpush1.msra.mxu0 %v8111
  %8150 = vmatprep.subr.mxu0 0.0
  %8151 = vmatpush1.msra.mxu0 %v8112
  %8152 = vmatprep.subr.mxu0 0.0
  %8153 = vmatpush1.msra.mxu0 %v8113
  %8154 = vmatprep.subr.mxu0 0.0
  %8155 = vmatpush1.msra.mxu0 0.0
  %8156 = vmatprep.subr.mxu0 0.0
  %8157 = vmatpush1.msra.mxu0 0.0
  %8158 = vmatprep.subr.mxu0 0.0
  %8159 = vmatpush1.msra.mxu0 0.0
  %8160 = vmatprep.subr.mxu0 0.0
  %8161 = vmatpush1.msra.mxu0 0.0
  %8162 = vmatprep.subr.mxu0 0.0
  %8163 = vmatpush1.msra.mxu0 0.0
  %8164 = vmatprep.subr.mxu0 0.0
  %8165 = vmatpush1.msra.mxu0 0.0
  %8166 = vmatprep.subr.mxu0 0.0
  %8167 = vmatpush1.msra.mxu0 0.0
  %8168 = vmatprep.subr.mxu0 0.0
  %8169 = vmatpush1.msra.mxu0 0.0
  %8170 = vmatprep.subr.mxu0 0.0
  %8171 = vmatpush1.msra.mxu0 0.0
  %8172 = vmatprep.subr.mxu0 0.0
  %8173 = vmatpush1.msra.mxu0 0.0
  %8174 = vmatprep.subr.mxu0 0.0
  %8175 = vmatpush1.msra.mxu0 0.0
  %8176 = vmatprep.subr.mxu0 0.0
  %8177 = vmatpush1.msra.mxu0 0.0
  %8178 = vmatprep.mubr.f32.mxu0 %v7252
  %8179 = vmatmul.mubr.f32.gmra.mrb[0].mxu0 %v6629
  %v8180 = vpop.f32.mrb[0].mxu0
  %v8181 = vadd.f32 0.0, %v8180
  %v8182 = vpop.f32.mrb[0].mxu0
  %8183 = vmatprep.mubr.f32.mxu0 %v7254
  %8184 = vmatmul.mubr.f32.gmra.mrb[0].mxu0 %v6631
  %v8185 = vpop.f32.mrb[0].mxu0
  %v8186 = vadd.f32 0.0, %v8185
  %v8187 = vpop.f32.mrb[0].mxu0
  %8188 = vmatprep.mubr.f32.mxu0 %v7256
  %8189 = vmatmul.mubr.f32.gmra.mrb[0].mxu0 %v6633
  %v8190 = vpop.f32.mrb[0].mxu0
  %v8191 = vadd.f32 0.0, %v8190
  %v8192 = vpop.f32.mrb[0].mxu0
  %8193 = vmatprep.mubr.f32.mxu0 %v7258
  %8194 = vmatmul.mubr.f32.gmra.mrb[0].mxu0 %v6635
  %v8195 = vpop.f32.mrb[0].mxu0
  %v8196 = vadd.f32 0.0, %v8195
  %v8197 = vpop.f32.mrb[0].mxu0
  %8198 = vmatprep.mubr.f32.mxu0 %v7260
  %8199 = vmatmul.mubr.f32.gmra.mrb[0].mxu0 %v6637
  %v8200 = vpop.f32.mrb[0].mxu0
  %v8201 = vadd.f32 0.0, %v8200
  %v8202 = vpop.f32.mrb[0].mxu0
  %8203 = vmatprep.mubr.f32.mxu0 %v7262
  %8204 = vmatmul.mubr.f32.gmra.mrb[0].mxu0 %v6639
  %v8205 = vpop.f32.mrb[0].mxu0
  %v8206 = vadd.f32 0.0, %v8205
  %v8207 = vpop.f32.mrb[0].mxu0
  %8208 = vmatprep.mubr.f32.mxu0 %v7264
  %8209 = vmatmul.mubr.f32.gmra.mrb[0].mxu0 %v6641
  %v8210 = vpop.f32.mrb[0].mxu0
  %v8211 = vadd.f32 0.0, %v8210
  %v8212 = vpop.f32.mrb[0].mxu0
  %8213 = vmatprep.mubr.f32.mxu0 %v7266
  %8214 = vmatmul.mubr.f32.gmra.mrb[0].mxu0 %v6643
  %v8215 = vpop.f32.mrb[0].mxu0
  %v8216 = vadd.f32 0.0, %v8215
  %v8217 = vpop.f32.mrb[0].mxu0
  %8218 = vmatprep.mubr.f32.mxu0 %v7268
  %8219 = vmatmul.mubr.f32.gmra.mrb[0].mxu0 %v6645
  %v8220 = vpop.f32.mrb[0].mxu0
  %v8221 = vadd.f32 0.0, %v8220
  %v8222 = vpop.f32.mrb[0].mxu0
  %8223 = vmatprep.mubr.f32.mxu0 %v7270
  %8224 = vmatmul.mubr.f32.gmra.mrb[0].mxu0 %v6647
  %v8225 = vpop.f32.mrb[0].mxu0
  %v8226 = vadd.f32 0.0, %v8225
  %v8227 = vpop.f32.mrb[0].mxu0
  %8228 = vmatprep.mubr.f32.mxu0 %v7272
  %8229 = vmatmul.mubr.f32.gmra.mrb[0].mxu0 %v6649
  %v8230 = vpop.f32.mrb[0].mxu0
  %v8231 = vadd.f32 0.0, %v8230
  %v8232 = vpop.f32.mrb[0].mxu0
  %8233 = vmatprep.mubr.f32.mxu0 %v7274
  %8234 = vmatmul.mubr.f32.gmra.mrb[0].mxu0 %v6651
  %v8235 = vpop.f32.mrb[0].mxu0
  %v8236 = vadd.f32 0.0, %v8235
  %v8237 = vpop.f32.mrb[0].mxu0
  %8238 = vmatprep.mubr.f32.mxu0 %v7276
  %8239 = vmatmul.mubr.f32.gmra.mrb[0].mxu0 %v6653
  %v8240 = vpop.f32.mrb[0].mxu0
  %v8241 = vadd.f32 0.0, %v8240
  %v8242 = vpop.f32.mrb[0].mxu0
  %8243 = vmatprep.mubr.f32.mxu0 %v7278
  %8244 = vmatmul.mubr.f32.gmra.mrb[0].mxu0 %v6655
  %v8245 = vpop.f32.mrb[0].mxu0
  %v8246 = vadd.f32 0.0, %v8245
  %v8247 = vpop.f32.mrb[0].mxu0
  %8248 = vmatprep.mubr.f32.mxu0 %v7280
  %8249 = vmatmul.mubr.f32.gmra.mrb[0].mxu0 %v6657
  %v8250 = vpop.f32.mrb[0].mxu0
  %v8251 = vadd.f32 0.0, %v8250
  %v8252 = vpop.f32.mrb[0].mxu0
  %8253 = vmatprep.mubr.f32.mxu0 %v7282
  %8254 = vmatmul.mubr.f32.gmra.mrb[0].mxu0 %v6659
  %v8255 = vpop.f32.mrb[0].mxu0
  %v8256 = vadd.f32 0.0, %v8255
  %v8257 = vpop.f32.mrb[0].mxu0
  %8258 = vmatprep.mubr.f32.mxu0 %v7284
  %8259 = vmatmul.mubr.f32.gmra.mrb[0].mxu0 %v6661
  %v8260 = vpop.f32.mrb[0].mxu0
  %v8261 = vadd.f32 0.0, %v8260
  %v8262 = vpop.f32.mrb[0].mxu0
  %8263 = vmatprep.mubr.f32.mxu0 %v7286
  %8264 = vmatmul.mubr.f32.gmra.mrb[0].mxu0 %v6663
  %v8265 = vpop.f32.mrb[0].mxu0
  %v8266 = vadd.f32 0.0, %v8265
  %v8267 = vpop.f32.mrb[0].mxu0
  %8268 = vmatprep.mubr.f32.mxu0 %v7288
  %8269 = vmatmul.mubr.f32.gmra.mrb[0].mxu0 %v6665
  %v8270 = vpop.f32.mrb[0].mxu0
  %v8271 = vadd.f32 0.0, %v8270
  %v8272 = vpop.f32.mrb[0].mxu0
  %8273 = vmatprep.mubr.f32.mxu0 %v7290
  %8274 = vmatmul.mubr.f32.gmra.mrb[0].mxu0 %v6667
  %v8275 = vpop.f32.mrb[0].mxu0
  %v8276 = vadd.f32 0.0, %v8275
  %v8277 = vpop.f32.mrb[0].mxu0
  %8278 = vmatprep.mubr.f32.mxu0 %v7292
  %8279 = vmatmul.mubr.f32.gmra.mrb[0].mxu0 %v6669
  %v8280 = vpop.f32.mrb[0].mxu0
  %v8281 = vadd.f32 0.0, %v8280
  %v8282 = vpop.f32.mrb[0].mxu0
  %8283 = vmatprep.mubr.f32.mxu0 %v7294
  %8284 = vmatmul.mubr.f32.gmra.mrb[0].mxu0 %v6671
  %v8285 = vpop.f32.mrb[0].mxu0
  %v8286 = vadd.f32 0.0, %v8285
  %v8287 = vpop.f32.mrb[0].mxu0
  %8288 = vmatprep.mubr.f32.mxu0 %v7296
  %8289 = vmatmul.mubr.f32.gmra.mrb[0].mxu0 %v6673
  %v8290 = vpop.f32.mrb[0].mxu0
  %v8291 = vadd.f32 0.0, %v8290
  %v8292 = vpop.f32.mrb[0].mxu0
  %8293 = vmatprep.mubr.f32.mxu0 %v7298
  %8294 = vmatmul.mubr.f32.gmra.mrb[0].mxu0 %v6675
  %v8295 = vpop.f32.mrb[0].mxu0
  %v8296 = vadd.f32 0.0, %v8295
  %v8297 = vpop.f32.mrb[0].mxu0
  %8298 = vmatprep.mubr.f32.mxu0 %v7300
  %8299 = vmatmul.mubr.f32.gmra.mrb[0].mxu0 %v6677
  %v8300 = vpop.f32.mrb[0].mxu0
  %v8301 = vadd.f32 0.0, %v8300
  %v8302 = vpop.f32.mrb[0].mxu0
  %8303 = vmatprep.mubr.f32.mxu0 %v7302
  %8304 = vmatmul.mubr.f32.gmra.mrb[0].mxu0 %v6679
  %v8305 = vpop.f32.mrb[0].mxu0
  %v8306 = vadd.f32 0.0, %v8305
  %v8307 = vpop.f32.mrb[0].mxu0
  %8308 = vmatprep.mubr.f32.mxu0 %v7304
  %8309 = vmatmul.mubr.f32.gmra.mrb[0].mxu0 %v6681
  %v8310 = vpop.f32.mrb[0].mxu0
  %v8311 = vadd.f32 0.0, %v8310
  %v8312 = vpop.f32.mrb[0].mxu0
  %8313 = vmatprep.mubr.f32.mxu0 %v7306
  %8314 = vmatmul.mubr.f32.gmra.mrb[0].mxu0 %v6683
  %v8315 = vpop.f32.mrb[0].mxu0
  %v8316 = vadd.f32 0.0, %v8315
  %v8317 = vpop.f32.mrb[0].mxu0
  %8318 = vmatprep.mubr.f32.mxu0 %v7308
  %8319 = vmatmul.mubr.f32.gmra.mrb[0].mxu0 %v6685
  %v8320 = vpop.f32.mrb[0].mxu0
  %v8321 = vadd.f32 0.0, %v8320
  %v8322 = vpop.f32.mrb[0].mxu0
  %8323 = vmatprep.mubr.f32.mxu0 %v7310
  %8324 = vmatmul.mubr.f32.gmra.mrb[0].mxu0 %v6687
  %v8325 = vpop.f32.mrb[0].mxu0
  %v8326 = vadd.f32 0.0, %v8325
  %v8327 = vpop.f32.mrb[0].mxu0
  %8328 = vmatprep.mubr.f32.mxu0 %v7248
  %8329 = vmatmul.mubr.f32.gmra.mrb[0].mxu0 %v6625
  %v8330 = vpop.f32.mrb[0].mxu0
  %v8331 = vadd.f32 0.0, %v8330
  %v8332 = vpop.f32.mrb[0].mxu0
  %8333 = vmatprep.mubr.f32.mxu0 %v7250
  %8334 = vmatmul.mubr.f32.gmra.mrb[0].mxu0 %v6627
  %v8335 = vpop.f32.mrb[0].mxu0
  %v8336 = vadd.f32 0.0, %v8335
  %v8337 = vpop.f32.mrb[0].mxu0
  %8338 = vdwg.mxu0
  %v8339 = vadd.f32 %v8061, %v8181
  %v8340 = vadd.f32 %v8062, %v8186
  %v8341 = vadd.f32 %v8063, %v8191
  %v8342 = vadd.f32 %v8064, %v8196
  %v8343 = vadd.f32 %v8065, %v8201
  %v8344 = vadd.f32 %v8066, %v8206
  %v8345 = vadd.f32 %v8067, %v8211
  %v8346 = vadd.f32 %v8068, %v8216
  %v8347 = vadd.f32 %v8069, %v8221
  %v8348 = vadd.f32 %v8070, %v8226
  %v8349 = vadd.f32 %v8071, %v8231
  %v8350 = vadd.f32 %v8072, %v8236
  %v8351 = vadd.f32 %v8073, %v8241
  %v8352 = vadd.f32 %v8074, %v8246
  %v8353 = vadd.f32 %v8075, %v8251
  %v8354 = vadd.f32 %v8076, %v8256
  %v8355 = vadd.f32 %v8077, %v8261
  %v8356 = vadd.f32 %v8078, %v8266
  %v8357 = vadd.f32 %v8079, %v8271
  %v8358 = vadd.f32 %v8080, %v8276
  %v8359 = vadd.f32 %v8081, %v8281
  %v8360 = vadd.f32 %v8082, %v8286
  %v8361 = vadd.f32 %v8083, %v8291
  %v8362 = vadd.f32 %v8084, %v8296
  %v8363 = vadd.f32 %v8085, %v8301
  %v8364 = vadd.f32 %v8086, %v8306
  %v8365 = vadd.f32 %v8087, %v8311
  %v8366 = vadd.f32 %v8088, %v8316
  %v8367 = vadd.f32 %v8089, %v8321
  %v8368 = vadd.f32 %v8090, %v8326
  %v8369 = vadd.f32 %v8091, %v8331
  %v8370 = vadd.f32 %v8092, %v8336
  %v8371 = vld [vmem:[%s6] sm:$0x1]
  %v8373 = vlaneseq
  %v8374 = vshrl.u32 %v8373, 7
  %v8375 = vsub.s32 0, %v8374
  %v8376 = vrot.slane %v8371, %v8375
  %v8378 = vadd.f32 %v8339, %v8376
  %v8379 = vadd.f32 %v8340, %v8376
  %v8380 = vadd.f32 %v8341, %v8376
  %v8381 = vadd.f32 %v8342, %v8376
  %v8382 = vadd.f32 %v8343, %v8376
  %v8383 = vadd.f32 %v8344, %v8376
  %v8384 = vadd.f32 %v8345, %v8376
  %v8385 = vadd.f32 %v8346, %v8376
  %v8386 = vadd.f32 %v8347, %v8376
  %v8387 = vadd.f32 %v8348, %v8376
  %v8388 = vadd.f32 %v8349, %v8376
  %v8389 = vadd.f32 %v8350, %v8376
  %v8390 = vadd.f32 %v8351, %v8376
  %v8391 = vadd.f32 %v8352, %v8376
  %v8392 = vadd.f32 %v8353, %v8376
  %v8393 = vadd.f32 %v8354, %v8376
  %v8394 = vadd.f32 %v8355, %v8376
  %v8395 = vadd.f32 %v8356, %v8376
  %v8396 = vadd.f32 %v8357, %v8376
  %v8397 = vadd.f32 %v8358, %v8376
  %v8398 = vadd.f32 %v8359, %v8376
  %v8399 = vadd.f32 %v8360, %v8376
  %v8400 = vadd.f32 %v8361, %v8376
  %v8401 = vadd.f32 %v8362, %v8376
  %v8402 = vadd.f32 %v8363, %v8376
  %v8403 = vadd.f32 %v8364, %v8376
  %v8404 = vadd.f32 %v8365, %v8376
  %v8405 = vadd.f32 %v8366, %v8376
  %v8406 = vadd.f32 %v8367, %v8376
  %v8407 = vadd.f32 %v8368, %v8376
  %v8408 = vadd.f32 %v8369, %v8376
  %v8409 = vadd.f32 %v8370, %v8376
  %v8410 = vmax.f32 %v8378, 0.0
  %v8411 = vmax.f32 %v8379, 0.0
  %v8412 = vmax.f32 %v8380, 0.0
  %v8413 = vmax.f32 %v8381, 0.0
  %v8414 = vmax.f32 %v8382, 0.0
  %v8415 = vmax.f32 %v8383, 0.0
  %v8416 = vmax.f32 %v8384, 0.0
  %v8417 = vmax.f32 %v8385, 0.0
  %v8418 = vmax.f32 %v8386, 0.0
  %v8419 = vmax.f32 %v8387, 0.0
  %v8420 = vmax.f32 %v8388, 0.0
  %v8421 = vmax.f32 %v8389, 0.0
  %v8422 = vmax.f32 %v8390, 0.0
  %v8423 = vmax.f32 %v8391, 0.0
  %v8424 = vmax.f32 %v8392, 0.0
  %v8425 = vmax.f32 %v8393, 0.0
  %v8426 = vmax.f32 %v8394, 0.0
  %v8427 = vmax.f32 %v8395, 0.0
  %v8428 = vmax.f32 %v8396, 0.0
  %v8429 = vmax.f32 %v8397, 0.0
  %v8430 = vmax.f32 %v8398, 0.0
  %v8431 = vmax.f32 %v8399, 0.0
  %v8432 = vmax.f32 %v8400, 0.0
  %v8433 = vmax.f32 %v8401, 0.0
  %v8434 = vmax.f32 %v8402, 0.0
  %v8435 = vmax.f32 %v8403, 0.0
  %v8436 = vmax.f32 %v8404, 0.0
  %v8437 = vmax.f32 %v8405, 0.0
  %v8438 = vmax.f32 %v8406, 0.0
  %v8439 = vmax.f32 %v8407, 0.0
  %v8440 = vmax.f32 %v8408, 0.0
  %v8441 = vmax.f32 %v8409, 0.0
  %v8442 = vld [vmem:[%s7] sm:$0xff]
  %v8443 = vld [vmem:[%s7 + $0x8] sm:$0xff]
  %v8444 = vld [vmem:[%s7 + $0x10] sm:$0xff]
  %v8445 = vld [vmem:[%s7 + $0x18] sm:$0xff]
  %v8446 = vld [vmem:[%s7 + $0x20] sm:$0xff]
  %v8447 = vld [vmem:[%s7 + $0x28] sm:$0xff]
  %v8448 = vld [vmem:[%s7 + $0x30] sm:$0xff]
  %v8449 = vld [vmem:[%s7 + $0x38] sm:$0xff]
  %v8450 = vld [vmem:[%s7 + $0x40] sm:$0xff]
  %v8451 = vld [vmem:[%s7 + $0x48] sm:$0xff]
  %v8452 = vld [vmem:[%s7 + $0x50] sm:$0xff]
  %v8453 = vld [vmem:[%s7 + $0x58] sm:$0xff]
  %v8454 = vld [vmem:[%s7 + $0x60] sm:$0xff]
  %v8455 = vld [vmem:[%s7 + $0x68] sm:$0xff]
  %v8456 = vld [vmem:[%s7 + $0x70] sm:$0xff]
  %v8457 = vld [vmem:[%s8] sm:$0x1]
  %v8459 = vlaneseq
  %v8460 = vshrl.u32 %v8459, 7
  %v8461 = vsub.s32 0, %v8460
  %v8462 = vrot.slane %v8457, %v8461
  %vm8464 = vcmask 982016
  %v8466 = vsel %vm8464, %v8410, 0
  %v8469 = vsel %vm8464, %v8411, 0
  %v8472 = vsel %vm8464, %v8412, 0
  %v8475 = vsel %vm8464, %v8413, 0
  %v8478 = vsel %vm8464, %v8414, 0
  %v8481 = vsel %vm8464, %v8415, 0
  %v8484 = vsel %vm8464, %v8416, 0
  %v8487 = vsel %vm8464, %v8417, 0
  %v8490 = vsel %vm8464, %v8418, 0
  %v8493 = vsel %vm8464, %v8419, 0
  %v8496 = vsel %vm8464, %v8420, 0
  %v8499 = vsel %vm8464, %v8421, 0
  %v8502 = vsel %vm8464, %v8422, 0
  %v8505 = vsel %vm8464, %v8423, 0
  %v8508 = vsel %vm8464, %v8424, 0
  %v8511 = vsel %vm8464, %v8425, 0
  %v8514 = vsel %vm8464, %v8426, 0
  %v8517 = vsel %vm8464, %v8427, 0
  %v8520 = vsel %vm8464, %v8428, 0
  %v8523 = vsel %vm8464, %v8429, 0
  %v8526 = vsel %vm8464, %v8430, 0
  %v8529 = vsel %vm8464, %v8431, 0
  %v8532 = vsel %vm8464, %v8432, 0
  %v8535 = vsel %vm8464, %v8433, 0
  %v8538 = vsel %vm8464, %v8434, 0
  %v8541 = vsel %vm8464, %v8435, 0
  %v8544 = vsel %vm8464, %v8436, 0
  %v8547 = vsel %vm8464, %v8437, 0
  %v8550 = vsel %vm8464, %v8438, 0
  %v8553 = vsel %vm8464, %v8439, 0
  %v8556 = vsel %vm8464, %v8440, 0
  %v8559 = vsel %vm8464, %v8441, 0
  %8561 = vmatprep.subr.mxu0 0.0
  %8562 = vmatpush1.msra.mxu0 %v8442
  %8563 = vmatprep.subr.mxu0 0.0
  %8564 = vmatpush1.msra.mxu0 %v8443
  %8565 = vmatprep.subr.mxu0 0.0
  %8566 = vmatpush1.msra.mxu0 %v8444
  %8567 = vmatprep.subr.mxu0 0.0
  %8568 = vmatpush1.msra.mxu0 %v8445
  %8569 = vmatprep.subr.mxu0 0.0
  %8570 = vmatpush1.msra.mxu0 %v8446
  %8571 = vmatprep.subr.mxu0 0.0
  %8572 = vmatpush1.msra.mxu0 %v8447
  %8573 = vmatprep.subr.mxu0 0.0
  %8574 = vmatpush1.msra.mxu0 %v8448
  %8575 = vmatprep.subr.mxu0 0.0
  %8576 = vmatpush1.msra.mxu0 %v8449
  %8577 = vmatprep.subr.mxu0 0.0
  %8578 = vmatpush1.msra.mxu0 %v8450
  %8579 = vmatprep.subr.mxu0 0.0
  %8580 = vmatpush1.msra.mxu0 %v8451
  %8581 = vmatprep.subr.mxu0 0.0
  %8582 = vmatpush1.msra.mxu0 %v8452
  %8583 = vmatprep.subr.mxu0 0.0
  %8584 = vmatpush1.msra.mxu0 %v8453
  %8585 = vmatprep.subr.mxu0 0.0
  %8586 = vmatpush1.msra.mxu0 %v8454
  %8587 = vmatprep.subr.mxu0 0.0
  %8588 = vmatpush1.msra.mxu0 %v8455
  %8589 = vmatprep.subr.mxu0 0.0
  %8590 = vmatpush1.msra.mxu0 %v8456
  %8591 = vmatprep.subr.mxu0 0.0
  %8592 = vmatpush1.msra.mxu0 0.0
  %8593 = vmatprep.subr.mxu0 0.0
  %8594 = vmatpush1.msra.mxu0 0.0
  %8595 = vmatprep.subr.mxu0 0.0
  %8596 = vmatpush1.msra.mxu0 0.0
  %8597 = vmatprep.subr.mxu0 0.0
  %8598 = vmatpush1.msra.mxu0 0.0
  %8599 = vmatprep.subr.mxu0 0.0
  %8600 = vmatpush1.msra.mxu0 0.0
  %8601 = vmatprep.subr.mxu0 0.0
  %8602 = vmatpush1.msra.mxu0 0.0
  %8603 = vmatprep.subr.mxu0 0.0
  %8604 = vmatpush1.msra.mxu0 0.0
  %8605 = vmatprep.subr.mxu0 0.0
  %8606 = vmatpush1.msra.mxu0 0.0
  %8607 = vmatprep.subr.mxu0 0.0
  %8608 = vmatpush1.msra.mxu0 0.0
  %8609 = vmatprep.subr.mxu0 0.0
  %8610 = vmatpush1.msra.mxu0 0.0
  %8611 = vmatprep.subr.mxu0 0.0
  %8612 = vmatpush1.msra.mxu0 0.0
  %8613 = vmatprep.subr.mxu0 0.0
  %8614 = vmatpush1.msra.mxu0 0.0
  %8615 = vmatprep.subr.mxu0 0.0
  %8616 = vmatpush1.msra.mxu0 0.0
  %8617 = vmatprep.subr.mxu0 0.0
  %8618 = vmatpush1.msra.mxu0 0.0
  %8619 = vmatprep.subr.mxu0 0.0
  %8620 = vmatpush1.msra.mxu0 0.0
  %8621 = vmatprep.subr.mxu0 0.0
  %8622 = vmatpush1.msra.mxu0 0.0
  %8623 = vmatprep.subr.mxu0 0.0
  %8624 = vmatpush1.msra.mxu0 0.0
  %8625 = vmatprep.mubr.f32.mxu0 0.0
  %8626 = vmatmul.mubr.f32.gmra.mrb[0].mxu0 %v8466
  %v8627 = vpop.f32.mrb[0].mxu0
  %v8628 = vadd.f32 %v8462, %v8627
  %v8629 = vpop.f32.mrb[0].mxu0
  %8630 = vmatprep.mubr.f32.mxu0 0.0
  %8631 = vmatmul.mubr.f32.gmra.mrb[0].mxu0 %v8469
  %v8632 = vpop.f32.mrb[0].mxu0
  %v8633 = vadd.f32 %v8462, %v8632
  %v8634 = vpop.f32.mrb[0].mxu0
  %8635 = vmatprep.mubr.f32.mxu0 0.0
  %8636 = vmatmul.mubr.f32.gmra.mrb[0].mxu0 %v8472
  %v8637 = vpop.f32.mrb[0].mxu0
  %v8638 = vadd.f32 %v8462, %v8637
  %v8639 = vpop.f32.mrb[0].mxu0
  %8640 = vmatprep.mubr.f32.mxu0 0.0
  %8641 = vmatmul.mubr.f32.gmra.mrb[0].mxu0 %v8475
  %v8642 = vpop.f32.mrb[0].mxu0
  %v8643 = vadd.f32 %v8462, %v8642
  %v8644 = vpop.f32.mrb[0].mxu0
  %8645 = vmatprep.mubr.f32.mxu0 0.0
  %8646 = vmatmul.mubr.f32.gmra.mrb[0].mxu0 %v8478
  %v8647 = vpop.f32.mrb[0].mxu0
  %v8648 = vadd.f32 %v8462, %v8647
  %v8649 = vpop.f32.mrb[0].mxu0
  %8650 = vmatprep.mubr.f32.mxu0 0.0
  %8651 = vmatmul.mubr.f32.gmra.mrb[0].mxu0 %v8481
  %v8652 = vpop.f32.mrb[0].mxu0
  %v8653 = vadd.f32 %v8462, %v8652
  %v8654 = vpop.f32.mrb[0].mxu0
  %8655 = vmatprep.mubr.f32.mxu0 0.0
  %8656 = vmatmul.mubr.f32.gmra.mrb[0].mxu0 %v8484
  %v8657 = vpop.f32.mrb[0].mxu0
  %v8658 = vadd.f32 %v8462, %v8657
  %v8659 = vpop.f32.mrb[0].mxu0
  %8660 = vmatprep.mubr.f32.mxu0 0.0
  %8661 = vmatmul.mubr.f32.gmra.mrb[0].mxu0 %v8487
  %v8662 = vpop.f32.mrb[0].mxu0
  %v8663 = vadd.f32 %v8462, %v8662
  %v8664 = vpop.f32.mrb[0].mxu0
  %8665 = vmatprep.mubr.f32.mxu0 0.0
  %8666 = vmatmul.mubr.f32.gmra.mrb[0].mxu0 %v8490
  %v8667 = vpop.f32.mrb[0].mxu0
  %v8668 = vadd.f32 %v8462, %v8667
  %v8669 = vpop.f32.mrb[0].mxu0
  %8670 = vmatprep.mubr.f32.mxu0 0.0
  %8671 = vmatmul.mubr.f32.gmra.mrb[0].mxu0 %v8493
  %v8672 = vpop.f32.mrb[0].mxu0
  %v8673 = vadd.f32 %v8462, %v8672
  %v8674 = vpop.f32.mrb[0].mxu0
  %8675 = vmatprep.mubr.f32.mxu0 0.0
  %8676 = vmatmul.mubr.f32.gmra.mrb[0].mxu0 %v8496
  %v8677 = vpop.f32.mrb[0].mxu0
  %v8678 = vadd.f32 %v8462, %v8677
  %v8679 = vpop.f32.mrb[0].mxu0
  %8680 = vmatprep.mubr.f32.mxu0 0.0
  %8681 = vmatmul.mubr.f32.gmra.mrb[0].mxu0 %v8499
  %v8682 = vpop.f32.mrb[0].mxu0
  %v8683 = vadd.f32 %v8462, %v8682
  %v8684 = vpop.f32.mrb[0].mxu0
  %8685 = vmatprep.mubr.f32.mxu0 0.0
  %8686 = vmatmul.mubr.f32.gmra.mrb[0].mxu0 %v8502
  %v8687 = vpop.f32.mrb[0].mxu0
  %v8688 = vadd.f32 %v8462, %v8687
  %v8689 = vpop.f32.mrb[0].mxu0
  %8690 = vmatprep.mubr.f32.mxu0 0.0
  %8691 = vmatmul.mubr.f32.gmra.mrb[0].mxu0 %v8505
  %v8692 = vpop.f32.mrb[0].mxu0
  %v8693 = vadd.f32 %v8462, %v8692
  %v8694 = vpop.f32.mrb[0].mxu0
  %8695 = vmatprep.mubr.f32.mxu0 0.0
  %8696 = vmatmul.mubr.f32.gmra.mrb[0].mxu0 %v8508
  %v8697 = vpop.f32.mrb[0].mxu0
  %v8698 = vadd.f32 %v8462, %v8697
  %v8699 = vpop.f32.mrb[0].mxu0
  %8700 = vmatprep.mubr.f32.mxu0 0.0
  %8701 = vmatmul.mubr.f32.gmra.mrb[0].mxu0 %v8511
  %v8702 = vpop.f32.mrb[0].mxu0
  %v8703 = vadd.f32 %v8462, %v8702
  %v8704 = vpop.f32.mrb[0].mxu0
  %8705 = vmatprep.mubr.f32.mxu0 0.0
  %8706 = vmatmul.mubr.f32.gmra.mrb[0].mxu0 %v8514
  %v8707 = vpop.f32.mrb[0].mxu0
  %v8708 = vadd.f32 %v8462, %v8707
  %v8709 = vpop.f32.mrb[0].mxu0
  %8710 = vmatprep.mubr.f32.mxu0 0.0
  %8711 = vmatmul.mubr.f32.gmra.mrb[0].mxu0 %v8517
  %v8712 = vpop.f32.mrb[0].mxu0
  %v8713 = vadd.f32 %v8462, %v8712
  %v8714 = vpop.f32.mrb[0].mxu0
  %8715 = vmatprep.mubr.f32.mxu0 0.0
  %8716 = vmatmul.mubr.f32.gmra.mrb[0].mxu0 %v8520
  %v8717 = vpop.f32.mrb[0].mxu0
  %v8718 = vadd.f32 %v8462, %v8717
  %v8719 = vpop.f32.mrb[0].mxu0
  %8720 = vmatprep.mubr.f32.mxu0 0.0
  %8721 = vmatmul.mubr.f32.gmra.mrb[0].mxu0 %v8523
  %v8722 = vpop.f32.mrb[0].mxu0
  %v8723 = vadd.f32 %v8462, %v8722
  %v8724 = vpop.f32.mrb[0].mxu0
  %8725 = vmatprep.mubr.f32.mxu0 0.0
  %8726 = vmatmul.mubr.f32.gmra.mrb[0].mxu0 %v8526
  %v8727 = vpop.f32.mrb[0].mxu0
  %v8728 = vadd.f32 %v8462, %v8727
  %v8729 = vpop.f32.mrb[0].mxu0
  %8730 = vmatprep.mubr.f32.mxu0 0.0
  %8731 = vmatmul.mubr.f32.gmra.mrb[0].mxu0 %v8529
  %v8732 = vpop.f32.mrb[0].mxu0
  %v8733 = vadd.f32 %v8462, %v8732
  %v8734 = vpop.f32.mrb[0].mxu0
  %8735 = vmatprep.mubr.f32.mxu0 0.0
  %8736 = vmatmul.mubr.f32.gmra.mrb[0].mxu0 %v8532
  %v8737 = vpop.f32.mrb[0].mxu0
  %v8738 = vadd.f32 %v8462, %v8737
  %v8739 = vpop.f32.mrb[0].mxu0
  %8740 = vmatprep.mubr.f32.mxu0 0.0
  %8741 = vmatmul.mubr.f32.gmra.mrb[0].mxu0 %v8535
  %v8742 = vpop.f32.mrb[0].mxu0
  %v8743 = vadd.f32 %v8462, %v8742
  %v8744 = vpop.f32.mrb[0].mxu0
  %8745 = vmatprep.mubr.f32.mxu0 0.0
  %8746 = vmatmul.mubr.f32.gmra.mrb[0].mxu0 %v8538
  %v8747 = vpop.f32.mrb[0].mxu0
  %v8748 = vadd.f32 %v8462, %v8747
  %v8749 = vpop.f32.mrb[0].mxu0
  %8750 = vmatprep.mubr.f32.mxu0 0.0
  %8751 = vmatmul.mubr.f32.gmra.mrb[0].mxu0 %v8541
  %v8752 = vpop.f32.mrb[0].mxu0
  %v8753 = vadd.f32 %v8462, %v8752
  %v8754 = vpop.f32.mrb[0].mxu0
  %8755 = vmatprep.mubr.f32.mxu0 0.0
  %8756 = vmatmul.mubr.f32.gmra.mrb[0].mxu0 %v8544
  %v8757 = vpop.f32.mrb[0].mxu0
  %v8758 = vadd.f32 %v8462, %v8757
  %v8759 = vpop.f32.mrb[0].mxu0
  %8760 = vmatprep.mubr.f32.mxu0 0.0
  %8761 = vmatmul.mubr.f32.gmra.mrb[0].mxu0 %v8547
  %v8762 = vpop.f32.mrb[0].mxu0
  %v8763 = vadd.f32 %v8462, %v8762
  %v8764 = vpop.f32.mrb[0].mxu0
  %8765 = vmatprep.mubr.f32.mxu0 0.0
  %8766 = vmatmul.mubr.f32.gmra.mrb[0].mxu0 %v8550
  %v8767 = vpop.f32.mrb[0].mxu0
  %v8768 = vadd.f32 %v8462, %v8767
  %v8769 = vpop.f32.mrb[0].mxu0
  %8770 = vmatprep.mubr.f32.mxu0 0.0
  %8771 = vmatmul.mubr.f32.gmra.mrb[0].mxu0 %v8553
  %v8772 = vpop.f32.mrb[0].mxu0
  %v8773 = vadd.f32 %v8462, %v8772
  %v8774 = vpop.f32.mrb[0].mxu0
  %8775 = vmatprep.mubr.f32.mxu0 0.0
  %8776 = vmatmul.mubr.f32.gmra.mrb[0].mxu0 %v8556
  %v8777 = vpop.f32.mrb[0].mxu0
  %v8778 = vadd.f32 %v8462, %v8777
  %v8779 = vpop.f32.mrb[0].mxu0
  %8780 = vmatprep.mubr.f32.mxu0 0.0
  %8781 = vmatmul.mubr.f32.gmra.mrb[0].mxu0 %v8559
  %v8782 = vpop.f32.mrb[0].mxu0
  %v8783 = vadd.f32 %v8462, %v8782
  %v8784 = vpop.f32.mrb[0].mxu0
  %8785 = vdwg.mxu0
  %v8786 = vmax.f32 %v8628, 0.0
  %v8787 = vmax.f32 %v8633, 0.0
  %v8788 = vmax.f32 %v8638, 0.0
  %v8789 = vmax.f32 %v8643, 0.0
  %v8790 = vmax.f32 %v8648, 0.0
  %v8791 = vmax.f32 %v8653, 0.0
  %v8792 = vmax.f32 %v8658, 0.0
  %v8793 = vmax.f32 %v8663, 0.0
  %v8794 = vmax.f32 %v8668, 0.0
  %v8795 = vmax.f32 %v8673, 0.0
  %v8796 = vmax.f32 %v8678, 0.0
  %v8797 = vmax.f32 %v8683, 0.0
  %v8798 = vmax.f32 %v8688, 0.0
  %v8799 = vmax.f32 %v8693, 0.0
  %v8800 = vmax.f32 %v8698, 0.0
  %v8801 = vmax.f32 %v8703, 0.0
  %v8802 = vmax.f32 %v8708, 0.0
  %v8803 = vmax.f32 %v8713, 0.0
  %v8804 = vmax.f32 %v8718, 0.0
  %v8805 = vmax.f32 %v8723, 0.0
  %v8806 = vmax.f32 %v8728, 0.0
  %v8807 = vmax.f32 %v8733, 0.0
  %v8808 = vmax.f32 %v8738, 0.0
  %v8809 = vmax.f32 %v8743, 0.0
  %v8810 = vmax.f32 %v8748, 0.0
  %v8811 = vmax.f32 %v8753, 0.0
  %v8812 = vmax.f32 %v8758, 0.0
  %v8813 = vmax.f32 %v8763, 0.0
  %v8814 = vmax.f32 %v8768, 0.0
  %v8815 = vmax.f32 %v8773, 0.0
  %v8816 = vmax.f32 %v8778, 0.0
  %v8817 = vmax.f32 %v8783, 0.0
  %v8818 = vld [vmem:[%s9] sm:$0xff]
  %v8819 = vld [vmem:[%s9 + $0x8] sm:$0xff]
  %v8820 = vld [vmem:[%s9 + $0x10] sm:$0xff]
  %v8821 = vld [vmem:[%s9 + $0x18] sm:$0xff]
  %v8822 = vld [vmem:[%s9 + $0x20] sm:$0xff]
  %v8823 = vld [vmem:[%s9 + $0x28] sm:$0xff]
  %v8824 = vld [vmem:[%s9 + $0x30] sm:$0xff]
  %v8825 = vld [vmem:[%s9 + $0x38] sm:$0xff]
  %v8826 = vld [vmem:[%s9 + $0x40] sm:$0xff]
  %v8827 = vld [vmem:[%s9 + $0x48] sm:$0xff]
  %v8828 = vld [vmem:[%s9 + $0x50] sm:$0xf]
  %v8829 = vld [vmem:[%s10] sm:$0x1]
  %v8831 = vlaneseq
  %v8832 = vshrl.u32 %v8831, 7
  %v8833 = vsub.s32 0, %v8832
  %v8834 = vrot.slane %v8829, %v8833
  %vm8836 = vcmask 687104
  %v8838 = vsel %vm8836, %v8786, 0
  %v8841 = vsel %vm8836, %v8787, 0
  %v8844 = vsel %vm8836, %v8788, 0
  %v8847 = vsel %vm8836, %v8789, 0
  %v8850 = vsel %vm8836, %v8790, 0
  %v8853 = vsel %vm8836, %v8791, 0
  %v8856 = vsel %vm8836, %v8792, 0
  %v8859 = vsel %vm8836, %v8793, 0
  %v8862 = vsel %vm8836, %v8794, 0
  %v8865 = vsel %vm8836, %v8795, 0
  %v8868 = vsel %vm8836, %v8796, 0
  %v8871 = vsel %vm8836, %v8797, 0
  %v8874 = vsel %vm8836, %v8798, 0
  %v8877 = vsel %vm8836, %v8799, 0
  %v8880 = vsel %vm8836, %v8800, 0
  %v8883 = vsel %vm8836, %v8801, 0
  %v8886 = vsel %vm8836, %v8802, 0
  %v8889 = vsel %vm8836, %v8803, 0
  %v8892 = vsel %vm8836, %v8804, 0
  %v8895 = vsel %vm8836, %v8805, 0
  %v8898 = vsel %vm8836, %v8806, 0
  %v8901 = vsel %vm8836, %v8807, 0
  %v8904 = vsel %vm8836, %v8808, 0
  %v8907 = vsel %vm8836, %v8809, 0
  %v8910 = vsel %vm8836, %v8810, 0
  %v8913 = vsel %vm8836, %v8811, 0
  %v8916 = vsel %vm8836, %v8812, 0
  %v8919 = vsel %vm8836, %v8813, 0
  %v8922 = vsel %vm8836, %v8814, 0
  %v8925 = vsel %vm8836, %v8815, 0
  %v8928 = vsel %vm8836, %v8816, 0
  %v8931 = vsel %vm8836, %v8817, 0
  %v8934 = vsel %vm1818, %v8828, 0
  %8936 = vmatprep.subr.mxu0 0.0
  %8937 = vmatpush1.msra.mxu0 %v8818
  %8938 = vmatprep.subr.mxu0 0.0
  %8939 = vmatpush1.msra.mxu0 %v8819
  %8940 = vmatprep.subr.mxu0 0.0
  %8941 = vmatpush1.msra.mxu0 %v8820
  %8942 = vmatprep.subr.mxu0 0.0
  %8943 = vmatpush1.msra.mxu0 %v8821
  %8944 = vmatprep.subr.mxu0 0.0
  %8945 = vmatpush1.msra.mxu0 %v8822
  %8946 = vmatprep.subr.mxu0 0.0
  %8947 = vmatpush1.msra.mxu0 %v8823
  %8948 = vmatprep.subr.mxu0 0.0
  %8949 = vmatpush1.msra.mxu0 %v8824
  %8950 = vmatprep.subr.mxu0 0.0
  %8951 = vmatpush1.msra.mxu0 %v8825
  %8952 = vmatprep.subr.mxu0 0.0
  %8953 = vmatpush1.msra.mxu0 %v8826
  %8954 = vmatprep.subr.mxu0 0.0
  %8955 = vmatpush1.msra.mxu0 %v8827
  %8956 = vmatprep.subr.mxu0 0.0
  %8957 = vmatpush1.msra.mxu0 %v8934
  %8958 = vmatprep.subr.mxu0 0.0
  %8959 = vmatpush1.msra.mxu0 0.0
  %8960 = vmatprep.subr.mxu0 0.0
  %8961 = vmatpush1.msra.mxu0 0.0
  %8962 = vmatprep.subr.mxu0 0.0
  %8963 = vmatpush1.msra.mxu0 0.0
  %8964 = vmatprep.subr.mxu0 0.0
  %8965 = vmatpush1.msra.mxu0 0.0
  %8966 = vmatprep.subr.mxu0 0.0
  %8967 = vmatpush1.msra.mxu0 0.0
  %8968 = vmatprep.subr.mxu0 0.0
  %8969 = vmatpush1.msra.mxu0 0.0
  %8970 = vmatprep.subr.mxu0 0.0
  %8971 = vmatpush1.msra.mxu0 0.0
  %8972 = vmatprep.subr.mxu0 0.0
  %8973 = vmatpush1.msra.mxu0 0.0
  %8974 = vmatprep.subr.mxu0 0.0
  %8975 = vmatpush1.msra.mxu0 0.0
  %8976 = vmatprep.subr.mxu0 0.0
  %8977 = vmatpush1.msra.mxu0 0.0
  %8978 = vmatprep.subr.mxu0 0.0
  %8979 = vmatpush1.msra.mxu0 0.0
  %8980 = vmatprep.subr.mxu0 0.0
  %8981 = vmatpush1.msra.mxu0 0.0
  %8982 = vmatprep.subr.mxu0 0.0
  %8983 = vmatpush1.msra.mxu0 0.0
  %8984 = vmatprep.subr.mxu0 0.0
  %8985 = vmatpush1.msra.mxu0 0.0
  %8986 = vmatprep.subr.mxu0 0.0
  %8987 = vmatpush1.msra.mxu0 0.0
  %8988 = vmatprep.subr.mxu0 0.0
  %8989 = vmatpush1.msra.mxu0 0.0
  %8990 = vmatprep.subr.mxu0 0.0
  %8991 = vmatpush1.msra.mxu0 0.0
  %8992 = vmatprep.subr.mxu0 0.0
  %8993 = vmatpush1.msra.mxu0 0.0
  %8994 = vmatprep.subr.mxu0 0.0
  %8995 = vmatpush1.msra.mxu0 0.0
  %8996 = vmatprep.subr.mxu0 0.0
  %8997 = vmatpush1.msra.mxu0 0.0
  %8998 = vmatprep.subr.mxu0 0.0
  %8999 = vmatpush1.msra.mxu0 0.0
  %9000 = vmatprep.mubr.f32.mxu0 0.0
  %9001 = vmatmul.mubr.f32.gmra.mrb[0].mxu0 %v8838
  %v9002 = vpop.f32.mrb[0].mxu0
  %v9003 = vadd.f32 %v8834, %v9002
  %v9004 = vpop.f32.mrb[0].mxu0
  %9005 = vmatprep.mubr.f32.mxu0 0.0
  %9006 = vmatmul.mubr.f32.gmra.mrb[0].mxu0 %v8841
  %v9007 = vpop.f32.mrb[0].mxu0
  %v9008 = vadd.f32 %v8834, %v9007
  %v9009 = vpop.f32.mrb[0].mxu0
  %9010 = vmatprep.mubr.f32.mxu0 0.0
  %9011 = vmatmul.mubr.f32.gmra.mrb[0].mxu0 %v8844
  %v9012 = vpop.f32.mrb[0].mxu0
  %v9013 = vadd.f32 %v8834, %v9012
  %v9014 = vpop.f32.mrb[0].mxu0
  %9015 = vmatprep.mubr.f32.mxu0 0.0
  %9016 = vmatmul.mubr.f32.gmra.mrb[0].mxu0 %v8847
  %v9017 = vpop.f32.mrb[0].mxu0
  %v9018 = vadd.f32 %v8834, %v9017
  %v9019 = vpop.f32.mrb[0].mxu0
  %9020 = vmatprep.mubr.f32.mxu0 0.0
  %9021 = vmatmul.mubr.f32.gmra.mrb[0].mxu0 %v8850
  %v9022 = vpop.f32.mrb[0].mxu0
  %v9023 = vadd.f32 %v8834, %v9022
  %v9024 = vpop.f32.mrb[0].mxu0
  %9025 = vmatprep.mubr.f32.mxu0 0.0
  %9026 = vmatmul.mubr.f32.gmra.mrb[0].mxu0 %v8853
  %v9027 = vpop.f32.mrb[0].mxu0
  %v9028 = vadd.f32 %v8834, %v9027
  %v9029 = vpop.f32.mrb[0].mxu0
  %9030 = vmatprep.mubr.f32.mxu0 0.0
  %9031 = vmatmul.mubr.f32.gmra.mrb[0].mxu0 %v8856
  %v9032 = vpop.f32.mrb[0].mxu0
  %v9033 = vadd.f32 %v8834, %v9032
  %v9034 = vpop.f32.mrb[0].mxu0
  %9035 = vmatprep.mubr.f32.mxu0 0.0
  %9036 = vmatmul.mubr.f32.gmra.mrb[0].mxu0 %v8859
  %v9037 = vpop.f32.mrb[0].mxu0
  %v9038 = vadd.f32 %v8834, %v9037
  %v9039 = vpop.f32.mrb[0].mxu0
  %9040 = vmatprep.mubr.f32.mxu0 0.0
  %9041 = vmatmul.mubr.f32.gmra.mrb[0].mxu0 %v8862
  %v9042 = vpop.f32.mrb[0].mxu0
  %v9043 = vadd.f32 %v8834, %v9042
  %v9044 = vpop.f32.mrb[0].mxu0
  %9045 = vmatprep.mubr.f32.mxu0 0.0
  %9046 = vmatmul.mubr.f32.gmra.mrb[0].mxu0 %v8865
  %v9047 = vpop.f32.mrb[0].mxu0
  %v9048 = vadd.f32 %v8834, %v9047
  %v9049 = vpop.f32.mrb[0].mxu0
  %9050 = vmatprep.mubr.f32.mxu0 0.0
  %9051 = vmatmul.mubr.f32.gmra.mrb[0].mxu0 %v8868
  %v9052 = vpop.f32.mrb[0].mxu0
  %v9053 = vadd.f32 %v8834, %v9052
  %v9054 = vpop.f32.mrb[0].mxu0
  %9055 = vmatprep.mubr.f32.mxu0 0.0
  %9056 = vmatmul.mubr.f32.gmra.mrb[0].mxu0 %v8871
  %v9057 = vpop.f32.mrb[0].mxu0
  %v9058 = vadd.f32 %v8834, %v9057
  %v9059 = vpop.f32.mrb[0].mxu0
  %9060 = vmatprep.mubr.f32.mxu0 0.0
  %9061 = vmatmul.mubr.f32.gmra.mrb[0].mxu0 %v8874
  %v9062 = vpop.f32.mrb[0].mxu0
  %v9063 = vadd.f32 %v8834, %v9062
  %v9064 = vpop.f32.mrb[0].mxu0
  %9065 = vmatprep.mubr.f32.mxu0 0.0
  %9066 = vmatmul.mubr.f32.gmra.mrb[0].mxu0 %v8877
  %v9067 = vpop.f32.mrb[0].mxu0
  %v9068 = vadd.f32 %v8834, %v9067
  %v9069 = vpop.f32.mrb[0].mxu0
  %9070 = vmatprep.mubr.f32.mxu0 0.0
  %9071 = vmatmul.mubr.f32.gmra.mrb[0].mxu0 %v8880
  %v9072 = vpop.f32.mrb[0].mxu0
  %v9073 = vadd.f32 %v8834, %v9072
  %v9074 = vpop.f32.mrb[0].mxu0
  %9075 = vmatprep.mubr.f32.mxu0 0.0
  %9076 = vmatmul.mubr.f32.gmra.mrb[0].mxu0 %v8883
  %v9077 = vpop.f32.mrb[0].mxu0
  %v9078 = vadd.f32 %v8834, %v9077
  %v9079 = vpop.f32.mrb[0].mxu0
  %9080 = vmatprep.mubr.f32.mxu0 0.0
  %9081 = vmatmul.mubr.f32.gmra.mrb[0].mxu0 %v8886
  %v9082 = vpop.f32.mrb[0].mxu0
  %v9083 = vadd.f32 %v8834, %v9082
  %v9084 = vpop.f32.mrb[0].mxu0
  %9085 = vmatprep.mubr.f32.mxu0 0.0
  %9086 = vmatmul.mubr.f32.gmra.mrb[0].mxu0 %v8889
  %v9087 = vpop.f32.mrb[0].mxu0
  %v9088 = vadd.f32 %v8834, %v9087
  %v9089 = vpop.f32.mrb[0].mxu0
  %9090 = vmatprep.mubr.f32.mxu0 0.0
  %9091 = vmatmul.mubr.f32.gmra.mrb[0].mxu0 %v8892
  %v9092 = vpop.f32.mrb[0].mxu0
  %v9093 = vadd.f32 %v8834, %v9092
  %v9094 = vpop.f32.mrb[0].mxu0
  %9095 = vmatprep.mubr.f32.mxu0 0.0
  %9096 = vmatmul.mubr.f32.gmra.mrb[0].mxu0 %v8895
  %v9097 = vpop.f32.mrb[0].mxu0
  %v9098 = vadd.f32 %v8834, %v9097
  %v9099 = vpop.f32.mrb[0].mxu0
  %9100 = vmatprep.mubr.f32.mxu0 0.0
  %9101 = vmatmul.mubr.f32.gmra.mrb[0].mxu0 %v8898
  %v9102 = vpop.f32.mrb[0].mxu0
  %v9103 = vadd.f32 %v8834, %v9102
  %v9104 = vpop.f32.mrb[0].mxu0
  %9105 = vmatprep.mubr.f32.mxu0 0.0
  %9106 = vmatmul.mubr.f32.gmra.mrb[0].mxu0 %v8901
  %v9107 = vpop.f32.mrb[0].mxu0
  %v9108 = vadd.f32 %v8834, %v9107
  %v9109 = vpop.f32.mrb[0].mxu0
  %9110 = vmatprep.mubr.f32.mxu0 0.0
  %9111 = vmatmul.mubr.f32.gmra.mrb[0].mxu0 %v8904
  %v9112 = vpop.f32.mrb[0].mxu0
  %v9113 = vadd.f32 %v8834, %v9112
  %v9114 = vpop.f32.mrb[0].mxu0
  %9115 = vmatprep.mubr.f32.mxu0 0.0
  %9116 = vmatmul.mubr.f32.gmra.mrb[0].mxu0 %v8907
  %v9117 = vpop.f32.mrb[0].mxu0
  %v9118 = vadd.f32 %v8834, %v9117
  %v9119 = vpop.f32.mrb[0].mxu0
  %9120 = vmatprep.mubr.f32.mxu0 0.0
  %9121 = vmatmul.mubr.f32.gmra.mrb[0].mxu0 %v8910
  %v9122 = vpop.f32.mrb[0].mxu0
  %v9123 = vadd.f32 %v8834, %v9122
  %v9124 = vpop.f32.mrb[0].mxu0
  %9125 = vmatprep.mubr.f32.mxu0 0.0
  %9126 = vmatmul.mubr.f32.gmra.mrb[0].mxu0 %v8913
  %v9127 = vpop.f32.mrb[0].mxu0
  %v9128 = vadd.f32 %v8834, %v9127
  %v9129 = vpop.f32.mrb[0].mxu0
  %9130 = vmatprep.mubr.f32.mxu0 0.0
  %9131 = vmatmul.mubr.f32.gmra.mrb[0].mxu0 %v8916
  %v9132 = vpop.f32.mrb[0].mxu0
  %v9133 = vadd.f32 %v8834, %v9132
  %v9134 = vpop.f32.mrb[0].mxu0
  %9135 = vmatprep.mubr.f32.mxu0 0.0
  %9136 = vmatmul.mubr.f32.gmra.mrb[0].mxu0 %v8919
  %v9137 = vpop.f32.mrb[0].mxu0
  %v9138 = vadd.f32 %v8834, %v9137
  %v9139 = vpop.f32.mrb[0].mxu0
  %9140 = vmatprep.mubr.f32.mxu0 0.0
  %9141 = vmatmul.mubr.f32.gmra.mrb[0].mxu0 %v8922
  %v9142 = vpop.f32.mrb[0].mxu0
  %v9143 = vadd.f32 %v8834, %v9142
  %v9144 = vpop.f32.mrb[0].mxu0
  %9145 = vmatprep.mubr.f32.mxu0 0.0
  %9146 = vmatmul.mubr.f32.gmra.mrb[0].mxu0 %v8925
  %v9147 = vpop.f32.mrb[0].mxu0
  %v9148 = vadd.f32 %v8834, %v9147
  %v9149 = vpop.f32.mrb[0].mxu0
  %9150 = vmatprep.mubr.f32.mxu0 0.0
  %9151 = vmatmul.mubr.f32.gmra.mrb[0].mxu0 %v8928
  %v9152 = vpop.f32.mrb[0].mxu0
  %v9153 = vadd.f32 %v8834, %v9152
  %v9154 = vpop.f32.mrb[0].mxu0
  %9155 = vmatprep.mubr.f32.mxu0 0.0
  %9156 = vmatmul.mubr.f32.gmra.mrb[0].mxu0 %v8931
  %v9157 = vpop.f32.mrb[0].mxu0
  %v9158 = vadd.f32 %v8834, %v9157
  %v9159 = vpop.f32.mrb[0].mxu0
  %9160 = vdwg.mxu0
  %vm9161 = vcmask 80896
  %9162 = vst.msk [vmem:[%s11] sm:$0xff] %vm9161, %v9003
  %9163 = vst.msk [vmem:[%s11 + $0x8] sm:$0xff] %vm9161, %v9008
  %9164 = vst.msk [vmem:[%s11 + $0x10] sm:$0xff] %vm9161, %v9013
  %9165 = vst.msk [vmem:[%s11 + $0x18] sm:$0xff] %vm9161, %v9018
  %9166 = vst.msk [vmem:[%s11 + $0x20] sm:$0xff] %vm9161, %v9023
  %9167 = vst.msk [vmem:[%s11 + $0x28] sm:$0xff] %vm9161, %v9028
  %9168 = vst.msk [vmem:[%s11 + $0x30] sm:$0xff] %vm9161, %v9033
  %9169 = vst.msk [vmem:[%s11 + $0x38] sm:$0xff] %vm9161, %v9038
  %9170 = vst.msk [vmem:[%s11 + $0x40] sm:$0xff] %vm9161, %v9043
  %9171 = vst.msk [vmem:[%s11 + $0x48] sm:$0xff] %vm9161, %v9048
  %9172 = vst.msk [vmem:[%s11 + $0x50] sm:$0xff] %vm9161, %v9053
  %9173 = vst.msk [vmem:[%s11 + $0x58] sm:$0xff] %vm9161, %v9058
  %9174 = vst.msk [vmem:[%s11 + $0x60] sm:$0xff] %vm9161, %v9063
  %9175 = vst.msk [vmem:[%s11 + $0x68] sm:$0xff] %vm9161, %v9068
  %9176 = vst.msk [vmem:[%s11 + $0x70] sm:$0xff] %vm9161, %v9073
  %9177 = vst.msk [vmem:[%s11 + $0x78] sm:$0xff] %vm9161, %v9078
  %9178 = vst.msk [vmem:[%s11 + $0x80] sm:$0xff] %vm9161, %v9083
  %9179 = vst.msk [vmem:[%s11 + $0x88] sm:$0xff] %vm9161, %v9088
  %9180 = vst.msk [vmem:[%s11 + $0x90] sm:$0xff] %vm9161, %v9093
  %9181 = vst.msk [vmem:[%s11 + $0x98] sm:$0xff] %vm9161, %v9098
  %9182 = vst.msk [vmem:[%s11 + $0xa0] sm:$0xff] %vm9161, %v9103
  %9183 = vst.msk [vmem:[%s11 + $0xa8] sm:$0xff] %vm9161, %v9108
  %9184 = vst.msk [vmem:[%s11 + $0xb0] sm:$0xff] %vm9161, %v9113
  %9185 = vst.msk [vmem:[%s11 + $0xb8] sm:$0xff] %vm9161, %v9118
  %9186 = vst.msk [vmem:[%s11 + $0xc0] sm:$0xff] %vm9161, %v9123
  %9187 = vst.msk [vmem:[%s11 + $0xc8] sm:$0xff] %vm9161, %v9128
  %9188 = vst.msk [vmem:[%s11 + $0xd0] sm:$0xff] %vm9161, %v9133
  %9189 = vst.msk [vmem:[%s11 + $0xd8] sm:$0xff] %vm9161, %v9138
  %9190 = vst.msk [vmem:[%s11 + $0xe0] sm:$0xff] %vm9161, %v9143
  %9191 = vst.msk [vmem:[%s11 + $0xe8] sm:$0xff] %vm9161, %v9148
  %9192 = vst.msk [vmem:[%s11 + $0xf0] sm:$0xff] %vm9161, %v9153
  %9193 = vst.msk [vmem:[%s11 + $0xf8] sm:$0xff] %vm9161, %v9158
  // Predicated region
  $region46: #{coolnet_forward.1} parent=0 // pred_check
    _
  $region47: #{coolnet_forward.1} parent=0 // pred_check_branch
    %9195 = sbr.rel (0) target = $region49
  $region48: #{coolnet_forward.1} parent=0 // pred_region
    _
  $region49: #{coolnet_forward.1} parent=0 // pred_fallthru
    _
  // Predicated region
  $region50: #{coolnet_forward.1} parent=0 // pred_check
    _
  $region51: #{coolnet_forward.1} parent=0 // pred_check_branch
    %9197 = sbr.rel (0) target = $region53
  $region52: #{coolnet_forward.1} parent=0 // pred_region
    _
  $region53: #{coolnet_forward.1} parent=0 // pred_fallthru
    _

</llo_original>
